<compile_context>
chip_gen: v7x
topology: tpu7x:2x2x1
jax: 0.10.0
libtpu: 0.0.40
codegen_flags: <defaults>
</compile_context>

<pallas_src>
import functools

import numpy as np
import jax
import jax.numpy as jnp
from jax.experimental import pallas as pl
from jax.experimental.pallas import tpu as pltpu

BF16 = jnp.bfloat16
F32 = jnp.float32


# --------------------------------------------------------------------------- in-kernel helpers

def _layernorm(x, g, b, eps):
    mu = jnp.mean(x, axis=-1, keepdims=True)
    var = jnp.mean(jnp.square(x - mu), axis=-1, keepdims=True)
    return (x - mu) * jax.lax.rsqrt(var + eps) * g + b


def _num_tensorcores():
    """2 on v7x (megacore batch split pays), else 1 (grid=(1,) minimizes launch overhead)."""
    try:
        kind = (jax.devices()[0].device_kind or "").lower()
    except Exception:
        return 1
    return 2 if ("v7" in kind or "tpu7" in kind) else 1


# --------------------------------------------------------------------------- fused stage kernel

def _block_body(x, refs, *, num_heads, L, imgs, eps):
    """One Swin block: LN1 -> QKV -> full-image MHA with precomputed (heads,L,L) bias
    (rel-pos bias + window/shift mask) -> proj + residual -> LN2 -> MLP + residual."""
    (ln1g, ln1b, qkvw, qkvb, bias_ref,
     projw, projb, ln2g, ln2b, fc1w, fc1b, fc2w, fc2b) = refs
    M, C = x.shape                                   # M = imgs * L
    Dh = C // num_heads

    # ---- LN1 + fused QKV projection (bf16 operands, f32 accumulation)
    xn = _layernorm(x, ln1g[...], ln1b[...], eps)
    qkv = jnp.dot(xn.astype(BF16), qkvw[...], preferred_element_type=F32) + qkvb[...]

    # ---- head-batched attention; window structure lives entirely in `bias`
    def split_heads(off):
        parts = [qkv[:, off + h * Dh: off + (h + 1) * Dh].reshape(imgs, L, Dh)
                 for h in range(num_heads)]
        return jnp.concatenate(parts, axis=0)        # (heads*imgs, L, Dh); b = h*imgs + a

    q = split_heads(0)                               # 1/sqrt(Dh) pre-folded into Q weights
    k = split_heads(C)
    v = split_heads(2 * C)
    s = jnp.einsum("bid,bjd->bij", q.astype(BF16), k.astype(BF16),
                   preferred_element_type=F32)       # (heads*imgs, L, L)
    bias = bias_ref[...]                             # (heads, L, L): rel-pos bias + mask
    s = (s.reshape(num_heads, imgs, L, L) + bias[:, None]).reshape(num_heads * imgs, L, L)
    m = jnp.max(s, axis=-1, keepdims=True)
    p = jnp.exp(s - m)
    p = p * pl.reciprocal(jnp.sum(p, axis=-1, keepdims=True), approx=True)   # EUP reciprocal
    o = jnp.einsum("bij,bjd->bid", p.astype(BF16), v.astype(BF16),
                   preferred_element_type=F32)       # (heads*imgs, L, Dh)
    o = o.reshape(num_heads, imgs, L, Dh)
    attn = jnp.concatenate([o[h].reshape(M, Dh) for h in range(num_heads)], axis=-1)

    # ---- output projection + residual, then MLP + residual
    y = x + jnp.dot(attn.astype(BF16), projw[...], preferred_element_type=F32) + projb[...]
    yn = _layernorm(y, ln2g[...], ln2b[...], eps)
    h1 = jnp.dot(yn.astype(BF16), fc1w[...], preferred_element_type=F32) + fc1b[...]
    # TODO(synk): PyTorch nn.GELU defaults to exact erf GELU; tanh approximation used here
    # for guaranteed Mosaic lowering of the transcendental.
    h1 = jax.nn.gelu(h1, approximate=True)
    h2 = jnp.dot(h1.astype(BF16), fc2w[...], preferred_element_type=F32) + fc2b[...]
    return y + h2


def _stage_kernel(*refs, depth, num_heads, L, imgs, pre, with_head, eps, norm_eps):
    """One fused Swin stage: optional prologue (patch-embed or patch-merging), `depth`
    transformer blocks, optional head epilogue (final LN + avg-pool + fc + L2-normalize)."""
    o_ref = refs[-1]
    it = iter(refs[:-1])
    x = next(it)[...]

    if pre == "embed":                               # patch embed: matmul + LN
        w, b, g, bb = next(it), next(it), next(it), next(it)
        x = jnp.dot(x.astype(BF16), w[...], preferred_element_type=F32) + b[...]
        x = _layernorm(x, g[...], bb[...], eps)
    elif pre == "merge":                             # patch merging: LN + reduction matmul
        g, bb, w = next(it), next(it), next(it)
        x = _layernorm(x, g[...], bb[...], eps)
        x = jnp.dot(x.astype(BF16), w[...], preferred_element_type=F32)

    for _ in range(depth):
        brefs = [next(it) for _ in range(13)]
        x = _block_body(x, brefs, num_heads=num_heads, L=L, imgs=imgs, eps=eps)

    if with_head:                                    # final LN + pool + fc + F.normalize
        g, bb, fw, fb = next(it), next(it), next(it), next(it)
        C = x.shape[-1]
        xn = _layernorm(x, g[...], bb[...], eps)
        pooled = jnp.mean(xn.reshape(imgs, L, C), axis=1)
        y = jnp.dot(pooled.astype(BF16), fw[...], preferred_element_type=F32) + fb[...]
        nrm = jnp.sqrt(jnp.sum(y * y, axis=-1, keepdims=True))
        y = y / jnp.maximum(nrm, norm_eps)
        o_ref[...] = y.reshape(o_ref.shape).astype(o_ref.dtype)
    else:
        o_ref[...] = x.astype(o_ref.dtype)


def _run_stage(x2d, st, *, pre_mode, with_head, B, grid_steps, num_heads, L, C,
               eps=1e-5, norm_eps=1e-12):
    imgs = B // grid_steps
    rows_in = x2d.shape[0] // grid_steps
    K_in = x2d.shape[1]

    inputs = [x2d]
    in_specs = [pl.BlockSpec((rows_in, K_in), lambda i: (i, 0))]

    def add_resident(a):                             # whole array resident in VMEM every step
        inputs.append(a)
        in_specs.append(pl.BlockSpec(a.shape, lambda i, _nd=a.ndim: (0,) * _nd))

    for a in st["pre"]:
        add_resident(a)
    for blk in st["blocks"]:
        for a in blk:
            add_resident(a)
    if with_head:
        for a in st["head"]:
            add_resident(a)
        out_dim = st["head"][2].shape[1]
        out_shape = jax.ShapeDtypeStruct((B, 1, out_dim), F32)
        out_spec = pl.BlockSpec((imgs, 1, out_dim), lambda i: (i, 0, 0))
    else:
        out_shape = jax.ShapeDtypeStruct((B * L, C), F32)
        out_spec = pl.BlockSpec((imgs * L, C), lambda i: (i, 0))

    kern = functools.partial(
        _stage_kernel, depth=len(st["blocks"]), num_heads=num_heads, L=L, imgs=imgs,
        pre=pre_mode, with_head=with_head, eps=eps, norm_eps=norm_eps)

    return pl.pallas_call(
        kern,
        out_shape=out_shape,
        grid=(grid_steps,),
        in_specs=in_specs,
        out_specs=out_spec,
        compiler_params=pltpu.CompilerParams(
            dimension_semantics=("parallel",) if grid_steps > 1 else ("arbitrary",)),
    )(*inputs)


# --------------------------------------------------------------------------- forward (only glue: patchify + merge regroup)

def swin_encoder_forward(x, kp, cfg):
    B, Cin, Himg, Wimg = x.shape
    patch = cfg["patch"]
    Hp, Wp = Himg // patch, Wimg // patch
    n_stages = len(cfg["depths"])

    grid_steps = B if (_num_tensorcores() >= 2 and B > 1) else 1
    min_L = (Hp * Wp) // (4 ** (n_stages - 1))
    if (B % grid_steps) or (((B // grid_steps) * min_L) % 8):
        grid_steps = 1

    # patchify (NCHW -> one row of (kh, kw, cin) per patch): the only XLA glue before stage 0.
    xp = x.transpose(0, 2, 3, 1).reshape(B, Hp, patch, Wp, patch, Cin)
    xp = xp.transpose(0, 1, 3, 2, 4, 5).reshape(B * Hp * Wp, patch * patch * Cin)

    tok = xp
    H, W, C = Hp, Wp, cfg["embed_dim"]
    for si in range(n_stages):
        st = kp["stages"][si]
        last = si == n_stages - 1
        tok = _run_stage(tok, st, pre_mode="embed" if si == 0 else "merge",
                         with_head=last, B=B, grid_steps=grid_steps,
                         num_heads=cfg["heads"][si], L=H * W, C=C)
        if not last:
            # patch-merging spatial regroup (natural [x0,x2,x1,x3] channel order; reduction
            # weight / LN rows are pre-permuted at prep time to keep torch semantics).
            tok = tok.reshape(B, H // 2, 2, W // 2, 2, C).transpose(0, 1, 3, 2, 4, 5)
            tok = tok.reshape(B * (H // 2) * (W // 2), 4 * C)
            H, W, C = H // 2, W // 2, 2 * C
    return tok.reshape(B, -1)


# --------------------------------------------------------------------------- static attention tables (numpy)

def _full_attn_tables(H, W, ws, shift):
    """Static (L, L) tables over the RAW token order for one (shifted-)window attention:
    rel  — relative-position-bias index between tokens of the same (rolled) window,
    mask — 0 where attention is allowed, -100 otherwise (window structure + Swin shift mask)."""
    hh, ww = np.meshgrid(np.arange(H), np.arange(W), indexing="ij")
    rh, rw = (hh - shift) % H, (ww - shift) % W            # coordinates after the cyclic shift
    win2d = (rh // ws) * (W // ws) + (rw // ws)            # shifted-window membership
    ph, pw = (rh % ws).reshape(-1), (rw % ws).reshape(-1)  # intra-window coordinates
    win = win2d.reshape(-1)

    rel = ((ph[:, None] - ph[None, :] + ws - 1) * (2 * ws - 1)
           + (pw[:, None] - pw[None, :] + ws - 1)).astype(np.int32)
    mask = np.where(win[:, None] == win[None, :], 0.0, -100.0).astype(np.float32)

    if shift > 0:                                          # standard Swin shift-region mask
        img = np.zeros((H, W), np.float32)
        cnt = 0
        for hs in (slice(0, -ws), slice(-ws, -shift), slice(-shift, None)):
            for cs in (slice(0, -ws), slice(-ws, -shift), slice(-shift, None)):
                img[hs, cs] = float(cnt)
                cnt += 1
        lab = img[rh, rw].reshape(-1)
        mask = mask + np.where(lab[:, None] == lab[None, :], 0.0, -100.0).astype(np.float32)
    return rel, mask


# --------------------------------------------------------------------------- params

def _dense(key, shape, scale=0.02):
    return (scale * jax.random.normal(key, shape)).astype(jnp.float32)


def init_params(key, cfg):
    """Raw, torch-layout parameters (Linear weights stored as (in_features, out_features))."""
    keys = iter(jax.random.split(key, 256))
    nk = lambda: next(keys)
    ed, patch, cin = cfg["embed_dim"], cfg["patch"], cfg["in_chans"]

    params = {"patch_embed": dict(
        proj_w=_dense(nk(), (patch * patch * cin, ed)),
        proj_b=jnp.zeros((ed,), jnp.float32),
        ln_g=jnp.ones((ed,), jnp.float32),
        ln_b=jnp.zeros((ed,), jnp.float32))}

    stages = []
    H = W = cfg["img"] // patch
    C = ed
    for si, (depth, heads) in enumerate(zip(cfg["depths"], cfg["heads"])):
        ws = cfg["window"]
        if min(H, W) <= ws:
            ws = min(H, W)
        hidden = int(C * cfg["mlp_ratio"])
        blocks = []
        for _ in range(depth):
            blocks.append(dict(
                ln1_g=jnp.ones((C,), jnp.float32), ln1_b=jnp.zeros((C,), jnp.float32),
                qkv_w=_dense(nk(), (C, 3 * C)), qkv_b=jnp.zeros((3 * C,), jnp.float32),
                rpb=_dense(nk(), ((2 * ws - 1) ** 2, heads)),
                proj_w=_dense(nk(), (C, C)), proj_b=jnp.zeros((C,), jnp.float32),
                ln2_g=jnp.ones((C,), jnp.float32), ln2_b=jnp.zeros((C,), jnp.float32),
                fc1_w=_dense(nk(), (C, hidden)), fc1_b=jnp.zeros((hidden,), jnp.float32),
                fc2_w=_dense(nk(), (hidden, C)), fc2_b=jnp.zeros((C,), jnp.float32)))
        stage = {"blocks": blocks}
        if si < len(cfg["depths"]) - 1:
            stage["merge"] = dict(
                ln_g=jnp.ones((4 * C,), jnp.float32), ln_b=jnp.zeros((4 * C,), jnp.float32),
                red_w=_dense(nk(), (4 * C, 2 * C)))
            H, W, C = H // 2, W // 2, 2 * C
        stages.append(stage)
    params["stages"] = stages
    params["head"] = dict(
        ln_g=jnp.ones((C,), jnp.float32), ln_b=jnp.zeros((C,), jnp.float32),
        fc_w=_dense(nk(), (C, cfg["out_dim"])),
        fc_b=jnp.zeros((cfg["out_dim"],), jnp.float32))
    return params


def _prep_block(bp, H, W, ws, shift, heads, scale):
    C = bp["qkv_w"].shape[0]
    L = H * W
    rel, mask = _full_attn_tables(H, W, ws, shift)
    bias = bp["rpb"][rel.reshape(-1)].reshape(L, L, heads)
    bias = jnp.transpose(bias, (2, 0, 1)).astype(F32) + jnp.asarray(mask)[None]   # (heads, L, L)
    qkv_w = bp["qkv_w"].at[:, :C].multiply(scale).astype(BF16)   # fold 1/sqrt(Dh) into Q
    qkv_b = bp["qkv_b"].at[:C].multiply(scale)
    return (bp["ln1_g"].reshape(1, -1), bp["ln1_b"].reshape(1, -1),
            qkv_w, qkv_b.reshape(1, -1), bias,
            bp["proj_w"].astype(BF16), bp["proj_b"].reshape(1, -1),
            bp["ln2_g"].reshape(1, -1), bp["ln2_b"].reshape(1, -1),
            bp["fc1_w"].astype(BF16), bp["fc1_b"].reshape(1, -1),
            bp["fc2_w"].astype(BF16), bp["fc2_b"].reshape(1, -1))


def prepare_params(params, cfg):
    """Run once, outside the jitted forward: bf16 weight copies, Q-scale fold, per-block
    (heads, L, L) attention bias tables, torch-order permutation of patch-merging params."""
    H = W = cfg["img"] // cfg["patch"]
    C = cfg["embed_dim"]
    n_stages = len(cfg["depths"])
    pe = params["patch_embed"]
    stages = []
    for si, (depth, heads) in enumerate(zip(cfg["depths"], cfg["heads"])):
        ws = cfg["window"]
        shift_base = ws // 2
        if min(H, W) <= ws:
            ws, shift_base = min(H, W), 0
        st = {}
        if si == 0:
            st["pre"] = (pe["proj_w"].astype(BF16), pe["proj_b"].reshape(1, -1),
                         pe["ln_g"].reshape(1, -1), pe["ln_b"].reshape(1, -1))
        else:
            mg = params["stages"][si - 1]["merge"]
            Cp = C // 2
            # the reshape-based merge produces channel blocks [x0, x2, x1, x3]
            idx = np.concatenate([np.arange(Cp) + b * Cp for b in (0, 2, 1, 3)])
            st["pre"] = (mg["ln_g"][idx].reshape(1, -1), mg["ln_b"][idx].reshape(1, -1),
                         mg["red_w"][idx, :].astype(BF16))
        scale = (C // heads) ** -0.5
        st["blocks"] = []
        for bi in range(depth):
            shift = 0 if bi % 2 == 0 else shift_base
            st["blocks"].append(_prep_block(params["stages"][si]["blocks"][bi],
                                            H, W, ws, shift, heads, scale))
        if si == n_stages - 1:
            hd = params["head"]
            st["head"] = (hd["ln_g"].reshape(1, -1), hd["ln_b"].reshape(1, -1),
                          hd["fc_w"].astype(BF16), hd["fc_b"].reshape(1, -1))
        stages.append(st)
        if si < n_stages - 1:
            H, W, C = H // 2, W // 2, 2 * C
    return {"stages": stages}


# --------------------------------------------------------------------------- main

if __name__ == "__main__":
    CFG = dict(img=32, patch=4, in_chans=3, embed_dim=32, depths=(2, 2),
               heads=(2, 4), window=4, mlp_ratio=4.0, out_dim=64)

    key = jax.random.PRNGKey(0)
    pkey, xkey = jax.random.split(key)
    raw_params = init_params(pkey, CFG)
    kparams = prepare_params(raw_params, CFG)
    x = jax.random.normal(xkey, (2, CFG["in_chans"], CFG["img"], CFG["img"]), jnp.float32)

    fwd = jax.jit(functools.partial(swin_encoder_forward, cfg=CFG))
    out = jax.block_until_ready(fwd(x, kparams))

    assert out.shape == (2, CFG["out_dim"]), out.shape
    assert bool(jnp.all(jnp.isfinite(out)))
    # output rows are L2-normalized (F.normalize(dim=-1))
    assert bool(jnp.allclose(jnp.linalg.norm(out, axis=-1), 1.0, atol=1e-3))
    print("KERNEL_OK")
</pallas_src>

<mosaic_0001>
module attributes {stable_mosaic.version = 11 : i64} {
  func.func @_stage_kernel(%arg0: i32, %arg1: memref<128x48xf32, #tpu.memory_space<vmem>>, %arg2: memref<48x32xbf16, #tpu.memory_space<vmem>>, %arg3: memref<1x32xf32, #tpu.memory_space<vmem>>, %arg4: memref<1x32xf32, #tpu.memory_space<vmem>>, %arg5: memref<1x32xf32, #tpu.memory_space<vmem>>, %arg6: memref<1x32xf32, #tpu.memory_space<vmem>>, %arg7: memref<1x32xf32, #tpu.memory_space<vmem>>, %arg8: memref<32x96xbf16, #tpu.memory_space<vmem>>, %arg9: memref<1x96xf32, #tpu.memory_space<vmem>>, %arg10: memref<2x64x64xf32, #tpu.memory_space<vmem>>, %arg11: memref<32x32xbf16, #tpu.memory_space<vmem>>, %arg12: memref<1x32xf32, #tpu.memory_space<vmem>>, %arg13: memref<1x32xf32, #tpu.memory_space<vmem>>, %arg14: memref<1x32xf32, #tpu.memory_space<vmem>>, %arg15: memref<32x128xbf16, #tpu.memory_space<vmem>>, %arg16: memref<1x128xf32, #tpu.memory_space<vmem>>, %arg17: memref<128x32xbf16, #tpu.memory_space<vmem>>, %arg18: memref<1x32xf32, #tpu.memory_space<vmem>>, %arg19: memref<1x32xf32, #tpu.memory_space<vmem>>, %arg20: memref<1x32xf32, #tpu.memory_space<vmem>>, %arg21: memref<32x96xbf16, #tpu.memory_space<vmem>>, %arg22: memref<1x96xf32, #tpu.memory_space<vmem>>, %arg23: memref<2x64x64xf32, #tpu.memory_space<vmem>>, %arg24: memref<32x32xbf16, #tpu.memory_space<vmem>>, %arg25: memref<1x32xf32, #tpu.memory_space<vmem>>, %arg26: memref<1x32xf32, #tpu.memory_space<vmem>>, %arg27: memref<1x32xf32, #tpu.memory_space<vmem>>, %arg28: memref<32x128xbf16, #tpu.memory_space<vmem>>, %arg29: memref<1x128xf32, #tpu.memory_space<vmem>>, %arg30: memref<128x32xbf16, #tpu.memory_space<vmem>>, %arg31: memref<1x32xf32, #tpu.memory_space<vmem>>, %arg32: memref<128x32xf32, #tpu.memory_space<vmem>>) attributes {dimension_semantics = [#tpu.dimension_semantics<arbitrary>], iteration_bounds = array<i64: 1>, scalar_prefetch = 0 : i64, scratch_operands = 0 : i64, tpu.core_type = #tpu.core_type<tc>, window_params = [{transform_indices = @transform_0, window_bounds = array<i64: 128, 48>}, {pipeline_mode = #tpu.pipeline_mode<synchronous>, transform_indices = @transform_1, window_bounds = array<i64: 48, 32>}, {pipeline_mode = #tpu.pipeline_mode<synchronous>, transform_indices = @transform_2, window_bounds = array<i64: 1, 32>}, {pipeline_mode = #tpu.pipeline_mode<synchronous>, transform_indices = @transform_3, window_bounds = array<i64: 1, 32>}, {pipeline_mode = #tpu.pipeline_mode<synchronous>, transform_indices = @transform_4, window_bounds = array<i64: 1, 32>}, {pipeline_mode = #tpu.pipeline_mode<synchronous>, transform_indices = @transform_5, window_bounds = array<i64: 1, 32>}, {pipeline_mode = #tpu.pipeline_mode<synchronous>, transform_indices = @transform_6, window_bounds = array<i64: 1, 32>}, {pipeline_mode = #tpu.pipeline_mode<synchronous>, transform_indices = @transform_7, window_bounds = array<i64: 32, 96>}, {pipeline_mode = #tpu.pipeline_mode<synchronous>, transform_indices = @transform_8, window_bounds = array<i64: 1, 96>}, {pipeline_mode = #tpu.pipeline_mode<synchronous>, transform_indices = @transform_9, window_bounds = array<i64: 2, 64, 64>}, {pipeline_mode = #tpu.pipeline_mode<synchronous>, transform_indices = @transform_10, window_bounds = array<i64: 32, 32>}, {pipeline_mode = #tpu.pipeline_mode<synchronous>, transform_indices = @transform_11, window_bounds = array<i64: 1, 32>}, {pipeline_mode = #tpu.pipeline_mode<synchronous>, transform_indices = @transform_12, window_bounds = array<i64: 1, 32>}, {pipeline_mode = #tpu.pipeline_mode<synchronous>, transform_indices = @transform_13, window_bounds = array<i64: 1, 32>}, {pipeline_mode = #tpu.pipeline_mode<synchronous>, transform_indices = @transform_14, window_bounds = array<i64: 32, 128>}, {pipeline_mode = #tpu.pipeline_mode<synchronous>, transform_indices = @transform_15, window_bounds = array<i64: 1, 128>}, {pipeline_mode = #tpu.pipeline_mode<synchronous>, transform_indices = @transform_16, window_bounds = array<i64: 128, 32>}, {pipeline_mode = #tpu.pipeline_mode<synchronous>, transform_indices = @transform_17, window_bounds = array<i64: 1, 32>}, {pipeline_mode = #tpu.pipeline_mode<synchronous>, transform_indices = @transform_18, window_bounds = array<i64: 1, 32>}, {pipeline_mode = #tpu.pipeline_mode<synchronous>, transform_indices = @transform_19, window_bounds = array<i64: 1, 32>}, {pipeline_mode = #tpu.pipeline_mode<synchronous>, transform_indices = @transform_20, window_bounds = array<i64: 32, 96>}, {pipeline_mode = #tpu.pipeline_mode<synchronous>, transform_indices = @transform_21, window_bounds = array<i64: 1, 96>}, {pipeline_mode = #tpu.pipeline_mode<synchronous>, transform_indices = @transform_22, window_bounds = array<i64: 2, 64, 64>}, {pipeline_mode = #tpu.pipeline_mode<synchronous>, transform_indices = @transform_23, window_bounds = array<i64: 32, 32>}, {pipeline_mode = #tpu.pipeline_mode<synchronous>, transform_indices = @transform_24, window_bounds = array<i64: 1, 32>}, {pipeline_mode = #tpu.pipeline_mode<synchronous>, transform_indices = @transform_25, window_bounds = array<i64: 1, 32>}, {pipeline_mode = #tpu.pipeline_mode<synchronous>, transform_indices = @transform_26, window_bounds = array<i64: 1, 32>}, {pipeline_mode = #tpu.pipeline_mode<synchronous>, transform_indices = @transform_27, window_bounds = array<i64: 32, 128>}, {pipeline_mode = #tpu.pipeline_mode<synchronous>, transform_indices = @transform_28, window_bounds = array<i64: 1, 128>}, {pipeline_mode = #tpu.pipeline_mode<synchronous>, transform_indices = @transform_29, window_bounds = array<i64: 128, 32>}, {pipeline_mode = #tpu.pipeline_mode<synchronous>, transform_indices = @transform_30, window_bounds = array<i64: 1, 32>}, {transform_indices = @transform_31, window_bounds = array<i64: 128, 32>}]} {
    %c0 = arith.constant 0 : index
    %c0_0 = arith.constant 0 : index
    %0 = vector.load %arg1[%c0, %c0_0] : memref<128x48xf32, #tpu.memory_space<vmem>>, vector<128x48xf32>
    %1 = arith.truncf %0 : vector<128x48xf32> to vector<128x48xbf16>
    %c0_1 = arith.constant 0 : index
    %c0_2 = arith.constant 0 : index
    %2 = vector.load %arg2[%c0_1, %c0_2] : memref<48x32xbf16, #tpu.memory_space<vmem>>, vector<48x32xbf16>
    %cst = arith.constant dense<0.000000e+00> : vector<128x32xf32>
    %3 = tpu.matmul %1, %2, %cst {dimension_numbers = #tpu.dot_dimension_numbers<[1], [0], [0], [1], [0, 0, 1, 1], [], []>} : vector<128x48xbf16>, vector<48x32xbf16>, vector<128x32xf32> -> vector<128x32xf32>
    %c0_3 = arith.constant 0 : index
    %c0_4 = arith.constant 0 : index
    %4 = vector.load %arg3[%c0_3, %c0_4] : memref<1x32xf32, #tpu.memory_space<vmem>>, vector<1x32xf32>
    %5 = vector.broadcast %4 : vector<1x32xf32> to vector<128x32xf32>
    %6 = arith.addf %3, %5 : vector<128x32xf32>
    %c0_5 = arith.constant 0 : index
    %c0_6 = arith.constant 0 : index
    %7 = vector.load %arg4[%c0_5, %c0_6] : memref<1x32xf32, #tpu.memory_space<vmem>>, vector<1x32xf32>
    %c0_7 = arith.constant 0 : index
    %c0_8 = arith.constant 0 : index
    %8 = vector.load %arg5[%c0_7, %c0_8] : memref<1x32xf32, #tpu.memory_space<vmem>>, vector<1x32xf32>
    %cst_9 = arith.constant dense<0.000000e+00> : vector<128xf32>
    %9 = vector.multi_reduction <add>, %6, %cst_9 [1] : vector<128x32xf32> to vector<128xf32>
    %10 = vector.shape_cast %9 : vector<128xf32> to vector<128x1xf32>
    %cst_10 = arith.constant 3.200000e+01 : f32
    %11 = vector.broadcast %cst_10 : f32 to vector<128x1xf32>
    %12 = arith.divf %10, %11 : vector<128x1xf32>
    %13 = vector.broadcast %12 : vector<128x1xf32> to vector<128x32xf32>
    %14 = arith.subf %6, %13 : vector<128x32xf32>
    %15 = arith.mulf %14, %14 : vector<128x32xf32>
    %cst_11 = arith.constant dense<0.000000e+00> : vector<128xf32>
    %16 = vector.multi_reduction <add>, %15, %cst_11 [1] : vector<128x32xf32> to vector<128xf32>
    %17 = vector.shape_cast %16 : vector<128xf32> to vector<128x1xf32>
    %cst_12 = arith.constant 3.200000e+01 : f32
    %18 = vector.broadcast %cst_12 : f32 to vector<128x1xf32>
    %19 = arith.divf %17, %18 : vector<128x1xf32>
    %20 = vector.broadcast %12 : vector<128x1xf32> to vector<128x32xf32>
    %21 = arith.subf %6, %20 : vector<128x32xf32>
    %cst_13 = arith.constant 9.99999974E-6 : f32
    %22 = vector.broadcast %cst_13 : f32 to vector<128x1xf32>
    %23 = arith.addf %19, %22 : vector<128x1xf32>
    %24 = math.rsqrt %23 : vector<128x1xf32>
    %25 = vector.broadcast %24 : vector<128x1xf32> to vector<128x32xf32>
    %26 = arith.mulf %21, %25 : vector<128x32xf32>
    %27 = vector.broadcast %7 : vector<1x32xf32> to vector<128x32xf32>
    %28 = arith.mulf %26, %27 : vector<128x32xf32>
    %29 = vector.broadcast %8 : vector<1x32xf32> to vector<128x32xf32>
    %30 = arith.addf %28, %29 : vector<128x32xf32>
    %c0_14 = arith.constant 0 : index
    %c0_15 = arith.constant 0 : index
    %31 = vector.load %arg6[%c0_14, %c0_15] : memref<1x32xf32, #tpu.memory_space<vmem>>, vector<1x32xf32>
    %c0_16 = arith.constant 0 : index
    %c0_17 = arith.constant 0 : index
    %32 = vector.load %arg7[%c0_16, %c0_17] : memref<1x32xf32, #tpu.memory_space<vmem>>, vector<1x32xf32>
    %cst_18 = arith.constant dense<0.000000e+00> : vector<128xf32>
    %33 = vector.multi_reduction <add>, %30, %cst_18 [1] : vector<128x32xf32> to vector<128xf32>
    %34 = vector.shape_cast %33 : vector<128xf32> to vector<128x1xf32>
    %cst_19 = arith.constant 3.200000e+01 : f32
    %35 = vector.broadcast %cst_19 : f32 to vector<128x1xf32>
    %36 = arith.divf %34, %35 : vector<128x1xf32>
    %37 = vector.broadcast %36 : vector<128x1xf32> to vector<128x32xf32>
    %38 = arith.subf %30, %37 : vector<128x32xf32>
    %39 = arith.mulf %38, %38 : vector<128x32xf32>
    %cst_20 = arith.constant dense<0.000000e+00> : vector<128xf32>
    %40 = vector.multi_reduction <add>, %39, %cst_20 [1] : vector<128x32xf32> to vector<128xf32>
    %41 = vector.shape_cast %40 : vector<128xf32> to vector<128x1xf32>
    %cst_21 = arith.constant 3.200000e+01 : f32
    %42 = vector.broadcast %cst_21 : f32 to vector<128x1xf32>
    %43 = arith.divf %41, %42 : vector<128x1xf32>
    %44 = vector.broadcast %36 : vector<128x1xf32> to vector<128x32xf32>
    %45 = arith.subf %30, %44 : vector<128x32xf32>
    %cst_22 = arith.constant 9.99999974E-6 : f32
    %46 = vector.broadcast %cst_22 : f32 to vector<128x1xf32>
    %47 = arith.addf %43, %46 : vector<128x1xf32>
    %48 = math.rsqrt %47 : vector<128x1xf32>
    %49 = vector.broadcast %48 : vector<128x1xf32> to vector<128x32xf32>
    %50 = arith.mulf %45, %49 : vector<128x32xf32>
    %51 = vector.broadcast %31 : vector<1x32xf32> to vector<128x32xf32>
    %52 = arith.mulf %50, %51 : vector<128x32xf32>
    %53 = vector.broadcast %32 : vector<1x32xf32> to vector<128x32xf32>
    %54 = arith.addf %52, %53 : vector<128x32xf32>
    %55 = arith.truncf %54 : vector<128x32xf32> to vector<128x32xbf16>
    %c0_23 = arith.constant 0 : index
    %c0_24 = arith.constant 0 : index
    %56 = vector.load %arg8[%c0_23, %c0_24] : memref<32x96xbf16, #tpu.memory_space<vmem>>, vector<32x96xbf16>
    %cst_25 = arith.constant dense<0.000000e+00> : vector<128x96xf32>
    %57 = tpu.matmul %55, %56, %cst_25 {dimension_numbers = #tpu.dot_dimension_numbers<[1], [0], [0], [1], [0, 0, 1, 1], [], []>} : vector<128x32xbf16>, vector<32x96xbf16>, vector<128x96xf32> -> vector<128x96xf32>
    %c0_26 = arith.constant 0 : index
    %c0_27 = arith.constant 0 : index
    %58 = vector.load %arg9[%c0_26, %c0_27] : memref<1x96xf32, #tpu.memory_space<vmem>>, vector<1x96xf32>
    %59 = vector.broadcast %58 : vector<1x96xf32> to vector<128x96xf32>
    %60 = arith.addf %57, %59 : vector<128x96xf32>
    %61 = vector.extract_strided_slice %60 {offsets = [0, 0], sizes = [128, 16], strides = [1, 1]} : vector<128x96xf32> to vector<128x16xf32>
    %62 = vector.shape_cast %61 : vector<128x16xf32> to vector<2x64x16xf32>
    %63 = vector.extract_strided_slice %60 {offsets = [0, 16], sizes = [128, 16], strides = [1, 1]} : vector<128x96xf32> to vector<128x16xf32>
    %64 = vector.shape_cast %63 : vector<128x16xf32> to vector<2x64x16xf32>
    %65 = tpu.concatenate %62, %64 in 0 : vector<2x64x16xf32>, vector<2x64x16xf32> -> vector<4x64x16xf32>
    %66 = vector.extract_strided_slice %60 {offsets = [0, 32], sizes = [128, 16], strides = [1, 1]} : vector<128x96xf32> to vector<128x16xf32>
    %67 = vector.shape_cast %66 : vector<128x16xf32> to vector<2x64x16xf32>
    %68 = vector.extract_strided_slice %60 {offsets = [0, 48], sizes = [128, 16], strides = [1, 1]} : vector<128x96xf32> to vector<128x16xf32>
    %69 = vector.shape_cast %68 : vector<128x16xf32> to vector<2x64x16xf32>
    %70 = tpu.concatenate %67, %69 in 0 : vector<2x64x16xf32>, vector<2x64x16xf32> -> vector<4x64x16xf32>
    %71 = vector.extract_strided_slice %60 {offsets = [0, 64], sizes = [128, 16], strides = [1, 1]} : vector<128x96xf32> to vector<128x16xf32>
    %72 = vector.shape_cast %71 : vector<128x16xf32> to vector<2x64x16xf32>
    %73 = vector.extract_strided_slice %60 {offsets = [0, 80], sizes = [128, 16], strides = [1, 1]} : vector<128x96xf32> to vector<128x16xf32>
    %74 = vector.shape_cast %73 : vector<128x16xf32> to vector<2x64x16xf32>
    %75 = tpu.concatenate %72, %74 in 0 : vector<2x64x16xf32>, vector<2x64x16xf32> -> vector<4x64x16xf32>
    %76 = arith.truncf %65 : vector<4x64x16xf32> to vector<4x64x16xbf16>
    %77 = arith.truncf %70 : vector<4x64x16xf32> to vector<4x64x16xbf16>
    "tpu.trace_start"() <{level = 10 : i32, message = "bid,bjd->bij"}> : () -> ()
    %cst_28 = arith.constant dense<0.000000e+00> : vector<4x64x64xf32>
    %78 = tpu.matmul %76, %77, %cst_28 {dimension_numbers = #tpu.dot_dimension_numbers<[2], [2], [1], [1], [0, 0, 0, 1, 1, 1], [0], [0]>} : vector<4x64x16xbf16>, vector<4x64x16xbf16>, vector<4x64x64xf32> -> vector<4x64x64xf32>
    "tpu.trace_stop"() : () -> ()
    %c0_29 = arith.constant 0 : index
    %c0_30 = arith.constant 0 : index
    %c0_31 = arith.constant 0 : index
    %79 = vector.load %arg10[%c0_29, %c0_30, %c0_31] : memref<2x64x64xf32, #tpu.memory_space<vmem>>, vector<2x64x64xf32>
    %80 = vector.shape_cast %78 : vector<4x64x64xf32> to vector<2x2x64x64xf32>
    %81 = vector.shape_cast %79 : vector<2x64x64xf32> to vector<2x1x64x64xf32>
    %82 = vector.broadcast %81 : vector<2x1x64x64xf32> to vector<2x2x64x64xf32>
    %83 = arith.addf %80, %82 : vector<2x2x64x64xf32>
    %84 = vector.shape_cast %83 : vector<2x2x64x64xf32> to vector<4x64x64xf32>
    %cst_32 = arith.constant dense<0xFF800000> : vector<4x64xf32>
    %85 = vector.multi_reduction <maximumf>, %84, %cst_32 [2] : vector<4x64x64xf32> to vector<4x64xf32>
    %86 = vector.shape_cast %85 : vector<4x64xf32> to vector<4x64x1xf32>
    %87 = vector.broadcast %86 : vector<4x64x1xf32> to vector<4x64x64xf32>
    %88 = arith.subf %84, %87 : vector<4x64x64xf32>
    %89 = math.exp %88 : vector<4x64x64xf32>
    %cst_33 = arith.constant dense<0.000000e+00> : vector<4x64xf32>
    %90 = vector.multi_reduction <add>, %89, %cst_33 [2] : vector<4x64x64xf32> to vector<4x64xf32>
    %91 = vector.shape_cast %90 : vector<4x64xf32> to vector<4x64x1xf32>
    %92 = tpu.reciprocal %91 {approx = true} : vector<4x64x1xf32> -> vector<4x64x1xf32>
    %93 = vector.broadcast %92 : vector<4x64x1xf32> to vector<4x64x64xf32>
    %94 = arith.mulf %89, %93 : vector<4x64x64xf32>
    %95 = arith.truncf %94 : vector<4x64x64xf32> to vector<4x64x64xbf16>
    %96 = arith.truncf %75 : vector<4x64x16xf32> to vector<4x64x16xbf16>
    "tpu.trace_start"() <{level = 10 : i32, message = "bij,bjd->bid"}> : () -> ()
    %cst_34 = arith.constant dense<0.000000e+00> : vector<4x64x16xf32>
    %97 = tpu.matmul %95, %96, %cst_34 {dimension_numbers = #tpu.dot_dimension_numbers<[2], [1], [1], [2], [0, 0, 0, 1, 1, 2], [0], [0]>} : vector<4x64x64xbf16>, vector<4x64x16xbf16>, vector<4x64x16xf32> -> vector<4x64x16xf32>
    "tpu.trace_stop"() : () -> ()
    %98 = vector.shape_cast %97 : vector<4x64x16xf32> to vector<2x2x64x16xf32>
    %99 = vector.extract_strided_slice %98 {offsets = [0, 0, 0, 0], sizes = [1, 2, 64, 16], strides = [1, 1, 1, 1]} : vector<2x2x64x16xf32> to vector<1x2x64x16xf32>
    %100 = vector.shape_cast %99 : vector<1x2x64x16xf32> to vector<2x64x16xf32>
    %101 = vector.shape_cast %100 : vector<2x64x16xf32> to vector<128x16xf32>
    %102 = vector.extract_strided_slice %98 {offsets = [1, 0, 0, 0], sizes = [1, 2, 64, 16], strides = [1, 1, 1, 1]} : vector<2x2x64x16xf32> to vector<1x2x64x16xf32>
    %103 = vector.shape_cast %102 : vector<1x2x64x16xf32> to vector<2x64x16xf32>
    %104 = vector.shape_cast %103 : vector<2x64x16xf32> to vector<128x16xf32>
    %105 = tpu.concatenate %101, %104 in 1 : vector<128x16xf32>, vector<128x16xf32> -> vector<128x32xf32>
    %106 = arith.truncf %105 : vector<128x32xf32> to vector<128x32xbf16>
    %c0_35 = arith.constant 0 : index
    %c0_36 = arith.constant 0 : index
    %107 = vector.load %arg11[%c0_35, %c0_36] : memref<32x32xbf16, #tpu.memory_space<vmem>>, vector<32x32xbf16>
    %cst_37 = arith.constant dense<0.000000e+00> : vector<128x32xf32>
    %108 = tpu.matmul %106, %107, %cst_37 {dimension_numbers = #tpu.dot_dimension_numbers<[1], [0], [0], [1], [0, 0, 1, 1], [], []>} : vector<128x32xbf16>, vector<32x32xbf16>, vector<128x32xf32> -> vector<128x32xf32>
    %109 = arith.addf %30, %108 : vector<128x32xf32>
    %c0_38 = arith.constant 0 : index
    %c0_39 = arith.constant 0 : index
    %110 = vector.load %arg12[%c0_38, %c0_39] : memref<1x32xf32, #tpu.memory_space<vmem>>, vector<1x32xf32>
    %111 = vector.broadcast %110 : vector<1x32xf32> to vector<128x32xf32>
    %112 = arith.addf %109, %111 : vector<128x32xf32>
    %c0_40 = arith.constant 0 : index
    %c0_41 = arith.constant 0 : index
    %113 = vector.load %arg13[%c0_40, %c0_41] : memref<1x32xf32, #tpu.memory_space<vmem>>, vector<1x32xf32>
    %c0_42 = arith.constant 0 : index
    %c0_43 = arith.constant 0 : index
    %114 = vector.load %arg14[%c0_42, %c0_43] : memref<1x32xf32, #tpu.memory_space<vmem>>, vector<1x32xf32>
    %cst_44 = arith.constant dense<0.000000e+00> : vector<128xf32>
    %115 = vector.multi_reduction <add>, %112, %cst_44 [1] : vector<128x32xf32> to vector<128xf32>
    %116 = vector.shape_cast %115 : vector<128xf32> to vector<128x1xf32>
    %cst_45 = arith.constant 3.200000e+01 : f32
    %117 = vector.broadcast %cst_45 : f32 to vector<128x1xf32>
    %118 = arith.divf %116, %117 : vector<128x1xf32>
    %119 = vector.broadcast %118 : vector<128x1xf32> to vector<128x32xf32>
    %120 = arith.subf %112, %119 : vector<128x32xf32>
    %121 = arith.mulf %120, %120 : vector<128x32xf32>
    %cst_46 = arith.constant dense<0.000000e+00> : vector<128xf32>
    %122 = vector.multi_reduction <add>, %121, %cst_46 [1] : vector<128x32xf32> to vector<128xf32>
    %123 = vector.shape_cast %122 : vector<128xf32> to vector<128x1xf32>
    %cst_47 = arith.constant 3.200000e+01 : f32
    %124 = vector.broadcast %cst_47 : f32 to vector<128x1xf32>
    %125 = arith.divf %123, %124 : vector<128x1xf32>
    %126 = vector.broadcast %118 : vector<128x1xf32> to vector<128x32xf32>
    %127 = arith.subf %112, %126 : vector<128x32xf32>
    %cst_48 = arith.constant 9.99999974E-6 : f32
    %128 = vector.broadcast %cst_48 : f32 to vector<128x1xf32>
    %129 = arith.addf %125, %128 : vector<128x1xf32>
    %130 = math.rsqrt %129 : vector<128x1xf32>
    %131 = vector.broadcast %130 : vector<128x1xf32> to vector<128x32xf32>
    %132 = arith.mulf %127, %131 : vector<128x32xf32>
    %133 = vector.broadcast %113 : vector<1x32xf32> to vector<128x32xf32>
    %134 = arith.mulf %132, %133 : vector<128x32xf32>
    %135 = vector.broadcast %114 : vector<1x32xf32> to vector<128x32xf32>
    %136 = arith.addf %134, %135 : vector<128x32xf32>
    %137 = arith.truncf %136 : vector<128x32xf32> to vector<128x32xbf16>
    %c0_49 = arith.constant 0 : index
    %c0_50 = arith.constant 0 : index
    %138 = vector.load %arg15[%c0_49, %c0_50] : memref<32x128xbf16, #tpu.memory_space<vmem>>, vector<32x128xbf16>
    %cst_51 = arith.constant dense<0.000000e+00> : vector<128x128xf32>
    %139 = tpu.matmul %137, %138, %cst_51 {dimension_numbers = #tpu.dot_dimension_numbers<[1], [0], [0], [1], [0, 0, 1, 1], [], []>} : vector<128x32xbf16>, vector<32x128xbf16>, vector<128x128xf32> -> vector<128x128xf32>
    %c0_52 = arith.constant 0 : index
    %c0_53 = arith.constant 0 : index
    %140 = vector.load %arg16[%c0_52, %c0_53] : memref<1x128xf32, #tpu.memory_space<vmem>>, vector<1x128xf32>
    %141 = vector.broadcast %140 : vector<1x128xf32> to vector<128x128xf32>
    %142 = arith.addf %139, %141 : vector<128x128xf32>
    %143 = arith.mulf %142, %142 : vector<128x128xf32>
    %144 = arith.mulf %142, %143 : vector<128x128xf32>
    %cst_54 = arith.constant 4.471500e-02 : f32
    %145 = vector.broadcast %cst_54 : f32 to vector<128x128xf32>
    %146 = arith.mulf %145, %144 : vector<128x128xf32>
    %147 = arith.addf %142, %146 : vector<128x128xf32>
    %cst_55 = arith.constant 0.797884583 : f32
    %148 = vector.broadcast %cst_55 : f32 to vector<128x128xf32>
    %149 = arith.mulf %148, %147 : vector<128x128xf32>
    %150 = math.tanh %149 : vector<128x128xf32>
    %cst_56 = arith.constant 1.000000e+00 : f32
    %151 = vector.broadcast %cst_56 : f32 to vector<128x128xf32>
    %152 = arith.addf %151, %150 : vector<128x128xf32>
    %cst_57 = arith.constant 5.000000e-01 : f32
    %153 = vector.broadcast %cst_57 : f32 to vector<128x128xf32>
    %154 = arith.mulf %153, %152 : vector<128x128xf32>
    %155 = arith.mulf %142, %154 : vector<128x128xf32>
    %156 = arith.truncf %155 : vector<128x128xf32> to vector<128x128xbf16>
    %c0_58 = arith.constant 0 : index
    %c0_59 = arith.constant 0 : index
    %157 = vector.load %arg17[%c0_58, %c0_59] : memref<128x32xbf16, #tpu.memory_space<vmem>>, vector<128x32xbf16>
    %cst_60 = arith.constant dense<0.000000e+00> : vector<128x32xf32>
    %158 = tpu.matmul %156, %157, %cst_60 {dimension_numbers = #tpu.dot_dimension_numbers<[1], [0], [0], [1], [0, 0, 1, 1], [], []>} : vector<128x128xbf16>, vector<128x32xbf16>, vector<128x32xf32> -> vector<128x32xf32>
    %c0_61 = arith.constant 0 : index
    %c0_62 = arith.constant 0 : index
    %159 = vector.load %arg18[%c0_61, %c0_62] : memref<1x32xf32, #tpu.memory_space<vmem>>, vector<1x32xf32>
    %160 = vector.broadcast %159 : vector<1x32xf32> to vector<128x32xf32>
    %161 = arith.addf %158, %160 : vector<128x32xf32>
    %162 = arith.addf %112, %161 : vector<128x32xf32>
    %c0_63 = arith.constant 0 : index
    %c0_64 = arith.constant 0 : index
    %163 = vector.load %arg19[%c0_63, %c0_64] : memref<1x32xf32, #tpu.memory_space<vmem>>, vector<1x32xf32>
    %c0_65 = arith.constant 0 : index
    %c0_66 = arith.constant 0 : index
    %164 = vector.load %arg20[%c0_65, %c0_66] : memref<1x32xf32, #tpu.memory_space<vmem>>, vector<1x32xf32>
    %cst_67 = arith.constant dense<0.000000e+00> : vector<128xf32>
    %165 = vector.multi_reduction <add>, %162, %cst_67 [1] : vector<128x32xf32> to vector<128xf32>
    %166 = vector.shape_cast %165 : vector<128xf32> to vector<128x1xf32>
    %cst_68 = arith.constant 3.200000e+01 : f32
    %167 = vector.broadcast %cst_68 : f32 to vector<128x1xf32>
    %168 = arith.divf %166, %167 : vector<128x1xf32>
    %169 = vector.broadcast %168 : vector<128x1xf32> to vector<128x32xf32>
    %170 = arith.subf %162, %169 : vector<128x32xf32>
    %171 = arith.mulf %170, %170 : vector<128x32xf32>
    %cst_69 = arith.constant dense<0.000000e+00> : vector<128xf32>
    %172 = vector.multi_reduction <add>, %171, %cst_69 [1] : vector<128x32xf32> to vector<128xf32>
    %173 = vector.shape_cast %172 : vector<128xf32> to vector<128x1xf32>
    %cst_70 = arith.constant 3.200000e+01 : f32
    %174 = vector.broadcast %cst_70 : f32 to vector<128x1xf32>
    %175 = arith.divf %173, %174 : vector<128x1xf32>
    %176 = vector.broadcast %168 : vector<128x1xf32> to vector<128x32xf32>
    %177 = arith.subf %162, %176 : vector<128x32xf32>
    %cst_71 = arith.constant 9.99999974E-6 : f32
    %178 = vector.broadcast %cst_71 : f32 to vector<128x1xf32>
    %179 = arith.addf %175, %178 : vector<128x1xf32>
    %180 = math.rsqrt %179 : vector<128x1xf32>
    %181 = vector.broadcast %180 : vector<128x1xf32> to vector<128x32xf32>
    %182 = arith.mulf %177, %181 : vector<128x32xf32>
    %183 = vector.broadcast %163 : vector<1x32xf32> to vector<128x32xf32>
    %184 = arith.mulf %182, %183 : vector<128x32xf32>
    %185 = vector.broadcast %164 : vector<1x32xf32> to vector<128x32xf32>
    %186 = arith.addf %184, %185 : vector<128x32xf32>
    %187 = arith.truncf %186 : vector<128x32xf32> to vector<128x32xbf16>
    %c0_72 = arith.constant 0 : index
    %c0_73 = arith.constant 0 : index
    %188 = vector.load %arg21[%c0_72, %c0_73] : memref<32x96xbf16, #tpu.memory_space<vmem>>, vector<32x96xbf16>
    %cst_74 = arith.constant dense<0.000000e+00> : vector<128x96xf32>
    %189 = tpu.matmul %187, %188, %cst_74 {dimension_numbers = #tpu.dot_dimension_numbers<[1], [0], [0], [1], [0, 0, 1, 1], [], []>} : vector<128x32xbf16>, vector<32x96xbf16>, vector<128x96xf32> -> vector<128x96xf32>
    %c0_75 = arith.constant 0 : index
    %c0_76 = arith.constant 0 : index
    %190 = vector.load %arg22[%c0_75, %c0_76] : memref<1x96xf32, #tpu.memory_space<vmem>>, vector<1x96xf32>
    %191 = vector.broadcast %190 : vector<1x96xf32> to vector<128x96xf32>
    %192 = arith.addf %189, %191 : vector<128x96xf32>
    %193 = vector.extract_strided_slice %192 {offsets = [0, 0], sizes = [128, 16], strides = [1, 1]} : vector<128x96xf32> to vector<128x16xf32>
    %194 = vector.shape_cast %193 : vector<128x16xf32> to vector<2x64x16xf32>
    %195 = vector.extract_strided_slice %192 {offsets = [0, 16], sizes = [128, 16], strides = [1, 1]} : vector<128x96xf32> to vector<128x16xf32>
    %196 = vector.shape_cast %195 : vector<128x16xf32> to vector<2x64x16xf32>
    %197 = tpu.concatenate %194, %196 in 0 : vector<2x64x16xf32>, vector<2x64x16xf32> -> vector<4x64x16xf32>
    %198 = vector.extract_strided_slice %192 {offsets = [0, 32], sizes = [128, 16], strides = [1, 1]} : vector<128x96xf32> to vector<128x16xf32>
    %199 = vector.shape_cast %198 : vector<128x16xf32> to vector<2x64x16xf32>
    %200 = vector.extract_strided_slice %192 {offsets = [0, 48], sizes = [128, 16], strides = [1, 1]} : vector<128x96xf32> to vector<128x16xf32>
    %201 = vector.shape_cast %200 : vector<128x16xf32> to vector<2x64x16xf32>
    %202 = tpu.concatenate %199, %201 in 0 : vector<2x64x16xf32>, vector<2x64x16xf32> -> vector<4x64x16xf32>
    %203 = vector.extract_strided_slice %192 {offsets = [0, 64], sizes = [128, 16], strides = [1, 1]} : vector<128x96xf32> to vector<128x16xf32>
    %204 = vector.shape_cast %203 : vector<128x16xf32> to vector<2x64x16xf32>
    %205 = vector.extract_strided_slice %192 {offsets = [0, 80], sizes = [128, 16], strides = [1, 1]} : vector<128x96xf32> to vector<128x16xf32>
    %206 = vector.shape_cast %205 : vector<128x16xf32> to vector<2x64x16xf32>
    %207 = tpu.concatenate %204, %206 in 0 : vector<2x64x16xf32>, vector<2x64x16xf32> -> vector<4x64x16xf32>
    %208 = arith.truncf %197 : vector<4x64x16xf32> to vector<4x64x16xbf16>
    %209 = arith.truncf %202 : vector<4x64x16xf32> to vector<4x64x16xbf16>
    "tpu.trace_start"() <{level = 10 : i32, message = "bid,bjd->bij"}> : () -> ()
    %cst_77 = arith.constant dense<0.000000e+00> : vector<4x64x64xf32>
    %210 = tpu.matmul %208, %209, %cst_77 {dimension_numbers = #tpu.dot_dimension_numbers<[2], [2], [1], [1], [0, 0, 0, 1, 1, 1], [0], [0]>} : vector<4x64x16xbf16>, vector<4x64x16xbf16>, vector<4x64x64xf32> -> vector<4x64x64xf32>
    "tpu.trace_stop"() : () -> ()
    %c0_78 = arith.constant 0 : index
    %c0_79 = arith.constant 0 : index
    %c0_80 = arith.constant 0 : index
    %211 = vector.load %arg23[%c0_78, %c0_79, %c0_80] : memref<2x64x64xf32, #tpu.memory_space<vmem>>, vector<2x64x64xf32>
    %212 = vector.shape_cast %210 : vector<4x64x64xf32> to vector<2x2x64x64xf32>
    %213 = vector.shape_cast %211 : vector<2x64x64xf32> to vector<2x1x64x64xf32>
    %214 = vector.broadcast %213 : vector<2x1x64x64xf32> to vector<2x2x64x64xf32>
    %215 = arith.addf %212, %214 : vector<2x2x64x64xf32>
    %216 = vector.shape_cast %215 : vector<2x2x64x64xf32> to vector<4x64x64xf32>
    %cst_81 = arith.constant dense<0xFF800000> : vector<4x64xf32>
    %217 = vector.multi_reduction <maximumf>, %216, %cst_81 [2] : vector<4x64x64xf32> to vector<4x64xf32>
    %218 = vector.shape_cast %217 : vector<4x64xf32> to vector<4x64x1xf32>
    %219 = vector.broadcast %218 : vector<4x64x1xf32> to vector<4x64x64xf32>
    %220 = arith.subf %216, %219 : vector<4x64x64xf32>
    %221 = math.exp %220 : vector<4x64x64xf32>
    %cst_82 = arith.constant dense<0.000000e+00> : vector<4x64xf32>
    %222 = vector.multi_reduction <add>, %221, %cst_82 [2] : vector<4x64x64xf32> to vector<4x64xf32>
    %223 = vector.shape_cast %222 : vector<4x64xf32> to vector<4x64x1xf32>
    %224 = tpu.reciprocal %223 {approx = true} : vector<4x64x1xf32> -> vector<4x64x1xf32>
    %225 = vector.broadcast %224 : vector<4x64x1xf32> to vector<4x64x64xf32>
    %226 = arith.mulf %221, %225 : vector<4x64x64xf32>
    %227 = arith.truncf %226 : vector<4x64x64xf32> to vector<4x64x64xbf16>
    %228 = arith.truncf %207 : vector<4x64x16xf32> to vector<4x64x16xbf16>
    "tpu.trace_start"() <{level = 10 : i32, message = "bij,bjd->bid"}> : () -> ()
    %cst_83 = arith.constant dense<0.000000e+00> : vector<4x64x16xf32>
    %229 = tpu.matmul %227, %228, %cst_83 {dimension_numbers = #tpu.dot_dimension_numbers<[2], [1], [1], [2], [0, 0, 0, 1, 1, 2], [0], [0]>} : vector<4x64x64xbf16>, vector<4x64x16xbf16>, vector<4x64x16xf32> -> vector<4x64x16xf32>
    "tpu.trace_stop"() : () -> ()
    %230 = vector.shape_cast %229 : vector<4x64x16xf32> to vector<2x2x64x16xf32>
    %231 = vector.extract_strided_slice %230 {offsets = [0, 0, 0, 0], sizes = [1, 2, 64, 16], strides = [1, 1, 1, 1]} : vector<2x2x64x16xf32> to vector<1x2x64x16xf32>
    %232 = vector.shape_cast %231 : vector<1x2x64x16xf32> to vector<2x64x16xf32>
    %233 = vector.shape_cast %232 : vector<2x64x16xf32> to vector<128x16xf32>
    %234 = vector.extract_strided_slice %230 {offsets = [1, 0, 0, 0], sizes = [1, 2, 64, 16], strides = [1, 1, 1, 1]} : vector<2x2x64x16xf32> to vector<1x2x64x16xf32>
    %235 = vector.shape_cast %234 : vector<1x2x64x16xf32> to vector<2x64x16xf32>
    %236 = vector.shape_cast %235 : vector<2x64x16xf32> to vector<128x16xf32>
    %237 = tpu.concatenate %233, %236 in 1 : vector<128x16xf32>, vector<128x16xf32> -> vector<128x32xf32>
    %238 = arith.truncf %237 : vector<128x32xf32> to vector<128x32xbf16>
    %c0_84 = arith.constant 0 : index
    %c0_85 = arith.constant 0 : index
    %239 = vector.load %arg24[%c0_84, %c0_85] : memref<32x32xbf16, #tpu.memory_space<vmem>>, vector<32x32xbf16>
    %cst_86 = arith.constant dense<0.000000e+00> : vector<128x32xf32>
    %240 = tpu.matmul %238, %239, %cst_86 {dimension_numbers = #tpu.dot_dimension_numbers<[1], [0], [0], [1], [0, 0, 1, 1], [], []>} : vector<128x32xbf16>, vector<32x32xbf16>, vector<128x32xf32> -> vector<128x32xf32>
    %241 = arith.addf %162, %240 : vector<128x32xf32>
    %c0_87 = arith.constant 0 : index
    %c0_88 = arith.constant 0 : index
    %242 = vector.load %arg25[%c0_87, %c0_88] : memref<1x32xf32, #tpu.memory_space<vmem>>, vector<1x32xf32>
    %243 = vector.broadcast %242 : vector<1x32xf32> to vector<128x32xf32>
    %244 = arith.addf %241, %243 : vector<128x32xf32>
    %c0_89 = arith.constant 0 : index
    %c0_90 = arith.constant 0 : index
    %245 = vector.load %arg26[%c0_89, %c0_90] : memref<1x32xf32, #tpu.memory_space<vmem>>, vector<1x32xf32>
    %c0_91 = arith.constant 0 : index
    %c0_92 = arith.constant 0 : index
    %246 = vector.load %arg27[%c0_91, %c0_92] : memref<1x32xf32, #tpu.memory_space<vmem>>, vector<1x32xf32>
    %cst_93 = arith.constant dense<0.000000e+00> : vector<128xf32>
    %247 = vector.multi_reduction <add>, %244, %cst_93 [1] : vector<128x32xf32> to vector<128xf32>
    %248 = vector.shape_cast %247 : vector<128xf32> to vector<128x1xf32>
    %cst_94 = arith.constant 3.200000e+01 : f32
    %249 = vector.broadcast %cst_94 : f32 to vector<128x1xf32>
    %250 = arith.divf %248, %249 : vector<128x1xf32>
    %251 = vector.broadcast %250 : vector<128x1xf32> to vector<128x32xf32>
    %252 = arith.subf %244, %251 : vector<128x32xf32>
    %253 = arith.mulf %252, %252 : vector<128x32xf32>
    %cst_95 = arith.constant dense<0.000000e+00> : vector<128xf32>
    %254 = vector.multi_reduction <add>, %253, %cst_95 [1] : vector<128x32xf32> to vector<128xf32>
    %255 = vector.shape_cast %254 : vector<128xf32> to vector<128x1xf32>
    %cst_96 = arith.constant 3.200000e+01 : f32
    %256 = vector.broadcast %cst_96 : f32 to vector<128x1xf32>
    %257 = arith.divf %255, %256 : vector<128x1xf32>
    %258 = vector.broadcast %250 : vector<128x1xf32> to vector<128x32xf32>
    %259 = arith.subf %244, %258 : vector<128x32xf32>
    %cst_97 = arith.constant 9.99999974E-6 : f32
    %260 = vector.broadcast %cst_97 : f32 to vector<128x1xf32>
    %261 = arith.addf %257, %260 : vector<128x1xf32>
    %262 = math.rsqrt %261 : vector<128x1xf32>
    %263 = vector.broadcast %262 : vector<128x1xf32> to vector<128x32xf32>
    %264 = arith.mulf %259, %263 : vector<128x32xf32>
    %265 = vector.broadcast %245 : vector<1x32xf32> to vector<128x32xf32>
    %266 = arith.mulf %264, %265 : vector<128x32xf32>
    %267 = vector.broadcast %246 : vector<1x32xf32> to vector<128x32xf32>
    %268 = arith.addf %266, %267 : vector<128x32xf32>
    %269 = arith.truncf %268 : vector<128x32xf32> to vector<128x32xbf16>
    %c0_98 = arith.constant 0 : index
    %c0_99 = arith.constant 0 : index
    %270 = vector.load %arg28[%c0_98, %c0_99] : memref<32x128xbf16, #tpu.memory_space<vmem>>, vector<32x128xbf16>
    %cst_100 = arith.constant dense<0.000000e+00> : vector<128x128xf32>
    %271 = tpu.matmul %269, %270, %cst_100 {dimension_numbers = #tpu.dot_dimension_numbers<[1], [0], [0], [1], [0, 0, 1, 1], [], []>} : vector<128x32xbf16>, vector<32x128xbf16>, vector<128x128xf32> -> vector<128x128xf32>
    %c0_101 = arith.constant 0 : index
    %c0_102 = arith.constant 0 : index
    %272 = vector.load %arg29[%c0_101, %c0_102] : memref<1x128xf32, #tpu.memory_space<vmem>>, vector<1x128xf32>
    %273 = vector.broadcast %272 : vector<1x128xf32> to vector<128x128xf32>
    %274 = arith.addf %271, %273 : vector<128x128xf32>
    %275 = arith.mulf %274, %274 : vector<128x128xf32>
    %276 = arith.mulf %274, %275 : vector<128x128xf32>
    %cst_103 = arith.constant 4.471500e-02 : f32
    %277 = vector.broadcast %cst_103 : f32 to vector<128x128xf32>
    %278 = arith.mulf %277, %276 : vector<128x128xf32>
    %279 = arith.addf %274, %278 : vector<128x128xf32>
    %cst_104 = arith.constant 0.797884583 : f32
    %280 = vector.broadcast %cst_104 : f32 to vector<128x128xf32>
    %281 = arith.mulf %280, %279 : vector<128x128xf32>
    %282 = math.tanh %281 : vector<128x128xf32>
    %cst_105 = arith.constant 1.000000e+00 : f32
    %283 = vector.broadcast %cst_105 : f32 to vector<128x128xf32>
    %284 = arith.addf %283, %282 : vector<128x128xf32>
    %cst_106 = arith.constant 5.000000e-01 : f32
    %285 = vector.broadcast %cst_106 : f32 to vector<128x128xf32>
    %286 = arith.mulf %285, %284 : vector<128x128xf32>
    %287 = arith.mulf %274, %286 : vector<128x128xf32>
    %288 = arith.truncf %287 : vector<128x128xf32> to vector<128x128xbf16>
    %c0_107 = arith.constant 0 : index
    %c0_108 = arith.constant 0 : index
    %289 = vector.load %arg30[%c0_107, %c0_108] : memref<128x32xbf16, #tpu.memory_space<vmem>>, vector<128x32xbf16>
    %cst_109 = arith.constant dense<0.000000e+00> : vector<128x32xf32>
    %290 = tpu.matmul %288, %289, %cst_109 {dimension_numbers = #tpu.dot_dimension_numbers<[1], [0], [0], [1], [0, 0, 1, 1], [], []>} : vector<128x128xbf16>, vector<128x32xbf16>, vector<128x32xf32> -> vector<128x32xf32>
    %c0_110 = arith.constant 0 : index
    %c0_111 = arith.constant 0 : index
    %291 = vector.load %arg31[%c0_110, %c0_111] : memref<1x32xf32, #tpu.memory_space<vmem>>, vector<1x32xf32>
    %292 = vector.broadcast %291 : vector<1x32xf32> to vector<128x32xf32>
    %293 = arith.addf %290, %292 : vector<128x32xf32>
    %294 = arith.addf %244, %293 : vector<128x32xf32>
    %c0_112 = arith.constant 0 : index
    %c0_113 = arith.constant 0 : index
    %295 = vector.load %arg32[%c0_112, %c0_113] : memref<128x32xf32, #tpu.memory_space<vmem>>, vector<128x32xf32>
    tpu.vector_store %arg32[%c0_112, %c0_113], %294 {strides = array<i32>} : memref<128x32xf32, #tpu.memory_space<vmem>>, vector<128x32xf32>,
    return
  }
  func.func @transform_0(%arg0: i32) -> (i32, i32) {
    %c0_i32 = arith.constant 0 : i32
    %c0_i32_0 = arith.constant 0 : i32
    return %arg0, %c0_i32 : i32, i32
  }
  func.func @transform_1(%arg0: i32) -> (i32, i32) {
    %c0_i32 = arith.constant 0 : i32
    %c0_i32_0 = arith.constant 0 : i32
    %c0_i32_1 = arith.constant 0 : i32
    return %c0_i32, %c0_i32_0 : i32, i32
  }
  func.func @transform_2(%arg0: i32) -> (i32, i32) {
    %c0_i32 = arith.constant 0 : i32
    %c0_i32_0 = arith.constant 0 : i32
    %c0_i32_1 = arith.constant 0 : i32
    return %c0_i32, %c0_i32_0 : i32, i32
  }
  func.func @transform_3(%arg0: i32) -> (i32, i32) {
    %c0_i32 = arith.constant 0 : i32
    %c0_i32_0 = arith.constant 0 : i32
    %c0_i32_1 = arith.constant 0 : i32
    return %c0_i32, %c0_i32_0 : i32, i32
  }
  func.func @transform_4(%arg0: i32) -> (i32, i32) {
    %c0_i32 = arith.constant 0 : i32
    %c0_i32_0 = arith.constant 0 : i32
    %c0_i32_1 = arith.constant 0 : i32
    return %c0_i32, %c0_i32_0 : i32, i32
  }
  func.func @transform_5(%arg0: i32) -> (i32, i32) {
    %c0_i32 = arith.constant 0 : i32
    %c0_i32_0 = arith.constant 0 : i32
    %c0_i32_1 = arith.constant 0 : i32
    return %c0_i32, %c0_i32_0 : i32, i32
  }
  func.func @transform_6(%arg0: i32) -> (i32, i32) {
    %c0_i32 = arith.constant 0 : i32
    %c0_i32_0 = arith.constant 0 : i32
    %c0_i32_1 = arith.constant 0 : i32
    return %c0_i32, %c0_i32_0 : i32, i32
  }
  func.func @transform_7(%arg0: i32) -> (i32, i32) {
    %c0_i32 = arith.constant 0 : i32
    %c0_i32_0 = arith.constant 0 : i32
    %c0_i32_1 = arith.constant 0 : i32
    return %c0_i32, %c0_i32_0 : i32, i32
  }
  func.func @transform_8(%arg0: i32) -> (i32, i32) {
    %c0_i32 = arith.constant 0 : i32
    %c0_i32_0 = arith.constant 0 : i32
    %c0_i32_1 = arith.constant 0 : i32
    return %c0_i32, %c0_i32_0 : i32, i32
  }
  func.func @transform_9(%arg0: i32) -> (i32, i32, i32) {
    %c0_i32 = arith.constant 0 : i32
    %c0_i32_0 = arith.constant 0 : i32
    %c0_i32_1 = arith.constant 0 : i32
    %c0_i32_2 = arith.constant 0 : i32
    return %c0_i32, %c0_i32_0, %c0_i32_1 : i32, i32, i32
  }
  func.func @transform_10(%arg0: i32) -> (i32, i32) {
    %c0_i32 = arith.constant 0 : i32
    %c0_i32_0 = arith.constant 0 : i32
    %c0_i32_1 = arith.constant 0 : i32
    return %c0_i32, %c0_i32_0 : i32, i32
  }
  func.func @transform_11(%arg0: i32) -> (i32, i32) {
    %c0_i32 = arith.constant 0 : i32
    %c0_i32_0 = arith.constant 0 : i32
    %c0_i32_1 = arith.constant 0 : i32
    return %c0_i32, %c0_i32_0 : i32, i32
  }
  func.func @transform_12(%arg0: i32) -> (i32, i32) {
    %c0_i32 = arith.constant 0 : i32
    %c0_i32_0 = arith.constant 0 : i32
    %c0_i32_1 = arith.constant 0 : i32
    return %c0_i32, %c0_i32_0 : i32, i32
  }
  func.func @transform_13(%arg0: i32) -> (i32, i32) {
    %c0_i32 = arith.constant 0 : i32
    %c0_i32_0 = arith.constant 0 : i32
    %c0_i32_1 = arith.constant 0 : i32
    return %c0_i32, %c0_i32_0 : i32, i32
  }
  func.func @transform_14(%arg0: i32) -> (i32, i32) {
    %c0_i32 = arith.constant 0 : i32
    %c0_i32_0 = arith.constant 0 : i32
    %c0_i32_1 = arith.constant 0 : i32
    return %c0_i32, %c0_i32_0 : i32, i32
  }
  func.func @transform_15(%arg0: i32) -> (i32, i32) {
    %c0_i32 = arith.constant 0 : i32
    %c0_i32_0 = arith.constant 0 : i32
    %c0_i32_1 = arith.constant 0 : i32
    return %c0_i32, %c0_i32_0 : i32, i32
  }
  func.func @transform_16(%arg0: i32) -> (i32, i32) {
    %c0_i32 = arith.constant 0 : i32
    %c0_i32_0 = arith.constant 0 : i32
    %c0_i32_1 = arith.constant 0 : i32
    return %c0_i32, %c0_i32_0 : i32, i32
  }
  func.func @transform_17(%arg0: i32) -> (i32, i32) {
    %c0_i32 = arith.constant 0 : i32
    %c0_i32_0 = arith.constant 0 : i32
    %c0_i32_1 = arith.constant 0 : i32
    return %c0_i32, %c0_i32_0 : i32, i32
  }
  func.func @transform_18(%arg0: i32) -> (i32, i32) {
    %c0_i32 = arith.constant 0 : i32
    %c0_i32_0 = arith.constant 0 : i32
    %c0_i32_1 = arith.constant 0 : i32
    return %c0_i32, %c0_i32_0 : i32, i32
  }
  func.func @transform_19(%arg0: i32) -> (i32, i32) {
    %c0_i32 = arith.constant 0 : i32
    %c0_i32_0 = arith.constant 0 : i32
    %c0_i32_1 = arith.constant 0 : i32
    return %c0_i32, %c0_i32_0 : i32, i32
  }
  func.func @transform_20(%arg0: i32) -> (i32, i32) {
    %c0_i32 = arith.constant 0 : i32
    %c0_i32_0 = arith.constant 0 : i32
    %c0_i32_1 = arith.constant 0 : i32
    return %c0_i32, %c0_i32_0 : i32, i32
  }
  func.func @transform_21(%arg0: i32) -> (i32, i32) {
    %c0_i32 = arith.constant 0 : i32
    %c0_i32_0 = arith.constant 0 : i32
    %c0_i32_1 = arith.constant 0 : i32
    return %c0_i32, %c0_i32_0 : i32, i32
  }
  func.func @transform_22(%arg0: i32) -> (i32, i32, i32) {
    %c0_i32 = arith.constant 0 : i32
    %c0_i32_0 = arith.constant 0 : i32
    %c0_i32_1 = arith.constant 0 : i32
    %c0_i32_2 = arith.constant 0 : i32
    return %c0_i32, %c0_i32_0, %c0_i32_1 : i32, i32, i32
  }
  func.func @transform_23(%arg0: i32) -> (i32, i32) {
    %c0_i32 = arith.constant 0 : i32
    %c0_i32_0 = arith.constant 0 : i32
    %c0_i32_1 = arith.constant 0 : i32
    return %c0_i32, %c0_i32_0 : i32, i32
  }
  func.func @transform_24(%arg0: i32) -> (i32, i32) {
    %c0_i32 = arith.constant 0 : i32
    %c0_i32_0 = arith.constant 0 : i32
    %c0_i32_1 = arith.constant 0 : i32
    return %c0_i32, %c0_i32_0 : i32, i32
  }
  func.func @transform_25(%arg0: i32) -> (i32, i32) {
    %c0_i32 = arith.constant 0 : i32
    %c0_i32_0 = arith.constant 0 : i32
    %c0_i32_1 = arith.constant 0 : i32
    return %c0_i32, %c0_i32_0 : i32, i32
  }
  func.func @transform_26(%arg0: i32) -> (i32, i32) {
    %c0_i32 = arith.constant 0 : i32
    %c0_i32_0 = arith.constant 0 : i32
    %c0_i32_1 = arith.constant 0 : i32
    return %c0_i32, %c0_i32_0 : i32, i32
  }
  func.func @transform_27(%arg0: i32) -> (i32, i32) {
    %c0_i32 = arith.constant 0 : i32
    %c0_i32_0 = arith.constant 0 : i32
    %c0_i32_1 = arith.constant 0 : i32
    return %c0_i32, %c0_i32_0 : i32, i32
  }
  func.func @transform_28(%arg0: i32) -> (i32, i32) {
    %c0_i32 = arith.constant 0 : i32
    %c0_i32_0 = arith.constant 0 : i32
    %c0_i32_1 = arith.constant 0 : i32
    return %c0_i32, %c0_i32_0 : i32, i32
  }
  func.func @transform_29(%arg0: i32) -> (i32, i32) {
    %c0_i32 = arith.constant 0 : i32
    %c0_i32_0 = arith.constant 0 : i32
    %c0_i32_1 = arith.constant 0 : i32
    return %c0_i32, %c0_i32_0 : i32, i32
  }
  func.func @transform_30(%arg0: i32) -> (i32, i32) {
    %c0_i32 = arith.constant 0 : i32
    %c0_i32_0 = arith.constant 0 : i32
    %c0_i32_1 = arith.constant 0 : i32
    return %c0_i32, %c0_i32_0 : i32, i32
  }
  func.func @transform_31(%arg0: i32) -> (i32, i32) {
    %c0_i32 = arith.constant 0 : i32
    %c0_i32_0 = arith.constant 0 : i32
    return %arg0, %c0_i32 : i32, i32
  }
}

module attributes {stable_mosaic.version = 11 : i64} {
  func.func @_stage_kernel(%arg0: i32, %arg1: memref<32x128xf32, #tpu.memory_space<vmem>>, %arg2: memref<1x128xf32, #tpu.memory_space<vmem>>, %arg3: memref<1x128xf32, #tpu.memory_space<vmem>>, %arg4: memref<128x64xbf16, #tpu.memory_space<vmem>>, %arg5: memref<1x64xf32, #tpu.memory_space<vmem>>, %arg6: memref<1x64xf32, #tpu.memory_space<vmem>>, %arg7: memref<64x192xbf16, #tpu.memory_space<vmem>>, %arg8: memref<1x192xf32, #tpu.memory_space<vmem>>, %arg9: memref<4x16x16xf32, #tpu.memory_space<vmem>>, %arg10: memref<64x64xbf16, #tpu.memory_space<vmem>>, %arg11: memref<1x64xf32, #tpu.memory_space<vmem>>, %arg12: memref<1x64xf32, #tpu.memory_space<vmem>>, %arg13: memref<1x64xf32, #tpu.memory_space<vmem>>, %arg14: memref<64x256xbf16, #tpu.memory_space<vmem>>, %arg15: memref<1x256xf32, #tpu.memory_space<vmem>>, %arg16: memref<256x64xbf16, #tpu.memory_space<vmem>>, %arg17: memref<1x64xf32, #tpu.memory_space<vmem>>, %arg18: memref<1x64xf32, #tpu.memory_space<vmem>>, %arg19: memref<1x64xf32, #tpu.memory_space<vmem>>, %arg20: memref<64x192xbf16, #tpu.memory_space<vmem>>, %arg21: memref<1x192xf32, #tpu.memory_space<vmem>>, %arg22: memref<4x16x16xf32, #tpu.memory_space<vmem>>, %arg23: memref<64x64xbf16, #tpu.memory_space<vmem>>, %arg24: memref<1x64xf32, #tpu.memory_space<vmem>>, %arg25: memref<1x64xf32, #tpu.memory_space<vmem>>, %arg26: memref<1x64xf32, #tpu.memory_space<vmem>>, %arg27: memref<64x256xbf16, #tpu.memory_space<vmem>>, %arg28: memref<1x256xf32, #tpu.memory_space<vmem>>, %arg29: memref<256x64xbf16, #tpu.memory_space<vmem>>, %arg30: memref<1x64xf32, #tpu.memory_space<vmem>>, %arg31: memref<1x64xf32, #tpu.memory_space<vmem>>, %arg32: memref<1x64xf32, #tpu.memory_space<vmem>>, %arg33: memref<64x64xbf16, #tpu.memory_space<vmem>>, %arg34: memref<1x64xf32, #tpu.memory_space<vmem>>, %arg35: memref<2x1x64xf32, #tpu.memory_space<vmem>>) attributes {dimension_semantics = [#tpu.dimension_semantics<arbitrary>], iteration_bounds = array<i64: 1>, scalar_prefetch = 0 : i64, scratch_operands = 0 : i64, tpu.core_type = #tpu.core_type<tc>, window_params = [{transform_indices = @transform_0, window_bounds = array<i64: 32, 128>}, {pipeline_mode = #tpu.pipeline_mode<synchronous>, transform_indices = @transform_1, window_bounds = array<i64: 1, 128>}, {pipeline_mode = #tpu.pipeline_mode<synchronous>, transform_indices = @transform_2, window_bounds = array<i64: 1, 128>}, {pipeline_mode = #tpu.pipeline_mode<synchronous>, transform_indices = @transform_3, window_bounds = array<i64: 128, 64>}, {pipeline_mode = #tpu.pipeline_mode<synchronous>, transform_indices = @transform_4, window_bounds = array<i64: 1, 64>}, {pipeline_mode = #tpu.pipeline_mode<synchronous>, transform_indices = @transform_5, window_bounds = array<i64: 1, 64>}, {pipeline_mode = #tpu.pipeline_mode<synchronous>, transform_indices = @transform_6, window_bounds = array<i64: 64, 192>}, {pipeline_mode = #tpu.pipeline_mode<synchronous>, transform_indices = @transform_7, window_bounds = array<i64: 1, 192>}, {pipeline_mode = #tpu.pipeline_mode<synchronous>, transform_indices = @transform_8, window_bounds = array<i64: 4, 16, 16>}, {pipeline_mode = #tpu.pipeline_mode<synchronous>, transform_indices = @transform_9, window_bounds = array<i64: 64, 64>}, {pipeline_mode = #tpu.pipeline_mode<synchronous>, transform_indices = @transform_10, window_bounds = array<i64: 1, 64>}, {pipeline_mode = #tpu.pipeline_mode<synchronous>, transform_indices = @transform_11, window_bounds = array<i64: 1, 64>}, {pipeline_mode = #tpu.pipeline_mode<synchronous>, transform_indices = @transform_12, window_bounds = array<i64: 1, 64>}, {pipeline_mode = #tpu.pipeline_mode<synchronous>, transform_indices = @transform_13, window_bounds = array<i64: 64, 256>}, {pipeline_mode = #tpu.pipeline_mode<synchronous>, transform_indices = @transform_14, window_bounds = array<i64: 1, 256>}, {pipeline_mode = #tpu.pipeline_mode<synchronous>, transform_indices = @transform_15, window_bounds = array<i64: 256, 64>}, {pipeline_mode = #tpu.pipeline_mode<synchronous>, transform_indices = @transform_16, window_bounds = array<i64: 1, 64>}, {pipeline_mode = #tpu.pipeline_mode<synchronous>, transform_indices = @transform_17, window_bounds = array<i64: 1, 64>}, {pipeline_mode = #tpu.pipeline_mode<synchronous>, transform_indices = @transform_18, window_bounds = array<i64: 1, 64>}, {pipeline_mode = #tpu.pipeline_mode<synchronous>, transform_indices = @transform_19, window_bounds = array<i64: 64, 192>}, {pipeline_mode = #tpu.pipeline_mode<synchronous>, transform_indices = @transform_20, window_bounds = array<i64: 1, 192>}, {pipeline_mode = #tpu.pipeline_mode<synchronous>, transform_indices = @transform_21, window_bounds = array<i64: 4, 16, 16>}, {pipeline_mode = #tpu.pipeline_mode<synchronous>, transform_indices = @transform_22, window_bounds = array<i64: 64, 64>}, {pipeline_mode = #tpu.pipeline_mode<synchronous>, transform_indices = @transform_23, window_bounds = array<i64: 1, 64>}, {pipeline_mode = #tpu.pipeline_mode<synchronous>, transform_indices = @transform_24, window_bounds = array<i64: 1, 64>}, {pipeline_mode = #tpu.pipeline_mode<synchronous>, transform_indices = @transform_25, window_bounds = array<i64: 1, 64>}, {pipeline_mode = #tpu.pipeline_mode<synchronous>, transform_indices = @transform_26, window_bounds = array<i64: 64, 256>}, {pipeline_mode = #tpu.pipeline_mode<synchronous>, transform_indices = @transform_27, window_bounds = array<i64: 1, 256>}, {pipeline_mode = #tpu.pipeline_mode<synchronous>, transform_indices = @transform_28, window_bounds = array<i64: 256, 64>}, {pipeline_mode = #tpu.pipeline_mode<synchronous>, transform_indices = @transform_29, window_bounds = array<i64: 1, 64>}, {pipeline_mode = #tpu.pipeline_mode<synchronous>, transform_indices = @transform_30, window_bounds = array<i64: 1, 64>}, {pipeline_mode = #tpu.pipeline_mode<synchronous>, transform_indices = @transform_31, window_bounds = array<i64: 1, 64>}, {pipeline_mode = #tpu.pipeline_mode<synchronous>, transform_indices = @transform_32, window_bounds = array<i64: 64, 64>}, {pipeline_mode = #tpu.pipeline_mode<synchronous>, transform_indices = @transform_33, window_bounds = array<i64: 1, 64>}, {transform_indices = @transform_34, window_bounds = array<i64: 2, 1, 64>}]} {
    %c0 = arith.constant 0 : index
    %c0_0 = arith.constant 0 : index
    %0 = vector.load %arg1[%c0, %c0_0] : memref<32x128xf32, #tpu.memory_space<vmem>>, vector<32x128xf32>
    %c0_1 = arith.constant 0 : index
    %c0_2 = arith.constant 0 : index
    %1 = vector.load %arg2[%c0_1, %c0_2] : memref<1x128xf32, #tpu.memory_space<vmem>>, vector<1x128xf32>
    %c0_3 = arith.constant 0 : index
    %c0_4 = arith.constant 0 : index
    %2 = vector.load %arg3[%c0_3, %c0_4] : memref<1x128xf32, #tpu.memory_space<vmem>>, vector<1x128xf32>
    %cst = arith.constant dense<0.000000e+00> : vector<32xf32>
    %3 = vector.multi_reduction <add>, %0, %cst [1] : vector<32x128xf32> to vector<32xf32>
    %4 = vector.shape_cast %3 : vector<32xf32> to vector<32x1xf32>
    %cst_5 = arith.constant 1.280000e+02 : f32
    %5 = vector.broadcast %cst_5 : f32 to vector<32x1xf32>
    %6 = arith.divf %4, %5 : vector<32x1xf32>
    %7 = vector.broadcast %6 : vector<32x1xf32> to vector<32x128xf32>
    %8 = arith.subf %0, %7 : vector<32x128xf32>
    %9 = arith.mulf %8, %8 : vector<32x128xf32>
    %cst_6 = arith.constant dense<0.000000e+00> : vector<32xf32>
    %10 = vector.multi_reduction <add>, %9, %cst_6 [1] : vector<32x128xf32> to vector<32xf32>
    %11 = vector.shape_cast %10 : vector<32xf32> to vector<32x1xf32>
    %cst_7 = arith.constant 1.280000e+02 : f32
    %12 = vector.broadcast %cst_7 : f32 to vector<32x1xf32>
    %13 = arith.divf %11, %12 : vector<32x1xf32>
    %14 = vector.broadcast %6 : vector<32x1xf32> to vector<32x128xf32>
    %15 = arith.subf %0, %14 : vector<32x128xf32>
    %cst_8 = arith.constant 9.99999974E-6 : f32
    %16 = vector.broadcast %cst_8 : f32 to vector<32x1xf32>
    %17 = arith.addf %13, %16 : vector<32x1xf32>
    %18 = math.rsqrt %17 : vector<32x1xf32>
    %19 = vector.broadcast %18 : vector<32x1xf32> to vector<32x128xf32>
    %20 = arith.mulf %15, %19 : vector<32x128xf32>
    %21 = vector.broadcast %1 : vector<1x128xf32> to vector<32x128xf32>
    %22 = arith.mulf %20, %21 : vector<32x128xf32>
    %23 = vector.broadcast %2 : vector<1x128xf32> to vector<32x128xf32>
    %24 = arith.addf %22, %23 : vector<32x128xf32>
    %25 = arith.truncf %24 : vector<32x128xf32> to vector<32x128xbf16>
    %c0_9 = arith.constant 0 : index
    %c0_10 = arith.constant 0 : index
    %26 = vector.load %arg4[%c0_9, %c0_10] : memref<128x64xbf16, #tpu.memory_space<vmem>>, vector<128x64xbf16>
    %cst_11 = arith.constant dense<0.000000e+00> : vector<32x64xf32>
    %27 = tpu.matmul %25, %26, %cst_11 {dimension_numbers = #tpu.dot_dimension_numbers<[1], [0], [0], [1], [0, 0, 1, 1], [], []>} : vector<32x128xbf16>, vector<128x64xbf16>, vector<32x64xf32> -> vector<32x64xf32>
    %c0_12 = arith.constant 0 : index
    %c0_13 = arith.constant 0 : index
    %28 = vector.load %arg5[%c0_12, %c0_13] : memref<1x64xf32, #tpu.memory_space<vmem>>, vector<1x64xf32>
    %c0_14 = arith.constant 0 : index
    %c0_15 = arith.constant 0 : index
    %29 = vector.load %arg6[%c0_14, %c0_15] : memref<1x64xf32, #tpu.memory_space<vmem>>, vector<1x64xf32>
    %cst_16 = arith.constant dense<0.000000e+00> : vector<32xf32>
    %30 = vector.multi_reduction <add>, %27, %cst_16 [1] : vector<32x64xf32> to vector<32xf32>
    %31 = vector.shape_cast %30 : vector<32xf32> to vector<32x1xf32>
    %cst_17 = arith.constant 6.400000e+01 : f32
    %32 = vector.broadcast %cst_17 : f32 to vector<32x1xf32>
    %33 = arith.divf %31, %32 : vector<32x1xf32>
    %34 = vector.broadcast %33 : vector<32x1xf32> to vector<32x64xf32>
    %35 = arith.subf %27, %34 : vector<32x64xf32>
    %36 = arith.mulf %35, %35 : vector<32x64xf32>
    %cst_18 = arith.constant dense<0.000000e+00> : vector<32xf32>
    %37 = vector.multi_reduction <add>, %36, %cst_18 [1] : vector<32x64xf32> to vector<32xf32>
    %38 = vector.shape_cast %37 : vector<32xf32> to vector<32x1xf32>
    %cst_19 = arith.constant 6.400000e+01 : f32
    %39 = vector.broadcast %cst_19 : f32 to vector<32x1xf32>
    %40 = arith.divf %38, %39 : vector<32x1xf32>
    %41 = vector.broadcast %33 : vector<32x1xf32> to vector<32x64xf32>
    %42 = arith.subf %27, %41 : vector<32x64xf32>
    %cst_20 = arith.constant 9.99999974E-6 : f32
    %43 = vector.broadcast %cst_20 : f32 to vector<32x1xf32>
    %44 = arith.addf %40, %43 : vector<32x1xf32>
    %45 = math.rsqrt %44 : vector<32x1xf32>
    %46 = vector.broadcast %45 : vector<32x1xf32> to vector<32x64xf32>
    %47 = arith.mulf %42, %46 : vector<32x64xf32>
    %48 = vector.broadcast %28 : vector<1x64xf32> to vector<32x64xf32>
    %49 = arith.mulf %47, %48 : vector<32x64xf32>
    %50 = vector.broadcast %29 : vector<1x64xf32> to vector<32x64xf32>
    %51 = arith.addf %49, %50 : vector<32x64xf32>
    %52 = arith.truncf %51 : vector<32x64xf32> to vector<32x64xbf16>
    %c0_21 = arith.constant 0 : index
    %c0_22 = arith.constant 0 : index
    %53 = vector.load %arg7[%c0_21, %c0_22] : memref<64x192xbf16, #tpu.memory_space<vmem>>, vector<64x192xbf16>
    %cst_23 = arith.constant dense<0.000000e+00> : vector<32x192xf32>
    %54 = tpu.matmul %52, %53, %cst_23 {dimension_numbers = #tpu.dot_dimension_numbers<[1], [0], [0], [1], [0, 0, 1, 1], [], []>} : vector<32x64xbf16>, vector<64x192xbf16>, vector<32x192xf32> -> vector<32x192xf32>
    %c0_24 = arith.constant 0 : index
    %c0_25 = arith.constant 0 : index
    %55 = vector.load %arg8[%c0_24, %c0_25] : memref<1x192xf32, #tpu.memory_space<vmem>>, vector<1x192xf32>
    %56 = vector.broadcast %55 : vector<1x192xf32> to vector<32x192xf32>
    %57 = arith.addf %54, %56 : vector<32x192xf32>
    %58 = vector.extract_strided_slice %57 {offsets = [0, 0], sizes = [32, 16], strides = [1, 1]} : vector<32x192xf32> to vector<32x16xf32>
    %59 = vector.shape_cast %58 : vector<32x16xf32> to vector<2x16x16xf32>
    %60 = vector.extract_strided_slice %57 {offsets = [0, 16], sizes = [32, 16], strides = [1, 1]} : vector<32x192xf32> to vector<32x16xf32>
    %61 = vector.shape_cast %60 : vector<32x16xf32> to vector<2x16x16xf32>
    %62 = vector.extract_strided_slice %57 {offsets = [0, 32], sizes = [32, 16], strides = [1, 1]} : vector<32x192xf32> to vector<32x16xf32>
    %63 = vector.shape_cast %62 : vector<32x16xf32> to vector<2x16x16xf32>
    %64 = vector.extract_strided_slice %57 {offsets = [0, 48], sizes = [32, 16], strides = [1, 1]} : vector<32x192xf32> to vector<32x16xf32>
    %65 = vector.shape_cast %64 : vector<32x16xf32> to vector<2x16x16xf32>
    %66 = tpu.concatenate %59, %61, %63, %65 in 0 : vector<2x16x16xf32>, vector<2x16x16xf32>, vector<2x16x16xf32>, vector<2x16x16xf32> -> vector<8x16x16xf32>
    %67 = vector.extract_strided_slice %57 {offsets = [0, 64], sizes = [32, 16], strides = [1, 1]} : vector<32x192xf32> to vector<32x16xf32>
    %68 = vector.shape_cast %67 : vector<32x16xf32> to vector<2x16x16xf32>
    %69 = vector.extract_strided_slice %57 {offsets = [0, 80], sizes = [32, 16], strides = [1, 1]} : vector<32x192xf32> to vector<32x16xf32>
    %70 = vector.shape_cast %69 : vector<32x16xf32> to vector<2x16x16xf32>
    %71 = vector.extract_strided_slice %57 {offsets = [0, 96], sizes = [32, 16], strides = [1, 1]} : vector<32x192xf32> to vector<32x16xf32>
    %72 = vector.shape_cast %71 : vector<32x16xf32> to vector<2x16x16xf32>
    %73 = vector.extract_strided_slice %57 {offsets = [0, 112], sizes = [32, 16], strides = [1, 1]} : vector<32x192xf32> to vector<32x16xf32>
    %74 = vector.shape_cast %73 : vector<32x16xf32> to vector<2x16x16xf32>
    %75 = tpu.concatenate %68, %70, %72, %74 in 0 : vector<2x16x16xf32>, vector<2x16x16xf32>, vector<2x16x16xf32>, vector<2x16x16xf32> -> vector<8x16x16xf32>
    %76 = vector.extract_strided_slice %57 {offsets = [0, 128], sizes = [32, 16], strides = [1, 1]} : vector<32x192xf32> to vector<32x16xf32>
    %77 = vector.shape_cast %76 : vector<32x16xf32> to vector<2x16x16xf32>
    %78 = vector.extract_strided_slice %57 {offsets = [0, 144], sizes = [32, 16], strides = [1, 1]} : vector<32x192xf32> to vector<32x16xf32>
    %79 = vector.shape_cast %78 : vector<32x16xf32> to vector<2x16x16xf32>
    %80 = vector.extract_strided_slice %57 {offsets = [0, 160], sizes = [32, 16], strides = [1, 1]} : vector<32x192xf32> to vector<32x16xf32>
    %81 = vector.shape_cast %80 : vector<32x16xf32> to vector<2x16x16xf32>
    %82 = vector.extract_strided_slice %57 {offsets = [0, 176], sizes = [32, 16], strides = [1, 1]} : vector<32x192xf32> to vector<32x16xf32>
    %83 = vector.shape_cast %82 : vector<32x16xf32> to vector<2x16x16xf32>
    %84 = tpu.concatenate %77, %79, %81, %83 in 0 : vector<2x16x16xf32>, vector<2x16x16xf32>, vector<2x16x16xf32>, vector<2x16x16xf32> -> vector<8x16x16xf32>
    %85 = arith.truncf %66 : vector<8x16x16xf32> to vector<8x16x16xbf16>
    %86 = arith.truncf %75 : vector<8x16x16xf32> to vector<8x16x16xbf16>
    "tpu.trace_start"() <{level = 10 : i32, message = "bid,bjd->bij"}> : () -> ()
    %cst_26 = arith.constant dense<0.000000e+00> : vector<8x16x16xf32>
    %87 = tpu.matmul %85, %86, %cst_26 {dimension_numbers = #tpu.dot_dimension_numbers<[2], [2], [1], [1], [0, 0, 0, 1, 1, 1], [0], [0]>} : vector<8x16x16xbf16>, vector<8x16x16xbf16>, vector<8x16x16xf32> -> vector<8x16x16xf32>
    "tpu.trace_stop"() : () -> ()
    %c0_27 = arith.constant 0 : index
    %c0_28 = arith.constant 0 : index
    %c0_29 = arith.constant 0 : index
    %88 = vector.load %arg9[%c0_27, %c0_28, %c0_29] : memref<4x16x16xf32, #tpu.memory_space<vmem>>, vector<4x16x16xf32>
    %89 = vector.shape_cast %87 : vector<8x16x16xf32> to vector<4x2x16x16xf32>
    %90 = vector.shape_cast %88 : vector<4x16x16xf32> to vector<4x1x16x16xf32>
    %91 = vector.broadcast %90 : vector<4x1x16x16xf32> to vector<4x2x16x16xf32>
    %92 = arith.addf %89, %91 : vector<4x2x16x16xf32>
    %93 = vector.shape_cast %92 : vector<4x2x16x16xf32> to vector<8x16x16xf32>
    %cst_30 = arith.constant dense<0xFF800000> : vector<8x16xf32>
    %94 = vector.multi_reduction <maximumf>, %93, %cst_30 [2] : vector<8x16x16xf32> to vector<8x16xf32>
    %95 = vector.shape_cast %94 : vector<8x16xf32> to vector<8x16x1xf32>
    %96 = vector.broadcast %95 : vector<8x16x1xf32> to vector<8x16x16xf32>
    %97 = arith.subf %93, %96 : vector<8x16x16xf32>
    %98 = math.exp %97 : vector<8x16x16xf32>
    %cst_31 = arith.constant dense<0.000000e+00> : vector<8x16xf32>
    %99 = vector.multi_reduction <add>, %98, %cst_31 [2] : vector<8x16x16xf32> to vector<8x16xf32>
    %100 = vector.shape_cast %99 : vector<8x16xf32> to vector<8x16x1xf32>
    %101 = tpu.reciprocal %100 {approx = true} : vector<8x16x1xf32> -> vector<8x16x1xf32>
    %102 = vector.broadcast %101 : vector<8x16x1xf32> to vector<8x16x16xf32>
    %103 = arith.mulf %98, %102 : vector<8x16x16xf32>
    %104 = arith.truncf %103 : vector<8x16x16xf32> to vector<8x16x16xbf16>
    %105 = arith.truncf %84 : vector<8x16x16xf32> to vector<8x16x16xbf16>
    "tpu.trace_start"() <{level = 10 : i32, message = "bij,bjd->bid"}> : () -> ()
    %cst_32 = arith.constant dense<0.000000e+00> : vector<8x16x16xf32>
    %106 = tpu.matmul %104, %105, %cst_32 {dimension_numbers = #tpu.dot_dimension_numbers<[2], [1], [1], [2], [0, 0, 0, 1, 1, 2], [0], [0]>} : vector<8x16x16xbf16>, vector<8x16x16xbf16>, vector<8x16x16xf32> -> vector<8x16x16xf32>
    "tpu.trace_stop"() : () -> ()
    %107 = vector.shape_cast %106 : vector<8x16x16xf32> to vector<4x2x16x16xf32>
    %108 = vector.extract_strided_slice %107 {offsets = [0, 0, 0, 0], sizes = [1, 2, 16, 16], strides = [1, 1, 1, 1]} : vector<4x2x16x16xf32> to vector<1x2x16x16xf32>
    %109 = vector.shape_cast %108 : vector<1x2x16x16xf32> to vector<2x16x16xf32>
    %110 = vector.shape_cast %109 : vector<2x16x16xf32> to vector<32x16xf32>
    %111 = vector.extract_strided_slice %107 {offsets = [1, 0, 0, 0], sizes = [1, 2, 16, 16], strides = [1, 1, 1, 1]} : vector<4x2x16x16xf32> to vector<1x2x16x16xf32>
    %112 = vector.shape_cast %111 : vector<1x2x16x16xf32> to vector<2x16x16xf32>
    %113 = vector.shape_cast %112 : vector<2x16x16xf32> to vector<32x16xf32>
    %114 = vector.extract_strided_slice %107 {offsets = [2, 0, 0, 0], sizes = [1, 2, 16, 16], strides = [1, 1, 1, 1]} : vector<4x2x16x16xf32> to vector<1x2x16x16xf32>
    %115 = vector.shape_cast %114 : vector<1x2x16x16xf32> to vector<2x16x16xf32>
    %116 = vector.shape_cast %115 : vector<2x16x16xf32> to vector<32x16xf32>
    %117 = vector.extract_strided_slice %107 {offsets = [3, 0, 0, 0], sizes = [1, 2, 16, 16], strides = [1, 1, 1, 1]} : vector<4x2x16x16xf32> to vector<1x2x16x16xf32>
    %118 = vector.shape_cast %117 : vector<1x2x16x16xf32> to vector<2x16x16xf32>
    %119 = vector.shape_cast %118 : vector<2x16x16xf32> to vector<32x16xf32>
    %120 = tpu.concatenate %110, %113, %116, %119 in 1 : vector<32x16xf32>, vector<32x16xf32>, vector<32x16xf32>, vector<32x16xf32> -> vector<32x64xf32>
    %121 = arith.truncf %120 : vector<32x64xf32> to vector<32x64xbf16>
    %c0_33 = arith.constant 0 : index
    %c0_34 = arith.constant 0 : index
    %122 = vector.load %arg10[%c0_33, %c0_34] : memref<64x64xbf16, #tpu.memory_space<vmem>>, vector<64x64xbf16>
    %cst_35 = arith.constant dense<0.000000e+00> : vector<32x64xf32>
    %123 = tpu.matmul %121, %122, %cst_35 {dimension_numbers = #tpu.dot_dimension_numbers<[1], [0], [0], [1], [0, 0, 1, 1], [], []>} : vector<32x64xbf16>, vector<64x64xbf16>, vector<32x64xf32> -> vector<32x64xf32>
    %124 = arith.addf %27, %123 : vector<32x64xf32>
    %c0_36 = arith.constant 0 : index
    %c0_37 = arith.constant 0 : index
    %125 = vector.load %arg11[%c0_36, %c0_37] : memref<1x64xf32, #tpu.memory_space<vmem>>, vector<1x64xf32>
    %126 = vector.broadcast %125 : vector<1x64xf32> to vector<32x64xf32>
    %127 = arith.addf %124, %126 : vector<32x64xf32>
    %c0_38 = arith.constant 0 : index
    %c0_39 = arith.constant 0 : index
    %128 = vector.load %arg12[%c0_38, %c0_39] : memref<1x64xf32, #tpu.memory_space<vmem>>, vector<1x64xf32>
    %c0_40 = arith.constant 0 : index
    %c0_41 = arith.constant 0 : index
    %129 = vector.load %arg13[%c0_40, %c0_41] : memref<1x64xf32, #tpu.memory_space<vmem>>, vector<1x64xf32>
    %cst_42 = arith.constant dense<0.000000e+00> : vector<32xf32>
    %130 = vector.multi_reduction <add>, %127, %cst_42 [1] : vector<32x64xf32> to vector<32xf32>
    %131 = vector.shape_cast %130 : vector<32xf32> to vector<32x1xf32>
    %cst_43 = arith.constant 6.400000e+01 : f32
    %132 = vector.broadcast %cst_43 : f32 to vector<32x1xf32>
    %133 = arith.divf %131, %132 : vector<32x1xf32>
    %134 = vector.broadcast %133 : vector<32x1xf32> to vector<32x64xf32>
    %135 = arith.subf %127, %134 : vector<32x64xf32>
    %136 = arith.mulf %135, %135 : vector<32x64xf32>
    %cst_44 = arith.constant dense<0.000000e+00> : vector<32xf32>
    %137 = vector.multi_reduction <add>, %136, %cst_44 [1] : vector<32x64xf32> to vector<32xf32>
    %138 = vector.shape_cast %137 : vector<32xf32> to vector<32x1xf32>
    %cst_45 = arith.constant 6.400000e+01 : f32
    %139 = vector.broadcast %cst_45 : f32 to vector<32x1xf32>
    %140 = arith.divf %138, %139 : vector<32x1xf32>
    %141 = vector.broadcast %133 : vector<32x1xf32> to vector<32x64xf32>
    %142 = arith.subf %127, %141 : vector<32x64xf32>
    %cst_46 = arith.constant 9.99999974E-6 : f32
    %143 = vector.broadcast %cst_46 : f32 to vector<32x1xf32>
    %144 = arith.addf %140, %143 : vector<32x1xf32>
    %145 = math.rsqrt %144 : vector<32x1xf32>
    %146 = vector.broadcast %145 : vector<32x1xf32> to vector<32x64xf32>
    %147 = arith.mulf %142, %146 : vector<32x64xf32>
    %148 = vector.broadcast %128 : vector<1x64xf32> to vector<32x64xf32>
    %149 = arith.mulf %147, %148 : vector<32x64xf32>
    %150 = vector.broadcast %129 : vector<1x64xf32> to vector<32x64xf32>
    %151 = arith.addf %149, %150 : vector<32x64xf32>
    %152 = arith.truncf %151 : vector<32x64xf32> to vector<32x64xbf16>
    %c0_47 = arith.constant 0 : index
    %c0_48 = arith.constant 0 : index
    %153 = vector.load %arg14[%c0_47, %c0_48] : memref<64x256xbf16, #tpu.memory_space<vmem>>, vector<64x256xbf16>
    %cst_49 = arith.constant dense<0.000000e+00> : vector<32x256xf32>
    %154 = tpu.matmul %152, %153, %cst_49 {dimension_numbers = #tpu.dot_dimension_numbers<[1], [0], [0], [1], [0, 0, 1, 1], [], []>} : vector<32x64xbf16>, vector<64x256xbf16>, vector<32x256xf32> -> vector<32x256xf32>
    %c0_50 = arith.constant 0 : index
    %c0_51 = arith.constant 0 : index
    %155 = vector.load %arg15[%c0_50, %c0_51] : memref<1x256xf32, #tpu.memory_space<vmem>>, vector<1x256xf32>
    %156 = vector.broadcast %155 : vector<1x256xf32> to vector<32x256xf32>
    %157 = arith.addf %154, %156 : vector<32x256xf32>
    %158 = arith.mulf %157, %157 : vector<32x256xf32>
    %159 = arith.mulf %157, %158 : vector<32x256xf32>
    %cst_52 = arith.constant 4.471500e-02 : f32
    %160 = vector.broadcast %cst_52 : f32 to vector<32x256xf32>
    %161 = arith.mulf %160, %159 : vector<32x256xf32>
    %162 = arith.addf %157, %161 : vector<32x256xf32>
    %cst_53 = arith.constant 0.797884583 : f32
    %163 = vector.broadcast %cst_53 : f32 to vector<32x256xf32>
    %164 = arith.mulf %163, %162 : vector<32x256xf32>
    %165 = math.tanh %164 : vector<32x256xf32>
    %cst_54 = arith.constant 1.000000e+00 : f32
    %166 = vector.broadcast %cst_54 : f32 to vector<32x256xf32>
    %167 = arith.addf %166, %165 : vector<32x256xf32>
    %cst_55 = arith.constant 5.000000e-01 : f32
    %168 = vector.broadcast %cst_55 : f32 to vector<32x256xf32>
    %169 = arith.mulf %168, %167 : vector<32x256xf32>
    %170 = arith.mulf %157, %169 : vector<32x256xf32>
    %171 = arith.truncf %170 : vector<32x256xf32> to vector<32x256xbf16>
    %c0_56 = arith.constant 0 : index
    %c0_57 = arith.constant 0 : index
    %172 = vector.load %arg16[%c0_56, %c0_57] : memref<256x64xbf16, #tpu.memory_space<vmem>>, vector<256x64xbf16>
    %cst_58 = arith.constant dense<0.000000e+00> : vector<32x64xf32>
    %173 = tpu.matmul %171, %172, %cst_58 {dimension_numbers = #tpu.dot_dimension_numbers<[1], [0], [0], [1], [0, 0, 1, 1], [], []>} : vector<32x256xbf16>, vector<256x64xbf16>, vector<32x64xf32> -> vector<32x64xf32>
    %c0_59 = arith.constant 0 : index
    %c0_60 = arith.constant 0 : index
    %174 = vector.load %arg17[%c0_59, %c0_60] : memref<1x64xf32, #tpu.memory_space<vmem>>, vector<1x64xf32>
    %175 = vector.broadcast %174 : vector<1x64xf32> to vector<32x64xf32>
    %176 = arith.addf %173, %175 : vector<32x64xf32>
    %177 = arith.addf %127, %176 : vector<32x64xf32>
    %c0_61 = arith.constant 0 : index
    %c0_62 = arith.constant 0 : index
    %178 = vector.load %arg18[%c0_61, %c0_62] : memref<1x64xf32, #tpu.memory_space<vmem>>, vector<1x64xf32>
    %c0_63 = arith.constant 0 : index
    %c0_64 = arith.constant 0 : index
    %179 = vector.load %arg19[%c0_63, %c0_64] : memref<1x64xf32, #tpu.memory_space<vmem>>, vector<1x64xf32>
    %cst_65 = arith.constant dense<0.000000e+00> : vector<32xf32>
    %180 = vector.multi_reduction <add>, %177, %cst_65 [1] : vector<32x64xf32> to vector<32xf32>
    %181 = vector.shape_cast %180 : vector<32xf32> to vector<32x1xf32>
    %cst_66 = arith.constant 6.400000e+01 : f32
    %182 = vector.broadcast %cst_66 : f32 to vector<32x1xf32>
    %183 = arith.divf %181, %182 : vector<32x1xf32>
    %184 = vector.broadcast %183 : vector<32x1xf32> to vector<32x64xf32>
    %185 = arith.subf %177, %184 : vector<32x64xf32>
    %186 = arith.mulf %185, %185 : vector<32x64xf32>
    %cst_67 = arith.constant dense<0.000000e+00> : vector<32xf32>
    %187 = vector.multi_reduction <add>, %186, %cst_67 [1] : vector<32x64xf32> to vector<32xf32>
    %188 = vector.shape_cast %187 : vector<32xf32> to vector<32x1xf32>
    %cst_68 = arith.constant 6.400000e+01 : f32
    %189 = vector.broadcast %cst_68 : f32 to vector<32x1xf32>
    %190 = arith.divf %188, %189 : vector<32x1xf32>
    %191 = vector.broadcast %183 : vector<32x1xf32> to vector<32x64xf32>
    %192 = arith.subf %177, %191 : vector<32x64xf32>
    %cst_69 = arith.constant 9.99999974E-6 : f32
    %193 = vector.broadcast %cst_69 : f32 to vector<32x1xf32>
    %194 = arith.addf %190, %193 : vector<32x1xf32>
    %195 = math.rsqrt %194 : vector<32x1xf32>
    %196 = vector.broadcast %195 : vector<32x1xf32> to vector<32x64xf32>
    %197 = arith.mulf %192, %196 : vector<32x64xf32>
    %198 = vector.broadcast %178 : vector<1x64xf32> to vector<32x64xf32>
    %199 = arith.mulf %197, %198 : vector<32x64xf32>
    %200 = vector.broadcast %179 : vector<1x64xf32> to vector<32x64xf32>
    %201 = arith.addf %199, %200 : vector<32x64xf32>
    %202 = arith.truncf %201 : vector<32x64xf32> to vector<32x64xbf16>
    %c0_70 = arith.constant 0 : index
    %c0_71 = arith.constant 0 : index
    %203 = vector.load %arg20[%c0_70, %c0_71] : memref<64x192xbf16, #tpu.memory_space<vmem>>, vector<64x192xbf16>
    %cst_72 = arith.constant dense<0.000000e+00> : vector<32x192xf32>
    %204 = tpu.matmul %202, %203, %cst_72 {dimension_numbers = #tpu.dot_dimension_numbers<[1], [0], [0], [1], [0, 0, 1, 1], [], []>} : vector<32x64xbf16>, vector<64x192xbf16>, vector<32x192xf32> -> vector<32x192xf32>
    %c0_73 = arith.constant 0 : index
    %c0_74 = arith.constant 0 : index
    %205 = vector.load %arg21[%c0_73, %c0_74] : memref<1x192xf32, #tpu.memory_space<vmem>>, vector<1x192xf32>
    %206 = vector.broadcast %205 : vector<1x192xf32> to vector<32x192xf32>
    %207 = arith.addf %204, %206 : vector<32x192xf32>
    %208 = vector.extract_strided_slice %207 {offsets = [0, 0], sizes = [32, 16], strides = [1, 1]} : vector<32x192xf32> to vector<32x16xf32>
    %209 = vector.shape_cast %208 : vector<32x16xf32> to vector<2x16x16xf32>
    %210 = vector.extract_strided_slice %207 {offsets = [0, 16], sizes = [32, 16], strides = [1, 1]} : vector<32x192xf32> to vector<32x16xf32>
    %211 = vector.shape_cast %210 : vector<32x16xf32> to vector<2x16x16xf32>
    %212 = vector.extract_strided_slice %207 {offsets = [0, 32], sizes = [32, 16], strides = [1, 1]} : vector<32x192xf32> to vector<32x16xf32>
    %213 = vector.shape_cast %212 : vector<32x16xf32> to vector<2x16x16xf32>
    %214 = vector.extract_strided_slice %207 {offsets = [0, 48], sizes = [32, 16], strides = [1, 1]} : vector<32x192xf32> to vector<32x16xf32>
    %215 = vector.shape_cast %214 : vector<32x16xf32> to vector<2x16x16xf32>
    %216 = tpu.concatenate %209, %211, %213, %215 in 0 : vector<2x16x16xf32>, vector<2x16x16xf32>, vector<2x16x16xf32>, vector<2x16x16xf32> -> vector<8x16x16xf32>
    %217 = vector.extract_strided_slice %207 {offsets = [0, 64], sizes = [32, 16], strides = [1, 1]} : vector<32x192xf32> to vector<32x16xf32>
    %218 = vector.shape_cast %217 : vector<32x16xf32> to vector<2x16x16xf32>
    %219 = vector.extract_strided_slice %207 {offsets = [0, 80], sizes = [32, 16], strides = [1, 1]} : vector<32x192xf32> to vector<32x16xf32>
    %220 = vector.shape_cast %219 : vector<32x16xf32> to vector<2x16x16xf32>
    %221 = vector.extract_strided_slice %207 {offsets = [0, 96], sizes = [32, 16], strides = [1, 1]} : vector<32x192xf32> to vector<32x16xf32>
    %222 = vector.shape_cast %221 : vector<32x16xf32> to vector<2x16x16xf32>
    %223 = vector.extract_strided_slice %207 {offsets = [0, 112], sizes = [32, 16], strides = [1, 1]} : vector<32x192xf32> to vector<32x16xf32>
    %224 = vector.shape_cast %223 : vector<32x16xf32> to vector<2x16x16xf32>
    %225 = tpu.concatenate %218, %220, %222, %224 in 0 : vector<2x16x16xf32>, vector<2x16x16xf32>, vector<2x16x16xf32>, vector<2x16x16xf32> -> vector<8x16x16xf32>
    %226 = vector.extract_strided_slice %207 {offsets = [0, 128], sizes = [32, 16], strides = [1, 1]} : vector<32x192xf32> to vector<32x16xf32>
    %227 = vector.shape_cast %226 : vector<32x16xf32> to vector<2x16x16xf32>
    %228 = vector.extract_strided_slice %207 {offsets = [0, 144], sizes = [32, 16], strides = [1, 1]} : vector<32x192xf32> to vector<32x16xf32>
    %229 = vector.shape_cast %228 : vector<32x16xf32> to vector<2x16x16xf32>
    %230 = vector.extract_strided_slice %207 {offsets = [0, 160], sizes = [32, 16], strides = [1, 1]} : vector<32x192xf32> to vector<32x16xf32>
    %231 = vector.shape_cast %230 : vector<32x16xf32> to vector<2x16x16xf32>
    %232 = vector.extract_strided_slice %207 {offsets = [0, 176], sizes = [32, 16], strides = [1, 1]} : vector<32x192xf32> to vector<32x16xf32>
    %233 = vector.shape_cast %232 : vector<32x16xf32> to vector<2x16x16xf32>
    %234 = tpu.concatenate %227, %229, %231, %233 in 0 : vector<2x16x16xf32>, vector<2x16x16xf32>, vector<2x16x16xf32>, vector<2x16x16xf32> -> vector<8x16x16xf32>
    %235 = arith.truncf %216 : vector<8x16x16xf32> to vector<8x16x16xbf16>
    %236 = arith.truncf %225 : vector<8x16x16xf32> to vector<8x16x16xbf16>
    "tpu.trace_start"() <{level = 10 : i32, message = "bid,bjd->bij"}> : () -> ()
    %cst_75 = arith.constant dense<0.000000e+00> : vector<8x16x16xf32>
    %237 = tpu.matmul %235, %236, %cst_75 {dimension_numbers = #tpu.dot_dimension_numbers<[2], [2], [1], [1], [0, 0, 0, 1, 1, 1], [0], [0]>} : vector<8x16x16xbf16>, vector<8x16x16xbf16>, vector<8x16x16xf32> -> vector<8x16x16xf32>
    "tpu.trace_stop"() : () -> ()
    %c0_76 = arith.constant 0 : index
    %c0_77 = arith.constant 0 : index
    %c0_78 = arith.constant 0 : index
    %238 = vector.load %arg22[%c0_76, %c0_77, %c0_78] : memref<4x16x16xf32, #tpu.memory_space<vmem>>, vector<4x16x16xf32>
    %239 = vector.shape_cast %237 : vector<8x16x16xf32> to vector<4x2x16x16xf32>
    %240 = vector.shape_cast %238 : vector<4x16x16xf32> to vector<4x1x16x16xf32>
    %241 = vector.broadcast %240 : vector<4x1x16x16xf32> to vector<4x2x16x16xf32>
    %242 = arith.addf %239, %241 : vector<4x2x16x16xf32>
    %243 = vector.shape_cast %242 : vector<4x2x16x16xf32> to vector<8x16x16xf32>
    %cst_79 = arith.constant dense<0xFF800000> : vector<8x16xf32>
    %244 = vector.multi_reduction <maximumf>, %243, %cst_79 [2] : vector<8x16x16xf32> to vector<8x16xf32>
    %245 = vector.shape_cast %244 : vector<8x16xf32> to vector<8x16x1xf32>
    %246 = vector.broadcast %245 : vector<8x16x1xf32> to vector<8x16x16xf32>
    %247 = arith.subf %243, %246 : vector<8x16x16xf32>
    %248 = math.exp %247 : vector<8x16x16xf32>
    %cst_80 = arith.constant dense<0.000000e+00> : vector<8x16xf32>
    %249 = vector.multi_reduction <add>, %248, %cst_80 [2] : vector<8x16x16xf32> to vector<8x16xf32>
    %250 = vector.shape_cast %249 : vector<8x16xf32> to vector<8x16x1xf32>
    %251 = tpu.reciprocal %250 {approx = true} : vector<8x16x1xf32> -> vector<8x16x1xf32>
    %252 = vector.broadcast %251 : vector<8x16x1xf32> to vector<8x16x16xf32>
    %253 = arith.mulf %248, %252 : vector<8x16x16xf32>
    %254 = arith.truncf %253 : vector<8x16x16xf32> to vector<8x16x16xbf16>
    %255 = arith.truncf %234 : vector<8x16x16xf32> to vector<8x16x16xbf16>
    "tpu.trace_start"() <{level = 10 : i32, message = "bij,bjd->bid"}> : () -> ()
    %cst_81 = arith.constant dense<0.000000e+00> : vector<8x16x16xf32>
    %256 = tpu.matmul %254, %255, %cst_81 {dimension_numbers = #tpu.dot_dimension_numbers<[2], [1], [1], [2], [0, 0, 0, 1, 1, 2], [0], [0]>} : vector<8x16x16xbf16>, vector<8x16x16xbf16>, vector<8x16x16xf32> -> vector<8x16x16xf32>
    "tpu.trace_stop"() : () -> ()
    %257 = vector.shape_cast %256 : vector<8x16x16xf32> to vector<4x2x16x16xf32>
    %258 = vector.extract_strided_slice %257 {offsets = [0, 0, 0, 0], sizes = [1, 2, 16, 16], strides = [1, 1, 1, 1]} : vector<4x2x16x16xf32> to vector<1x2x16x16xf32>
    %259 = vector.shape_cast %258 : vector<1x2x16x16xf32> to vector<2x16x16xf32>
    %260 = vector.shape_cast %259 : vector<2x16x16xf32> to vector<32x16xf32>
    %261 = vector.extract_strided_slice %257 {offsets = [1, 0, 0, 0], sizes = [1, 2, 16, 16], strides = [1, 1, 1, 1]} : vector<4x2x16x16xf32> to vector<1x2x16x16xf32>
    %262 = vector.shape_cast %261 : vector<1x2x16x16xf32> to vector<2x16x16xf32>
    %263 = vector.shape_cast %262 : vector<2x16x16xf32> to vector<32x16xf32>
    %264 = vector.extract_strided_slice %257 {offsets = [2, 0, 0, 0], sizes = [1, 2, 16, 16], strides = [1, 1, 1, 1]} : vector<4x2x16x16xf32> to vector<1x2x16x16xf32>
    %265 = vector.shape_cast %264 : vector<1x2x16x16xf32> to vector<2x16x16xf32>
    %266 = vector.shape_cast %265 : vector<2x16x16xf32> to vector<32x16xf32>
    %267 = vector.extract_strided_slice %257 {offsets = [3, 0, 0, 0], sizes = [1, 2, 16, 16], strides = [1, 1, 1, 1]} : vector<4x2x16x16xf32> to vector<1x2x16x16xf32>
    %268 = vector.shape_cast %267 : vector<1x2x16x16xf32> to vector<2x16x16xf32>
    %269 = vector.shape_cast %268 : vector<2x16x16xf32> to vector<32x16xf32>
    %270 = tpu.concatenate %260, %263, %266, %269 in 1 : vector<32x16xf32>, vector<32x16xf32>, vector<32x16xf32>, vector<32x16xf32> -> vector<32x64xf32>
    %271 = arith.truncf %270 : vector<32x64xf32> to vector<32x64xbf16>
    %c0_82 = arith.constant 0 : index
    %c0_83 = arith.constant 0 : index
    %272 = vector.load %arg23[%c0_82, %c0_83] : memref<64x64xbf16, #tpu.memory_space<vmem>>, vector<64x64xbf16>
    %cst_84 = arith.constant dense<0.000000e+00> : vector<32x64xf32>
    %273 = tpu.matmul %271, %272, %cst_84 {dimension_numbers = #tpu.dot_dimension_numbers<[1], [0], [0], [1], [0, 0, 1, 1], [], []>} : vector<32x64xbf16>, vector<64x64xbf16>, vector<32x64xf32> -> vector<32x64xf32>
    %274 = arith.addf %177, %273 : vector<32x64xf32>
    %c0_85 = arith.constant 0 : index
    %c0_86 = arith.constant 0 : index
    %275 = vector.load %arg24[%c0_85, %c0_86] : memref<1x64xf32, #tpu.memory_space<vmem>>, vector<1x64xf32>
    %276 = vector.broadcast %275 : vector<1x64xf32> to vector<32x64xf32>
    %277 = arith.addf %274, %276 : vector<32x64xf32>
    %c0_87 = arith.constant 0 : index
    %c0_88 = arith.constant 0 : index
    %278 = vector.load %arg25[%c0_87, %c0_88] : memref<1x64xf32, #tpu.memory_space<vmem>>, vector<1x64xf32>
    %c0_89 = arith.constant 0 : index
    %c0_90 = arith.constant 0 : index
    %279 = vector.load %arg26[%c0_89, %c0_90] : memref<1x64xf32, #tpu.memory_space<vmem>>, vector<1x64xf32>
    %cst_91 = arith.constant dense<0.000000e+00> : vector<32xf32>
    %280 = vector.multi_reduction <add>, %277, %cst_91 [1] : vector<32x64xf32> to vector<32xf32>
    %281 = vector.shape_cast %280 : vector<32xf32> to vector<32x1xf32>
    %cst_92 = arith.constant 6.400000e+01 : f32
    %282 = vector.broadcast %cst_92 : f32 to vector<32x1xf32>
    %283 = arith.divf %281, %282 : vector<32x1xf32>
    %284 = vector.broadcast %283 : vector<32x1xf32> to vector<32x64xf32>
    %285 = arith.subf %277, %284 : vector<32x64xf32>
    %286 = arith.mulf %285, %285 : vector<32x64xf32>
    %cst_93 = arith.constant dense<0.000000e+00> : vector<32xf32>
    %287 = vector.multi_reduction <add>, %286, %cst_93 [1] : vector<32x64xf32> to vector<32xf32>
    %288 = vector.shape_cast %287 : vector<32xf32> to vector<32x1xf32>
    %cst_94 = arith.constant 6.400000e+01 : f32
    %289 = vector.broadcast %cst_94 : f32 to vector<32x1xf32>
    %290 = arith.divf %288, %289 : vector<32x1xf32>
    %291 = vector.broadcast %283 : vector<32x1xf32> to vector<32x64xf32>
    %292 = arith.subf %277, %291 : vector<32x64xf32>
    %cst_95 = arith.constant 9.99999974E-6 : f32
    %293 = vector.broadcast %cst_95 : f32 to vector<32x1xf32>
    %294 = arith.addf %290, %293 : vector<32x1xf32>
    %295 = math.rsqrt %294 : vector<32x1xf32>
    %296 = vector.broadcast %295 : vector<32x1xf32> to vector<32x64xf32>
    %297 = arith.mulf %292, %296 : vector<32x64xf32>
    %298 = vector.broadcast %278 : vector<1x64xf32> to vector<32x64xf32>
    %299 = arith.mulf %297, %298 : vector<32x64xf32>
    %300 = vector.broadcast %279 : vector<1x64xf32> to vector<32x64xf32>
    %301 = arith.addf %299, %300 : vector<32x64xf32>
    %302 = arith.truncf %301 : vector<32x64xf32> to vector<32x64xbf16>
    %c0_96 = arith.constant 0 : index
    %c0_97 = arith.constant 0 : index
    %303 = vector.load %arg27[%c0_96, %c0_97] : memref<64x256xbf16, #tpu.memory_space<vmem>>, vector<64x256xbf16>
    %cst_98 = arith.constant dense<0.000000e+00> : vector<32x256xf32>
    %304 = tpu.matmul %302, %303, %cst_98 {dimension_numbers = #tpu.dot_dimension_numbers<[1], [0], [0], [1], [0, 0, 1, 1], [], []>} : vector<32x64xbf16>, vector<64x256xbf16>, vector<32x256xf32> -> vector<32x256xf32>
    %c0_99 = arith.constant 0 : index
    %c0_100 = arith.constant 0 : index
    %305 = vector.load %arg28[%c0_99, %c0_100] : memref<1x256xf32, #tpu.memory_space<vmem>>, vector<1x256xf32>
    %306 = vector.broadcast %305 : vector<1x256xf32> to vector<32x256xf32>
    %307 = arith.addf %304, %306 : vector<32x256xf32>
    %308 = arith.mulf %307, %307 : vector<32x256xf32>
    %309 = arith.mulf %307, %308 : vector<32x256xf32>
    %cst_101 = arith.constant 4.471500e-02 : f32
    %310 = vector.broadcast %cst_101 : f32 to vector<32x256xf32>
    %311 = arith.mulf %310, %309 : vector<32x256xf32>
    %312 = arith.addf %307, %311 : vector<32x256xf32>
    %cst_102 = arith.constant 0.797884583 : f32
    %313 = vector.broadcast %cst_102 : f32 to vector<32x256xf32>
    %314 = arith.mulf %313, %312 : vector<32x256xf32>
    %315 = math.tanh %314 : vector<32x256xf32>
    %cst_103 = arith.constant 1.000000e+00 : f32
    %316 = vector.broadcast %cst_103 : f32 to vector<32x256xf32>
    %317 = arith.addf %316, %315 : vector<32x256xf32>
    %cst_104 = arith.constant 5.000000e-01 : f32
    %318 = vector.broadcast %cst_104 : f32 to vector<32x256xf32>
    %319 = arith.mulf %318, %317 : vector<32x256xf32>
    %320 = arith.mulf %307, %319 : vector<32x256xf32>
    %321 = arith.truncf %320 : vector<32x256xf32> to vector<32x256xbf16>
    %c0_105 = arith.constant 0 : index
    %c0_106 = arith.constant 0 : index
    %322 = vector.load %arg29[%c0_105, %c0_106] : memref<256x64xbf16, #tpu.memory_space<vmem>>, vector<256x64xbf16>
    %cst_107 = arith.constant dense<0.000000e+00> : vector<32x64xf32>
    %323 = tpu.matmul %321, %322, %cst_107 {dimension_numbers = #tpu.dot_dimension_numbers<[1], [0], [0], [1], [0, 0, 1, 1], [], []>} : vector<32x256xbf16>, vector<256x64xbf16>, vector<32x64xf32> -> vector<32x64xf32>
    %c0_108 = arith.constant 0 : index
    %c0_109 = arith.constant 0 : index
    %324 = vector.load %arg30[%c0_108, %c0_109] : memref<1x64xf32, #tpu.memory_space<vmem>>, vector<1x64xf32>
    %325 = vector.broadcast %324 : vector<1x64xf32> to vector<32x64xf32>
    %326 = arith.addf %323, %325 : vector<32x64xf32>
    %327 = arith.addf %277, %326 : vector<32x64xf32>
    %c0_110 = arith.constant 0 : index
    %c0_111 = arith.constant 0 : index
    %328 = vector.load %arg31[%c0_110, %c0_111] : memref<1x64xf32, #tpu.memory_space<vmem>>, vector<1x64xf32>
    %c0_112 = arith.constant 0 : index
    %c0_113 = arith.constant 0 : index
    %329 = vector.load %arg32[%c0_112, %c0_113] : memref<1x64xf32, #tpu.memory_space<vmem>>, vector<1x64xf32>
    %cst_114 = arith.constant dense<0.000000e+00> : vector<32xf32>
    %330 = vector.multi_reduction <add>, %327, %cst_114 [1] : vector<32x64xf32> to vector<32xf32>
    %331 = vector.shape_cast %330 : vector<32xf32> to vector<32x1xf32>
    %cst_115 = arith.constant 6.400000e+01 : f32
    %332 = vector.broadcast %cst_115 : f32 to vector<32x1xf32>
    %333 = arith.divf %331, %332 : vector<32x1xf32>
    %334 = vector.broadcast %333 : vector<32x1xf32> to vector<32x64xf32>
    %335 = arith.subf %327, %334 : vector<32x64xf32>
    %336 = arith.mulf %335, %335 : vector<32x64xf32>
    %cst_116 = arith.constant dense<0.000000e+00> : vector<32xf32>
    %337 = vector.multi_reduction <add>, %336, %cst_116 [1] : vector<32x64xf32> to vector<32xf32>
    %338 = vector.shape_cast %337 : vector<32xf32> to vector<32x1xf32>
    %cst_117 = arith.constant 6.400000e+01 : f32
    %339 = vector.broadcast %cst_117 : f32 to vector<32x1xf32>
    %340 = arith.divf %338, %339 : vector<32x1xf32>
    %341 = vector.broadcast %333 : vector<32x1xf32> to vector<32x64xf32>
    %342 = arith.subf %327, %341 : vector<32x64xf32>
    %cst_118 = arith.constant 9.99999974E-6 : f32
    %343 = vector.broadcast %cst_118 : f32 to vector<32x1xf32>
    %344 = arith.addf %340, %343 : vector<32x1xf32>
    %345 = math.rsqrt %344 : vector<32x1xf32>
    %346 = vector.broadcast %345 : vector<32x1xf32> to vector<32x64xf32>
    %347 = arith.mulf %342, %346 : vector<32x64xf32>
    %348 = vector.broadcast %328 : vector<1x64xf32> to vector<32x64xf32>
    %349 = arith.mulf %347, %348 : vector<32x64xf32>
    %350 = vector.broadcast %329 : vector<1x64xf32> to vector<32x64xf32>
    %351 = arith.addf %349, %350 : vector<32x64xf32>
    %352 = vector.shape_cast %351 : vector<32x64xf32> to vector<2x16x64xf32>
    %cst_119 = arith.constant dense<0.000000e+00> : vector<2x64xf32>
    %353 = vector.multi_reduction <add>, %352, %cst_119 [1] : vector<2x16x64xf32> to vector<2x64xf32>
    %cst_120 = arith.constant 1.600000e+01 : f32
    %354 = vector.broadcast %cst_120 : f32 to vector<2x64xf32>
    %355 = arith.divf %353, %354 : vector<2x64xf32>
    %356 = arith.truncf %355 : vector<2x64xf32> to vector<2x64xbf16>
    %c0_121 = arith.constant 0 : index
    %c0_122 = arith.constant 0 : index
    %357 = vector.load %arg33[%c0_121, %c0_122] : memref<64x64xbf16, #tpu.memory_space<vmem>>, vector<64x64xbf16>
    %cst_123 = arith.constant dense<0.000000e+00> : vector<2x64xf32>
    %358 = tpu.matmul %356, %357, %cst_123 {dimension_numbers = #tpu.dot_dimension_numbers<[1], [0], [0], [1], [0, 0, 1, 1], [], []>} : vector<2x64xbf16>, vector<64x64xbf16>, vector<2x64xf32> -> vector<2x64xf32>
    %c0_124 = arith.constant 0 : index
    %c0_125 = arith.constant 0 : index
    %359 = vector.load %arg34[%c0_124, %c0_125] : memref<1x64xf32, #tpu.memory_space<vmem>>, vector<1x64xf32>
    %360 = vector.broadcast %359 : vector<1x64xf32> to vector<2x64xf32>
    %361 = arith.addf %358, %360 : vector<2x64xf32>
    %362 = arith.mulf %361, %361 : vector<2x64xf32>
    %cst_126 = arith.constant dense<0.000000e+00> : vector<2xf32>
    %363 = vector.multi_reduction <add>, %362, %cst_126 [1] : vector<2x64xf32> to vector<2xf32>
    %364 = vector.shape_cast %363 : vector<2xf32> to vector<2x1xf32>
    %365 = math.sqrt %364 : vector<2x1xf32>
    %cst_127 = arith.constant 9.99999996E-13 : f32
    %366 = vector.broadcast %cst_127 : f32 to vector<2x1xf32>
    %367 = arith.maximumf %365, %366 : vector<2x1xf32>
    %368 = vector.broadcast %367 : vector<2x1xf32> to vector<2x64xf32>
    %369 = arith.divf %361, %368 : vector<2x64xf32>
    %370 = vector.shape_cast %369 : vector<2x64xf32> to vector<2x1x64xf32>
    %c0_128 = arith.constant 0 : index
    %c0_129 = arith.constant 0 : index
    %c0_130 = arith.constant 0 : index
    %371 = vector.load %arg35[%c0_128, %c0_129, %c0_130] : memref<2x1x64xf32, #tpu.memory_space<vmem>>, vector<2x1x64xf32>
    tpu.vector_store %arg35[%c0_128, %c0_129, %c0_130], %370 {strides = array<i32>} : memref<2x1x64xf32, #tpu.memory_space<vmem>>, vector<2x1x64xf32>,
    return
  }
  func.func @transform_0(%arg0: i32) -> (i32, i32) {
    %c0_i32 = arith.constant 0 : i32
    %c0_i32_0 = arith.constant 0 : i32
    return %arg0, %c0_i32 : i32, i32
  }
  func.func @transform_1(%arg0: i32) -> (i32, i32) {
    %c0_i32 = arith.constant 0 : i32
    %c0_i32_0 = arith.constant 0 : i32
    %c0_i32_1 = arith.constant 0 : i32
    return %c0_i32, %c0_i32_0 : i32, i32
  }
  func.func @transform_2(%arg0: i32) -> (i32, i32) {
    %c0_i32 = arith.constant 0 : i32
    %c0_i32_0 = arith.constant 0 : i32
    %c0_i32_1 = arith.constant 0 : i32
    return %c0_i32, %c0_i32_0 : i32, i32
  }
  func.func @transform_3(%arg0: i32) -> (i32, i32) {
    %c0_i32 = arith.constant 0 : i32
    %c0_i32_0 = arith.constant 0 : i32
    %c0_i32_1 = arith.constant 0 : i32
    return %c0_i32, %c0_i32_0 : i32, i32
  }
  func.func @transform_4(%arg0: i32) -> (i32, i32) {
    %c0_i32 = arith.constant 0 : i32
    %c0_i32_0 = arith.constant 0 : i32
    %c0_i32_1 = arith.constant 0 : i32
    return %c0_i32, %c0_i32_0 : i32, i32
  }
  func.func @transform_5(%arg0: i32) -> (i32, i32) {
    %c0_i32 = arith.constant 0 : i32
    %c0_i32_0 = arith.constant 0 : i32
    %c0_i32_1 = arith.constant 0 : i32
    return %c0_i32, %c0_i32_0 : i32, i32
  }
  func.func @transform_6(%arg0: i32) -> (i32, i32) {
    %c0_i32 = arith.constant 0 : i32
    %c0_i32_0 = arith.constant 0 : i32
    %c0_i32_1 = arith.constant 0 : i32
    return %c0_i32, %c0_i32_0 : i32, i32
  }
  func.func @transform_7(%arg0: i32) -> (i32, i32) {
    %c0_i32 = arith.constant 0 : i32
    %c0_i32_0 = arith.constant 0 : i32
    %c0_i32_1 = arith.constant 0 : i32
    return %c0_i32, %c0_i32_0 : i32, i32
  }
  func.func @transform_8(%arg0: i32) -> (i32, i32, i32) {
    %c0_i32 = arith.constant 0 : i32
    %c0_i32_0 = arith.constant 0 : i32
    %c0_i32_1 = arith.constant 0 : i32
    %c0_i32_2 = arith.constant 0 : i32
    return %c0_i32, %c0_i32_0, %c0_i32_1 : i32, i32, i32
  }
  func.func @transform_9(%arg0: i32) -> (i32, i32) {
    %c0_i32 = arith.constant 0 : i32
    %c0_i32_0 = arith.constant 0 : i32
    %c0_i32_1 = arith.constant 0 : i32
    return %c0_i32, %c0_i32_0 : i32, i32
  }
  func.func @transform_10(%arg0: i32) -> (i32, i32) {
    %c0_i32 = arith.constant 0 : i32
    %c0_i32_0 = arith.constant 0 : i32
    %c0_i32_1 = arith.constant 0 : i32
    return %c0_i32, %c0_i32_0 : i32, i32
  }
  func.func @transform_11(%arg0: i32) -> (i32, i32) {
    %c0_i32 = arith.constant 0 : i32
    %c0_i32_0 = arith.constant 0 : i32
    %c0_i32_1 = arith.constant 0 : i32
    return %c0_i32, %c0_i32_0 : i32, i32
  }
  func.func @transform_12(%arg0: i32) -> (i32, i32) {
    %c0_i32 = arith.constant 0 : i32
    %c0_i32_0 = arith.constant 0 : i32
    %c0_i32_1 = arith.constant 0 : i32
    return %c0_i32, %c0_i32_0 : i32, i32
  }
  func.func @transform_13(%arg0: i32) -> (i32, i32) {
    %c0_i32 = arith.constant 0 : i32
    %c0_i32_0 = arith.constant 0 : i32
    %c0_i32_1 = arith.constant 0 : i32
    return %c0_i32, %c0_i32_0 : i32, i32
  }
  func.func @transform_14(%arg0: i32) -> (i32, i32) {
    %c0_i32 = arith.constant 0 : i32
    %c0_i32_0 = arith.constant 0 : i32
    %c0_i32_1 = arith.constant 0 : i32
    return %c0_i32, %c0_i32_0 : i32, i32
  }
  func.func @transform_15(%arg0: i32) -> (i32, i32) {
    %c0_i32 = arith.constant 0 : i32
    %c0_i32_0 = arith.constant 0 : i32
    %c0_i32_1 = arith.constant 0 : i32
    return %c0_i32, %c0_i32_0 : i32, i32
  }
  func.func @transform_16(%arg0: i32) -> (i32, i32) {
    %c0_i32 = arith.constant 0 : i32
    %c0_i32_0 = arith.constant 0 : i32
    %c0_i32_1 = arith.constant 0 : i32
    return %c0_i32, %c0_i32_0 : i32, i32
  }
  func.func @transform_17(%arg0: i32) -> (i32, i32) {
    %c0_i32 = arith.constant 0 : i32
    %c0_i32_0 = arith.constant 0 : i32
    %c0_i32_1 = arith.constant 0 : i32
    return %c0_i32, %c0_i32_0 : i32, i32
  }
  func.func @transform_18(%arg0: i32) -> (i32, i32) {
    %c0_i32 = arith.constant 0 : i32
    %c0_i32_0 = arith.constant 0 : i32
    %c0_i32_1 = arith.constant 0 : i32
    return %c0_i32, %c0_i32_0 : i32, i32
  }
  func.func @transform_19(%arg0: i32) -> (i32, i32) {
    %c0_i32 = arith.constant 0 : i32
    %c0_i32_0 = arith.constant 0 : i32
    %c0_i32_1 = arith.constant 0 : i32
    return %c0_i32, %c0_i32_0 : i32, i32
  }
  func.func @transform_20(%arg0: i32) -> (i32, i32) {
    %c0_i32 = arith.constant 0 : i32
    %c0_i32_0 = arith.constant 0 : i32
    %c0_i32_1 = arith.constant 0 : i32
    return %c0_i32, %c0_i32_0 : i32, i32
  }
  func.func @transform_21(%arg0: i32) -> (i32, i32, i32) {
    %c0_i32 = arith.constant 0 : i32
    %c0_i32_0 = arith.constant 0 : i32
    %c0_i32_1 = arith.constant 0 : i32
    %c0_i32_2 = arith.constant 0 : i32
    return %c0_i32, %c0_i32_0, %c0_i32_1 : i32, i32, i32
  }
  func.func @transform_22(%arg0: i32) -> (i32, i32) {
    %c0_i32 = arith.constant 0 : i32
    %c0_i32_0 = arith.constant 0 : i32
    %c0_i32_1 = arith.constant 0 : i32
    return %c0_i32, %c0_i32_0 : i32, i32
  }
  func.func @transform_23(%arg0: i32) -> (i32, i32) {
    %c0_i32 = arith.constant 0 : i32
    %c0_i32_0 = arith.constant 0 : i32
    %c0_i32_1 = arith.constant 0 : i32
    return %c0_i32, %c0_i32_0 : i32, i32
  }
  func.func @transform_24(%arg0: i32) -> (i32, i32) {
    %c0_i32 = arith.constant 0 : i32
    %c0_i32_0 = arith.constant 0 : i32
    %c0_i32_1 = arith.constant 0 : i32
    return %c0_i32, %c0_i32_0 : i32, i32
  }
  func.func @transform_25(%arg0: i32) -> (i32, i32) {
    %c0_i32 = arith.constant 0 : i32
    %c0_i32_0 = arith.constant 0 : i32
    %c0_i32_1 = arith.constant 0 : i32
    return %c0_i32, %c0_i32_0 : i32, i32
  }
  func.func @transform_26(%arg0: i32) -> (i32, i32) {
    %c0_i32 = arith.constant 0 : i32
    %c0_i32_0 = arith.constant 0 : i32
    %c0_i32_1 = arith.constant 0 : i32
    return %c0_i32, %c0_i32_0 : i32, i32
  }
  func.func @transform_27(%arg0: i32) -> (i32, i32) {
    %c0_i32 = arith.constant 0 : i32
    %c0_i32_0 = arith.constant 0 : i32
    %c0_i32_1 = arith.constant 0 : i32
    return %c0_i32, %c0_i32_0 : i32, i32
  }
  func.func @transform_28(%arg0: i32) -> (i32, i32) {
    %c0_i32 = arith.constant 0 : i32
    %c0_i32_0 = arith.constant 0 : i32
    %c0_i32_1 = arith.constant 0 : i32
    return %c0_i32, %c0_i32_0 : i32, i32
  }
  func.func @transform_29(%arg0: i32) -> (i32, i32) {
    %c0_i32 = arith.constant 0 : i32
    %c0_i32_0 = arith.constant 0 : i32
    %c0_i32_1 = arith.constant 0 : i32
    return %c0_i32, %c0_i32_0 : i32, i32
  }
  func.func @transform_30(%arg0: i32) -> (i32, i32) {
    %c0_i32 = arith.constant 0 : i32
    %c0_i32_0 = arith.constant 0 : i32
    %c0_i32_1 = arith.constant 0 : i32
    return %c0_i32, %c0_i32_0 : i32, i32
  }
  func.func @transform_31(%arg0: i32) -> (i32, i32) {
    %c0_i32 = arith.constant 0 : i32
    %c0_i32_0 = arith.constant 0 : i32
    %c0_i32_1 = arith.constant 0 : i32
    return %c0_i32, %c0_i32_0 : i32, i32
  }
  func.func @transform_32(%arg0: i32) -> (i32, i32) {
    %c0_i32 = arith.constant 0 : i32
    %c0_i32_0 = arith.constant 0 : i32
    %c0_i32_1 = arith.constant 0 : i32
    return %c0_i32, %c0_i32_0 : i32, i32
  }
  func.func @transform_33(%arg0: i32) -> (i32, i32) {
    %c0_i32 = arith.constant 0 : i32
    %c0_i32_0 = arith.constant 0 : i32
    %c0_i32_1 = arith.constant 0 : i32
    return %c0_i32, %c0_i32_0 : i32, i32
  }
  func.func @transform_34(%arg0: i32) -> (i32, i32, i32) {
    %c0_i32 = arith.constant 0 : i32
    %c0_i32_0 = arith.constant 0 : i32
    %c0_i32_1 = arith.constant 0 : i32
    return %arg0, %c0_i32, %c0_i32_0 : i32, i32, i32
  }
}

</mosaic_0001>

<llo_original>
// kernel: swin_encoder_forward.3
$region0: #{swin_encoder_forward.3}
  #allocation0 [shape = 'u32[]', space=smem, size = 0x4, offset = 0x4, fixed_abs, tag = 'smem constant byte address 0x4 - core index']
  #allocation1 [shape = 'u32[144,128]{1,0:T(1,128)}', space=vmem, size = 0x12000, scoped, tag = 'internal scratch']
  %s0 = inlined_call_operand.smem [shape: u32[35], index: -1, kind: input, shape index: {}]
  %s1 = sld [smem:[%s0]]
  %s2 = scalar_lea.smem %s0, 1
  %s3 = sld [smem:[%s2]]
  %s4 = scalar_lea.smem %s0, 2
  %s5 = sld [smem:[%s4]]
  %s6 = scalar_lea.smem %s0, 3
  %s7 = sld [smem:[%s6]]
  %s8 = scalar_lea.smem %s0, 4
  %s9 = sld [smem:[%s8]]
  %s10 = scalar_lea.smem %s0, 5
  %s11 = sld [smem:[%s10]]
  %s12 = scalar_lea.smem %s0, 6
  %s13 = sld [smem:[%s12]]
  %s14 = scalar_lea.smem %s0, 7
  %s15 = sld [smem:[%s14]]
  %s16 = scalar_lea.smem %s0, 8
  %s17 = sld [smem:[%s16]]
  %s18 = scalar_lea.smem %s0, 9
  %s19 = sld [smem:[%s18]]
  %s20 = scalar_lea.smem %s0, 10
  %s21 = sld [smem:[%s20]]
  %s22 = scalar_lea.smem %s0, 11
  %s23 = sld [smem:[%s22]]
  %s24 = scalar_lea.smem %s0, 12
  %s25 = sld [smem:[%s24]]
  %s26 = scalar_lea.smem %s0, 13
  %s27 = sld [smem:[%s26]]
  %s28 = scalar_lea.smem %s0, 14
  %s29 = sld [smem:[%s28]]
  %s30 = scalar_lea.smem %s0, 15
  %s31 = sld [smem:[%s30]]
  %s32 = scalar_lea.smem %s0, 16
  %s33 = sld [smem:[%s32]]
  %s34 = scalar_lea.smem %s0, 17
  %s35 = sld [smem:[%s34]]
  %s36 = scalar_lea.smem %s0, 18
  %s37 = sld [smem:[%s36]]
  %s38 = scalar_lea.smem %s0, 19
  %s39 = sld [smem:[%s38]]
  %s40 = scalar_lea.smem %s0, 20
  %s41 = sld [smem:[%s40]]
  %s42 = scalar_lea.smem %s0, 21
  %s43 = sld [smem:[%s42]]
  %s44 = scalar_lea.smem %s0, 22
  %s45 = sld [smem:[%s44]]
  %s46 = scalar_lea.smem %s0, 23
  %s47 = sld [smem:[%s46]]
  %s48 = scalar_lea.smem %s0, 24
  %s49 = sld [smem:[%s48]]
  %s50 = scalar_lea.smem %s0, 25
  %s51 = sld [smem:[%s50]]
  %s52 = scalar_lea.smem %s0, 26
  %s53 = sld [smem:[%s52]]
  %s54 = scalar_lea.smem %s0, 27
  %s55 = sld [smem:[%s54]]
  %s56 = scalar_lea.smem %s0, 28
  %s57 = sld [smem:[%s56]]
  %s58 = scalar_lea.smem %s0, 29
  %s59 = sld [smem:[%s58]]
  %s60 = scalar_lea.smem %s0, 30
  %s61 = sld [smem:[%s60]]
  %s62 = scalar_lea.smem %s0, 31
  %s63 = sld [smem:[%s62]]
  %s64 = scalar_lea.smem %s0, 32
  %s65 = sld [smem:[%s64]]
  %s66 = scalar_lea.smem %s0, 33
  %s67 = sld [smem:[%s66]]
  %s68 = scalar_lea.smem %s0, 34
  %s69 = sld [smem:[%s68]]
  %s70 = sld [smem:[#allocation0]]
  $region146: #{swin_encoder_forward.3} parent=0
    _
  %s72 = ssub.s32 1, %s70
  %s73 = scalar_select 0, %s72, %s70
  $region1: #{swin_encoder_forward.3} parent=0
    #allocation2 [shape = 'u8[1024]{0}', space=vmem, size = 0x400, scoped, tag = 'output window, operand 0, single buffered']
    #allocation3 [shape = 's32[1]{0}', space=sflag, size = 0x4, scoped, tag = 'scoped memory for swin_encoder_forward.3']
    %74 = vsyncpa [#allocation3], 0
    // Predicated region
    $region2: #{swin_encoder_forward.3} parent=1 // pred_check
      _
    $region3: #{swin_encoder_forward.3} parent=1 // pred_check_branch
      %76 = sbr.rel (0) target = $region5
    $region4: #{swin_encoder_forward.3} parent=1 // pred_region
      _
    $region5: #{swin_encoder_forward.3} parent=1 // pred_fallthru
      _
    // Predicated region
    $region6: #{swin_encoder_forward.3} parent=1 // pred_check
      _
    $region7: #{swin_encoder_forward.3} parent=1 // pred_check_branch
      %78 = sbr.rel (0) target = $region9
    $region8: #{swin_encoder_forward.3} parent=1 // pred_region
      _
    $region9: #{swin_encoder_forward.3} parent=1 // pred_fallthru
      _
    // Predicated region
    $region10: #{swin_encoder_forward.3} parent=1 // pred_check
      _
    $region11: #{swin_encoder_forward.3} parent=1 // pred_check_branch
      %80 = sbr.rel (0) target = $region13
    $region12: #{swin_encoder_forward.3} parent=1 // pred_region
      _
    $region13: #{swin_encoder_forward.3} parent=1 // pred_fallthru
      _
    // Predicated region
    $region14: #{swin_encoder_forward.3} parent=1 // pred_check
      _
    $region15: #{swin_encoder_forward.3} parent=1 // pred_check_branch
      %82 = sbr.rel (0) target = $region17
    $region16: #{swin_encoder_forward.3} parent=1 // pred_region
      _
    $region17: #{swin_encoder_forward.3} parent=1 // pred_fallthru
      _
    // Predicated region
    $region18: #{swin_encoder_forward.3} parent=1 // pred_check
      _
    $region19: #{swin_encoder_forward.3} parent=1 // pred_check_branch
      %84 = sbr.rel (0) target = $region21
    $region20: #{swin_encoder_forward.3} parent=1 // pred_region
      _
    $region21: #{swin_encoder_forward.3} parent=1 // pred_fallthru
      _
    // Predicated region
    $region22: #{swin_encoder_forward.3} parent=1 // pred_check
      _
    $region23: #{swin_encoder_forward.3} parent=1 // pred_check_branch
      %86 = sbr.rel (0) target = $region25
    $region24: #{swin_encoder_forward.3} parent=1 // pred_region
      _
    $region25: #{swin_encoder_forward.3} parent=1 // pred_fallthru
      _
    // Predicated region
    $region26: #{swin_encoder_forward.3} parent=1 // pred_check
      _
    $region27: #{swin_encoder_forward.3} parent=1 // pred_check_branch
      %88 = sbr.rel (0) target = $region29
    $region28: #{swin_encoder_forward.3} parent=1 // pred_region
      _
    $region29: #{swin_encoder_forward.3} parent=1 // pred_fallthru
      _
    // Predicated region
    $region30: #{swin_encoder_forward.3} parent=1 // pred_check
      _
    $region31: #{swin_encoder_forward.3} parent=1 // pred_check_branch
      %90 = sbr.rel (0) target = $region33
    $region32: #{swin_encoder_forward.3} parent=1 // pred_region
      _
    $region33: #{swin_encoder_forward.3} parent=1 // pred_fallthru
      _
    // Predicated region
    $region34: #{swin_encoder_forward.3} parent=1 // pred_check
      _
    $region35: #{swin_encoder_forward.3} parent=1 // pred_check_branch
      %92 = sbr.rel (0) target = $region37
    $region36: #{swin_encoder_forward.3} parent=1 // pred_region
      _
    $region37: #{swin_encoder_forward.3} parent=1 // pred_fallthru
      _
    // Predicated region
    $region38: #{swin_encoder_forward.3} parent=1 // pred_check
      _
    $region39: #{swin_encoder_forward.3} parent=1 // pred_check_branch
      %94 = sbr.rel (0) target = $region41
    $region40: #{swin_encoder_forward.3} parent=1 // pred_region
      _
    $region41: #{swin_encoder_forward.3} parent=1 // pred_fallthru
      _
    // Predicated region
    $region42: #{swin_encoder_forward.3} parent=1 // pred_check
      _
    $region43: #{swin_encoder_forward.3} parent=1 // pred_check_branch
      %96 = sbr.rel (0) target = $region45
    $region44: #{swin_encoder_forward.3} parent=1 // pred_region
      _
    $region45: #{swin_encoder_forward.3} parent=1 // pred_fallthru
      _
    // Predicated region
    $region46: #{swin_encoder_forward.3} parent=1 // pred_check
      _
    $region47: #{swin_encoder_forward.3} parent=1 // pred_check_branch
      %98 = sbr.rel (0) target = $region49
    $region48: #{swin_encoder_forward.3} parent=1 // pred_region
      _
    $region49: #{swin_encoder_forward.3} parent=1 // pred_fallthru
      _
    // Predicated region
    $region50: #{swin_encoder_forward.3} parent=1 // pred_check
      _
    $region51: #{swin_encoder_forward.3} parent=1 // pred_check_branch
      %100 = sbr.rel (0) target = $region53
    $region52: #{swin_encoder_forward.3} parent=1 // pred_region
      _
    $region53: #{swin_encoder_forward.3} parent=1 // pred_fallthru
      _
    // Predicated region
    $region54: #{swin_encoder_forward.3} parent=1 // pred_check
      _
    $region55: #{swin_encoder_forward.3} parent=1 // pred_check_branch
      %102 = sbr.rel (0) target = $region57
    $region56: #{swin_encoder_forward.3} parent=1 // pred_region
      _
    $region57: #{swin_encoder_forward.3} parent=1 // pred_fallthru
      _
    // Predicated region
    $region58: #{swin_encoder_forward.3} parent=1 // pred_check
      _
    $region59: #{swin_encoder_forward.3} parent=1 // pred_check_branch
      %104 = sbr.rel (0) target = $region61
    $region60: #{swin_encoder_forward.3} parent=1 // pred_region
      _
    $region61: #{swin_encoder_forward.3} parent=1 // pred_fallthru
      _
    // Predicated region
    $region62: #{swin_encoder_forward.3} parent=1 // pred_check
      _
    $region63: #{swin_encoder_forward.3} parent=1 // pred_check_branch
      %106 = sbr.rel (0) target = $region65
    $region64: #{swin_encoder_forward.3} parent=1 // pred_region
      _
    $region65: #{swin_encoder_forward.3} parent=1 // pred_fallthru
      _
    // Predicated region
    $region66: #{swin_encoder_forward.3} parent=1 // pred_check
      _
    $region67: #{swin_encoder_forward.3} parent=1 // pred_check_branch
      %108 = sbr.rel (0) target = $region69
    $region68: #{swin_encoder_forward.3} parent=1 // pred_region
      _
    $region69: #{swin_encoder_forward.3} parent=1 // pred_fallthru
      _
    // Predicated region
    $region70: #{swin_encoder_forward.3} parent=1 // pred_check
      _
    $region71: #{swin_encoder_forward.3} parent=1 // pred_check_branch
      %110 = sbr.rel (0) target = $region73
    $region72: #{swin_encoder_forward.3} parent=1 // pred_region
      _
    $region73: #{swin_encoder_forward.3} parent=1 // pred_fallthru
      _
    // Predicated region
    $region74: #{swin_encoder_forward.3} parent=1 // pred_check
      _
    $region75: #{swin_encoder_forward.3} parent=1 // pred_check_branch
      %112 = sbr.rel (0) target = $region77
    $region76: #{swin_encoder_forward.3} parent=1 // pred_region
      _
    $region77: #{swin_encoder_forward.3} parent=1 // pred_fallthru
      _
    // Predicated region
    $region78: #{swin_encoder_forward.3} parent=1 // pred_check
      _
    $region79: #{swin_encoder_forward.3} parent=1 // pred_check_branch
      %114 = sbr.rel (0) target = $region81
    $region80: #{swin_encoder_forward.3} parent=1 // pred_region
      _
    $region81: #{swin_encoder_forward.3} parent=1 // pred_fallthru
      _
    // Predicated region
    $region82: #{swin_encoder_forward.3} parent=1 // pred_check
      _
    $region83: #{swin_encoder_forward.3} parent=1 // pred_check_branch
      %116 = sbr.rel (0) target = $region85
    $region84: #{swin_encoder_forward.3} parent=1 // pred_region
      _
    $region85: #{swin_encoder_forward.3} parent=1 // pred_fallthru
      _
    // Predicated region
    $region86: #{swin_encoder_forward.3} parent=1 // pred_check
      _
    $region87: #{swin_encoder_forward.3} parent=1 // pred_check_branch
      %118 = sbr.rel (0) target = $region89
    $region88: #{swin_encoder_forward.3} parent=1 // pred_region
      _
    $region89: #{swin_encoder_forward.3} parent=1 // pred_fallthru
      _
    // Predicated region
    $region90: #{swin_encoder_forward.3} parent=1 // pred_check
      _
    $region91: #{swin_encoder_forward.3} parent=1 // pred_check_branch
      %120 = sbr.rel (0) target = $region93
    $region92: #{swin_encoder_forward.3} parent=1 // pred_region
      _
    $region93: #{swin_encoder_forward.3} parent=1 // pred_fallthru
      _
    // Predicated region
    $region94: #{swin_encoder_forward.3} parent=1 // pred_check
      _
    $region95: #{swin_encoder_forward.3} parent=1 // pred_check_branch
      %122 = sbr.rel (0) target = $region97
    $region96: #{swin_encoder_forward.3} parent=1 // pred_region
      _
    $region97: #{swin_encoder_forward.3} parent=1 // pred_fallthru
      _
    // Predicated region
    $region98: #{swin_encoder_forward.3} parent=1 // pred_check
      _
    $region99: #{swin_encoder_forward.3} parent=1 // pred_check_branch
      %124 = sbr.rel (0) target = $region101
    $region100: #{swin_encoder_forward.3} parent=1 // pred_region
      _
    $region101: #{swin_encoder_forward.3} parent=1 // pred_fallthru
      _
    // Predicated region
    $region102: #{swin_encoder_forward.3} parent=1 // pred_check
      _
    $region103: #{swin_encoder_forward.3} parent=1 // pred_check_branch
      %126 = sbr.rel (0) target = $region105
    $region104: #{swin_encoder_forward.3} parent=1 // pred_region
      _
    $region105: #{swin_encoder_forward.3} parent=1 // pred_fallthru
      _
    // Predicated region
    $region106: #{swin_encoder_forward.3} parent=1 // pred_check
      _
    $region107: #{swin_encoder_forward.3} parent=1 // pred_check_branch
      %128 = sbr.rel (0) target = $region109
    $region108: #{swin_encoder_forward.3} parent=1 // pred_region
      _
    $region109: #{swin_encoder_forward.3} parent=1 // pred_fallthru
      _
    // Predicated region
    $region110: #{swin_encoder_forward.3} parent=1 // pred_check
      _
    $region111: #{swin_encoder_forward.3} parent=1 // pred_check_branch
      %130 = sbr.rel (0) target = $region113
    $region112: #{swin_encoder_forward.3} parent=1 // pred_region
      _
    $region113: #{swin_encoder_forward.3} parent=1 // pred_fallthru
      _
    // Predicated region
    $region114: #{swin_encoder_forward.3} parent=1 // pred_check
      _
    $region115: #{swin_encoder_forward.3} parent=1 // pred_check_branch
      %132 = sbr.rel (0) target = $region117
    $region116: #{swin_encoder_forward.3} parent=1 // pred_region
      _
    $region117: #{swin_encoder_forward.3} parent=1 // pred_fallthru
      _
    // Predicated region
    $region118: #{swin_encoder_forward.3} parent=1 // pred_check
      _
    $region119: #{swin_encoder_forward.3} parent=1 // pred_check_branch
      %134 = sbr.rel (0) target = $region121
    $region120: #{swin_encoder_forward.3} parent=1 // pred_region
      _
    $region121: #{swin_encoder_forward.3} parent=1 // pred_fallthru
      _
    // Predicated region
    $region122: #{swin_encoder_forward.3} parent=1 // pred_check
      _
    $region123: #{swin_encoder_forward.3} parent=1 // pred_check_branch
      %136 = sbr.rel (0) target = $region125
    $region124: #{swin_encoder_forward.3} parent=1 // pred_region
      _
    $region125: #{swin_encoder_forward.3} parent=1 // pred_fallthru
      _
    // Predicated region
    $region126: #{swin_encoder_forward.3} parent=1 // pred_check
      _
    $region127: #{swin_encoder_forward.3} parent=1 // pred_check_branch
      %138 = sbr.rel (0) target = $region129
    $region128: #{swin_encoder_forward.3} parent=1 // pred_region
      _
    $region129: #{swin_encoder_forward.3} parent=1 // pred_fallthru
      _
    // Predicated region
    $region130: #{swin_encoder_forward.3} parent=1 // pred_check
      _
    $region131: #{swin_encoder_forward.3} parent=1 // pred_check_branch
      %140 = sbr.rel (0) target = $region133
    $region132: #{swin_encoder_forward.3} parent=1 // pred_region
      _
    $region133: #{swin_encoder_forward.3} parent=1 // pred_fallthru
      _
    // Predicated region
    $region134: #{swin_encoder_forward.3} parent=1 // pred_check
      _
    $region135: #{swin_encoder_forward.3} parent=1 // pred_check_branch
      %142 = sbr.rel (0) target = $region137
    $region136: #{swin_encoder_forward.3} parent=1 // pred_region
      _
    $region137: #{swin_encoder_forward.3} parent=1 // pred_fallthru
      _
    %v144 = vld [vmem:[%s1] sm:$0xff]
    %v145 = vld [vmem:[%s1 + $0x8] sm:$0xff]
    %v146 = vld [vmem:[%s1 + $0x10] sm:$0xff]
    %v147 = vld [vmem:[%s1 + $0x18] sm:$0xff]
    %v148 = vld [vmem:[%s3] sm:$0x1]
    %v149 = vld [vmem:[%s5] sm:$0x1]
    %150 = vadd.xlane.f32.xlu0 %v144
    %v151 = vpop.xlane.xlu0 %150
    %152 = vadd.xlane.f32.xlu0 %v145
    %v153 = vpop.xlane.xlu0 %152
    %154 = vadd.xlane.f32.xlu0 %v146
    %v155 = vpop.xlane.xlu0 %154
    %156 = vadd.xlane.f32.xlu0 %v147
    %v157 = vpop.xlane.xlu0 %156
    %v158 = vrcp.pop 128.0
    %v159 = vmul.f32 %v151, %v158
    %v160 = vmul.f32 %v153, %v158
    %v161 = vmul.f32 %v155, %v158
    %v162 = vmul.f32 %v157, %v158
    %v163 = vsub.f32 %v144, %v159
    %v164 = vsub.f32 %v145, %v160
    %v165 = vsub.f32 %v146, %v161
    %v166 = vsub.f32 %v147, %v162
    %v167 = vmul.f32 %v163, %v163
    %v168 = vmul.f32 %v164, %v164
    %v169 = vmul.f32 %v165, %v165
    %v170 = vmul.f32 %v166, %v166
    %171 = vadd.xlane.f32.xlu0 %v167
    %v172 = vpop.xlane.xlu0 %171
    %173 = vadd.xlane.f32.xlu0 %v168
    %v174 = vpop.xlane.xlu0 %173
    %175 = vadd.xlane.f32.xlu0 %v169
    %v176 = vpop.xlane.xlu0 %175
    %177 = vadd.xlane.f32.xlu0 %v170
    %v178 = vpop.xlane.xlu0 %177
    %v179 = vmul.f32 %v172, %v158
    %v180 = vmul.f32 %v174, %v158
    %v181 = vmul.f32 %v176, %v158
    %v182 = vmul.f32 %v178, %v158
    %v183 = vadd.f32 %v179, 1e-05
    %v184 = vadd.f32 %v180, 1e-05
    %v185 = vadd.f32 %v181, 1e-05
    %v186 = vadd.f32 %v182, 1e-05
    %v187 = vrsqrt.pop %v183
    %v188 = vrsqrt.pop %v184
    %v189 = vrsqrt.pop %v185
    %v190 = vrsqrt.pop %v186
    %v191 = vmul.f32 %v163, %v187
    %v192 = vmul.f32 %v164, %v188
    %v193 = vmul.f32 %v165, %v189
    %v194 = vmul.f32 %v166, %v190
    %v196 = vlaneseq
    %v197 = vshrl.u32 %v196, 7
    %v198 = vsub.s32 0, %v197
    %v199 = vrot.slane %v148, %v198
    %v201 = vmul.f32 %v191, %v199
    %v202 = vmul.f32 %v192, %v199
    %v203 = vmul.f32 %v193, %v199
    %v204 = vmul.f32 %v194, %v199
    %v206 = vlaneseq
    %v207 = vshrl.u32 %v206, 7
    %v208 = vsub.s32 0, %v207
    %v209 = vrot.slane %v149, %v208
    %v211 = vadd.f32 %v201, %v209
    %v212 = vadd.f32 %v202, %v209
    %v213 = vadd.f32 %v203, %v209
    %v214 = vadd.f32 %v204, %v209
    %v215 = vpack.c.bf16 %v212, %v211
    %v216 = vpack.c.bf16 %v214, %v213
    %v217 = vld [vmem:[%s7] sm:$0xf]
    %v218 = vld [vmem:[%s7 + $0x4] sm:$0xf]
    %v219 = vld [vmem:[%s7 + $0x8] sm:$0xf]
    %v220 = vld [vmem:[%s7 + $0xc] sm:$0xf]
    %v221 = vld [vmem:[%s7 + $0x10] sm:$0xf]
    %v222 = vld [vmem:[%s7 + $0x14] sm:$0xf]
    %v223 = vld [vmem:[%s7 + $0x18] sm:$0xf]
    %v224 = vld [vmem:[%s7 + $0x1c] sm:$0xf]
    %v225 = vld [vmem:[%s7 + $0x20] sm:$0xf]
    %v226 = vld [vmem:[%s7 + $0x24] sm:$0xf]
    %v227 = vld [vmem:[%s7 + $0x28] sm:$0xf]
    %v228 = vld [vmem:[%s7 + $0x2c] sm:$0xf]
    %v229 = vld [vmem:[%s7 + $0x30] sm:$0xf]
    %v230 = vld [vmem:[%s7 + $0x34] sm:$0xf]
    %v231 = vld [vmem:[%s7 + $0x38] sm:$0xf]
    %v232 = vld [vmem:[%s7 + $0x3c] sm:$0xf]
    %v249 = vunpack.c.l.b16 %v217
    %v250 = vunpack.c.l.b16 %v218
    %v251 = vunpack.c.l.b16 %v219
    %v252 = vunpack.c.l.b16 %v220
    %v253 = vunpack.c.l.b16 %v221
    %v254 = vunpack.c.l.b16 %v222
    %v255 = vunpack.c.l.b16 %v223
    %v256 = vunpack.c.l.b16 %v224
    %v257 = vunpack.c.l.b16 %v225
    %v258 = vunpack.c.l.b16 %v226
    %v259 = vunpack.c.l.b16 %v227
    %v260 = vunpack.c.l.b16 %v228
    %v261 = vunpack.c.l.b16 %v229
    %v262 = vunpack.c.l.b16 %v230
    %v263 = vunpack.c.l.b16 %v231
    %v264 = vunpack.c.l.b16 %v232
    %v265 = vpack.c.b16 %v250, %v249
    %v266 = vpack.c.b16 %v252, %v251
    %v267 = vpack.c.b16 %v254, %v253
    %v268 = vpack.c.b16 %v256, %v255
    %v269 = vpack.c.b16 %v258, %v257
    %v270 = vpack.c.b16 %v260, %v259
    %v271 = vpack.c.b16 %v262, %v261
    %v272 = vpack.c.b16 %v264, %v263
    %281 = vmatprep.subr.bf16.mxu0 0
    %282 = vmatpush1.bf16.msra.mxu0 %v265
    %283 = vmatprep.subr.bf16.mxu0 0
    %284 = vmatpush1.bf16.msra.mxu0 %v266
    %285 = vmatprep.subr.bf16.mxu0 0
    %286 = vmatpush1.bf16.msra.mxu0 %v267
    %287 = vmatprep.subr.bf16.mxu0 0
    %288 = vmatpush1.bf16.msra.mxu0 %v268
    %289 = vmatprep.subr.bf16.mxu0 0
    %290 = vmatpush1.bf16.msra.mxu0 %v269
    %291 = vmatprep.subr.bf16.mxu0 0
    %292 = vmatpush1.bf16.msra.mxu0 %v270
    %293 = vmatprep.subr.bf16.mxu0 0
    %294 = vmatpush1.bf16.msra.mxu0 %v271
    %295 = vmatprep.subr.bf16.mxu0 0
    %296 = vmatpush1.bf16.msra.mxu0 %v272
    %297 = vmatprep.subr.bf16.mxu0 0
    %298 = vmatpush1.bf16.msra.mxu0 0
    %299 = vmatprep.subr.bf16.mxu0 0
    %300 = vmatpush1.bf16.msra.mxu0 0
    %301 = vmatprep.subr.bf16.mxu0 0
    %302 = vmatpush1.bf16.msra.mxu0 0
    %303 = vmatprep.subr.bf16.mxu0 0
    %304 = vmatpush1.bf16.msra.mxu0 0
    %305 = vmatprep.subr.bf16.mxu0 0
    %306 = vmatpush1.bf16.msra.mxu0 0
    %307 = vmatprep.subr.bf16.mxu0 0
    %308 = vmatpush1.bf16.msra.mxu0 0
    %309 = vmatprep.subr.bf16.mxu0 0
    %310 = vmatpush1.bf16.msra.mxu0 0
    %311 = vmatprep.subr.bf16.mxu0 0
    %312 = vmatpush1.bf16.msra.mxu0 0
    %313 = vmatprep.mubr.bf16.mxu0 0
    %314 = vmatmul.mubr.bf16.gmra.mrb[0].mxu0 %v215
    %v315 = vpop.f32.mrb[0].mxu0
    %v316 = vadd.f32 0.0, %v315
    %v317 = vpop.f32.mrb[0].mxu0
    %v318 = vpop.f32.mrb[0].mxu0
    %v319 = vadd.f32 0.0, %v318
    %v320 = vpop.f32.mrb[0].mxu0
    %321 = vmatprep.mubr.bf16.mxu0 0
    %322 = vmatmul.mubr.bf16.gmra.mrb[0].mxu0 %v216
    %v323 = vpop.f32.mrb[0].mxu0
    %v324 = vadd.f32 0.0, %v323
    %v325 = vpop.f32.mrb[0].mxu0
    %v326 = vpop.f32.mrb[0].mxu0
    %v327 = vadd.f32 0.0, %v326
    %v328 = vpop.f32.mrb[0].mxu0
    %329 = vdwg.mxu0
    %v330 = vld [vmem:[%s9] sm:$0x1]
    %v331 = vld [vmem:[%s11] sm:$0x1]
    %vm332 = vcmask 523264
    %v333 = vsel %vm332, %v316, 0.0
    %334 = vadd.xlane.f32.xlu0 %v333
    %v335 = vpop.xlane.xlu0 %334
    %v336 = vsel %vm332, %v319, 0.0
    %337 = vadd.xlane.f32.xlu0 %v336
    %v338 = vpop.xlane.xlu0 %337
    %v339 = vsel %vm332, %v324, 0.0
    %340 = vadd.xlane.f32.xlu0 %v339
    %v341 = vpop.xlane.xlu0 %340
    %v342 = vsel %vm332, %v327, 0.0
    %343 = vadd.xlane.f32.xlu0 %v342
    %v344 = vpop.xlane.xlu0 %343
    %v345 = vrcp.pop 64.0
    %v346 = vmul.f32 %v335, %v345
    %v347 = vmul.f32 %v338, %v345
    %v348 = vmul.f32 %v341, %v345
    %v349 = vmul.f32 %v344, %v345
    %v350 = vsub.f32 %v316, %v346
    %v351 = vsub.f32 %v319, %v347
    %v352 = vsub.f32 %v324, %v348
    %v353 = vsub.f32 %v327, %v349
    %v354 = vmul.f32 %v350, %v350
    %v355 = vmul.f32 %v351, %v351
    %v356 = vmul.f32 %v352, %v352
    %v357 = vmul.f32 %v353, %v353
    %v358 = vsel %vm332, %v354, 0.0
    %359 = vadd.xlane.f32.xlu0 %v358
    %v360 = vpop.xlane.xlu0 %359
    %v361 = vsel %vm332, %v355, 0.0
    %362 = vadd.xlane.f32.xlu0 %v361
    %v363 = vpop.xlane.xlu0 %362
    %v364 = vsel %vm332, %v356, 0.0
    %365 = vadd.xlane.f32.xlu0 %v364
    %v366 = vpop.xlane.xlu0 %365
    %v367 = vsel %vm332, %v357, 0.0
    %368 = vadd.xlane.f32.xlu0 %v367
    %v369 = vpop.xlane.xlu0 %368
    %v370 = vmul.f32 %v360, %v345
    %v371 = vmul.f32 %v363, %v345
    %v372 = vmul.f32 %v366, %v345
    %v373 = vmul.f32 %v369, %v345
    %v374 = vadd.f32 %v370, 1e-05
    %v375 = vadd.f32 %v371, 1e-05
    %v376 = vadd.f32 %v372, 1e-05
    %v377 = vadd.f32 %v373, 1e-05
    %v378 = vrsqrt.pop %v374
    %v379 = vrsqrt.pop %v375
    %v380 = vrsqrt.pop %v376
    %v381 = vrsqrt.pop %v377
    %v382 = vmul.f32 %v350, %v378
    %v383 = vmul.f32 %v351, %v379
    %v384 = vmul.f32 %v352, %v380
    %v385 = vmul.f32 %v353, %v381
    %v387 = vlaneseq
    %v388 = vshrl.u32 %v387, 7
    %v389 = vsub.s32 0, %v388
    %v390 = vrot.slane %v330, %v389
    %v392 = vmul.f32 %v382, %v390
    %v393 = vmul.f32 %v383, %v390
    %v394 = vmul.f32 %v384, %v390
    %v395 = vmul.f32 %v385, %v390
    %v397 = vlaneseq
    %v398 = vshrl.u32 %v397, 7
    %v399 = vsub.s32 0, %v398
    %v400 = vrot.slane %v331, %v399
    %v402 = vadd.f32 %v392, %v400
    %v403 = vadd.f32 %v393, %v400
    %v404 = vadd.f32 %v394, %v400
    %v405 = vadd.f32 %v395, %v400
    %v406 = vpack.c.bf16 %v403, %v402
    %v407 = vpack.c.bf16 %v405, %v404
    %v408 = vld [vmem:[%s13] sm:$0xff]
    %v409 = vld [vmem:[%s13 + $0x8] sm:$0xff]
    %v410 = vld [vmem:[%s13 + $0x10] sm:$0xff]
    %v411 = vld [vmem:[%s13 + $0x18] sm:$0xff]
    %v412 = vld [vmem:[%s13 + $0x20] sm:$0xff]
    %v413 = vld [vmem:[%s13 + $0x28] sm:$0xff]
    %v414 = vld [vmem:[%s13 + $0x30] sm:$0xff]
    %v415 = vld [vmem:[%s13 + $0x38] sm:$0xff]
    %v416 = vld [vmem:[%s15] sm:$0x3]
    %v418 = vlaneseq
    %v419 = vshrl.u32 %v418, 7
    %v420 = vsub.s32 0, %v419
    %v421 = vrot.slane %v416, %v420
    %v422 = vlaneseq
    %v423 = vshrl.u32 %v422, 7
    %v424 = vsub.s32 1, %v423
    %v425 = vrot.slane %v416, %v424
    %v436 = vunpack.c.l.b16 %v408
    %v437 = vunpack.c.h.b16 %v408
    %v438 = vunpack.c.l.b16 %v409
    %v439 = vunpack.c.h.b16 %v409
    %v440 = vunpack.c.l.b16 %v410
    %v441 = vunpack.c.h.b16 %v410
    %v442 = vunpack.c.l.b16 %v411
    %v443 = vunpack.c.h.b16 %v411
    %v444 = vunpack.c.l.b16 %v412
    %v445 = vunpack.c.h.b16 %v412
    %v446 = vunpack.c.l.b16 %v413
    %v447 = vunpack.c.h.b16 %v413
    %v448 = vunpack.c.l.b16 %v414
    %v449 = vunpack.c.h.b16 %v414
    %v450 = vunpack.c.l.b16 %v415
    %v451 = vunpack.c.h.b16 %v415
    %v452 = vpack.c.b16 %v438, %v436
    %v453 = vpack.c.b16 %v439, %v437
    %v454 = vpack.c.b16 %v442, %v440
    %v455 = vpack.c.b16 %v443, %v441
    %v456 = vpack.c.b16 %v446, %v444
    %v457 = vpack.c.b16 %v447, %v445
    %v458 = vpack.c.b16 %v450, %v448
    %v459 = vpack.c.b16 %v451, %v449
    %v469 = vsel %vm332, %v406, 0
    %v472 = vsel %vm332, %v407, 0
    %474 = vmatprep.subr.bf16.mxu0 %v453
    %475 = vmatpush1.bf16.msra.mxu0 %v452
    %476 = vmatprep.subr.bf16.mxu0 %v455
    %477 = vmatpush1.bf16.msra.mxu0 %v454
    %478 = vmatprep.subr.bf16.mxu0 %v457
    %479 = vmatpush1.bf16.msra.mxu0 %v456
    %480 = vmatprep.subr.bf16.mxu0 %v459
    %481 = vmatpush1.bf16.msra.mxu0 %v458
    %482 = vmatprep.subr.bf16.mxu0 0
    %483 = vmatpush1.bf16.msra.mxu0 0
    %484 = vmatprep.subr.bf16.mxu0 0
    %485 = vmatpush1.bf16.msra.mxu0 0
    %486 = vmatprep.subr.bf16.mxu0 0
    %487 = vmatpush1.bf16.msra.mxu0 0
    %488 = vmatprep.subr.bf16.mxu0 0
    %489 = vmatpush1.bf16.msra.mxu0 0
    %490 = vmatprep.subr.bf16.mxu0 0
    %491 = vmatpush1.bf16.msra.mxu0 0
    %492 = vmatprep.subr.bf16.mxu0 0
    %493 = vmatpush1.bf16.msra.mxu0 0
    %494 = vmatprep.subr.bf16.mxu0 0
    %495 = vmatpush1.bf16.msra.mxu0 0
    %496 = vmatprep.subr.bf16.mxu0 0
    %497 = vmatpush1.bf16.msra.mxu0 0
    %498 = vmatprep.subr.bf16.mxu0 0
    %499 = vmatpush1.bf16.msra.mxu0 0
    %500 = vmatprep.subr.bf16.mxu0 0
    %501 = vmatpush1.bf16.msra.mxu0 0
    %502 = vmatprep.subr.bf16.mxu0 0
    %503 = vmatpush1.bf16.msra.mxu0 0
    %504 = vmatprep.subr.bf16.mxu0 0
    %505 = vmatpush1.bf16.msra.mxu0 0
    %506 = vmatprep.mubr.bf16.mxu0 0
    %507 = vmatmul.mubr.bf16.gmra.mrb[0].mxu0 %v469
    %v508 = vpop.f32.mrb[0].mxu0
    %v509 = vadd.f32 %v421, %v508
    %v510 = vpop.f32.mrb[0].mxu0
    %v511 = vadd.f32 %v425, %v510
    %v512 = vpop.f32.mrb[0].mxu0
    %v513 = vadd.f32 %v421, %v512
    %v514 = vpop.f32.mrb[0].mxu0
    %v515 = vadd.f32 %v425, %v514
    %516 = vmatprep.mubr.bf16.mxu0 0
    %517 = vmatmul.mubr.bf16.gmra.mrb[0].mxu0 %v472
    %v518 = vpop.f32.mrb[0].mxu0
    %v519 = vadd.f32 %v421, %v518
    %v520 = vpop.f32.mrb[0].mxu0
    %v521 = vadd.f32 %v425, %v520
    %v522 = vpop.f32.mrb[0].mxu0
    %v523 = vadd.f32 %v421, %v522
    %v524 = vpop.f32.mrb[0].mxu0
    %v525 = vadd.f32 %v425, %v524
    %526 = vdwg.mxu0
    %531 = vrot.lane.b32.xlu0 %v509, 112
    %v532 = vpop.permute.xlu0 %531
    %533 = vrot.lane.b32.xlu0 %v513, 112
    %v534 = vpop.permute.xlu0 %533
    %535 = vrot.lane.b32.xlu0 %v519, 112
    %v536 = vpop.permute.xlu0 %535
    %537 = vrot.lane.b32.xlu0 %v523, 112
    %v538 = vpop.permute.xlu0 %537
    %543 = vrot.lane.b32.xlu0 %v509, 96
    %v544 = vpop.permute.xlu0 %543
    %545 = vrot.lane.b32.xlu0 %v513, 96
    %v546 = vpop.permute.xlu0 %545
    %547 = vrot.lane.b32.xlu0 %v519, 96
    %v548 = vpop.permute.xlu0 %547
    %549 = vrot.lane.b32.xlu0 %v523, 96
    %v550 = vpop.permute.xlu0 %549
    %555 = vrot.lane.b32.xlu0 %v509, 80
    %v556 = vpop.permute.xlu0 %555
    %557 = vrot.lane.b32.xlu0 %v513, 80
    %v558 = vpop.permute.xlu0 %557
    %559 = vrot.lane.b32.xlu0 %v519, 80
    %v560 = vpop.permute.xlu0 %559
    %561 = vrot.lane.b32.xlu0 %v523, 80
    %v562 = vpop.permute.xlu0 %561
    %571 = vrot.lane.b32.xlu0 %v511, 112
    %v572 = vpop.permute.xlu0 %571
    %573 = vrot.lane.b32.xlu0 %v515, 112
    %v574 = vpop.permute.xlu0 %573
    %575 = vrot.lane.b32.xlu0 %v521, 112
    %v576 = vpop.permute.xlu0 %575
    %577 = vrot.lane.b32.xlu0 %v525, 112
    %v578 = vpop.permute.xlu0 %577
    %583 = vrot.lane.b32.xlu0 %v511, 96
    %v584 = vpop.permute.xlu0 %583
    %585 = vrot.lane.b32.xlu0 %v515, 96
    %v586 = vpop.permute.xlu0 %585
    %587 = vrot.lane.b32.xlu0 %v521, 96
    %v588 = vpop.permute.xlu0 %587
    %589 = vrot.lane.b32.xlu0 %v525, 96
    %v590 = vpop.permute.xlu0 %589
    %595 = vrot.lane.b32.xlu0 %v511, 80
    %v596 = vpop.permute.xlu0 %595
    %597 = vrot.lane.b32.xlu0 %v515, 80
    %v598 = vpop.permute.xlu0 %597
    %599 = vrot.lane.b32.xlu0 %v521, 80
    %v600 = vpop.permute.xlu0 %599
    %601 = vrot.lane.b32.xlu0 %v525, 80
    %v602 = vpop.permute.xlu0 %601
    %v607 = vpack.c.bf16 %v513, %v509
    %v608 = vpack.c.bf16 %v523, %v519
    %v609 = vpack.c.bf16 %v534, %v532
    %v610 = vpack.c.bf16 %v538, %v536
    %v611 = vpack.c.bf16 %v546, %v544
    %v612 = vpack.c.bf16 %v550, %v548
    %v613 = vpack.c.bf16 %v558, %v556
    %v614 = vpack.c.bf16 %v562, %v560
    %616 = vrot.lane.b32.xlu0 %v607, 64
    %v617 = vpop.permute.xlu0 %616
    %vm618 = vcmask 130048
    %v620 = vsel %vm618, %v607, 0
    %v623 = vsel %vm618, %v617, 0
    %625 = vmatprep.subr.bf16.mxu0 0
    %626 = vmatpush1.bf16.xpose.msra.mxu0 %v623
    %627 = vmatprep.subr.bf16.mxu0 0
    %628 = vmatpush1.bf16.xpose.msra.mxu0 0
    %629 = vmatprep.subr.bf16.mxu0 0
    %630 = vmatpush1.bf16.xpose.msra.mxu0 0
    %631 = vmatprep.subr.bf16.mxu0 0
    %632 = vmatpush1.bf16.xpose.msra.mxu0 0
    %633 = vmatprep.subr.bf16.mxu0 0
    %634 = vmatpush1.bf16.xpose.msra.mxu0 0
    %635 = vmatprep.subr.bf16.mxu0 0
    %636 = vmatpush1.bf16.xpose.msra.mxu0 0
    %637 = vmatprep.subr.bf16.mxu0 0
    %638 = vmatpush1.bf16.xpose.msra.mxu0 0
    %639 = vmatprep.subr.bf16.mxu0 0
    %640 = vmatpush1.bf16.xpose.msra.mxu0 0
    %641 = vmatprep.subr.bf16.mxu0 0
    %642 = vmatpush1.bf16.xpose.msra.mxu0 0
    %643 = vmatprep.subr.bf16.mxu0 0
    %644 = vmatpush1.bf16.xpose.msra.mxu0 0
    %645 = vmatprep.subr.bf16.mxu0 0
    %646 = vmatpush1.bf16.xpose.msra.mxu0 0
    %647 = vmatprep.subr.bf16.mxu0 0
    %648 = vmatpush1.bf16.xpose.msra.mxu0 0
    %649 = vmatprep.subr.bf16.mxu0 0
    %650 = vmatpush1.bf16.xpose.msra.mxu0 0
    %651 = vmatprep.subr.bf16.mxu0 0
    %652 = vmatpush1.bf16.xpose.msra.mxu0 0
    %653 = vmatprep.subr.bf16.mxu0 0
    %654 = vmatpush1.bf16.xpose.msra.mxu0 0
    %655 = vmatprep.subr.bf16.mxu0 0
    %656 = vmatpush1.bf16.xpose.msra.mxu0 0
    %657 = vmatprep.mubr.bf16.mxu0 0
    %658 = vmatmul.mubr.bf16.gmra.mrb[0].mxu0 %v620
    %v659 = vpop.f32.mrb[0].mxu0
    %v660 = vadd.f32 0.0, %v659
    %v661 = vpop.f32.mrb[0].mxu0
    %v662 = vpop.f32.mrb[0].mxu0
    %v663 = vadd.f32 0.0, %v662
    %v664 = vpop.f32.mrb[0].mxu0
    %665 = vdwg.mxu0
    %667 = vrot.lane.b32.xlu0 %v608, 64
    %v668 = vpop.permute.xlu0 %667
    %v670 = vsel %vm618, %v608, 0
    %v673 = vsel %vm618, %v668, 0
    %675 = vmatprep.subr.bf16.mxu0 0
    %676 = vmatpush1.bf16.xpose.msra.mxu0 %v673
    %677 = vmatprep.subr.bf16.mxu0 0
    %678 = vmatpush1.bf16.xpose.msra.mxu0 0
    %679 = vmatprep.subr.bf16.mxu0 0
    %680 = vmatpush1.bf16.xpose.msra.mxu0 0
    %681 = vmatprep.subr.bf16.mxu0 0
    %682 = vmatpush1.bf16.xpose.msra.mxu0 0
    %683 = vmatprep.subr.bf16.mxu0 0
    %684 = vmatpush1.bf16.xpose.msra.mxu0 0
    %685 = vmatprep.subr.bf16.mxu0 0
    %686 = vmatpush1.bf16.xpose.msra.mxu0 0
    %687 = vmatprep.subr.bf16.mxu0 0
    %688 = vmatpush1.bf16.xpose.msra.mxu0 0
    %689 = vmatprep.subr.bf16.mxu0 0
    %690 = vmatpush1.bf16.xpose.msra.mxu0 0
    %691 = vmatprep.subr.bf16.mxu0 0
    %692 = vmatpush1.bf16.xpose.msra.mxu0 0
    %693 = vmatprep.subr.bf16.mxu0 0
    %694 = vmatpush1.bf16.xpose.msra.mxu0 0
    %695 = vmatprep.subr.bf16.mxu0 0
    %696 = vmatpush1.bf16.xpose.msra.mxu0 0
    %697 = vmatprep.subr.bf16.mxu0 0
    %698 = vmatpush1.bf16.xpose.msra.mxu0 0
    %699 = vmatprep.subr.bf16.mxu0 0
    %700 = vmatpush1.bf16.xpose.msra.mxu0 0
    %701 = vmatprep.subr.bf16.mxu0 0
    %702 = vmatpush1.bf16.xpose.msra.mxu0 0
    %703 = vmatprep.subr.bf16.mxu0 0
    %704 = vmatpush1.bf16.xpose.msra.mxu0 0
    %705 = vmatprep.subr.bf16.mxu0 0
    %706 = vmatpush1.bf16.xpose.msra.mxu0 0
    %707 = vmatprep.mubr.bf16.mxu0 0
    %708 = vmatmul.mubr.bf16.gmra.mrb[0].mxu0 %v670
    %v709 = vpop.f32.mrb[0].mxu0
    %v710 = vadd.f32 0.0, %v709
    %v711 = vpop.f32.mrb[0].mxu0
    %v712 = vpop.f32.mrb[0].mxu0
    %v713 = vadd.f32 0.0, %v712
    %v714 = vpop.f32.mrb[0].mxu0
    %715 = vdwg.mxu0
    %717 = vrot.lane.b32.xlu0 %v609, 64
    %v718 = vpop.permute.xlu0 %717
    %v720 = vsel %vm618, %v609, 0
    %v723 = vsel %vm618, %v718, 0
    %725 = vmatprep.subr.bf16.mxu0 0
    %726 = vmatpush1.bf16.xpose.msra.mxu0 %v723
    %727 = vmatprep.subr.bf16.mxu0 0
    %728 = vmatpush1.bf16.xpose.msra.mxu0 0
    %729 = vmatprep.subr.bf16.mxu0 0
    %730 = vmatpush1.bf16.xpose.msra.mxu0 0
    %731 = vmatprep.subr.bf16.mxu0 0
    %732 = vmatpush1.bf16.xpose.msra.mxu0 0
    %733 = vmatprep.subr.bf16.mxu0 0
    %734 = vmatpush1.bf16.xpose.msra.mxu0 0
    %735 = vmatprep.subr.bf16.mxu0 0
    %736 = vmatpush1.bf16.xpose.msra.mxu0 0
    %737 = vmatprep.subr.bf16.mxu0 0
    %738 = vmatpush1.bf16.xpose.msra.mxu0 0
    %739 = vmatprep.subr.bf16.mxu0 0
    %740 = vmatpush1.bf16.xpose.msra.mxu0 0
    %741 = vmatprep.subr.bf16.mxu0 0
    %742 = vmatpush1.bf16.xpose.msra.mxu0 0
    %743 = vmatprep.subr.bf16.mxu0 0
    %744 = vmatpush1.bf16.xpose.msra.mxu0 0
    %745 = vmatprep.subr.bf16.mxu0 0
    %746 = vmatpush1.bf16.xpose.msra.mxu0 0
    %747 = vmatprep.subr.bf16.mxu0 0
    %748 = vmatpush1.bf16.xpose.msra.mxu0 0
    %749 = vmatprep.subr.bf16.mxu0 0
    %750 = vmatpush1.bf16.xpose.msra.mxu0 0
    %751 = vmatprep.subr.bf16.mxu0 0
    %752 = vmatpush1.bf16.xpose.msra.mxu0 0
    %753 = vmatprep.subr.bf16.mxu0 0
    %754 = vmatpush1.bf16.xpose.msra.mxu0 0
    %755 = vmatprep.subr.bf16.mxu0 0
    %756 = vmatpush1.bf16.xpose.msra.mxu0 0
    %757 = vmatprep.mubr.bf16.mxu0 0
    %758 = vmatmul.mubr.bf16.gmra.mrb[0].mxu0 %v720
    %v759 = vpop.f32.mrb[0].mxu0
    %v760 = vadd.f32 0.0, %v759
    %v761 = vpop.f32.mrb[0].mxu0
    %v762 = vpop.f32.mrb[0].mxu0
    %v763 = vadd.f32 0.0, %v762
    %v764 = vpop.f32.mrb[0].mxu0
    %765 = vdwg.mxu0
    %767 = vrot.lane.b32.xlu0 %v610, 64
    %v768 = vpop.permute.xlu0 %767
    %v770 = vsel %vm618, %v610, 0
    %v773 = vsel %vm618, %v768, 0
    %775 = vmatprep.subr.bf16.mxu0 0
    %776 = vmatpush1.bf16.xpose.msra.mxu0 %v773
    %777 = vmatprep.subr.bf16.mxu0 0
    %778 = vmatpush1.bf16.xpose.msra.mxu0 0
    %779 = vmatprep.subr.bf16.mxu0 0
    %780 = vmatpush1.bf16.xpose.msra.mxu0 0
    %781 = vmatprep.subr.bf16.mxu0 0
    %782 = vmatpush1.bf16.xpose.msra.mxu0 0
    %783 = vmatprep.subr.bf16.mxu0 0
    %784 = vmatpush1.bf16.xpose.msra.mxu0 0
    %785 = vmatprep.subr.bf16.mxu0 0
    %786 = vmatpush1.bf16.xpose.msra.mxu0 0
    %787 = vmatprep.subr.bf16.mxu0 0
    %788 = vmatpush1.bf16.xpose.msra.mxu0 0
    %789 = vmatprep.subr.bf16.mxu0 0
    %790 = vmatpush1.bf16.xpose.msra.mxu0 0
    %791 = vmatprep.subr.bf16.mxu0 0
    %792 = vmatpush1.bf16.xpose.msra.mxu0 0
    %793 = vmatprep.subr.bf16.mxu0 0
    %794 = vmatpush1.bf16.xpose.msra.mxu0 0
    %795 = vmatprep.subr.bf16.mxu0 0
    %796 = vmatpush1.bf16.xpose.msra.mxu0 0
    %797 = vmatprep.subr.bf16.mxu0 0
    %798 = vmatpush1.bf16.xpose.msra.mxu0 0
    %799 = vmatprep.subr.bf16.mxu0 0
    %800 = vmatpush1.bf16.xpose.msra.mxu0 0
    %801 = vmatprep.subr.bf16.mxu0 0
    %802 = vmatpush1.bf16.xpose.msra.mxu0 0
    %803 = vmatprep.subr.bf16.mxu0 0
    %804 = vmatpush1.bf16.xpose.msra.mxu0 0
    %805 = vmatprep.subr.bf16.mxu0 0
    %806 = vmatpush1.bf16.xpose.msra.mxu0 0
    %807 = vmatprep.mubr.bf16.mxu0 0
    %808 = vmatmul.mubr.bf16.gmra.mrb[0].mxu0 %v770
    %v809 = vpop.f32.mrb[0].mxu0
    %v810 = vadd.f32 0.0, %v809
    %v811 = vpop.f32.mrb[0].mxu0
    %v812 = vpop.f32.mrb[0].mxu0
    %v813 = vadd.f32 0.0, %v812
    %v814 = vpop.f32.mrb[0].mxu0
    %815 = vdwg.mxu0
    %817 = vrot.lane.b32.xlu0 %v611, 64
    %v818 = vpop.permute.xlu0 %817
    %v820 = vsel %vm618, %v611, 0
    %v823 = vsel %vm618, %v818, 0
    %825 = vmatprep.subr.bf16.mxu0 0
    %826 = vmatpush1.bf16.xpose.msra.mxu0 %v823
    %827 = vmatprep.subr.bf16.mxu0 0
    %828 = vmatpush1.bf16.xpose.msra.mxu0 0
    %829 = vmatprep.subr.bf16.mxu0 0
    %830 = vmatpush1.bf16.xpose.msra.mxu0 0
    %831 = vmatprep.subr.bf16.mxu0 0
    %832 = vmatpush1.bf16.xpose.msra.mxu0 0
    %833 = vmatprep.subr.bf16.mxu0 0
    %834 = vmatpush1.bf16.xpose.msra.mxu0 0
    %835 = vmatprep.subr.bf16.mxu0 0
    %836 = vmatpush1.bf16.xpose.msra.mxu0 0
    %837 = vmatprep.subr.bf16.mxu0 0
    %838 = vmatpush1.bf16.xpose.msra.mxu0 0
    %839 = vmatprep.subr.bf16.mxu0 0
    %840 = vmatpush1.bf16.xpose.msra.mxu0 0
    %841 = vmatprep.subr.bf16.mxu0 0
    %842 = vmatpush1.bf16.xpose.msra.mxu0 0
    %843 = vmatprep.subr.bf16.mxu0 0
    %844 = vmatpush1.bf16.xpose.msra.mxu0 0
    %845 = vmatprep.subr.bf16.mxu0 0
    %846 = vmatpush1.bf16.xpose.msra.mxu0 0
    %847 = vmatprep.subr.bf16.mxu0 0
    %848 = vmatpush1.bf16.xpose.msra.mxu0 0
    %849 = vmatprep.subr.bf16.mxu0 0
    %850 = vmatpush1.bf16.xpose.msra.mxu0 0
    %851 = vmatprep.subr.bf16.mxu0 0
    %852 = vmatpush1.bf16.xpose.msra.mxu0 0
    %853 = vmatprep.subr.bf16.mxu0 0
    %854 = vmatpush1.bf16.xpose.msra.mxu0 0
    %855 = vmatprep.subr.bf16.mxu0 0
    %856 = vmatpush1.bf16.xpose.msra.mxu0 0
    %857 = vmatprep.mubr.bf16.mxu0 0
    %858 = vmatmul.mubr.bf16.gmra.mrb[0].mxu0 %v820
    %v859 = vpop.f32.mrb[0].mxu0
    %v860 = vadd.f32 0.0, %v859
    %v861 = vpop.f32.mrb[0].mxu0
    %v862 = vpop.f32.mrb[0].mxu0
    %v863 = vadd.f32 0.0, %v862
    %v864 = vpop.f32.mrb[0].mxu0
    %865 = vdwg.mxu0
    %867 = vrot.lane.b32.xlu0 %v612, 64
    %v868 = vpop.permute.xlu0 %867
    %v870 = vsel %vm618, %v612, 0
    %v873 = vsel %vm618, %v868, 0
    %875 = vmatprep.subr.bf16.mxu0 0
    %876 = vmatpush1.bf16.xpose.msra.mxu0 %v873
    %877 = vmatprep.subr.bf16.mxu0 0
    %878 = vmatpush1.bf16.xpose.msra.mxu0 0
    %879 = vmatprep.subr.bf16.mxu0 0
    %880 = vmatpush1.bf16.xpose.msra.mxu0 0
    %881 = vmatprep.subr.bf16.mxu0 0
    %882 = vmatpush1.bf16.xpose.msra.mxu0 0
    %883 = vmatprep.subr.bf16.mxu0 0
    %884 = vmatpush1.bf16.xpose.msra.mxu0 0
    %885 = vmatprep.subr.bf16.mxu0 0
    %886 = vmatpush1.bf16.xpose.msra.mxu0 0
    %887 = vmatprep.subr.bf16.mxu0 0
    %888 = vmatpush1.bf16.xpose.msra.mxu0 0
    %889 = vmatprep.subr.bf16.mxu0 0
    %890 = vmatpush1.bf16.xpose.msra.mxu0 0
    %891 = vmatprep.subr.bf16.mxu0 0
    %892 = vmatpush1.bf16.xpose.msra.mxu0 0
    %893 = vmatprep.subr.bf16.mxu0 0
    %894 = vmatpush1.bf16.xpose.msra.mxu0 0
    %895 = vmatprep.subr.bf16.mxu0 0
    %896 = vmatpush1.bf16.xpose.msra.mxu0 0
    %897 = vmatprep.subr.bf16.mxu0 0
    %898 = vmatpush1.bf16.xpose.msra.mxu0 0
    %899 = vmatprep.subr.bf16.mxu0 0
    %900 = vmatpush1.bf16.xpose.msra.mxu0 0
    %901 = vmatprep.subr.bf16.mxu0 0
    %902 = vmatpush1.bf16.xpose.msra.mxu0 0
    %903 = vmatprep.subr.bf16.mxu0 0
    %904 = vmatpush1.bf16.xpose.msra.mxu0 0
    %905 = vmatprep.subr.bf16.mxu0 0
    %906 = vmatpush1.bf16.xpose.msra.mxu0 0
    %907 = vmatprep.mubr.bf16.mxu0 0
    %908 = vmatmul.mubr.bf16.gmra.mrb[0].mxu0 %v870
    %v909 = vpop.f32.mrb[0].mxu0
    %v910 = vadd.f32 0.0, %v909
    %v911 = vpop.f32.mrb[0].mxu0
    %v912 = vpop.f32.mrb[0].mxu0
    %v913 = vadd.f32 0.0, %v912
    %v914 = vpop.f32.mrb[0].mxu0
    %915 = vdwg.mxu0
    %917 = vrot.lane.b32.xlu0 %v613, 64
    %v918 = vpop.permute.xlu0 %917
    %v920 = vsel %vm618, %v613, 0
    %v923 = vsel %vm618, %v918, 0
    %925 = vmatprep.subr.bf16.mxu0 0
    %926 = vmatpush1.bf16.xpose.msra.mxu0 %v923
    %927 = vmatprep.subr.bf16.mxu0 0
    %928 = vmatpush1.bf16.xpose.msra.mxu0 0
    %929 = vmatprep.subr.bf16.mxu0 0
    %930 = vmatpush1.bf16.xpose.msra.mxu0 0
    %931 = vmatprep.subr.bf16.mxu0 0
    %932 = vmatpush1.bf16.xpose.msra.mxu0 0
    %933 = vmatprep.subr.bf16.mxu0 0
    %934 = vmatpush1.bf16.xpose.msra.mxu0 0
    %935 = vmatprep.subr.bf16.mxu0 0
    %936 = vmatpush1.bf16.xpose.msra.mxu0 0
    %937 = vmatprep.subr.bf16.mxu0 0
    %938 = vmatpush1.bf16.xpose.msra.mxu0 0
    %939 = vmatprep.subr.bf16.mxu0 0
    %940 = vmatpush1.bf16.xpose.msra.mxu0 0
    %941 = vmatprep.subr.bf16.mxu0 0
    %942 = vmatpush1.bf16.xpose.msra.mxu0 0
    %943 = vmatprep.subr.bf16.mxu0 0
    %944 = vmatpush1.bf16.xpose.msra.mxu0 0
    %945 = vmatprep.subr.bf16.mxu0 0
    %946 = vmatpush1.bf16.xpose.msra.mxu0 0
    %947 = vmatprep.subr.bf16.mxu0 0
    %948 = vmatpush1.bf16.xpose.msra.mxu0 0
    %949 = vmatprep.subr.bf16.mxu0 0
    %950 = vmatpush1.bf16.xpose.msra.mxu0 0
    %951 = vmatprep.subr.bf16.mxu0 0
    %952 = vmatpush1.bf16.xpose.msra.mxu0 0
    %953 = vmatprep.subr.bf16.mxu0 0
    %954 = vmatpush1.bf16.xpose.msra.mxu0 0
    %955 = vmatprep.subr.bf16.mxu0 0
    %956 = vmatpush1.bf16.xpose.msra.mxu0 0
    %957 = vmatprep.mubr.bf16.mxu0 0
    %958 = vmatmul.mubr.bf16.gmra.mrb[0].mxu0 %v920
    %v959 = vpop.f32.mrb[0].mxu0
    %v960 = vadd.f32 0.0, %v959
    %v961 = vpop.f32.mrb[0].mxu0
    %v962 = vpop.f32.mrb[0].mxu0
    %v963 = vadd.f32 0.0, %v962
    %v964 = vpop.f32.mrb[0].mxu0
    %965 = vdwg.mxu0
    %967 = vrot.lane.b32.xlu0 %v614, 64
    %v968 = vpop.permute.xlu0 %967
    %v970 = vsel %vm618, %v614, 0
    %v973 = vsel %vm618, %v968, 0
    %975 = vmatprep.subr.bf16.mxu0 0
    %976 = vmatpush1.bf16.xpose.msra.mxu0 %v973
    %977 = vmatprep.subr.bf16.mxu0 0
    %978 = vmatpush1.bf16.xpose.msra.mxu0 0
    %979 = vmatprep.subr.bf16.mxu0 0
    %980 = vmatpush1.bf16.xpose.msra.mxu0 0
    %981 = vmatprep.subr.bf16.mxu0 0
    %982 = vmatpush1.bf16.xpose.msra.mxu0 0
    %983 = vmatprep.subr.bf16.mxu0 0
    %984 = vmatpush1.bf16.xpose.msra.mxu0 0
    %985 = vmatprep.subr.bf16.mxu0 0
    %986 = vmatpush1.bf16.xpose.msra.mxu0 0
    %987 = vmatprep.subr.bf16.mxu0 0
    %988 = vmatpush1.bf16.xpose.msra.mxu0 0
    %989 = vmatprep.subr.bf16.mxu0 0
    %990 = vmatpush1.bf16.xpose.msra.mxu0 0
    %991 = vmatprep.subr.bf16.mxu0 0
    %992 = vmatpush1.bf16.xpose.msra.mxu0 0
    %993 = vmatprep.subr.bf16.mxu0 0
    %994 = vmatpush1.bf16.xpose.msra.mxu0 0
    %995 = vmatprep.subr.bf16.mxu0 0
    %996 = vmatpush1.bf16.xpose.msra.mxu0 0
    %997 = vmatprep.subr.bf16.mxu0 0
    %998 = vmatpush1.bf16.xpose.msra.mxu0 0
    %999 = vmatprep.subr.bf16.mxu0 0
    %1000 = vmatpush1.bf16.xpose.msra.mxu0 0
    %1001 = vmatprep.subr.bf16.mxu0 0
    %1002 = vmatpush1.bf16.xpose.msra.mxu0 0
    %1003 = vmatprep.subr.bf16.mxu0 0
    %1004 = vmatpush1.bf16.xpose.msra.mxu0 0
    %1005 = vmatprep.subr.bf16.mxu0 0
    %1006 = vmatpush1.bf16.xpose.msra.mxu0 0
    %1007 = vmatprep.mubr.bf16.mxu0 0
    %1008 = vmatmul.mubr.bf16.gmra.mrb[0].mxu0 %v970
    %v1009 = vpop.f32.mrb[0].mxu0
    %v1010 = vadd.f32 0.0, %v1009
    %v1011 = vpop.f32.mrb[0].mxu0
    %v1012 = vpop.f32.mrb[0].mxu0
    %v1013 = vadd.f32 0.0, %v1012
    %v1014 = vpop.f32.mrb[0].mxu0
    %1015 = vdwg.mxu0
    %v1016 = vld [vmem:[%s17] sm:$0xff]
    %v1017 = vld [vmem:[%s17 + $0x8] sm:$0xff]
    %v1018 = vld [vmem:[%s17 + $0x10] sm:$0xff]
    %v1019 = vld [vmem:[%s17 + $0x18] sm:$0xff]
    %v1020 = vld [vmem:[%s17 + $0x20] sm:$0xff]
    %v1021 = vld [vmem:[%s17 + $0x28] sm:$0xff]
    %v1022 = vld [vmem:[%s17 + $0x30] sm:$0xff]
    %v1023 = vld [vmem:[%s17 + $0x38] sm:$0xff]
    %v1024 = vadd.f32 %v660, %v1016
    %v1025 = vadd.f32 %v663, %v1017
    %v1026 = vadd.f32 %v710, %v1016
    %v1027 = vadd.f32 %v713, %v1017
    %v1028 = vadd.f32 %v760, %v1018
    %v1029 = vadd.f32 %v763, %v1019
    %v1030 = vadd.f32 %v810, %v1018
    %v1031 = vadd.f32 %v813, %v1019
    %v1032 = vadd.f32 %v860, %v1020
    %v1033 = vadd.f32 %v863, %v1021
    %v1034 = vadd.f32 %v910, %v1020
    %v1035 = vadd.f32 %v913, %v1021
    %v1036 = vadd.f32 %v960, %v1022
    %v1037 = vadd.f32 %v963, %v1023
    %v1038 = vadd.f32 %v1010, %v1022
    %v1039 = vadd.f32 %v1013, %v1023
    %v1040 = vsel %vm618, %v1024, -inf
    %1041 = vmax.xlane.f32.xlu0 %v1040
    %v1042 = vpop.xlane.xlu0 %1041
    %v1043 = vsel %vm618, %v1025, -inf
    %1044 = vmax.xlane.f32.xlu0 %v1043
    %v1045 = vpop.xlane.xlu0 %1044
    %v1046 = vsel %vm618, %v1026, -inf
    %1047 = vmax.xlane.f32.xlu0 %v1046
    %v1048 = vpop.xlane.xlu0 %1047
    %v1049 = vsel %vm618, %v1027, -inf
    %1050 = vmax.xlane.f32.xlu0 %v1049
    %v1051 = vpop.xlane.xlu0 %1050
    %v1052 = vsel %vm618, %v1028, -inf
    %1053 = vmax.xlane.f32.xlu0 %v1052
    %v1054 = vpop.xlane.xlu0 %1053
    %v1055 = vsel %vm618, %v1029, -inf
    %1056 = vmax.xlane.f32.xlu0 %v1055
    %v1057 = vpop.xlane.xlu0 %1056
    %v1058 = vsel %vm618, %v1030, -inf
    %1059 = vmax.xlane.f32.xlu0 %v1058
    %v1060 = vpop.xlane.xlu0 %1059
    %v1061 = vsel %vm618, %v1031, -inf
    %1062 = vmax.xlane.f32.xlu0 %v1061
    %v1063 = vpop.xlane.xlu0 %1062
    %v1064 = vsel %vm618, %v1032, -inf
    %1065 = vmax.xlane.f32.xlu0 %v1064
    %v1066 = vpop.xlane.xlu0 %1065
    %v1067 = vsel %vm618, %v1033, -inf
    %1068 = vmax.xlane.f32.xlu0 %v1067
    %v1069 = vpop.xlane.xlu0 %1068
    %v1070 = vsel %vm618, %v1034, -inf
    %1071 = vmax.xlane.f32.xlu0 %v1070
    %v1072 = vpop.xlane.xlu0 %1071
    %v1073 = vsel %vm618, %v1035, -inf
    %1074 = vmax.xlane.f32.xlu0 %v1073
    %v1075 = vpop.xlane.xlu0 %1074
    %v1076 = vsel %vm618, %v1036, -inf
    %1077 = vmax.xlane.f32.xlu0 %v1076
    %v1078 = vpop.xlane.xlu0 %1077
    %v1079 = vsel %vm618, %v1037, -inf
    %1080 = vmax.xlane.f32.xlu0 %v1079
    %v1081 = vpop.xlane.xlu0 %1080
    %v1082 = vsel %vm618, %v1038, -inf
    %1083 = vmax.xlane.f32.xlu0 %v1082
    %v1084 = vpop.xlane.xlu0 %1083
    %v1085 = vsel %vm618, %v1039, -inf
    %1086 = vmax.xlane.f32.xlu0 %v1085
    %v1087 = vpop.xlane.xlu0 %1086
    %v1088 = vsub.f32 %v1024, %v1042
    %v1089 = vsub.f32 %v1025, %v1045
    %v1090 = vsub.f32 %v1026, %v1048
    %v1091 = vsub.f32 %v1027, %v1051
    %v1092 = vsub.f32 %v1028, %v1054
    %v1093 = vsub.f32 %v1029, %v1057
    %v1094 = vsub.f32 %v1030, %v1060
    %v1095 = vsub.f32 %v1031, %v1063
    %v1096 = vsub.f32 %v1032, %v1066
    %v1097 = vsub.f32 %v1033, %v1069
    %v1098 = vsub.f32 %v1034, %v1072
    %v1099 = vsub.f32 %v1035, %v1075
    %v1100 = vsub.f32 %v1036, %v1078
    %v1101 = vsub.f32 %v1037, %v1081
    %v1102 = vsub.f32 %v1038, %v1084
    %v1103 = vsub.f32 %v1039, %v1087
    %v1104 = vmul.f32 %v1088, 1.442695
    %v1105 = vpow.pop %v1104
    %v1106 = vmul.f32 %v1089, 1.442695
    %v1107 = vpow.pop %v1106
    %v1108 = vmul.f32 %v1090, 1.442695
    %v1109 = vpow.pop %v1108
    %v1110 = vmul.f32 %v1091, 1.442695
    %v1111 = vpow.pop %v1110
    %v1112 = vmul.f32 %v1092, 1.442695
    %v1113 = vpow.pop %v1112
    %v1114 = vmul.f32 %v1093, 1.442695
    %v1115 = vpow.pop %v1114
    %v1116 = vmul.f32 %v1094, 1.442695
    %v1117 = vpow.pop %v1116
    %v1118 = vmul.f32 %v1095, 1.442695
    %v1119 = vpow.pop %v1118
    %v1120 = vmul.f32 %v1096, 1.442695
    %v1121 = vpow.pop %v1120
    %v1122 = vmul.f32 %v1097, 1.442695
    %v1123 = vpow.pop %v1122
    %v1124 = vmul.f32 %v1098, 1.442695
    %v1125 = vpow.pop %v1124
    %v1126 = vmul.f32 %v1099, 1.442695
    %v1127 = vpow.pop %v1126
    %v1128 = vmul.f32 %v1100, 1.442695
    %v1129 = vpow.pop %v1128
    %v1130 = vmul.f32 %v1101, 1.442695
    %v1131 = vpow.pop %v1130
    %v1132 = vmul.f32 %v1102, 1.442695
    %v1133 = vpow.pop %v1132
    %v1134 = vmul.f32 %v1103, 1.442695
    %v1135 = vpow.pop %v1134
    %v1136 = vsel %vm618, %v1105, 0.0
    %1137 = vadd.xlane.f32.xlu0 %v1136
    %v1138 = vpop.xlane.xlu0 %1137
    %v1139 = vsel %vm618, %v1107, 0.0
    %1140 = vadd.xlane.f32.xlu0 %v1139
    %v1141 = vpop.xlane.xlu0 %1140
    %v1142 = vsel %vm618, %v1109, 0.0
    %1143 = vadd.xlane.f32.xlu0 %v1142
    %v1144 = vpop.xlane.xlu0 %1143
    %v1145 = vsel %vm618, %v1111, 0.0
    %1146 = vadd.xlane.f32.xlu0 %v1145
    %v1147 = vpop.xlane.xlu0 %1146
    %v1148 = vsel %vm618, %v1113, 0.0
    %1149 = vadd.xlane.f32.xlu0 %v1148
    %v1150 = vpop.xlane.xlu0 %1149
    %v1151 = vsel %vm618, %v1115, 0.0
    %1152 = vadd.xlane.f32.xlu0 %v1151
    %v1153 = vpop.xlane.xlu0 %1152
    %v1154 = vsel %vm618, %v1117, 0.0
    %1155 = vadd.xlane.f32.xlu0 %v1154
    %v1156 = vpop.xlane.xlu0 %1155
    %v1157 = vsel %vm618, %v1119, 0.0
    %1158 = vadd.xlane.f32.xlu0 %v1157
    %v1159 = vpop.xlane.xlu0 %1158
    %v1160 = vsel %vm618, %v1121, 0.0
    %1161 = vadd.xlane.f32.xlu0 %v1160
    %v1162 = vpop.xlane.xlu0 %1161
    %v1163 = vsel %vm618, %v1123, 0.0
    %1164 = vadd.xlane.f32.xlu0 %v1163
    %v1165 = vpop.xlane.xlu0 %1164
    %v1166 = vsel %vm618, %v1125, 0.0
    %1167 = vadd.xlane.f32.xlu0 %v1166
    %v1168 = vpop.xlane.xlu0 %1167
    %v1169 = vsel %vm618, %v1127, 0.0
    %1170 = vadd.xlane.f32.xlu0 %v1169
    %v1171 = vpop.xlane.xlu0 %1170
    %v1172 = vsel %vm618, %v1129, 0.0
    %1173 = vadd.xlane.f32.xlu0 %v1172
    %v1174 = vpop.xlane.xlu0 %1173
    %v1175 = vsel %vm618, %v1131, 0.0
    %1176 = vadd.xlane.f32.xlu0 %v1175
    %v1177 = vpop.xlane.xlu0 %1176
    %v1178 = vsel %vm618, %v1133, 0.0
    %1179 = vadd.xlane.f32.xlu0 %v1178
    %v1180 = vpop.xlane.xlu0 %1179
    %v1181 = vsel %vm618, %v1135, 0.0
    %1182 = vadd.xlane.f32.xlu0 %v1181
    %v1183 = vpop.xlane.xlu0 %1182
    %v1184 = vrcp.pop %v1138
    %v1185 = vrcp.pop %v1141
    %v1186 = vrcp.pop %v1144
    %v1187 = vrcp.pop %v1147
    %v1188 = vrcp.pop %v1150
    %v1189 = vrcp.pop %v1153
    %v1190 = vrcp.pop %v1156
    %v1191 = vrcp.pop %v1159
    %v1192 = vrcp.pop %v1162
    %v1193 = vrcp.pop %v1165
    %v1194 = vrcp.pop %v1168
    %v1195 = vrcp.pop %v1171
    %v1196 = vrcp.pop %v1174
    %v1197 = vrcp.pop %v1177
    %v1198 = vrcp.pop %v1180
    %v1199 = vrcp.pop %v1183
    %v1200 = vmul.f32 %v1105, %v1184
    %v1201 = vmul.f32 %v1107, %v1185
    %v1202 = vmul.f32 %v1109, %v1186
    %v1203 = vmul.f32 %v1111, %v1187
    %v1204 = vmul.f32 %v1113, %v1188
    %v1205 = vmul.f32 %v1115, %v1189
    %v1206 = vmul.f32 %v1117, %v1190
    %v1207 = vmul.f32 %v1119, %v1191
    %v1208 = vmul.f32 %v1121, %v1192
    %v1209 = vmul.f32 %v1123, %v1193
    %v1210 = vmul.f32 %v1125, %v1194
    %v1211 = vmul.f32 %v1127, %v1195
    %v1212 = vmul.f32 %v1129, %v1196
    %v1213 = vmul.f32 %v1131, %v1197
    %v1214 = vmul.f32 %v1133, %v1198
    %v1215 = vmul.f32 %v1135, %v1199
    %v1216 = vpack.c.bf16 %v1201, %v1200
    %v1217 = vpack.c.bf16 %v1203, %v1202
    %v1218 = vpack.c.bf16 %v1205, %v1204
    %v1219 = vpack.c.bf16 %v1207, %v1206
    %v1220 = vpack.c.bf16 %v1209, %v1208
    %v1221 = vpack.c.bf16 %v1211, %v1210
    %v1222 = vpack.c.bf16 %v1213, %v1212
    %v1223 = vpack.c.bf16 %v1215, %v1214
    %v1224 = vpack.c.bf16 %v515, %v511
    %v1225 = vpack.c.bf16 %v525, %v521
    %v1226 = vpack.c.bf16 %v574, %v572
    %v1227 = vpack.c.bf16 %v578, %v576
    %v1228 = vpack.c.bf16 %v586, %v584
    %v1229 = vpack.c.bf16 %v590, %v588
    %v1230 = vpack.c.bf16 %v598, %v596
    %v1231 = vpack.c.bf16 %v602, %v600
    %v1233 = vsel %vm618, %v1216, 0
    %1235 = vmatprep.subr.bf16.mxu0 0
    %1236 = vmatpush1.bf16.msra.mxu0 %v1224
    %1237 = vmatprep.subr.bf16.mxu0 0
    %1238 = vmatpush1.bf16.msra.mxu0 0
    %1239 = vmatprep.subr.bf16.mxu0 0
    %1240 = vmatpush1.bf16.msra.mxu0 0
    %1241 = vmatprep.subr.bf16.mxu0 0
    %1242 = vmatpush1.bf16.msra.mxu0 0
    %1243 = vmatprep.subr.bf16.mxu0 0
    %1244 = vmatpush1.bf16.msra.mxu0 0
    %1245 = vmatprep.subr.bf16.mxu0 0
    %1246 = vmatpush1.bf16.msra.mxu0 0
    %1247 = vmatprep.subr.bf16.mxu0 0
    %1248 = vmatpush1.bf16.msra.mxu0 0
    %1249 = vmatprep.subr.bf16.mxu0 0
    %1250 = vmatpush1.bf16.msra.mxu0 0
    %1251 = vmatprep.subr.bf16.mxu0 0
    %1252 = vmatpush1.bf16.msra.mxu0 0
    %1253 = vmatprep.subr.bf16.mxu0 0
    %1254 = vmatpush1.bf16.msra.mxu0 0
    %1255 = vmatprep.subr.bf16.mxu0 0
    %1256 = vmatpush1.bf16.msra.mxu0 0
    %1257 = vmatprep.subr.bf16.mxu0 0
    %1258 = vmatpush1.bf16.msra.mxu0 0
    %1259 = vmatprep.subr.bf16.mxu0 0
    %1260 = vmatpush1.bf16.msra.mxu0 0
    %1261 = vmatprep.subr.bf16.mxu0 0
    %1262 = vmatpush1.bf16.msra.mxu0 0
    %1263 = vmatprep.subr.bf16.mxu0 0
    %1264 = vmatpush1.bf16.msra.mxu0 0
    %1265 = vmatprep.subr.bf16.mxu0 0
    %1266 = vmatpush1.bf16.msra.mxu0 0
    %1267 = vmatprep.mubr.bf16.mxu0 0
    %1268 = vmatmul.mubr.bf16.gmra.mrb[0].mxu0 %v1233
    %v1269 = vpop.f32.mrb[0].mxu0
    %v1270 = vadd.f32 0.0, %v1269
    %v1271 = vpop.f32.mrb[0].mxu0
    %v1272 = vpop.f32.mrb[0].mxu0
    %v1273 = vadd.f32 0.0, %v1272
    %v1274 = vpop.f32.mrb[0].mxu0
    %1275 = vdwg.mxu0
    %v1277 = vsel %vm618, %v1217, 0
    %1279 = vmatprep.subr.bf16.mxu0 0
    %1280 = vmatpush1.bf16.msra.mxu0 %v1225
    %1281 = vmatprep.subr.bf16.mxu0 0
    %1282 = vmatpush1.bf16.msra.mxu0 0
    %1283 = vmatprep.subr.bf16.mxu0 0
    %1284 = vmatpush1.bf16.msra.mxu0 0
    %1285 = vmatprep.subr.bf16.mxu0 0
    %1286 = vmatpush1.bf16.msra.mxu0 0
    %1287 = vmatprep.subr.bf16.mxu0 0
    %1288 = vmatpush1.bf16.msra.mxu0 0
    %1289 = vmatprep.subr.bf16.mxu0 0
    %1290 = vmatpush1.bf16.msra.mxu0 0
    %1291 = vmatprep.subr.bf16.mxu0 0
    %1292 = vmatpush1.bf16.msra.mxu0 0
    %1293 = vmatprep.subr.bf16.mxu0 0
    %1294 = vmatpush1.bf16.msra.mxu0 0
    %1295 = vmatprep.subr.bf16.mxu0 0
    %1296 = vmatpush1.bf16.msra.mxu0 0
    %1297 = vmatprep.subr.bf16.mxu0 0
    %1298 = vmatpush1.bf16.msra.mxu0 0
    %1299 = vmatprep.subr.bf16.mxu0 0
    %1300 = vmatpush1.bf16.msra.mxu0 0
    %1301 = vmatprep.subr.bf16.mxu0 0
    %1302 = vmatpush1.bf16.msra.mxu0 0
    %1303 = vmatprep.subr.bf16.mxu0 0
    %1304 = vmatpush1.bf16.msra.mxu0 0
    %1305 = vmatprep.subr.bf16.mxu0 0
    %1306 = vmatpush1.bf16.msra.mxu0 0
    %1307 = vmatprep.subr.bf16.mxu0 0
    %1308 = vmatpush1.bf16.msra.mxu0 0
    %1309 = vmatprep.subr.bf16.mxu0 0
    %1310 = vmatpush1.bf16.msra.mxu0 0
    %1311 = vmatprep.mubr.bf16.mxu0 0
    %1312 = vmatmul.mubr.bf16.gmra.mrb[0].mxu0 %v1277
    %v1313 = vpop.f32.mrb[0].mxu0
    %v1314 = vadd.f32 0.0, %v1313
    %v1315 = vpop.f32.mrb[0].mxu0
    %v1316 = vpop.f32.mrb[0].mxu0
    %v1317 = vadd.f32 0.0, %v1316
    %v1318 = vpop.f32.mrb[0].mxu0
    %1319 = vdwg.mxu0
    %v1321 = vsel %vm618, %v1218, 0
    %1323 = vmatprep.subr.bf16.mxu0 0
    %1324 = vmatpush1.bf16.msra.mxu0 %v1226
    %1325 = vmatprep.subr.bf16.mxu0 0
    %1326 = vmatpush1.bf16.msra.mxu0 0
    %1327 = vmatprep.subr.bf16.mxu0 0
    %1328 = vmatpush1.bf16.msra.mxu0 0
    %1329 = vmatprep.subr.bf16.mxu0 0
    %1330 = vmatpush1.bf16.msra.mxu0 0
    %1331 = vmatprep.subr.bf16.mxu0 0
    %1332 = vmatpush1.bf16.msra.mxu0 0
    %1333 = vmatprep.subr.bf16.mxu0 0
    %1334 = vmatpush1.bf16.msra.mxu0 0
    %1335 = vmatprep.subr.bf16.mxu0 0
    %1336 = vmatpush1.bf16.msra.mxu0 0
    %1337 = vmatprep.subr.bf16.mxu0 0
    %1338 = vmatpush1.bf16.msra.mxu0 0
    %1339 = vmatprep.subr.bf16.mxu0 0
    %1340 = vmatpush1.bf16.msra.mxu0 0
    %1341 = vmatprep.subr.bf16.mxu0 0
    %1342 = vmatpush1.bf16.msra.mxu0 0
    %1343 = vmatprep.subr.bf16.mxu0 0
    %1344 = vmatpush1.bf16.msra.mxu0 0
    %1345 = vmatprep.subr.bf16.mxu0 0
    %1346 = vmatpush1.bf16.msra.mxu0 0
    %1347 = vmatprep.subr.bf16.mxu0 0
    %1348 = vmatpush1.bf16.msra.mxu0 0
    %1349 = vmatprep.subr.bf16.mxu0 0
    %1350 = vmatpush1.bf16.msra.mxu0 0
    %1351 = vmatprep.subr.bf16.mxu0 0
    %1352 = vmatpush1.bf16.msra.mxu0 0
    %1353 = vmatprep.subr.bf16.mxu0 0
    %1354 = vmatpush1.bf16.msra.mxu0 0
    %1355 = vmatprep.mubr.bf16.mxu0 0
    %1356 = vmatmul.mubr.bf16.gmra.mrb[0].mxu0 %v1321
    %v1357 = vpop.f32.mrb[0].mxu0
    %v1358 = vadd.f32 0.0, %v1357
    %v1359 = vpop.f32.mrb[0].mxu0
    %v1360 = vpop.f32.mrb[0].mxu0
    %v1361 = vadd.f32 0.0, %v1360
    %v1362 = vpop.f32.mrb[0].mxu0
    %1363 = vdwg.mxu0
    %v1365 = vsel %vm618, %v1219, 0
    %1367 = vmatprep.subr.bf16.mxu0 0
    %1368 = vmatpush1.bf16.msra.mxu0 %v1227
    %1369 = vmatprep.subr.bf16.mxu0 0
    %1370 = vmatpush1.bf16.msra.mxu0 0
    %1371 = vmatprep.subr.bf16.mxu0 0
    %1372 = vmatpush1.bf16.msra.mxu0 0
    %1373 = vmatprep.subr.bf16.mxu0 0
    %1374 = vmatpush1.bf16.msra.mxu0 0
    %1375 = vmatprep.subr.bf16.mxu0 0
    %1376 = vmatpush1.bf16.msra.mxu0 0
    %1377 = vmatprep.subr.bf16.mxu0 0
    %1378 = vmatpush1.bf16.msra.mxu0 0
    %1379 = vmatprep.subr.bf16.mxu0 0
    %1380 = vmatpush1.bf16.msra.mxu0 0
    %1381 = vmatprep.subr.bf16.mxu0 0
    %1382 = vmatpush1.bf16.msra.mxu0 0
    %1383 = vmatprep.subr.bf16.mxu0 0
    %1384 = vmatpush1.bf16.msra.mxu0 0
    %1385 = vmatprep.subr.bf16.mxu0 0
    %1386 = vmatpush1.bf16.msra.mxu0 0
    %1387 = vmatprep.subr.bf16.mxu0 0
    %1388 = vmatpush1.bf16.msra.mxu0 0
    %1389 = vmatprep.subr.bf16.mxu0 0
    %1390 = vmatpush1.bf16.msra.mxu0 0
    %1391 = vmatprep.subr.bf16.mxu0 0
    %1392 = vmatpush1.bf16.msra.mxu0 0
    %1393 = vmatprep.subr.bf16.mxu0 0
    %1394 = vmatpush1.bf16.msra.mxu0 0
    %1395 = vmatprep.subr.bf16.mxu0 0
    %1396 = vmatpush1.bf16.msra.mxu0 0
    %1397 = vmatprep.subr.bf16.mxu0 0
    %1398 = vmatpush1.bf16.msra.mxu0 0
    %1399 = vmatprep.mubr.bf16.mxu0 0
    %1400 = vmatmul.mubr.bf16.gmra.mrb[0].mxu0 %v1365
    %v1401 = vpop.f32.mrb[0].mxu0
    %v1402 = vadd.f32 0.0, %v1401
    %v1403 = vpop.f32.mrb[0].mxu0
    %v1404 = vpop.f32.mrb[0].mxu0
    %v1405 = vadd.f32 0.0, %v1404
    %v1406 = vpop.f32.mrb[0].mxu0
    %1407 = vdwg.mxu0
    %v1409 = vsel %vm618, %v1220, 0
    %1411 = vmatprep.subr.bf16.mxu0 0
    %1412 = vmatpush1.bf16.msra.mxu0 %v1228
    %1413 = vmatprep.subr.bf16.mxu0 0
    %1414 = vmatpush1.bf16.msra.mxu0 0
    %1415 = vmatprep.subr.bf16.mxu0 0
    %1416 = vmatpush1.bf16.msra.mxu0 0
    %1417 = vmatprep.subr.bf16.mxu0 0
    %1418 = vmatpush1.bf16.msra.mxu0 0
    %1419 = vmatprep.subr.bf16.mxu0 0
    %1420 = vmatpush1.bf16.msra.mxu0 0
    %1421 = vmatprep.subr.bf16.mxu0 0
    %1422 = vmatpush1.bf16.msra.mxu0 0
    %1423 = vmatprep.subr.bf16.mxu0 0
    %1424 = vmatpush1.bf16.msra.mxu0 0
    %1425 = vmatprep.subr.bf16.mxu0 0
    %1426 = vmatpush1.bf16.msra.mxu0 0
    %1427 = vmatprep.subr.bf16.mxu0 0
    %1428 = vmatpush1.bf16.msra.mxu0 0
    %1429 = vmatprep.subr.bf16.mxu0 0
    %1430 = vmatpush1.bf16.msra.mxu0 0
    %1431 = vmatprep.subr.bf16.mxu0 0
    %1432 = vmatpush1.bf16.msra.mxu0 0
    %1433 = vmatprep.subr.bf16.mxu0 0
    %1434 = vmatpush1.bf16.msra.mxu0 0
    %1435 = vmatprep.subr.bf16.mxu0 0
    %1436 = vmatpush1.bf16.msra.mxu0 0
    %1437 = vmatprep.subr.bf16.mxu0 0
    %1438 = vmatpush1.bf16.msra.mxu0 0
    %1439 = vmatprep.subr.bf16.mxu0 0
    %1440 = vmatpush1.bf16.msra.mxu0 0
    %1441 = vmatprep.subr.bf16.mxu0 0
    %1442 = vmatpush1.bf16.msra.mxu0 0
    %1443 = vmatprep.mubr.bf16.mxu0 0
    %1444 = vmatmul.mubr.bf16.gmra.mrb[0].mxu0 %v1409
    %v1445 = vpop.f32.mrb[0].mxu0
    %v1446 = vadd.f32 0.0, %v1445
    %v1447 = vpop.f32.mrb[0].mxu0
    %v1448 = vpop.f32.mrb[0].mxu0
    %v1449 = vadd.f32 0.0, %v1448
    %v1450 = vpop.f32.mrb[0].mxu0
    %1451 = vdwg.mxu0
    %v1453 = vsel %vm618, %v1221, 0
    %1455 = vmatprep.subr.bf16.mxu0 0
    %1456 = vmatpush1.bf16.msra.mxu0 %v1229
    %1457 = vmatprep.subr.bf16.mxu0 0
    %1458 = vmatpush1.bf16.msra.mxu0 0
    %1459 = vmatprep.subr.bf16.mxu0 0
    %1460 = vmatpush1.bf16.msra.mxu0 0
    %1461 = vmatprep.subr.bf16.mxu0 0
    %1462 = vmatpush1.bf16.msra.mxu0 0
    %1463 = vmatprep.subr.bf16.mxu0 0
    %1464 = vmatpush1.bf16.msra.mxu0 0
    %1465 = vmatprep.subr.bf16.mxu0 0
    %1466 = vmatpush1.bf16.msra.mxu0 0
    %1467 = vmatprep.subr.bf16.mxu0 0
    %1468 = vmatpush1.bf16.msra.mxu0 0
    %1469 = vmatprep.subr.bf16.mxu0 0
    %1470 = vmatpush1.bf16.msra.mxu0 0
    %1471 = vmatprep.subr.bf16.mxu0 0
    %1472 = vmatpush1.bf16.msra.mxu0 0
    %1473 = vmatprep.subr.bf16.mxu0 0
    %1474 = vmatpush1.bf16.msra.mxu0 0
    %1475 = vmatprep.subr.bf16.mxu0 0
    %1476 = vmatpush1.bf16.msra.mxu0 0
    %1477 = vmatprep.subr.bf16.mxu0 0
    %1478 = vmatpush1.bf16.msra.mxu0 0
    %1479 = vmatprep.subr.bf16.mxu0 0
    %1480 = vmatpush1.bf16.msra.mxu0 0
    %1481 = vmatprep.subr.bf16.mxu0 0
    %1482 = vmatpush1.bf16.msra.mxu0 0
    %1483 = vmatprep.subr.bf16.mxu0 0
    %1484 = vmatpush1.bf16.msra.mxu0 0
    %1485 = vmatprep.subr.bf16.mxu0 0
    %1486 = vmatpush1.bf16.msra.mxu0 0
    %1487 = vmatprep.mubr.bf16.mxu0 0
    %1488 = vmatmul.mubr.bf16.gmra.mrb[0].mxu0 %v1453
    %v1489 = vpop.f32.mrb[0].mxu0
    %v1490 = vadd.f32 0.0, %v1489
    %v1491 = vpop.f32.mrb[0].mxu0
    %v1492 = vpop.f32.mrb[0].mxu0
    %v1493 = vadd.f32 0.0, %v1492
    %v1494 = vpop.f32.mrb[0].mxu0
    %1495 = vdwg.mxu0
    %v1497 = vsel %vm618, %v1222, 0
    %1499 = vmatprep.subr.bf16.mxu0 0
    %1500 = vmatpush1.bf16.msra.mxu0 %v1230
    %1501 = vmatprep.subr.bf16.mxu0 0
    %1502 = vmatpush1.bf16.msra.mxu0 0
    %1503 = vmatprep.subr.bf16.mxu0 0
    %1504 = vmatpush1.bf16.msra.mxu0 0
    %1505 = vmatprep.subr.bf16.mxu0 0
    %1506 = vmatpush1.bf16.msra.mxu0 0
    %1507 = vmatprep.subr.bf16.mxu0 0
    %1508 = vmatpush1.bf16.msra.mxu0 0
    %1509 = vmatprep.subr.bf16.mxu0 0
    %1510 = vmatpush1.bf16.msra.mxu0 0
    %1511 = vmatprep.subr.bf16.mxu0 0
    %1512 = vmatpush1.bf16.msra.mxu0 0
    %1513 = vmatprep.subr.bf16.mxu0 0
    %1514 = vmatpush1.bf16.msra.mxu0 0
    %1515 = vmatprep.subr.bf16.mxu0 0
    %1516 = vmatpush1.bf16.msra.mxu0 0
    %1517 = vmatprep.subr.bf16.mxu0 0
    %1518 = vmatpush1.bf16.msra.mxu0 0
    %1519 = vmatprep.subr.bf16.mxu0 0
    %1520 = vmatpush1.bf16.msra.mxu0 0
    %1521 = vmatprep.subr.bf16.mxu0 0
    %1522 = vmatpush1.bf16.msra.mxu0 0
    %1523 = vmatprep.subr.bf16.mxu0 0
    %1524 = vmatpush1.bf16.msra.mxu0 0
    %1525 = vmatprep.subr.bf16.mxu0 0
    %1526 = vmatpush1.bf16.msra.mxu0 0
    %1527 = vmatprep.subr.bf16.mxu0 0
    %1528 = vmatpush1.bf16.msra.mxu0 0
    %1529 = vmatprep.subr.bf16.mxu0 0
    %1530 = vmatpush1.bf16.msra.mxu0 0
    %1531 = vmatprep.mubr.bf16.mxu0 0
    %1532 = vmatmul.mubr.bf16.gmra.mrb[0].mxu0 %v1497
    %v1533 = vpop.f32.mrb[0].mxu0
    %v1534 = vadd.f32 0.0, %v1533
    %v1535 = vpop.f32.mrb[0].mxu0
    %v1536 = vpop.f32.mrb[0].mxu0
    %v1537 = vadd.f32 0.0, %v1536
    %v1538 = vpop.f32.mrb[0].mxu0
    %1539 = vdwg.mxu0
    %v1541 = vsel %vm618, %v1223, 0
    %1543 = vmatprep.subr.bf16.mxu0 0
    %1544 = vmatpush1.bf16.msra.mxu0 %v1231
    %1545 = vmatprep.subr.bf16.mxu0 0
    %1546 = vmatpush1.bf16.msra.mxu0 0
    %1547 = vmatprep.subr.bf16.mxu0 0
    %1548 = vmatpush1.bf16.msra.mxu0 0
    %1549 = vmatprep.subr.bf16.mxu0 0
    %1550 = vmatpush1.bf16.msra.mxu0 0
    %1551 = vmatprep.subr.bf16.mxu0 0
    %1552 = vmatpush1.bf16.msra.mxu0 0
    %1553 = vmatprep.subr.bf16.mxu0 0
    %1554 = vmatpush1.bf16.msra.mxu0 0
    %1555 = vmatprep.subr.bf16.mxu0 0
    %1556 = vmatpush1.bf16.msra.mxu0 0
    %1557 = vmatprep.subr.bf16.mxu0 0
    %1558 = vmatpush1.bf16.msra.mxu0 0
    %1559 = vmatprep.subr.bf16.mxu0 0
    %1560 = vmatpush1.bf16.msra.mxu0 0
    %1561 = vmatprep.subr.bf16.mxu0 0
    %1562 = vmatpush1.bf16.msra.mxu0 0
    %1563 = vmatprep.subr.bf16.mxu0 0
    %1564 = vmatpush1.bf16.msra.mxu0 0
    %1565 = vmatprep.subr.bf16.mxu0 0
    %1566 = vmatpush1.bf16.msra.mxu0 0
    %1567 = vmatprep.subr.bf16.mxu0 0
    %1568 = vmatpush1.bf16.msra.mxu0 0
    %1569 = vmatprep.subr.bf16.mxu0 0
    %1570 = vmatpush1.bf16.msra.mxu0 0
    %1571 = vmatprep.subr.bf16.mxu0 0
    %1572 = vmatpush1.bf16.msra.mxu0 0
    %1573 = vmatprep.subr.bf16.mxu0 0
    %1574 = vmatpush1.bf16.msra.mxu0 0
    %1575 = vmatprep.mubr.bf16.mxu0 0
    %1576 = vmatmul.mubr.bf16.gmra.mrb[0].mxu0 %v1541
    %v1577 = vpop.f32.mrb[0].mxu0
    %v1578 = vadd.f32 0.0, %v1577
    %v1579 = vpop.f32.mrb[0].mxu0
    %v1580 = vpop.f32.mrb[0].mxu0
    %v1581 = vadd.f32 0.0, %v1580
    %v1582 = vpop.f32.mrb[0].mxu0
    %1583 = vdwg.mxu0
    %1588 = vrot.lane.b32.xlu0 %v1358, 16
    %v1589 = vpop.permute.xlu0 %1588
    %1590 = vrot.lane.b32.xlu0 %v1361, 16
    %v1591 = vpop.permute.xlu0 %1590
    %1592 = vrot.lane.b32.xlu0 %v1402, 16
    %v1593 = vpop.permute.xlu0 %1592
    %1594 = vrot.lane.b32.xlu0 %v1405, 16
    %v1595 = vpop.permute.xlu0 %1594
    %1604 = vrot.lane.b32.xlu0 %v1446, 32
    %v1605 = vpop.permute.xlu0 %1604
    %1606 = vrot.lane.b32.xlu0 %v1449, 32
    %v1607 = vpop.permute.xlu0 %1606
    %1608 = vrot.lane.b32.xlu0 %v1490, 32
    %v1609 = vpop.permute.xlu0 %1608
    %1610 = vrot.lane.b32.xlu0 %v1493, 32
    %v1611 = vpop.permute.xlu0 %1610
    %1620 = vrot.lane.b32.xlu0 %v1534, 48
    %v1621 = vpop.permute.xlu0 %1620
    %1622 = vrot.lane.b32.xlu0 %v1537, 48
    %v1623 = vpop.permute.xlu0 %1622
    %1624 = vrot.lane.b32.xlu0 %v1578, 48
    %v1625 = vpop.permute.xlu0 %1624
    %1626 = vrot.lane.b32.xlu0 %v1581, 48
    %v1627 = vpop.permute.xlu0 %1626
    %v1632 = vsel %vm618, %v1270, %v1589
    %v1633 = vsel %vm618, %v1273, %v1591
    %v1634 = vsel %vm618, %v1314, %v1593
    %v1635 = vsel %vm618, %v1317, %v1595
    %vm1636 = vcmask 261120
    %v1637 = vsel %vm1636, %v1632, %v1605
    %v1638 = vsel %vm1636, %v1633, %v1607
    %v1639 = vsel %vm1636, %v1634, %v1609
    %v1640 = vsel %vm1636, %v1635, %v1611
    %vm1641 = vcmask 392192
    %v1642 = vsel %vm1641, %v1637, %v1621
    %v1643 = vsel %vm1641, %v1638, %v1623
    %v1644 = vsel %vm1641, %v1639, %v1625
    %v1645 = vsel %vm1641, %v1640, %v1627
    %v1646 = vpack.c.bf16 %v1643, %v1642
    %v1647 = vpack.c.bf16 %v1645, %v1644
    %v1648 = vld [vmem:[%s19] sm:$0xf]
    %v1649 = vld [vmem:[%s19 + $0x4] sm:$0xf]
    %v1650 = vld [vmem:[%s19 + $0x8] sm:$0xf]
    %v1651 = vld [vmem:[%s19 + $0xc] sm:$0xf]
    %v1652 = vld [vmem:[%s19 + $0x10] sm:$0xf]
    %v1653 = vld [vmem:[%s19 + $0x14] sm:$0xf]
    %v1654 = vld [vmem:[%s19 + $0x18] sm:$0xf]
    %v1655 = vld [vmem:[%s19 + $0x1c] sm:$0xf]
    %v1664 = vunpack.c.l.b16 %v1648
    %v1665 = vunpack.c.l.b16 %v1649
    %v1666 = vunpack.c.l.b16 %v1650
    %v1667 = vunpack.c.l.b16 %v1651
    %v1668 = vunpack.c.l.b16 %v1652
    %v1669 = vunpack.c.l.b16 %v1653
    %v1670 = vunpack.c.l.b16 %v1654
    %v1671 = vunpack.c.l.b16 %v1655
    %v1672 = vpack.c.b16 %v1665, %v1664
    %v1673 = vpack.c.b16 %v1667, %v1666
    %v1674 = vpack.c.b16 %v1669, %v1668
    %v1675 = vpack.c.b16 %v1671, %v1670
    %v1681 = vsel %vm332, %v1646, 0
    %v1684 = vsel %vm332, %v1647, 0
    %1686 = vmatprep.subr.bf16.mxu0 0
    %1687 = vmatpush1.bf16.msra.mxu0 %v1672
    %1688 = vmatprep.subr.bf16.mxu0 0
    %1689 = vmatpush1.bf16.msra.mxu0 %v1673
    %1690 = vmatprep.subr.bf16.mxu0 0
    %1691 = vmatpush1.bf16.msra.mxu0 %v1674
    %1692 = vmatprep.subr.bf16.mxu0 0
    %1693 = vmatpush1.bf16.msra.mxu0 %v1675
    %1694 = vmatprep.subr.bf16.mxu0 0
    %1695 = vmatpush1.bf16.msra.mxu0 0
    %1696 = vmatprep.subr.bf16.mxu0 0
    %1697 = vmatpush1.bf16.msra.mxu0 0
    %1698 = vmatprep.subr.bf16.mxu0 0
    %1699 = vmatpush1.bf16.msra.mxu0 0
    %1700 = vmatprep.subr.bf16.mxu0 0
    %1701 = vmatpush1.bf16.msra.mxu0 0
    %1702 = vmatprep.subr.bf16.mxu0 0
    %1703 = vmatpush1.bf16.msra.mxu0 0
    %1704 = vmatprep.subr.bf16.mxu0 0
    %1705 = vmatpush1.bf16.msra.mxu0 0
    %1706 = vmatprep.subr.bf16.mxu0 0
    %1707 = vmatpush1.bf16.msra.mxu0 0
    %1708 = vmatprep.subr.bf16.mxu0 0
    %1709 = vmatpush1.bf16.msra.mxu0 0
    %1710 = vmatprep.subr.bf16.mxu0 0
    %1711 = vmatpush1.bf16.msra.mxu0 0
    %1712 = vmatprep.subr.bf16.mxu0 0
    %1713 = vmatpush1.bf16.msra.mxu0 0
    %1714 = vmatprep.subr.bf16.mxu0 0
    %1715 = vmatpush1.bf16.msra.mxu0 0
    %1716 = vmatprep.subr.bf16.mxu0 0
    %1717 = vmatpush1.bf16.msra.mxu0 0
    %1718 = vmatprep.mubr.bf16.mxu0 0
    %1719 = vmatmul.mubr.bf16.gmra.mrb[0].mxu0 %v1681
    %v1720 = vpop.f32.mrb[0].mxu0
    %v1721 = vadd.f32 0.0, %v1720
    %v1722 = vpop.f32.mrb[0].mxu0
    %v1723 = vpop.f32.mrb[0].mxu0
    %v1724 = vadd.f32 0.0, %v1723
    %v1725 = vpop.f32.mrb[0].mxu0
    %1726 = vmatprep.mubr.bf16.mxu0 0
    %1727 = vmatmul.mubr.bf16.gmra.mrb[0].mxu0 %v1684
    %v1728 = vpop.f32.mrb[0].mxu0
    %v1729 = vadd.f32 0.0, %v1728
    %v1730 = vpop.f32.mrb[0].mxu0
    %v1731 = vpop.f32.mrb[0].mxu0
    %v1732 = vadd.f32 0.0, %v1731
    %v1733 = vpop.f32.mrb[0].mxu0
    %1734 = vdwg.mxu0
    %v1735 = vadd.f32 %v316, %v1721
    %v1736 = vadd.f32 %v319, %v1724
    %v1737 = vadd.f32 %v324, %v1729
    %v1738 = vadd.f32 %v327, %v1732
    %v1739 = vld [vmem:[%s21] sm:$0x1]
    %v1741 = vlaneseq
    %v1742 = vshrl.u32 %v1741, 7
    %v1743 = vsub.s32 0, %v1742
    %v1744 = vrot.slane %v1739, %v1743
    %v1746 = vadd.f32 %v1735, %v1744
    %v1747 = vadd.f32 %v1736, %v1744
    %v1748 = vadd.f32 %v1737, %v1744
    %v1749 = vadd.f32 %v1738, %v1744
    %v1750 = vld [vmem:[%s23] sm:$0x1]
    %v1751 = vld [vmem:[%s25] sm:$0x1]
    %v1752 = vsel %vm332, %v1746, 0.0
    %1753 = vadd.xlane.f32.xlu0 %v1752
    %v1754 = vpop.xlane.xlu0 %1753
    %v1755 = vsel %vm332, %v1747, 0.0
    %1756 = vadd.xlane.f32.xlu0 %v1755
    %v1757 = vpop.xlane.xlu0 %1756
    %v1758 = vsel %vm332, %v1748, 0.0
    %1759 = vadd.xlane.f32.xlu0 %v1758
    %v1760 = vpop.xlane.xlu0 %1759
    %v1761 = vsel %vm332, %v1749, 0.0
    %1762 = vadd.xlane.f32.xlu0 %v1761
    %v1763 = vpop.xlane.xlu0 %1762
    %v1764 = vmul.f32 %v1754, %v345
    %v1765 = vmul.f32 %v1757, %v345
    %v1766 = vmul.f32 %v1760, %v345
    %v1767 = vmul.f32 %v1763, %v345
    %v1768 = vsub.f32 %v1746, %v1764
    %v1769 = vsub.f32 %v1747, %v1765
    %v1770 = vsub.f32 %v1748, %v1766
    %v1771 = vsub.f32 %v1749, %v1767
    %v1772 = vmul.f32 %v1768, %v1768
    %v1773 = vmul.f32 %v1769, %v1769
    %v1774 = vmul.f32 %v1770, %v1770
    %v1775 = vmul.f32 %v1771, %v1771
    %v1776 = vsel %vm332, %v1772, 0.0
    %1777 = vadd.xlane.f32.xlu0 %v1776
    %v1778 = vpop.xlane.xlu0 %1777
    %v1779 = vsel %vm332, %v1773, 0.0
    %1780 = vadd.xlane.f32.xlu0 %v1779
    %v1781 = vpop.xlane.xlu0 %1780
    %v1782 = vsel %vm332, %v1774, 0.0
    %1783 = vadd.xlane.f32.xlu0 %v1782
    %v1784 = vpop.xlane.xlu0 %1783
    %v1785 = vsel %vm332, %v1775, 0.0
    %1786 = vadd.xlane.f32.xlu0 %v1785
    %v1787 = vpop.xlane.xlu0 %1786
    %v1788 = vmul.f32 %v1778, %v345
    %v1789 = vmul.f32 %v1781, %v345
    %v1790 = vmul.f32 %v1784, %v345
    %v1791 = vmul.f32 %v1787, %v345
    %v1792 = vadd.f32 %v1788, 1e-05
    %v1793 = vadd.f32 %v1789, 1e-05
    %v1794 = vadd.f32 %v1790, 1e-05
    %v1795 = vadd.f32 %v1791, 1e-05
    %v1796 = vrsqrt.pop %v1792
    %v1797 = vrsqrt.pop %v1793
    %v1798 = vrsqrt.pop %v1794
    %v1799 = vrsqrt.pop %v1795
    %v1800 = vmul.f32 %v1768, %v1796
    %v1801 = vmul.f32 %v1769, %v1797
    %v1802 = vmul.f32 %v1770, %v1798
    %v1803 = vmul.f32 %v1771, %v1799
    %v1805 = vlaneseq
    %v1806 = vshrl.u32 %v1805, 7
    %v1807 = vsub.s32 0, %v1806
    %v1808 = vrot.slane %v1750, %v1807
    %v1810 = vmul.f32 %v1800, %v1808
    %v1811 = vmul.f32 %v1801, %v1808
    %v1812 = vmul.f32 %v1802, %v1808
    %v1813 = vmul.f32 %v1803, %v1808
    %v1815 = vlaneseq
    %v1816 = vshrl.u32 %v1815, 7
    %v1817 = vsub.s32 0, %v1816
    %v1818 = vrot.slane %v1751, %v1817
    %v1820 = vadd.f32 %v1810, %v1818
    %v1821 = vadd.f32 %v1811, %v1818
    %v1822 = vadd.f32 %v1812, %v1818
    %v1823 = vadd.f32 %v1813, %v1818
    %v1824 = vpack.c.bf16 %v1821, %v1820
    %v1825 = vpack.c.bf16 %v1823, %v1822
    %v1826 = vld [vmem:[%s27] sm:$0xff]
    %v1827 = vld [vmem:[%s27 + $0x8] sm:$0xff]
    %v1828 = vld [vmem:[%s27 + $0x10] sm:$0xff]
    %v1829 = vld [vmem:[%s27 + $0x18] sm:$0xff]
    %v1830 = vld [vmem:[%s27 + $0x20] sm:$0xff]
    %v1831 = vld [vmem:[%s27 + $0x28] sm:$0xff]
    %v1832 = vld [vmem:[%s27 + $0x30] sm:$0xff]
    %v1833 = vld [vmem:[%s27 + $0x38] sm:$0xff]
    %v1834 = vld [vmem:[%s29] sm:$0x3]
    %v1836 = vlaneseq
    %v1837 = vshrl.u32 %v1836, 7
    %v1838 = vsub.s32 0, %v1837
    %v1839 = vrot.slane %v1834, %v1838
    %v1840 = vlaneseq
    %v1841 = vshrl.u32 %v1840, 7
    %v1842 = vsub.s32 1, %v1841
    %v1843 = vrot.slane %v1834, %v1842
    %v1854 = vunpack.c.l.b16 %v1826
    %v1855 = vunpack.c.h.b16 %v1826
    %v1856 = vunpack.c.l.b16 %v1827
    %v1857 = vunpack.c.h.b16 %v1827
    %v1858 = vunpack.c.l.b16 %v1828
    %v1859 = vunpack.c.h.b16 %v1828
    %v1860 = vunpack.c.l.b16 %v1829
    %v1861 = vunpack.c.h.b16 %v1829
    %v1862 = vunpack.c.l.b16 %v1830
    %v1863 = vunpack.c.h.b16 %v1830
    %v1864 = vunpack.c.l.b16 %v1831
    %v1865 = vunpack.c.h.b16 %v1831
    %v1866 = vunpack.c.l.b16 %v1832
    %v1867 = vunpack.c.h.b16 %v1832
    %v1868 = vunpack.c.l.b16 %v1833
    %v1869 = vunpack.c.h.b16 %v1833
    %v1870 = vpack.c.b16 %v1856, %v1854
    %v1871 = vpack.c.b16 %v1857, %v1855
    %v1872 = vpack.c.b16 %v1860, %v1858
    %v1873 = vpack.c.b16 %v1861, %v1859
    %v1874 = vpack.c.b16 %v1864, %v1862
    %v1875 = vpack.c.b16 %v1865, %v1863
    %v1876 = vpack.c.b16 %v1868, %v1866
    %v1877 = vpack.c.b16 %v1869, %v1867
    %v1887 = vsel %vm332, %v1824, 0
    %v1890 = vsel %vm332, %v1825, 0
    %1892 = vmatprep.subr.bf16.mxu0 %v1871
    %1893 = vmatpush1.bf16.msra.mxu0 %v1870
    %1894 = vmatprep.subr.bf16.mxu0 %v1873
    %1895 = vmatpush1.bf16.msra.mxu0 %v1872
    %1896 = vmatprep.subr.bf16.mxu0 %v1875
    %1897 = vmatpush1.bf16.msra.mxu0 %v1874
    %1898 = vmatprep.subr.bf16.mxu0 %v1877
    %1899 = vmatpush1.bf16.msra.mxu0 %v1876
    %1900 = vmatprep.subr.bf16.mxu0 0
    %1901 = vmatpush1.bf16.msra.mxu0 0
    %1902 = vmatprep.subr.bf16.mxu0 0
    %1903 = vmatpush1.bf16.msra.mxu0 0
    %1904 = vmatprep.subr.bf16.mxu0 0
    %1905 = vmatpush1.bf16.msra.mxu0 0
    %1906 = vmatprep.subr.bf16.mxu0 0
    %1907 = vmatpush1.bf16.msra.mxu0 0
    %1908 = vmatprep.subr.bf16.mxu0 0
    %1909 = vmatpush1.bf16.msra.mxu0 0
    %1910 = vmatprep.subr.bf16.mxu0 0
    %1911 = vmatpush1.bf16.msra.mxu0 0
    %1912 = vmatprep.subr.bf16.mxu0 0
    %1913 = vmatpush1.bf16.msra.mxu0 0
    %1914 = vmatprep.subr.bf16.mxu0 0
    %1915 = vmatpush1.bf16.msra.mxu0 0
    %1916 = vmatprep.subr.bf16.mxu0 0
    %1917 = vmatpush1.bf16.msra.mxu0 0
    %1918 = vmatprep.subr.bf16.mxu0 0
    %1919 = vmatpush1.bf16.msra.mxu0 0
    %1920 = vmatprep.subr.bf16.mxu0 0
    %1921 = vmatpush1.bf16.msra.mxu0 0
    %1922 = vmatprep.subr.bf16.mxu0 0
    %1923 = vmatpush1.bf16.msra.mxu0 0
    %1924 = vmatprep.mubr.bf16.mxu0 0
    %1925 = vmatmul.mubr.bf16.gmra.mrb[0].mxu0 %v1887
    %v1926 = vpop.f32.mrb[0].mxu0
    %v1927 = vadd.f32 %v1839, %v1926
    %v1928 = vpop.f32.mrb[0].mxu0
    %v1929 = vadd.f32 %v1843, %v1928
    %v1930 = vpop.f32.mrb[0].mxu0
    %v1931 = vadd.f32 %v1839, %v1930
    %v1932 = vpop.f32.mrb[0].mxu0
    %v1933 = vadd.f32 %v1843, %v1932
    %1934 = vmatprep.mubr.bf16.mxu0 0
    %1935 = vmatmul.mubr.bf16.gmra.mrb[0].mxu0 %v1890
    %v1936 = vpop.f32.mrb[0].mxu0
    %v1937 = vadd.f32 %v1839, %v1936
    %v1938 = vpop.f32.mrb[0].mxu0
    %v1939 = vadd.f32 %v1843, %v1938
    %v1940 = vpop.f32.mrb[0].mxu0
    %v1941 = vadd.f32 %v1839, %v1940
    %v1942 = vpop.f32.mrb[0].mxu0
    %v1943 = vadd.f32 %v1843, %v1942
    %1944 = vdwg.mxu0
    %v1945 = vmul.f32 %v1927, %v1927
    %v1946 = vmul.f32 %v1929, %v1929
    %v1947 = vmul.f32 %v1931, %v1931
    %v1948 = vmul.f32 %v1933, %v1933
    %v1949 = vmul.f32 %v1937, %v1937
    %v1950 = vmul.f32 %v1939, %v1939
    %v1951 = vmul.f32 %v1941, %v1941
    %v1952 = vmul.f32 %v1943, %v1943
    %v1953 = vmul.f32 %v1927, %v1945
    %v1954 = vmul.f32 %v1929, %v1946
    %v1955 = vmul.f32 %v1931, %v1947
    %v1956 = vmul.f32 %v1933, %v1948
    %v1957 = vmul.f32 %v1937, %v1949
    %v1958 = vmul.f32 %v1939, %v1950
    %v1959 = vmul.f32 %v1941, %v1951
    %v1960 = vmul.f32 %v1943, %v1952
    %v1961 = vmul.f32 %v1953, 0.044715
    %v1962 = vmul.f32 %v1954, 0.044715
    %v1963 = vmul.f32 %v1955, 0.044715
    %v1964 = vmul.f32 %v1956, 0.044715
    %v1965 = vmul.f32 %v1957, 0.044715
    %v1966 = vmul.f32 %v1958, 0.044715
    %v1967 = vmul.f32 %v1959, 0.044715
    %v1968 = vmul.f32 %v1960, 0.044715
    %v1969 = vadd.f32 %v1927, %v1961
    %v1970 = vadd.f32 %v1929, %v1962
    %v1971 = vadd.f32 %v1931, %v1963
    %v1972 = vadd.f32 %v1933, %v1964
    %v1973 = vadd.f32 %v1937, %v1965
    %v1974 = vadd.f32 %v1939, %v1966
    %v1975 = vadd.f32 %v1941, %v1967
    %v1976 = vadd.f32 %v1943, %v1968
    %v1977 = vmul.f32 %v1969, 0.7978846
    %v1978 = vmul.f32 %v1970, 0.7978846
    %v1979 = vmul.f32 %v1971, 0.7978846
    %v1980 = vmul.f32 %v1972, 0.7978846
    %v1981 = vmul.f32 %v1973, 0.7978846
    %v1982 = vmul.f32 %v1974, 0.7978846
    %v1983 = vmul.f32 %v1975, 0.7978846
    %v1984 = vmul.f32 %v1976, 0.7978846
    %v1985 = vtanh.pop %v1977
    %v1986 = vtanh.pop %v1978
    %v1987 = vtanh.pop %v1979
    %v1988 = vtanh.pop %v1980
    %v1989 = vtanh.pop %v1981
    %v1990 = vtanh.pop %v1982
    %v1991 = vtanh.pop %v1983
    %v1992 = vtanh.pop %v1984
    %v1993 = vadd.f32 %v1985, 1.0
    %v1994 = vadd.f32 %v1986, 1.0
    %v1995 = vadd.f32 %v1987, 1.0
    %v1996 = vadd.f32 %v1988, 1.0
    %v1997 = vadd.f32 %v1989, 1.0
    %v1998 = vadd.f32 %v1990, 1.0
    %v1999 = vadd.f32 %v1991, 1.0
    %v2000 = vadd.f32 %v1992, 1.0
    %v2001 = vmul.f32 %v1993, 0.5
    %v2002 = vmul.f32 %v1994, 0.5
    %v2003 = vmul.f32 %v1995, 0.5
    %v2004 = vmul.f32 %v1996, 0.5
    %v2005 = vmul.f32 %v1997, 0.5
    %v2006 = vmul.f32 %v1998, 0.5
    %v2007 = vmul.f32 %v1999, 0.5
    %v2008 = vmul.f32 %v2000, 0.5
    %v2009 = vmul.f32 %v1927, %v2001
    %v2010 = vmul.f32 %v1929, %v2002
    %v2011 = vmul.f32 %v1931, %v2003
    %v2012 = vmul.f32 %v1933, %v2004
    %v2013 = vmul.f32 %v1937, %v2005
    %v2014 = vmul.f32 %v1939, %v2006
    %v2015 = vmul.f32 %v1941, %v2007
    %v2016 = vmul.f32 %v1943, %v2008
    %v2017 = vpack.c.bf16 %v2011, %v2009
    %v2018 = vpack.c.bf16 %v2012, %v2010
    %v2019 = vpack.c.bf16 %v2015, %v2013
    %v2020 = vpack.c.bf16 %v2016, %v2014
    %v2021 = vld [vmem:[%s31] sm:$0xf]
    %v2022 = vld [vmem:[%s31 + $0x4] sm:$0xf]
    %v2023 = vld [vmem:[%s31 + $0x8] sm:$0xf]
    %v2024 = vld [vmem:[%s31 + $0xc] sm:$0xf]
    %v2025 = vld [vmem:[%s31 + $0x10] sm:$0xf]
    %v2026 = vld [vmem:[%s31 + $0x14] sm:$0xf]
    %v2027 = vld [vmem:[%s31 + $0x18] sm:$0xf]
    %v2028 = vld [vmem:[%s31 + $0x1c] sm:$0xf]
    %v2029 = vld [vmem:[%s31 + $0x20] sm:$0xf]
    %v2030 = vld [vmem:[%s31 + $0x24] sm:$0xf]
    %v2031 = vld [vmem:[%s31 + $0x28] sm:$0xf]
    %v2032 = vld [vmem:[%s31 + $0x2c] sm:$0xf]
    %v2033 = vld [vmem:[%s31 + $0x30] sm:$0xf]
    %v2034 = vld [vmem:[%s31 + $0x34] sm:$0xf]
    %v2035 = vld [vmem:[%s31 + $0x38] sm:$0xf]
    %v2036 = vld [vmem:[%s31 + $0x3c] sm:$0xf]
    %v2037 = vld [vmem:[%s31 + $0x40] sm:$0xf]
    %v2038 = vld [vmem:[%s31 + $0x44] sm:$0xf]
    %v2039 = vld [vmem:[%s31 + $0x48] sm:$0xf]
    %v2040 = vld [vmem:[%s31 + $0x4c] sm:$0xf]
    %v2041 = vld [vmem:[%s31 + $0x50] sm:$0xf]
    %v2042 = vld [vmem:[%s31 + $0x54] sm:$0xf]
    %v2043 = vld [vmem:[%s31 + $0x58] sm:$0xf]
    %v2044 = vld [vmem:[%s31 + $0x5c] sm:$0xf]
    %v2045 = vld [vmem:[%s31 + $0x60] sm:$0xf]
    %v2046 = vld [vmem:[%s31 + $0x64] sm:$0xf]
    %v2047 = vld [vmem:[%s31 + $0x68] sm:$0xf]
    %v2048 = vld [vmem:[%s31 + $0x6c] sm:$0xf]
    %v2049 = vld [vmem:[%s31 + $0x70] sm:$0xf]
    %v2050 = vld [vmem:[%s31 + $0x74] sm:$0xf]
    %v2051 = vld [vmem:[%s31 + $0x78] sm:$0xf]
    %v2052 = vld [vmem:[%s31 + $0x7c] sm:$0xf]
    %v2053 = vld [vmem:[%s33] sm:$0x1]
    %v2055 = vlaneseq
    %v2056 = vshrl.u32 %v2055, 7
    %v2057 = vsub.s32 0, %v2056
    %v2058 = vrot.slane %v2053, %v2057
    %v2092 = vunpack.c.l.b16 %v2021
    %v2093 = vunpack.c.l.b16 %v2022
    %v2094 = vunpack.c.l.b16 %v2023
    %v2095 = vunpack.c.l.b16 %v2024
    %v2096 = vunpack.c.l.b16 %v2025
    %v2097 = vunpack.c.l.b16 %v2026
    %v2098 = vunpack.c.l.b16 %v2027
    %v2099 = vunpack.c.l.b16 %v2028
    %v2100 = vunpack.c.l.b16 %v2029
    %v2101 = vunpack.c.l.b16 %v2030
    %v2102 = vunpack.c.l.b16 %v2031
    %v2103 = vunpack.c.l.b16 %v2032
    %v2104 = vunpack.c.l.b16 %v2033
    %v2105 = vunpack.c.l.b16 %v2034
    %v2106 = vunpack.c.l.b16 %v2035
    %v2107 = vunpack.c.l.b16 %v2036
    %v2108 = vunpack.c.l.b16 %v2037
    %v2109 = vunpack.c.l.b16 %v2038
    %v2110 = vunpack.c.l.b16 %v2039
    %v2111 = vunpack.c.l.b16 %v2040
    %v2112 = vunpack.c.l.b16 %v2041
    %v2113 = vunpack.c.l.b16 %v2042
    %v2114 = vunpack.c.l.b16 %v2043
    %v2115 = vunpack.c.l.b16 %v2044
    %v2116 = vunpack.c.l.b16 %v2045
    %v2117 = vunpack.c.l.b16 %v2046
    %v2118 = vunpack.c.l.b16 %v2047
    %v2119 = vunpack.c.l.b16 %v2048
    %v2120 = vunpack.c.l.b16 %v2049
    %v2121 = vunpack.c.l.b16 %v2050
    %v2122 = vunpack.c.l.b16 %v2051
    %v2123 = vunpack.c.l.b16 %v2052
    %v2124 = vpack.c.b16 %v2093, %v2092
    %v2125 = vpack.c.b16 %v2095, %v2094
    %v2126 = vpack.c.b16 %v2097, %v2096
    %v2127 = vpack.c.b16 %v2099, %v2098
    %v2128 = vpack.c.b16 %v2101, %v2100
    %v2129 = vpack.c.b16 %v2103, %v2102
    %v2130 = vpack.c.b16 %v2105, %v2104
    %v2131 = vpack.c.b16 %v2107, %v2106
    %v2132 = vpack.c.b16 %v2109, %v2108
    %v2133 = vpack.c.b16 %v2111, %v2110
    %v2134 = vpack.c.b16 %v2113, %v2112
    %v2135 = vpack.c.b16 %v2115, %v2114
    %v2136 = vpack.c.b16 %v2117, %v2116
    %v2137 = vpack.c.b16 %v2119, %v2118
    %v2138 = vpack.c.b16 %v2121, %v2120
    %v2139 = vpack.c.b16 %v2123, %v2122
    %2156 = vmatprep.subr.bf16.mxu0 0
    %2157 = vmatpush1.bf16.msra.mxu0 %v2124
    %2158 = vmatprep.subr.bf16.mxu0 0
    %2159 = vmatpush1.bf16.msra.mxu0 %v2125
    %2160 = vmatprep.subr.bf16.mxu0 0
    %2161 = vmatpush1.bf16.msra.mxu0 %v2126
    %2162 = vmatprep.subr.bf16.mxu0 0
    %2163 = vmatpush1.bf16.msra.mxu0 %v2127
    %2164 = vmatprep.subr.bf16.mxu0 0
    %2165 = vmatpush1.bf16.msra.mxu0 %v2128
    %2166 = vmatprep.subr.bf16.mxu0 0
    %2167 = vmatpush1.bf16.msra.mxu0 %v2129
    %2168 = vmatprep.subr.bf16.mxu0 0
    %2169 = vmatpush1.bf16.msra.mxu0 %v2130
    %2170 = vmatprep.subr.bf16.mxu0 0
    %2171 = vmatpush1.bf16.msra.mxu0 %v2131
    %2172 = vmatprep.subr.bf16.mxu0 0
    %2173 = vmatpush1.bf16.msra.mxu0 %v2132
    %2174 = vmatprep.subr.bf16.mxu0 0
    %2175 = vmatpush1.bf16.msra.mxu0 %v2133
    %2176 = vmatprep.subr.bf16.mxu0 0
    %2177 = vmatpush1.bf16.msra.mxu0 %v2134
    %2178 = vmatprep.subr.bf16.mxu0 0
    %2179 = vmatpush1.bf16.msra.mxu0 %v2135
    %2180 = vmatprep.subr.bf16.mxu0 0
    %2181 = vmatpush1.bf16.msra.mxu0 %v2136
    %2182 = vmatprep.subr.bf16.mxu0 0
    %2183 = vmatpush1.bf16.msra.mxu0 %v2137
    %2184 = vmatprep.subr.bf16.mxu0 0
    %2185 = vmatpush1.bf16.msra.mxu0 %v2138
    %2186 = vmatprep.subr.bf16.mxu0 0
    %2187 = vmatpush1.bf16.msra.mxu0 %v2139
    %2188 = vmatprep.mubr.bf16.mxu0 %v2018
    %2189 = vmatmul.mubr.bf16.gmra.mrb[0].mxu0 %v2017
    %v2190 = vpop.f32.mrb[0].mxu0
    %v2191 = vadd.f32 %v2058, %v2190
    %v2192 = vpop.f32.mrb[0].mxu0
    %v2193 = vpop.f32.mrb[0].mxu0
    %v2194 = vadd.f32 %v2058, %v2193
    %v2195 = vpop.f32.mrb[0].mxu0
    %2196 = vmatprep.mubr.bf16.mxu0 %v2020
    %2197 = vmatmul.mubr.bf16.gmra.mrb[0].mxu0 %v2019
    %v2198 = vpop.f32.mrb[0].mxu0
    %v2199 = vadd.f32 %v2058, %v2198
    %v2200 = vpop.f32.mrb[0].mxu0
    %v2201 = vpop.f32.mrb[0].mxu0
    %v2202 = vadd.f32 %v2058, %v2201
    %v2203 = vpop.f32.mrb[0].mxu0
    %2204 = vdwg.mxu0
    %v2205 = vadd.f32 %v1746, %v2191
    %v2206 = vadd.f32 %v1747, %v2194
    %v2207 = vadd.f32 %v1748, %v2199
    %v2208 = vadd.f32 %v1749, %v2202
    %v2209 = vld [vmem:[%s35] sm:$0x1]
    %v2210 = vld [vmem:[%s37] sm:$0x1]
    %v2211 = vsel %vm332, %v2205, 0.0
    %2212 = vadd.xlane.f32.xlu0 %v2211
    %v2213 = vpop.xlane.xlu0 %2212
    %v2214 = vsel %vm332, %v2206, 0.0
    %2215 = vadd.xlane.f32.xlu0 %v2214
    %v2216 = vpop.xlane.xlu0 %2215
    %v2217 = vsel %vm332, %v2207, 0.0
    %2218 = vadd.xlane.f32.xlu0 %v2217
    %v2219 = vpop.xlane.xlu0 %2218
    %v2220 = vsel %vm332, %v2208, 0.0
    %2221 = vadd.xlane.f32.xlu0 %v2220
    %v2222 = vpop.xlane.xlu0 %2221
    %v2223 = vmul.f32 %v2213, %v345
    %v2224 = vmul.f32 %v2216, %v345
    %v2225 = vmul.f32 %v2219, %v345
    %v2226 = vmul.f32 %v2222, %v345
    %v2227 = vsub.f32 %v2205, %v2223
    %v2228 = vsub.f32 %v2206, %v2224
    %v2229 = vsub.f32 %v2207, %v2225
    %v2230 = vsub.f32 %v2208, %v2226
    %v2231 = vmul.f32 %v2227, %v2227
    %v2232 = vmul.f32 %v2228, %v2228
    %v2233 = vmul.f32 %v2229, %v2229
    %v2234 = vmul.f32 %v2230, %v2230
    %v2235 = vsel %vm332, %v2231, 0.0
    %2236 = vadd.xlane.f32.xlu0 %v2235
    %v2237 = vpop.xlane.xlu0 %2236
    %v2238 = vsel %vm332, %v2232, 0.0
    %2239 = vadd.xlane.f32.xlu0 %v2238
    %v2240 = vpop.xlane.xlu0 %2239
    %v2241 = vsel %vm332, %v2233, 0.0
    %2242 = vadd.xlane.f32.xlu0 %v2241
    %v2243 = vpop.xlane.xlu0 %2242
    %v2244 = vsel %vm332, %v2234, 0.0
    %2245 = vadd.xlane.f32.xlu0 %v2244
    %v2246 = vpop.xlane.xlu0 %2245
    %v2247 = vmul.f32 %v2237, %v345
    %v2248 = vmul.f32 %v2240, %v345
    %v2249 = vmul.f32 %v2243, %v345
    %v2250 = vmul.f32 %v2246, %v345
    %v2251 = vadd.f32 %v2247, 1e-05
    %v2252 = vadd.f32 %v2248, 1e-05
    %v2253 = vadd.f32 %v2249, 1e-05
    %v2254 = vadd.f32 %v2250, 1e-05
    %v2255 = vrsqrt.pop %v2251
    %v2256 = vrsqrt.pop %v2252
    %v2257 = vrsqrt.pop %v2253
    %v2258 = vrsqrt.pop %v2254
    %v2259 = vmul.f32 %v2227, %v2255
    %v2260 = vmul.f32 %v2228, %v2256
    %v2261 = vmul.f32 %v2229, %v2257
    %v2262 = vmul.f32 %v2230, %v2258
    %v2264 = vlaneseq
    %v2265 = vshrl.u32 %v2264, 7
    %v2266 = vsub.s32 0, %v2265
    %v2267 = vrot.slane %v2209, %v2266
    %v2269 = vmul.f32 %v2259, %v2267
    %v2270 = vmul.f32 %v2260, %v2267
    %v2271 = vmul.f32 %v2261, %v2267
    %v2272 = vmul.f32 %v2262, %v2267
    %v2274 = vlaneseq
    %v2275 = vshrl.u32 %v2274, 7
    %v2276 = vsub.s32 0, %v2275
    %v2277 = vrot.slane %v2210, %v2276
    %v2279 = vadd.f32 %v2269, %v2277
    %v2280 = vadd.f32 %v2270, %v2277
    %v2281 = vadd.f32 %v2271, %v2277
    %v2282 = vadd.f32 %v2272, %v2277
    %v2283 = vpack.c.bf16 %v2280, %v2279
    %v2284 = vpack.c.bf16 %v2282, %v2281
    %v2285 = vld [vmem:[%s39] sm:$0xff]
    %v2286 = vld [vmem:[%s39 + $0x8] sm:$0xff]
    %v2287 = vld [vmem:[%s39 + $0x10] sm:$0xff]
    %v2288 = vld [vmem:[%s39 + $0x18] sm:$0xff]
    %v2289 = vld [vmem:[%s39 + $0x20] sm:$0xff]
    %v2290 = vld [vmem:[%s39 + $0x28] sm:$0xff]
    %v2291 = vld [vmem:[%s39 + $0x30] sm:$0xff]
    %v2292 = vld [vmem:[%s39 + $0x38] sm:$0xff]
    %v2293 = vld [vmem:[%s41] sm:$0x3]
    %v2295 = vlaneseq
    %v2296 = vshrl.u32 %v2295, 7
    %v2297 = vsub.s32 0, %v2296
    %v2298 = vrot.slane %v2293, %v2297
    %v2299 = vlaneseq
    %v2300 = vshrl.u32 %v2299, 7
    %v2301 = vsub.s32 1, %v2300
    %v2302 = vrot.slane %v2293, %v2301
    %v2313 = vunpack.c.l.b16 %v2285
    %v2314 = vunpack.c.h.b16 %v2285
    %v2315 = vunpack.c.l.b16 %v2286
    %v2316 = vunpack.c.h.b16 %v2286
    %v2317 = vunpack.c.l.b16 %v2287
    %v2318 = vunpack.c.h.b16 %v2287
    %v2319 = vunpack.c.l.b16 %v2288
    %v2320 = vunpack.c.h.b16 %v2288
    %v2321 = vunpack.c.l.b16 %v2289
    %v2322 = vunpack.c.h.b16 %v2289
    %v2323 = vunpack.c.l.b16 %v2290
    %v2324 = vunpack.c.h.b16 %v2290
    %v2325 = vunpack.c.l.b16 %v2291
    %v2326 = vunpack.c.h.b16 %v2291
    %v2327 = vunpack.c.l.b16 %v2292
    %v2328 = vunpack.c.h.b16 %v2292
    %v2329 = vpack.c.b16 %v2315, %v2313
    %v2330 = vpack.c.b16 %v2316, %v2314
    %v2331 = vpack.c.b16 %v2319, %v2317
    %v2332 = vpack.c.b16 %v2320, %v2318
    %v2333 = vpack.c.b16 %v2323, %v2321
    %v2334 = vpack.c.b16 %v2324, %v2322
    %v2335 = vpack.c.b16 %v2327, %v2325
    %v2336 = vpack.c.b16 %v2328, %v2326
    %v2346 = vsel %vm332, %v2283, 0
    %v2349 = vsel %vm332, %v2284, 0
    %2351 = vmatprep.subr.bf16.mxu0 %v2330
    %2352 = vmatpush1.bf16.msra.mxu0 %v2329
    %2353 = vmatprep.subr.bf16.mxu0 %v2332
    %2354 = vmatpush1.bf16.msra.mxu0 %v2331
    %2355 = vmatprep.subr.bf16.mxu0 %v2334
    %2356 = vmatpush1.bf16.msra.mxu0 %v2333
    %2357 = vmatprep.subr.bf16.mxu0 %v2336
    %2358 = vmatpush1.bf16.msra.mxu0 %v2335
    %2359 = vmatprep.subr.bf16.mxu0 0
    %2360 = vmatpush1.bf16.msra.mxu0 0
    %2361 = vmatprep.subr.bf16.mxu0 0
    %2362 = vmatpush1.bf16.msra.mxu0 0
    %2363 = vmatprep.subr.bf16.mxu0 0
    %2364 = vmatpush1.bf16.msra.mxu0 0
    %2365 = vmatprep.subr.bf16.mxu0 0
    %2366 = vmatpush1.bf16.msra.mxu0 0
    %2367 = vmatprep.subr.bf16.mxu0 0
    %2368 = vmatpush1.bf16.msra.mxu0 0
    %2369 = vmatprep.subr.bf16.mxu0 0
    %2370 = vmatpush1.bf16.msra.mxu0 0
    %2371 = vmatprep.subr.bf16.mxu0 0
    %2372 = vmatpush1.bf16.msra.mxu0 0
    %2373 = vmatprep.subr.bf16.mxu0 0
    %2374 = vmatpush1.bf16.msra.mxu0 0
    %2375 = vmatprep.subr.bf16.mxu0 0
    %2376 = vmatpush1.bf16.msra.mxu0 0
    %2377 = vmatprep.subr.bf16.mxu0 0
    %2378 = vmatpush1.bf16.msra.mxu0 0
    %2379 = vmatprep.subr.bf16.mxu0 0
    %2380 = vmatpush1.bf16.msra.mxu0 0
    %2381 = vmatprep.subr.bf16.mxu0 0
    %2382 = vmatpush1.bf16.msra.mxu0 0
    %2383 = vmatprep.mubr.bf16.mxu0 0
    %2384 = vmatmul.mubr.bf16.gmra.mrb[0].mxu0 %v2346
    %v2385 = vpop.f32.mrb[0].mxu0
    %v2386 = vadd.f32 %v2298, %v2385
    %v2387 = vpop.f32.mrb[0].mxu0
    %v2388 = vadd.f32 %v2302, %v2387
    %v2389 = vpop.f32.mrb[0].mxu0
    %v2390 = vadd.f32 %v2298, %v2389
    %v2391 = vpop.f32.mrb[0].mxu0
    %v2392 = vadd.f32 %v2302, %v2391
    %2393 = vmatprep.mubr.bf16.mxu0 0
    %2394 = vmatmul.mubr.bf16.gmra.mrb[0].mxu0 %v2349
    %v2395 = vpop.f32.mrb[0].mxu0
    %v2396 = vadd.f32 %v2298, %v2395
    %v2397 = vpop.f32.mrb[0].mxu0
    %v2398 = vadd.f32 %v2302, %v2397
    %v2399 = vpop.f32.mrb[0].mxu0
    %v2400 = vadd.f32 %v2298, %v2399
    %v2401 = vpop.f32.mrb[0].mxu0
    %v2402 = vadd.f32 %v2302, %v2401
    %2403 = vdwg.mxu0
    %2408 = vrot.lane.b32.xlu0 %v2386, 112
    %v2409 = vpop.permute.xlu0 %2408
    %2410 = vrot.lane.b32.xlu0 %v2390, 112
    %v2411 = vpop.permute.xlu0 %2410
    %2412 = vrot.lane.b32.xlu0 %v2396, 112
    %v2413 = vpop.permute.xlu0 %2412
    %2414 = vrot.lane.b32.xlu0 %v2400, 112
    %v2415 = vpop.permute.xlu0 %2414
    %2420 = vrot.lane.b32.xlu0 %v2386, 96
    %v2421 = vpop.permute.xlu0 %2420
    %2422 = vrot.lane.b32.xlu0 %v2390, 96
    %v2423 = vpop.permute.xlu0 %2422
    %2424 = vrot.lane.b32.xlu0 %v2396, 96
    %v2425 = vpop.permute.xlu0 %2424
    %2426 = vrot.lane.b32.xlu0 %v2400, 96
    %v2427 = vpop.permute.xlu0 %2426
    %2432 = vrot.lane.b32.xlu0 %v2386, 80
    %v2433 = vpop.permute.xlu0 %2432
    %2434 = vrot.lane.b32.xlu0 %v2390, 80
    %v2435 = vpop.permute.xlu0 %2434
    %2436 = vrot.lane.b32.xlu0 %v2396, 80
    %v2437 = vpop.permute.xlu0 %2436
    %2438 = vrot.lane.b32.xlu0 %v2400, 80
    %v2439 = vpop.permute.xlu0 %2438
    %2448 = vrot.lane.b32.xlu0 %v2388, 112
    %v2449 = vpop.permute.xlu0 %2448
    %2450 = vrot.lane.b32.xlu0 %v2392, 112
    %v2451 = vpop.permute.xlu0 %2450
    %2452 = vrot.lane.b32.xlu0 %v2398, 112
    %v2453 = vpop.permute.xlu0 %2452
    %2454 = vrot.lane.b32.xlu0 %v2402, 112
    %v2455 = vpop.permute.xlu0 %2454
    %2460 = vrot.lane.b32.xlu0 %v2388, 96
    %v2461 = vpop.permute.xlu0 %2460
    %2462 = vrot.lane.b32.xlu0 %v2392, 96
    %v2463 = vpop.permute.xlu0 %2462
    %2464 = vrot.lane.b32.xlu0 %v2398, 96
    %v2465 = vpop.permute.xlu0 %2464
    %2466 = vrot.lane.b32.xlu0 %v2402, 96
    %v2467 = vpop.permute.xlu0 %2466
    %2472 = vrot.lane.b32.xlu0 %v2388, 80
    %v2473 = vpop.permute.xlu0 %2472
    %2474 = vrot.lane.b32.xlu0 %v2392, 80
    %v2475 = vpop.permute.xlu0 %2474
    %2476 = vrot.lane.b32.xlu0 %v2398, 80
    %v2477 = vpop.permute.xlu0 %2476
    %2478 = vrot.lane.b32.xlu0 %v2402, 80
    %v2479 = vpop.permute.xlu0 %2478
    %v2484 = vpack.c.bf16 %v2390, %v2386
    %v2485 = vpack.c.bf16 %v2400, %v2396
    %v2486 = vpack.c.bf16 %v2411, %v2409
    %v2487 = vpack.c.bf16 %v2415, %v2413
    %v2488 = vpack.c.bf16 %v2423, %v2421
    %v2489 = vpack.c.bf16 %v2427, %v2425
    %v2490 = vpack.c.bf16 %v2435, %v2433
    %v2491 = vpack.c.bf16 %v2439, %v2437
    %2493 = vrot.lane.b32.xlu0 %v2484, 64
    %v2494 = vpop.permute.xlu0 %2493
    %v2496 = vsel %vm618, %v2484, 0
    %v2499 = vsel %vm618, %v2494, 0
    %2501 = vmatprep.subr.bf16.mxu0 0
    %2502 = vmatpush1.bf16.xpose.msra.mxu0 %v2499
    %2503 = vmatprep.subr.bf16.mxu0 0
    %2504 = vmatpush1.bf16.xpose.msra.mxu0 0
    %2505 = vmatprep.subr.bf16.mxu0 0
    %2506 = vmatpush1.bf16.xpose.msra.mxu0 0
    %2507 = vmatprep.subr.bf16.mxu0 0
    %2508 = vmatpush1.bf16.xpose.msra.mxu0 0
    %2509 = vmatprep.subr.bf16.mxu0 0
    %2510 = vmatpush1.bf16.xpose.msra.mxu0 0
    %2511 = vmatprep.subr.bf16.mxu0 0
    %2512 = vmatpush1.bf16.xpose.msra.mxu0 0
    %2513 = vmatprep.subr.bf16.mxu0 0
    %2514 = vmatpush1.bf16.xpose.msra.mxu0 0
    %2515 = vmatprep.subr.bf16.mxu0 0
    %2516 = vmatpush1.bf16.xpose.msra.mxu0 0
    %2517 = vmatprep.subr.bf16.mxu0 0
    %2518 = vmatpush1.bf16.xpose.msra.mxu0 0
    %2519 = vmatprep.subr.bf16.mxu0 0
    %2520 = vmatpush1.bf16.xpose.msra.mxu0 0
    %2521 = vmatprep.subr.bf16.mxu0 0
    %2522 = vmatpush1.bf16.xpose.msra.mxu0 0
    %2523 = vmatprep.subr.bf16.mxu0 0
    %2524 = vmatpush1.bf16.xpose.msra.mxu0 0
    %2525 = vmatprep.subr.bf16.mxu0 0
    %2526 = vmatpush1.bf16.xpose.msra.mxu0 0
    %2527 = vmatprep.subr.bf16.mxu0 0
    %2528 = vmatpush1.bf16.xpose.msra.mxu0 0
    %2529 = vmatprep.subr.bf16.mxu0 0
    %2530 = vmatpush1.bf16.xpose.msra.mxu0 0
    %2531 = vmatprep.subr.bf16.mxu0 0
    %2532 = vmatpush1.bf16.xpose.msra.mxu0 0
    %2533 = vmatprep.mubr.bf16.mxu0 0
    %2534 = vmatmul.mubr.bf16.gmra.mrb[0].mxu0 %v2496
    %v2535 = vpop.f32.mrb[0].mxu0
    %v2536 = vadd.f32 0.0, %v2535
    %v2537 = vpop.f32.mrb[0].mxu0
    %v2538 = vpop.f32.mrb[0].mxu0
    %v2539 = vadd.f32 0.0, %v2538
    %v2540 = vpop.f32.mrb[0].mxu0
    %2541 = vdwg.mxu0
    %2543 = vrot.lane.b32.xlu0 %v2485, 64
    %v2544 = vpop.permute.xlu0 %2543
    %v2546 = vsel %vm618, %v2485, 0
    %v2549 = vsel %vm618, %v2544, 0
    %2551 = vmatprep.subr.bf16.mxu0 0
    %2552 = vmatpush1.bf16.xpose.msra.mxu0 %v2549
    %2553 = vmatprep.subr.bf16.mxu0 0
    %2554 = vmatpush1.bf16.xpose.msra.mxu0 0
    %2555 = vmatprep.subr.bf16.mxu0 0
    %2556 = vmatpush1.bf16.xpose.msra.mxu0 0
    %2557 = vmatprep.subr.bf16.mxu0 0
    %2558 = vmatpush1.bf16.xpose.msra.mxu0 0
    %2559 = vmatprep.subr.bf16.mxu0 0
    %2560 = vmatpush1.bf16.xpose.msra.mxu0 0
    %2561 = vmatprep.subr.bf16.mxu0 0
    %2562 = vmatpush1.bf16.xpose.msra.mxu0 0
    %2563 = vmatprep.subr.bf16.mxu0 0
    %2564 = vmatpush1.bf16.xpose.msra.mxu0 0
    %2565 = vmatprep.subr.bf16.mxu0 0
    %2566 = vmatpush1.bf16.xpose.msra.mxu0 0
    %2567 = vmatprep.subr.bf16.mxu0 0
    %2568 = vmatpush1.bf16.xpose.msra.mxu0 0
    %2569 = vmatprep.subr.bf16.mxu0 0
    %2570 = vmatpush1.bf16.xpose.msra.mxu0 0
    %2571 = vmatprep.subr.bf16.mxu0 0
    %2572 = vmatpush1.bf16.xpose.msra.mxu0 0
    %2573 = vmatprep.subr.bf16.mxu0 0
    %2574 = vmatpush1.bf16.xpose.msra.mxu0 0
    %2575 = vmatprep.subr.bf16.mxu0 0
    %2576 = vmatpush1.bf16.xpose.msra.mxu0 0
    %2577 = vmatprep.subr.bf16.mxu0 0
    %2578 = vmatpush1.bf16.xpose.msra.mxu0 0
    %2579 = vmatprep.subr.bf16.mxu0 0
    %2580 = vmatpush1.bf16.xpose.msra.mxu0 0
    %2581 = vmatprep.subr.bf16.mxu0 0
    %2582 = vmatpush1.bf16.xpose.msra.mxu0 0
    %2583 = vmatprep.mubr.bf16.mxu0 0
    %2584 = vmatmul.mubr.bf16.gmra.mrb[0].mxu0 %v2546
    %v2585 = vpop.f32.mrb[0].mxu0
    %v2586 = vadd.f32 0.0, %v2585
    %v2587 = vpop.f32.mrb[0].mxu0
    %v2588 = vpop.f32.mrb[0].mxu0
    %v2589 = vadd.f32 0.0, %v2588
    %v2590 = vpop.f32.mrb[0].mxu0
    %2591 = vdwg.mxu0
    %2593 = vrot.lane.b32.xlu0 %v2486, 64
    %v2594 = vpop.permute.xlu0 %2593
    %v2596 = vsel %vm618, %v2486, 0
    %v2599 = vsel %vm618, %v2594, 0
    %2601 = vmatprep.subr.bf16.mxu0 0
    %2602 = vmatpush1.bf16.xpose.msra.mxu0 %v2599
    %2603 = vmatprep.subr.bf16.mxu0 0
    %2604 = vmatpush1.bf16.xpose.msra.mxu0 0
    %2605 = vmatprep.subr.bf16.mxu0 0
    %2606 = vmatpush1.bf16.xpose.msra.mxu0 0
    %2607 = vmatprep.subr.bf16.mxu0 0
    %2608 = vmatpush1.bf16.xpose.msra.mxu0 0
    %2609 = vmatprep.subr.bf16.mxu0 0
    %2610 = vmatpush1.bf16.xpose.msra.mxu0 0
    %2611 = vmatprep.subr.bf16.mxu0 0
    %2612 = vmatpush1.bf16.xpose.msra.mxu0 0
    %2613 = vmatprep.subr.bf16.mxu0 0
    %2614 = vmatpush1.bf16.xpose.msra.mxu0 0
    %2615 = vmatprep.subr.bf16.mxu0 0
    %2616 = vmatpush1.bf16.xpose.msra.mxu0 0
    %2617 = vmatprep.subr.bf16.mxu0 0
    %2618 = vmatpush1.bf16.xpose.msra.mxu0 0
    %2619 = vmatprep.subr.bf16.mxu0 0
    %2620 = vmatpush1.bf16.xpose.msra.mxu0 0
    %2621 = vmatprep.subr.bf16.mxu0 0
    %2622 = vmatpush1.bf16.xpose.msra.mxu0 0
    %2623 = vmatprep.subr.bf16.mxu0 0
    %2624 = vmatpush1.bf16.xpose.msra.mxu0 0
    %2625 = vmatprep.subr.bf16.mxu0 0
    %2626 = vmatpush1.bf16.xpose.msra.mxu0 0
    %2627 = vmatprep.subr.bf16.mxu0 0
    %2628 = vmatpush1.bf16.xpose.msra.mxu0 0
    %2629 = vmatprep.subr.bf16.mxu0 0
    %2630 = vmatpush1.bf16.xpose.msra.mxu0 0
    %2631 = vmatprep.subr.bf16.mxu0 0
    %2632 = vmatpush1.bf16.xpose.msra.mxu0 0
    %2633 = vmatprep.mubr.bf16.mxu0 0
    %2634 = vmatmul.mubr.bf16.gmra.mrb[0].mxu0 %v2596
    %v2635 = vpop.f32.mrb[0].mxu0
    %v2636 = vadd.f32 0.0, %v2635
    %v2637 = vpop.f32.mrb[0].mxu0
    %v2638 = vpop.f32.mrb[0].mxu0
    %v2639 = vadd.f32 0.0, %v2638
    %v2640 = vpop.f32.mrb[0].mxu0
    %2641 = vdwg.mxu0
    %2643 = vrot.lane.b32.xlu0 %v2487, 64
    %v2644 = vpop.permute.xlu0 %2643
    %v2646 = vsel %vm618, %v2487, 0
    %v2649 = vsel %vm618, %v2644, 0
    %2651 = vmatprep.subr.bf16.mxu0 0
    %2652 = vmatpush1.bf16.xpose.msra.mxu0 %v2649
    %2653 = vmatprep.subr.bf16.mxu0 0
    %2654 = vmatpush1.bf16.xpose.msra.mxu0 0
    %2655 = vmatprep.subr.bf16.mxu0 0
    %2656 = vmatpush1.bf16.xpose.msra.mxu0 0
    %2657 = vmatprep.subr.bf16.mxu0 0
    %2658 = vmatpush1.bf16.xpose.msra.mxu0 0
    %2659 = vmatprep.subr.bf16.mxu0 0
    %2660 = vmatpush1.bf16.xpose.msra.mxu0 0
    %2661 = vmatprep.subr.bf16.mxu0 0
    %2662 = vmatpush1.bf16.xpose.msra.mxu0 0
    %2663 = vmatprep.subr.bf16.mxu0 0
    %2664 = vmatpush1.bf16.xpose.msra.mxu0 0
    %2665 = vmatprep.subr.bf16.mxu0 0
    %2666 = vmatpush1.bf16.xpose.msra.mxu0 0
    %2667 = vmatprep.subr.bf16.mxu0 0
    %2668 = vmatpush1.bf16.xpose.msra.mxu0 0
    %2669 = vmatprep.subr.bf16.mxu0 0
    %2670 = vmatpush1.bf16.xpose.msra.mxu0 0
    %2671 = vmatprep.subr.bf16.mxu0 0
    %2672 = vmatpush1.bf16.xpose.msra.mxu0 0
    %2673 = vmatprep.subr.bf16.mxu0 0
    %2674 = vmatpush1.bf16.xpose.msra.mxu0 0
    %2675 = vmatprep.subr.bf16.mxu0 0
    %2676 = vmatpush1.bf16.xpose.msra.mxu0 0
    %2677 = vmatprep.subr.bf16.mxu0 0
    %2678 = vmatpush1.bf16.xpose.msra.mxu0 0
    %2679 = vmatprep.subr.bf16.mxu0 0
    %2680 = vmatpush1.bf16.xpose.msra.mxu0 0
    %2681 = vmatprep.subr.bf16.mxu0 0
    %2682 = vmatpush1.bf16.xpose.msra.mxu0 0
    %2683 = vmatprep.mubr.bf16.mxu0 0
    %2684 = vmatmul.mubr.bf16.gmra.mrb[0].mxu0 %v2646
    %v2685 = vpop.f32.mrb[0].mxu0
    %v2686 = vadd.f32 0.0, %v2685
    %v2687 = vpop.f32.mrb[0].mxu0
    %v2688 = vpop.f32.mrb[0].mxu0
    %v2689 = vadd.f32 0.0, %v2688
    %v2690 = vpop.f32.mrb[0].mxu0
    %2691 = vdwg.mxu0
    %2693 = vrot.lane.b32.xlu0 %v2488, 64
    %v2694 = vpop.permute.xlu0 %2693
    %v2696 = vsel %vm618, %v2488, 0
    %v2699 = vsel %vm618, %v2694, 0
    %2701 = vmatprep.subr.bf16.mxu0 0
    %2702 = vmatpush1.bf16.xpose.msra.mxu0 %v2699
    %2703 = vmatprep.subr.bf16.mxu0 0
    %2704 = vmatpush1.bf16.xpose.msra.mxu0 0
    %2705 = vmatprep.subr.bf16.mxu0 0
    %2706 = vmatpush1.bf16.xpose.msra.mxu0 0
    %2707 = vmatprep.subr.bf16.mxu0 0
    %2708 = vmatpush1.bf16.xpose.msra.mxu0 0
    %2709 = vmatprep.subr.bf16.mxu0 0
    %2710 = vmatpush1.bf16.xpose.msra.mxu0 0
    %2711 = vmatprep.subr.bf16.mxu0 0
    %2712 = vmatpush1.bf16.xpose.msra.mxu0 0
    %2713 = vmatprep.subr.bf16.mxu0 0
    %2714 = vmatpush1.bf16.xpose.msra.mxu0 0
    %2715 = vmatprep.subr.bf16.mxu0 0
    %2716 = vmatpush1.bf16.xpose.msra.mxu0 0
    %2717 = vmatprep.subr.bf16.mxu0 0
    %2718 = vmatpush1.bf16.xpose.msra.mxu0 0
    %2719 = vmatprep.subr.bf16.mxu0 0
    %2720 = vmatpush1.bf16.xpose.msra.mxu0 0
    %2721 = vmatprep.subr.bf16.mxu0 0
    %2722 = vmatpush1.bf16.xpose.msra.mxu0 0
    %2723 = vmatprep.subr.bf16.mxu0 0
    %2724 = vmatpush1.bf16.xpose.msra.mxu0 0
    %2725 = vmatprep.subr.bf16.mxu0 0
    %2726 = vmatpush1.bf16.xpose.msra.mxu0 0
    %2727 = vmatprep.subr.bf16.mxu0 0
    %2728 = vmatpush1.bf16.xpose.msra.mxu0 0
    %2729 = vmatprep.subr.bf16.mxu0 0
    %2730 = vmatpush1.bf16.xpose.msra.mxu0 0
    %2731 = vmatprep.subr.bf16.mxu0 0
    %2732 = vmatpush1.bf16.xpose.msra.mxu0 0
    %2733 = vmatprep.mubr.bf16.mxu0 0
    %2734 = vmatmul.mubr.bf16.gmra.mrb[0].mxu0 %v2696
    %v2735 = vpop.f32.mrb[0].mxu0
    %v2736 = vadd.f32 0.0, %v2735
    %v2737 = vpop.f32.mrb[0].mxu0
    %v2738 = vpop.f32.mrb[0].mxu0
    %v2739 = vadd.f32 0.0, %v2738
    %v2740 = vpop.f32.mrb[0].mxu0
    %2741 = vdwg.mxu0
    %2743 = vrot.lane.b32.xlu0 %v2489, 64
    %v2744 = vpop.permute.xlu0 %2743
    %v2746 = vsel %vm618, %v2489, 0
    %v2749 = vsel %vm618, %v2744, 0
    %2751 = vmatprep.subr.bf16.mxu0 0
    %2752 = vmatpush1.bf16.xpose.msra.mxu0 %v2749
    %2753 = vmatprep.subr.bf16.mxu0 0
    %2754 = vmatpush1.bf16.xpose.msra.mxu0 0
    %2755 = vmatprep.subr.bf16.mxu0 0
    %2756 = vmatpush1.bf16.xpose.msra.mxu0 0
    %2757 = vmatprep.subr.bf16.mxu0 0
    %2758 = vmatpush1.bf16.xpose.msra.mxu0 0
    %2759 = vmatprep.subr.bf16.mxu0 0
    %2760 = vmatpush1.bf16.xpose.msra.mxu0 0
    %2761 = vmatprep.subr.bf16.mxu0 0
    %2762 = vmatpush1.bf16.xpose.msra.mxu0 0
    %2763 = vmatprep.subr.bf16.mxu0 0
    %2764 = vmatpush1.bf16.xpose.msra.mxu0 0
    %2765 = vmatprep.subr.bf16.mxu0 0
    %2766 = vmatpush1.bf16.xpose.msra.mxu0 0
    %2767 = vmatprep.subr.bf16.mxu0 0
    %2768 = vmatpush1.bf16.xpose.msra.mxu0 0
    %2769 = vmatprep.subr.bf16.mxu0 0
    %2770 = vmatpush1.bf16.xpose.msra.mxu0 0
    %2771 = vmatprep.subr.bf16.mxu0 0
    %2772 = vmatpush1.bf16.xpose.msra.mxu0 0
    %2773 = vmatprep.subr.bf16.mxu0 0
    %2774 = vmatpush1.bf16.xpose.msra.mxu0 0
    %2775 = vmatprep.subr.bf16.mxu0 0
    %2776 = vmatpush1.bf16.xpose.msra.mxu0 0
    %2777 = vmatprep.subr.bf16.mxu0 0
    %2778 = vmatpush1.bf16.xpose.msra.mxu0 0
    %2779 = vmatprep.subr.bf16.mxu0 0
    %2780 = vmatpush1.bf16.xpose.msra.mxu0 0
    %2781 = vmatprep.subr.bf16.mxu0 0
    %2782 = vmatpush1.bf16.xpose.msra.mxu0 0
    %2783 = vmatprep.mubr.bf16.mxu0 0
    %2784 = vmatmul.mubr.bf16.gmra.mrb[0].mxu0 %v2746
    %v2785 = vpop.f32.mrb[0].mxu0
    %v2786 = vadd.f32 0.0, %v2785
    %v2787 = vpop.f32.mrb[0].mxu0
    %v2788 = vpop.f32.mrb[0].mxu0
    %v2789 = vadd.f32 0.0, %v2788
    %v2790 = vpop.f32.mrb[0].mxu0
    %2791 = vdwg.mxu0
    %2793 = vrot.lane.b32.xlu0 %v2490, 64
    %v2794 = vpop.permute.xlu0 %2793
    %v2796 = vsel %vm618, %v2490, 0
    %v2799 = vsel %vm618, %v2794, 0
    %2801 = vmatprep.subr.bf16.mxu0 0
    %2802 = vmatpush1.bf16.xpose.msra.mxu0 %v2799
    %2803 = vmatprep.subr.bf16.mxu0 0
    %2804 = vmatpush1.bf16.xpose.msra.mxu0 0
    %2805 = vmatprep.subr.bf16.mxu0 0
    %2806 = vmatpush1.bf16.xpose.msra.mxu0 0
    %2807 = vmatprep.subr.bf16.mxu0 0
    %2808 = vmatpush1.bf16.xpose.msra.mxu0 0
    %2809 = vmatprep.subr.bf16.mxu0 0
    %2810 = vmatpush1.bf16.xpose.msra.mxu0 0
    %2811 = vmatprep.subr.bf16.mxu0 0
    %2812 = vmatpush1.bf16.xpose.msra.mxu0 0
    %2813 = vmatprep.subr.bf16.mxu0 0
    %2814 = vmatpush1.bf16.xpose.msra.mxu0 0
    %2815 = vmatprep.subr.bf16.mxu0 0
    %2816 = vmatpush1.bf16.xpose.msra.mxu0 0
    %2817 = vmatprep.subr.bf16.mxu0 0
    %2818 = vmatpush1.bf16.xpose.msra.mxu0 0
    %2819 = vmatprep.subr.bf16.mxu0 0
    %2820 = vmatpush1.bf16.xpose.msra.mxu0 0
    %2821 = vmatprep.subr.bf16.mxu0 0
    %2822 = vmatpush1.bf16.xpose.msra.mxu0 0
    %2823 = vmatprep.subr.bf16.mxu0 0
    %2824 = vmatpush1.bf16.xpose.msra.mxu0 0
    %2825 = vmatprep.subr.bf16.mxu0 0
    %2826 = vmatpush1.bf16.xpose.msra.mxu0 0
    %2827 = vmatprep.subr.bf16.mxu0 0
    %2828 = vmatpush1.bf16.xpose.msra.mxu0 0
    %2829 = vmatprep.subr.bf16.mxu0 0
    %2830 = vmatpush1.bf16.xpose.msra.mxu0 0
    %2831 = vmatprep.subr.bf16.mxu0 0
    %2832 = vmatpush1.bf16.xpose.msra.mxu0 0
    %2833 = vmatprep.mubr.bf16.mxu0 0
    %2834 = vmatmul.mubr.bf16.gmra.mrb[0].mxu0 %v2796
    %v2835 = vpop.f32.mrb[0].mxu0
    %v2836 = vadd.f32 0.0, %v2835
    %v2837 = vpop.f32.mrb[0].mxu0
    %v2838 = vpop.f32.mrb[0].mxu0
    %v2839 = vadd.f32 0.0, %v2838
    %v2840 = vpop.f32.mrb[0].mxu0
    %2841 = vdwg.mxu0
    %2843 = vrot.lane.b32.xlu0 %v2491, 64
    %v2844 = vpop.permute.xlu0 %2843
    %v2846 = vsel %vm618, %v2491, 0
    %v2849 = vsel %vm618, %v2844, 0
    %2851 = vmatprep.subr.bf16.mxu0 0
    %2852 = vmatpush1.bf16.xpose.msra.mxu0 %v2849
    %2853 = vmatprep.subr.bf16.mxu0 0
    %2854 = vmatpush1.bf16.xpose.msra.mxu0 0
    %2855 = vmatprep.subr.bf16.mxu0 0
    %2856 = vmatpush1.bf16.xpose.msra.mxu0 0
    %2857 = vmatprep.subr.bf16.mxu0 0
    %2858 = vmatpush1.bf16.xpose.msra.mxu0 0
    %2859 = vmatprep.subr.bf16.mxu0 0
    %2860 = vmatpush1.bf16.xpose.msra.mxu0 0
    %2861 = vmatprep.subr.bf16.mxu0 0
    %2862 = vmatpush1.bf16.xpose.msra.mxu0 0
    %2863 = vmatprep.subr.bf16.mxu0 0
    %2864 = vmatpush1.bf16.xpose.msra.mxu0 0
    %2865 = vmatprep.subr.bf16.mxu0 0
    %2866 = vmatpush1.bf16.xpose.msra.mxu0 0
    %2867 = vmatprep.subr.bf16.mxu0 0
    %2868 = vmatpush1.bf16.xpose.msra.mxu0 0
    %2869 = vmatprep.subr.bf16.mxu0 0
    %2870 = vmatpush1.bf16.xpose.msra.mxu0 0
    %2871 = vmatprep.subr.bf16.mxu0 0
    %2872 = vmatpush1.bf16.xpose.msra.mxu0 0
    %2873 = vmatprep.subr.bf16.mxu0 0
    %2874 = vmatpush1.bf16.xpose.msra.mxu0 0
    %2875 = vmatprep.subr.bf16.mxu0 0
    %2876 = vmatpush1.bf16.xpose.msra.mxu0 0
    %2877 = vmatprep.subr.bf16.mxu0 0
    %2878 = vmatpush1.bf16.xpose.msra.mxu0 0
    %2879 = vmatprep.subr.bf16.mxu0 0
    %2880 = vmatpush1.bf16.xpose.msra.mxu0 0
    %2881 = vmatprep.subr.bf16.mxu0 0
    %2882 = vmatpush1.bf16.xpose.msra.mxu0 0
    %2883 = vmatprep.mubr.bf16.mxu0 0
    %2884 = vmatmul.mubr.bf16.gmra.mrb[0].mxu0 %v2846
    %v2885 = vpop.f32.mrb[0].mxu0
    %v2886 = vadd.f32 0.0, %v2885
    %v2887 = vpop.f32.mrb[0].mxu0
    %v2888 = vpop.f32.mrb[0].mxu0
    %v2889 = vadd.f32 0.0, %v2888
    %v2890 = vpop.f32.mrb[0].mxu0
    %2891 = vdwg.mxu0
    %v2892 = vld [vmem:[%s43] sm:$0xff]
    %v2893 = vld [vmem:[%s43 + $0x8] sm:$0xff]
    %v2894 = vld [vmem:[%s43 + $0x10] sm:$0xff]
    %v2895 = vld [vmem:[%s43 + $0x18] sm:$0xff]
    %v2896 = vld [vmem:[%s43 + $0x20] sm:$0xff]
    %v2897 = vld [vmem:[%s43 + $0x28] sm:$0xff]
    %v2898 = vld [vmem:[%s43 + $0x30] sm:$0xff]
    %v2899 = vld [vmem:[%s43 + $0x38] sm:$0xff]
    %v2900 = vadd.f32 %v2536, %v2892
    %v2901 = vadd.f32 %v2539, %v2893
    %v2902 = vadd.f32 %v2586, %v2892
    %v2903 = vadd.f32 %v2589, %v2893
    %v2904 = vadd.f32 %v2636, %v2894
    %v2905 = vadd.f32 %v2639, %v2895
    %v2906 = vadd.f32 %v2686, %v2894
    %v2907 = vadd.f32 %v2689, %v2895
    %v2908 = vadd.f32 %v2736, %v2896
    %v2909 = vadd.f32 %v2739, %v2897
    %v2910 = vadd.f32 %v2786, %v2896
    %v2911 = vadd.f32 %v2789, %v2897
    %v2912 = vadd.f32 %v2836, %v2898
    %v2913 = vadd.f32 %v2839, %v2899
    %v2914 = vadd.f32 %v2886, %v2898
    %v2915 = vadd.f32 %v2889, %v2899
    %v2916 = vsel %vm618, %v2900, -inf
    %2917 = vmax.xlane.f32.xlu0 %v2916
    %v2918 = vpop.xlane.xlu0 %2917
    %v2919 = vsel %vm618, %v2901, -inf
    %2920 = vmax.xlane.f32.xlu0 %v2919
    %v2921 = vpop.xlane.xlu0 %2920
    %v2922 = vsel %vm618, %v2902, -inf
    %2923 = vmax.xlane.f32.xlu0 %v2922
    %v2924 = vpop.xlane.xlu0 %2923
    %v2925 = vsel %vm618, %v2903, -inf
    %2926 = vmax.xlane.f32.xlu0 %v2925
    %v2927 = vpop.xlane.xlu0 %2926
    %v2928 = vsel %vm618, %v2904, -inf
    %2929 = vmax.xlane.f32.xlu0 %v2928
    %v2930 = vpop.xlane.xlu0 %2929
    %v2931 = vsel %vm618, %v2905, -inf
    %2932 = vmax.xlane.f32.xlu0 %v2931
    %v2933 = vpop.xlane.xlu0 %2932
    %v2934 = vsel %vm618, %v2906, -inf
    %2935 = vmax.xlane.f32.xlu0 %v2934
    %v2936 = vpop.xlane.xlu0 %2935
    %v2937 = vsel %vm618, %v2907, -inf
    %2938 = vmax.xlane.f32.xlu0 %v2937
    %v2939 = vpop.xlane.xlu0 %2938
    %v2940 = vsel %vm618, %v2908, -inf
    %2941 = vmax.xlane.f32.xlu0 %v2940
    %v2942 = vpop.xlane.xlu0 %2941
    %v2943 = vsel %vm618, %v2909, -inf
    %2944 = vmax.xlane.f32.xlu0 %v2943
    %v2945 = vpop.xlane.xlu0 %2944
    %v2946 = vsel %vm618, %v2910, -inf
    %2947 = vmax.xlane.f32.xlu0 %v2946
    %v2948 = vpop.xlane.xlu0 %2947
    %v2949 = vsel %vm618, %v2911, -inf
    %2950 = vmax.xlane.f32.xlu0 %v2949
    %v2951 = vpop.xlane.xlu0 %2950
    %v2952 = vsel %vm618, %v2912, -inf
    %2953 = vmax.xlane.f32.xlu0 %v2952
    %v2954 = vpop.xlane.xlu0 %2953
    %v2955 = vsel %vm618, %v2913, -inf
    %2956 = vmax.xlane.f32.xlu0 %v2955
    %v2957 = vpop.xlane.xlu0 %2956
    %v2958 = vsel %vm618, %v2914, -inf
    %2959 = vmax.xlane.f32.xlu0 %v2958
    %v2960 = vpop.xlane.xlu0 %2959
    %v2961 = vsel %vm618, %v2915, -inf
    %2962 = vmax.xlane.f32.xlu0 %v2961
    %v2963 = vpop.xlane.xlu0 %2962
    %v2964 = vsub.f32 %v2900, %v2918
    %v2965 = vsub.f32 %v2901, %v2921
    %v2966 = vsub.f32 %v2902, %v2924
    %v2967 = vsub.f32 %v2903, %v2927
    %v2968 = vsub.f32 %v2904, %v2930
    %v2969 = vsub.f32 %v2905, %v2933
    %v2970 = vsub.f32 %v2906, %v2936
    %v2971 = vsub.f32 %v2907, %v2939
    %v2972 = vsub.f32 %v2908, %v2942
    %v2973 = vsub.f32 %v2909, %v2945
    %v2974 = vsub.f32 %v2910, %v2948
    %v2975 = vsub.f32 %v2911, %v2951
    %v2976 = vsub.f32 %v2912, %v2954
    %v2977 = vsub.f32 %v2913, %v2957
    %v2978 = vsub.f32 %v2914, %v2960
    %v2979 = vsub.f32 %v2915, %v2963
    %v2980 = vmul.f32 %v2964, 1.442695
    %v2981 = vpow.pop %v2980
    %v2982 = vmul.f32 %v2965, 1.442695
    %v2983 = vpow.pop %v2982
    %v2984 = vmul.f32 %v2966, 1.442695
    %v2985 = vpow.pop %v2984
    %v2986 = vmul.f32 %v2967, 1.442695
    %v2987 = vpow.pop %v2986
    %v2988 = vmul.f32 %v2968, 1.442695
    %v2989 = vpow.pop %v2988
    %v2990 = vmul.f32 %v2969, 1.442695
    %v2991 = vpow.pop %v2990
    %v2992 = vmul.f32 %v2970, 1.442695
    %v2993 = vpow.pop %v2992
    %v2994 = vmul.f32 %v2971, 1.442695
    %v2995 = vpow.pop %v2994
    %v2996 = vmul.f32 %v2972, 1.442695
    %v2997 = vpow.pop %v2996
    %v2998 = vmul.f32 %v2973, 1.442695
    %v2999 = vpow.pop %v2998
    %v3000 = vmul.f32 %v2974, 1.442695
    %v3001 = vpow.pop %v3000
    %v3002 = vmul.f32 %v2975, 1.442695
    %v3003 = vpow.pop %v3002
    %v3004 = vmul.f32 %v2976, 1.442695
    %v3005 = vpow.pop %v3004
    %v3006 = vmul.f32 %v2977, 1.442695
    %v3007 = vpow.pop %v3006
    %v3008 = vmul.f32 %v2978, 1.442695
    %v3009 = vpow.pop %v3008
    %v3010 = vmul.f32 %v2979, 1.442695
    %v3011 = vpow.pop %v3010
    %v3012 = vsel %vm618, %v2981, 0.0
    %3013 = vadd.xlane.f32.xlu0 %v3012
    %v3014 = vpop.xlane.xlu0 %3013
    %v3015 = vsel %vm618, %v2983, 0.0
    %3016 = vadd.xlane.f32.xlu0 %v3015
    %v3017 = vpop.xlane.xlu0 %3016
    %v3018 = vsel %vm618, %v2985, 0.0
    %3019 = vadd.xlane.f32.xlu0 %v3018
    %v3020 = vpop.xlane.xlu0 %3019
    %v3021 = vsel %vm618, %v2987, 0.0
    %3022 = vadd.xlane.f32.xlu0 %v3021
    %v3023 = vpop.xlane.xlu0 %3022
    %v3024 = vsel %vm618, %v2989, 0.0
    %3025 = vadd.xlane.f32.xlu0 %v3024
    %v3026 = vpop.xlane.xlu0 %3025
    %v3027 = vsel %vm618, %v2991, 0.0
    %3028 = vadd.xlane.f32.xlu0 %v3027
    %v3029 = vpop.xlane.xlu0 %3028
    %v3030 = vsel %vm618, %v2993, 0.0
    %3031 = vadd.xlane.f32.xlu0 %v3030
    %v3032 = vpop.xlane.xlu0 %3031
    %v3033 = vsel %vm618, %v2995, 0.0
    %3034 = vadd.xlane.f32.xlu0 %v3033
    %v3035 = vpop.xlane.xlu0 %3034
    %v3036 = vsel %vm618, %v2997, 0.0
    %3037 = vadd.xlane.f32.xlu0 %v3036
    %v3038 = vpop.xlane.xlu0 %3037
    %v3039 = vsel %vm618, %v2999, 0.0
    %3040 = vadd.xlane.f32.xlu0 %v3039
    %v3041 = vpop.xlane.xlu0 %3040
    %v3042 = vsel %vm618, %v3001, 0.0
    %3043 = vadd.xlane.f32.xlu0 %v3042
    %v3044 = vpop.xlane.xlu0 %3043
    %v3045 = vsel %vm618, %v3003, 0.0
    %3046 = vadd.xlane.f32.xlu0 %v3045
    %v3047 = vpop.xlane.xlu0 %3046
    %v3048 = vsel %vm618, %v3005, 0.0
    %3049 = vadd.xlane.f32.xlu0 %v3048
    %v3050 = vpop.xlane.xlu0 %3049
    %v3051 = vsel %vm618, %v3007, 0.0
    %3052 = vadd.xlane.f32.xlu0 %v3051
    %v3053 = vpop.xlane.xlu0 %3052
    %v3054 = vsel %vm618, %v3009, 0.0
    %3055 = vadd.xlane.f32.xlu0 %v3054
    %v3056 = vpop.xlane.xlu0 %3055
    %v3057 = vsel %vm618, %v3011, 0.0
    %3058 = vadd.xlane.f32.xlu0 %v3057
    %v3059 = vpop.xlane.xlu0 %3058
    %v3060 = vrcp.pop %v3014
    %v3061 = vrcp.pop %v3017
    %v3062 = vrcp.pop %v3020
    %v3063 = vrcp.pop %v3023
    %v3064 = vrcp.pop %v3026
    %v3065 = vrcp.pop %v3029
    %v3066 = vrcp.pop %v3032
    %v3067 = vrcp.pop %v3035
    %v3068 = vrcp.pop %v3038
    %v3069 = vrcp.pop %v3041
    %v3070 = vrcp.pop %v3044
    %v3071 = vrcp.pop %v3047
    %v3072 = vrcp.pop %v3050
    %v3073 = vrcp.pop %v3053
    %v3074 = vrcp.pop %v3056
    %v3075 = vrcp.pop %v3059
    %v3076 = vmul.f32 %v2981, %v3060
    %v3077 = vmul.f32 %v2983, %v3061
    %v3078 = vmul.f32 %v2985, %v3062
    %v3079 = vmul.f32 %v2987, %v3063
    %v3080 = vmul.f32 %v2989, %v3064
    %v3081 = vmul.f32 %v2991, %v3065
    %v3082 = vmul.f32 %v2993, %v3066
    %v3083 = vmul.f32 %v2995, %v3067
    %v3084 = vmul.f32 %v2997, %v3068
    %v3085 = vmul.f32 %v2999, %v3069
    %v3086 = vmul.f32 %v3001, %v3070
    %v3087 = vmul.f32 %v3003, %v3071
    %v3088 = vmul.f32 %v3005, %v3072
    %v3089 = vmul.f32 %v3007, %v3073
    %v3090 = vmul.f32 %v3009, %v3074
    %v3091 = vmul.f32 %v3011, %v3075
    %v3092 = vpack.c.bf16 %v3077, %v3076
    %v3093 = vpack.c.bf16 %v3079, %v3078
    %v3094 = vpack.c.bf16 %v3081, %v3080
    %v3095 = vpack.c.bf16 %v3083, %v3082
    %v3096 = vpack.c.bf16 %v3085, %v3084
    %v3097 = vpack.c.bf16 %v3087, %v3086
    %v3098 = vpack.c.bf16 %v3089, %v3088
    %v3099 = vpack.c.bf16 %v3091, %v3090
    %v3100 = vpack.c.bf16 %v2392, %v2388
    %v3101 = vpack.c.bf16 %v2402, %v2398
    %v3102 = vpack.c.bf16 %v2451, %v2449
    %v3103 = vpack.c.bf16 %v2455, %v2453
    %v3104 = vpack.c.bf16 %v2463, %v2461
    %v3105 = vpack.c.bf16 %v2467, %v2465
    %v3106 = vpack.c.bf16 %v2475, %v2473
    %v3107 = vpack.c.bf16 %v2479, %v2477
    %v3109 = vsel %vm618, %v3092, 0
    %3111 = vmatprep.subr.bf16.mxu0 0
    %3112 = vmatpush1.bf16.msra.mxu0 %v3100
    %3113 = vmatprep.subr.bf16.mxu0 0
    %3114 = vmatpush1.bf16.msra.mxu0 0
    %3115 = vmatprep.subr.bf16.mxu0 0
    %3116 = vmatpush1.bf16.msra.mxu0 0
    %3117 = vmatprep.subr.bf16.mxu0 0
    %3118 = vmatpush1.bf16.msra.mxu0 0
    %3119 = vmatprep.subr.bf16.mxu0 0
    %3120 = vmatpush1.bf16.msra.mxu0 0
    %3121 = vmatprep.subr.bf16.mxu0 0
    %3122 = vmatpush1.bf16.msra.mxu0 0
    %3123 = vmatprep.subr.bf16.mxu0 0
    %3124 = vmatpush1.bf16.msra.mxu0 0
    %3125 = vmatprep.subr.bf16.mxu0 0
    %3126 = vmatpush1.bf16.msra.mxu0 0
    %3127 = vmatprep.subr.bf16.mxu0 0
    %3128 = vmatpush1.bf16.msra.mxu0 0
    %3129 = vmatprep.subr.bf16.mxu0 0
    %3130 = vmatpush1.bf16.msra.mxu0 0
    %3131 = vmatprep.subr.bf16.mxu0 0
    %3132 = vmatpush1.bf16.msra.mxu0 0
    %3133 = vmatprep.subr.bf16.mxu0 0
    %3134 = vmatpush1.bf16.msra.mxu0 0
    %3135 = vmatprep.subr.bf16.mxu0 0
    %3136 = vmatpush1.bf16.msra.mxu0 0
    %3137 = vmatprep.subr.bf16.mxu0 0
    %3138 = vmatpush1.bf16.msra.mxu0 0
    %3139 = vmatprep.subr.bf16.mxu0 0
    %3140 = vmatpush1.bf16.msra.mxu0 0
    %3141 = vmatprep.subr.bf16.mxu0 0
    %3142 = vmatpush1.bf16.msra.mxu0 0
    %3143 = vmatprep.mubr.bf16.mxu0 0
    %3144 = vmatmul.mubr.bf16.gmra.mrb[0].mxu0 %v3109
    %v3145 = vpop.f32.mrb[0].mxu0
    %v3146 = vadd.f32 0.0, %v3145
    %v3147 = vpop.f32.mrb[0].mxu0
    %v3148 = vpop.f32.mrb[0].mxu0
    %v3149 = vadd.f32 0.0, %v3148
    %v3150 = vpop.f32.mrb[0].mxu0
    %3151 = vdwg.mxu0
    %v3153 = vsel %vm618, %v3093, 0
    %3155 = vmatprep.subr.bf16.mxu0 0
    %3156 = vmatpush1.bf16.msra.mxu0 %v3101
    %3157 = vmatprep.subr.bf16.mxu0 0
    %3158 = vmatpush1.bf16.msra.mxu0 0
    %3159 = vmatprep.subr.bf16.mxu0 0
    %3160 = vmatpush1.bf16.msra.mxu0 0
    %3161 = vmatprep.subr.bf16.mxu0 0
    %3162 = vmatpush1.bf16.msra.mxu0 0
    %3163 = vmatprep.subr.bf16.mxu0 0
    %3164 = vmatpush1.bf16.msra.mxu0 0
    %3165 = vmatprep.subr.bf16.mxu0 0
    %3166 = vmatpush1.bf16.msra.mxu0 0
    %3167 = vmatprep.subr.bf16.mxu0 0
    %3168 = vmatpush1.bf16.msra.mxu0 0
    %3169 = vmatprep.subr.bf16.mxu0 0
    %3170 = vmatpush1.bf16.msra.mxu0 0
    %3171 = vmatprep.subr.bf16.mxu0 0
    %3172 = vmatpush1.bf16.msra.mxu0 0
    %3173 = vmatprep.subr.bf16.mxu0 0
    %3174 = vmatpush1.bf16.msra.mxu0 0
    %3175 = vmatprep.subr.bf16.mxu0 0
    %3176 = vmatpush1.bf16.msra.mxu0 0
    %3177 = vmatprep.subr.bf16.mxu0 0
    %3178 = vmatpush1.bf16.msra.mxu0 0
    %3179 = vmatprep.subr.bf16.mxu0 0
    %3180 = vmatpush1.bf16.msra.mxu0 0
    %3181 = vmatprep.subr.bf16.mxu0 0
    %3182 = vmatpush1.bf16.msra.mxu0 0
    %3183 = vmatprep.subr.bf16.mxu0 0
    %3184 = vmatpush1.bf16.msra.mxu0 0
    %3185 = vmatprep.subr.bf16.mxu0 0
    %3186 = vmatpush1.bf16.msra.mxu0 0
    %3187 = vmatprep.mubr.bf16.mxu0 0
    %3188 = vmatmul.mubr.bf16.gmra.mrb[0].mxu0 %v3153
    %v3189 = vpop.f32.mrb[0].mxu0
    %v3190 = vadd.f32 0.0, %v3189
    %v3191 = vpop.f32.mrb[0].mxu0
    %v3192 = vpop.f32.mrb[0].mxu0
    %v3193 = vadd.f32 0.0, %v3192
    %v3194 = vpop.f32.mrb[0].mxu0
    %3195 = vdwg.mxu0
    %v3197 = vsel %vm618, %v3094, 0
    %3199 = vmatprep.subr.bf16.mxu0 0
    %3200 = vmatpush1.bf16.msra.mxu0 %v3102
    %3201 = vmatprep.subr.bf16.mxu0 0
    %3202 = vmatpush1.bf16.msra.mxu0 0
    %3203 = vmatprep.subr.bf16.mxu0 0
    %3204 = vmatpush1.bf16.msra.mxu0 0
    %3205 = vmatprep.subr.bf16.mxu0 0
    %3206 = vmatpush1.bf16.msra.mxu0 0
    %3207 = vmatprep.subr.bf16.mxu0 0
    %3208 = vmatpush1.bf16.msra.mxu0 0
    %3209 = vmatprep.subr.bf16.mxu0 0
    %3210 = vmatpush1.bf16.msra.mxu0 0
    %3211 = vmatprep.subr.bf16.mxu0 0
    %3212 = vmatpush1.bf16.msra.mxu0 0
    %3213 = vmatprep.subr.bf16.mxu0 0
    %3214 = vmatpush1.bf16.msra.mxu0 0
    %3215 = vmatprep.subr.bf16.mxu0 0
    %3216 = vmatpush1.bf16.msra.mxu0 0
    %3217 = vmatprep.subr.bf16.mxu0 0
    %3218 = vmatpush1.bf16.msra.mxu0 0
    %3219 = vmatprep.subr.bf16.mxu0 0
    %3220 = vmatpush1.bf16.msra.mxu0 0
    %3221 = vmatprep.subr.bf16.mxu0 0
    %3222 = vmatpush1.bf16.msra.mxu0 0
    %3223 = vmatprep.subr.bf16.mxu0 0
    %3224 = vmatpush1.bf16.msra.mxu0 0
    %3225 = vmatprep.subr.bf16.mxu0 0
    %3226 = vmatpush1.bf16.msra.mxu0 0
    %3227 = vmatprep.subr.bf16.mxu0 0
    %3228 = vmatpush1.bf16.msra.mxu0 0
    %3229 = vmatprep.subr.bf16.mxu0 0
    %3230 = vmatpush1.bf16.msra.mxu0 0
    %3231 = vmatprep.mubr.bf16.mxu0 0
    %3232 = vmatmul.mubr.bf16.gmra.mrb[0].mxu0 %v3197
    %v3233 = vpop.f32.mrb[0].mxu0
    %v3234 = vadd.f32 0.0, %v3233
    %v3235 = vpop.f32.mrb[0].mxu0
    %v3236 = vpop.f32.mrb[0].mxu0
    %v3237 = vadd.f32 0.0, %v3236
    %v3238 = vpop.f32.mrb[0].mxu0
    %3239 = vdwg.mxu0
    %v3241 = vsel %vm618, %v3095, 0
    %3243 = vmatprep.subr.bf16.mxu0 0
    %3244 = vmatpush1.bf16.msra.mxu0 %v3103
    %3245 = vmatprep.subr.bf16.mxu0 0
    %3246 = vmatpush1.bf16.msra.mxu0 0
    %3247 = vmatprep.subr.bf16.mxu0 0
    %3248 = vmatpush1.bf16.msra.mxu0 0
    %3249 = vmatprep.subr.bf16.mxu0 0
    %3250 = vmatpush1.bf16.msra.mxu0 0
    %3251 = vmatprep.subr.bf16.mxu0 0
    %3252 = vmatpush1.bf16.msra.mxu0 0
    %3253 = vmatprep.subr.bf16.mxu0 0
    %3254 = vmatpush1.bf16.msra.mxu0 0
    %3255 = vmatprep.subr.bf16.mxu0 0
    %3256 = vmatpush1.bf16.msra.mxu0 0
    %3257 = vmatprep.subr.bf16.mxu0 0
    %3258 = vmatpush1.bf16.msra.mxu0 0
    %3259 = vmatprep.subr.bf16.mxu0 0
    %3260 = vmatpush1.bf16.msra.mxu0 0
    %3261 = vmatprep.subr.bf16.mxu0 0
    %3262 = vmatpush1.bf16.msra.mxu0 0
    %3263 = vmatprep.subr.bf16.mxu0 0
    %3264 = vmatpush1.bf16.msra.mxu0 0
    %3265 = vmatprep.subr.bf16.mxu0 0
    %3266 = vmatpush1.bf16.msra.mxu0 0
    %3267 = vmatprep.subr.bf16.mxu0 0
    %3268 = vmatpush1.bf16.msra.mxu0 0
    %3269 = vmatprep.subr.bf16.mxu0 0
    %3270 = vmatpush1.bf16.msra.mxu0 0
    %3271 = vmatprep.subr.bf16.mxu0 0
    %3272 = vmatpush1.bf16.msra.mxu0 0
    %3273 = vmatprep.subr.bf16.mxu0 0
    %3274 = vmatpush1.bf16.msra.mxu0 0
    %3275 = vmatprep.mubr.bf16.mxu0 0
    %3276 = vmatmul.mubr.bf16.gmra.mrb[0].mxu0 %v3241
    %v3277 = vpop.f32.mrb[0].mxu0
    %v3278 = vadd.f32 0.0, %v3277
    %v3279 = vpop.f32.mrb[0].mxu0
    %v3280 = vpop.f32.mrb[0].mxu0
    %v3281 = vadd.f32 0.0, %v3280
    %v3282 = vpop.f32.mrb[0].mxu0
    %3283 = vdwg.mxu0
    %v3285 = vsel %vm618, %v3096, 0
    %3287 = vmatprep.subr.bf16.mxu0 0
    %3288 = vmatpush1.bf16.msra.mxu0 %v3104
    %3289 = vmatprep.subr.bf16.mxu0 0
    %3290 = vmatpush1.bf16.msra.mxu0 0
    %3291 = vmatprep.subr.bf16.mxu0 0
    %3292 = vmatpush1.bf16.msra.mxu0 0
    %3293 = vmatprep.subr.bf16.mxu0 0
    %3294 = vmatpush1.bf16.msra.mxu0 0
    %3295 = vmatprep.subr.bf16.mxu0 0
    %3296 = vmatpush1.bf16.msra.mxu0 0
    %3297 = vmatprep.subr.bf16.mxu0 0
    %3298 = vmatpush1.bf16.msra.mxu0 0
    %3299 = vmatprep.subr.bf16.mxu0 0
    %3300 = vmatpush1.bf16.msra.mxu0 0
    %3301 = vmatprep.subr.bf16.mxu0 0
    %3302 = vmatpush1.bf16.msra.mxu0 0
    %3303 = vmatprep.subr.bf16.mxu0 0
    %3304 = vmatpush1.bf16.msra.mxu0 0
    %3305 = vmatprep.subr.bf16.mxu0 0
    %3306 = vmatpush1.bf16.msra.mxu0 0
    %3307 = vmatprep.subr.bf16.mxu0 0
    %3308 = vmatpush1.bf16.msra.mxu0 0
    %3309 = vmatprep.subr.bf16.mxu0 0
    %3310 = vmatpush1.bf16.msra.mxu0 0
    %3311 = vmatprep.subr.bf16.mxu0 0
    %3312 = vmatpush1.bf16.msra.mxu0 0
    %3313 = vmatprep.subr.bf16.mxu0 0
    %3314 = vmatpush1.bf16.msra.mxu0 0
    %3315 = vmatprep.subr.bf16.mxu0 0
    %3316 = vmatpush1.bf16.msra.mxu0 0
    %3317 = vmatprep.subr.bf16.mxu0 0
    %3318 = vmatpush1.bf16.msra.mxu0 0
    %3319 = vmatprep.mubr.bf16.mxu0 0
    %3320 = vmatmul.mubr.bf16.gmra.mrb[0].mxu0 %v3285
    %v3321 = vpop.f32.mrb[0].mxu0
    %v3322 = vadd.f32 0.0, %v3321
    %v3323 = vpop.f32.mrb[0].mxu0
    %v3324 = vpop.f32.mrb[0].mxu0
    %v3325 = vadd.f32 0.0, %v3324
    %v3326 = vpop.f32.mrb[0].mxu0
    %3327 = vdwg.mxu0
    %v3329 = vsel %vm618, %v3097, 0
    %3331 = vmatprep.subr.bf16.mxu0 0
    %3332 = vmatpush1.bf16.msra.mxu0 %v3105
    %3333 = vmatprep.subr.bf16.mxu0 0
    %3334 = vmatpush1.bf16.msra.mxu0 0
    %3335 = vmatprep.subr.bf16.mxu0 0
    %3336 = vmatpush1.bf16.msra.mxu0 0
    %3337 = vmatprep.subr.bf16.mxu0 0
    %3338 = vmatpush1.bf16.msra.mxu0 0
    %3339 = vmatprep.subr.bf16.mxu0 0
    %3340 = vmatpush1.bf16.msra.mxu0 0
    %3341 = vmatprep.subr.bf16.mxu0 0
    %3342 = vmatpush1.bf16.msra.mxu0 0
    %3343 = vmatprep.subr.bf16.mxu0 0
    %3344 = vmatpush1.bf16.msra.mxu0 0
    %3345 = vmatprep.subr.bf16.mxu0 0
    %3346 = vmatpush1.bf16.msra.mxu0 0
    %3347 = vmatprep.subr.bf16.mxu0 0
    %3348 = vmatpush1.bf16.msra.mxu0 0
    %3349 = vmatprep.subr.bf16.mxu0 0
    %3350 = vmatpush1.bf16.msra.mxu0 0
    %3351 = vmatprep.subr.bf16.mxu0 0
    %3352 = vmatpush1.bf16.msra.mxu0 0
    %3353 = vmatprep.subr.bf16.mxu0 0
    %3354 = vmatpush1.bf16.msra.mxu0 0
    %3355 = vmatprep.subr.bf16.mxu0 0
    %3356 = vmatpush1.bf16.msra.mxu0 0
    %3357 = vmatprep.subr.bf16.mxu0 0
    %3358 = vmatpush1.bf16.msra.mxu0 0
    %3359 = vmatprep.subr.bf16.mxu0 0
    %3360 = vmatpush1.bf16.msra.mxu0 0
    %3361 = vmatprep.subr.bf16.mxu0 0
    %3362 = vmatpush1.bf16.msra.mxu0 0
    %3363 = vmatprep.mubr.bf16.mxu0 0
    %3364 = vmatmul.mubr.bf16.gmra.mrb[0].mxu0 %v3329
    %v3365 = vpop.f32.mrb[0].mxu0
    %v3366 = vadd.f32 0.0, %v3365
    %v3367 = vpop.f32.mrb[0].mxu0
    %v3368 = vpop.f32.mrb[0].mxu0
    %v3369 = vadd.f32 0.0, %v3368
    %v3370 = vpop.f32.mrb[0].mxu0
    %3371 = vdwg.mxu0
    %v3373 = vsel %vm618, %v3098, 0
    %3375 = vmatprep.subr.bf16.mxu0 0
    %3376 = vmatpush1.bf16.msra.mxu0 %v3106
    %3377 = vmatprep.subr.bf16.mxu0 0
    %3378 = vmatpush1.bf16.msra.mxu0 0
    %3379 = vmatprep.subr.bf16.mxu0 0
    %3380 = vmatpush1.bf16.msra.mxu0 0
    %3381 = vmatprep.subr.bf16.mxu0 0
    %3382 = vmatpush1.bf16.msra.mxu0 0
    %3383 = vmatprep.subr.bf16.mxu0 0
    %3384 = vmatpush1.bf16.msra.mxu0 0
    %3385 = vmatprep.subr.bf16.mxu0 0
    %3386 = vmatpush1.bf16.msra.mxu0 0
    %3387 = vmatprep.subr.bf16.mxu0 0
    %3388 = vmatpush1.bf16.msra.mxu0 0
    %3389 = vmatprep.subr.bf16.mxu0 0
    %3390 = vmatpush1.bf16.msra.mxu0 0
    %3391 = vmatprep.subr.bf16.mxu0 0
    %3392 = vmatpush1.bf16.msra.mxu0 0
    %3393 = vmatprep.subr.bf16.mxu0 0
    %3394 = vmatpush1.bf16.msra.mxu0 0
    %3395 = vmatprep.subr.bf16.mxu0 0
    %3396 = vmatpush1.bf16.msra.mxu0 0
    %3397 = vmatprep.subr.bf16.mxu0 0
    %3398 = vmatpush1.bf16.msra.mxu0 0
    %3399 = vmatprep.subr.bf16.mxu0 0
    %3400 = vmatpush1.bf16.msra.mxu0 0
    %3401 = vmatprep.subr.bf16.mxu0 0
    %3402 = vmatpush1.bf16.msra.mxu0 0
    %3403 = vmatprep.subr.bf16.mxu0 0
    %3404 = vmatpush1.bf16.msra.mxu0 0
    %3405 = vmatprep.subr.bf16.mxu0 0
    %3406 = vmatpush1.bf16.msra.mxu0 0
    %3407 = vmatprep.mubr.bf16.mxu0 0
    %3408 = vmatmul.mubr.bf16.gmra.mrb[0].mxu0 %v3373
    %v3409 = vpop.f32.mrb[0].mxu0
    %v3410 = vadd.f32 0.0, %v3409
    %v3411 = vpop.f32.mrb[0].mxu0
    %v3412 = vpop.f32.mrb[0].mxu0
    %v3413 = vadd.f32 0.0, %v3412
    %v3414 = vpop.f32.mrb[0].mxu0
    %3415 = vdwg.mxu0
    %v3417 = vsel %vm618, %v3099, 0
    %3419 = vmatprep.subr.bf16.mxu0 0
    %3420 = vmatpush1.bf16.msra.mxu0 %v3107
    %3421 = vmatprep.subr.bf16.mxu0 0
    %3422 = vmatpush1.bf16.msra.mxu0 0
    %3423 = vmatprep.subr.bf16.mxu0 0
    %3424 = vmatpush1.bf16.msra.mxu0 0
    %3425 = vmatprep.subr.bf16.mxu0 0
    %3426 = vmatpush1.bf16.msra.mxu0 0
    %3427 = vmatprep.subr.bf16.mxu0 0
    %3428 = vmatpush1.bf16.msra.mxu0 0
    %3429 = vmatprep.subr.bf16.mxu0 0
    %3430 = vmatpush1.bf16.msra.mxu0 0
    %3431 = vmatprep.subr.bf16.mxu0 0
    %3432 = vmatpush1.bf16.msra.mxu0 0
    %3433 = vmatprep.subr.bf16.mxu0 0
    %3434 = vmatpush1.bf16.msra.mxu0 0
    %3435 = vmatprep.subr.bf16.mxu0 0
    %3436 = vmatpush1.bf16.msra.mxu0 0
    %3437 = vmatprep.subr.bf16.mxu0 0
    %3438 = vmatpush1.bf16.msra.mxu0 0
    %3439 = vmatprep.subr.bf16.mxu0 0
    %3440 = vmatpush1.bf16.msra.mxu0 0
    %3441 = vmatprep.subr.bf16.mxu0 0
    %3442 = vmatpush1.bf16.msra.mxu0 0
    %3443 = vmatprep.subr.bf16.mxu0 0
    %3444 = vmatpush1.bf16.msra.mxu0 0
    %3445 = vmatprep.subr.bf16.mxu0 0
    %3446 = vmatpush1.bf16.msra.mxu0 0
    %3447 = vmatprep.subr.bf16.mxu0 0
    %3448 = vmatpush1.bf16.msra.mxu0 0
    %3449 = vmatprep.subr.bf16.mxu0 0
    %3450 = vmatpush1.bf16.msra.mxu0 0
    %3451 = vmatprep.mubr.bf16.mxu0 0
    %3452 = vmatmul.mubr.bf16.gmra.mrb[0].mxu0 %v3417
    %v3453 = vpop.f32.mrb[0].mxu0
    %v3454 = vadd.f32 0.0, %v3453
    %v3455 = vpop.f32.mrb[0].mxu0
    %v3456 = vpop.f32.mrb[0].mxu0
    %v3457 = vadd.f32 0.0, %v3456
    %v3458 = vpop.f32.mrb[0].mxu0
    %3459 = vdwg.mxu0
    %3464 = vrot.lane.b32.xlu0 %v3234, 16
    %v3465 = vpop.permute.xlu0 %3464
    %3466 = vrot.lane.b32.xlu0 %v3237, 16
    %v3467 = vpop.permute.xlu0 %3466
    %3468 = vrot.lane.b32.xlu0 %v3278, 16
    %v3469 = vpop.permute.xlu0 %3468
    %3470 = vrot.lane.b32.xlu0 %v3281, 16
    %v3471 = vpop.permute.xlu0 %3470
    %3480 = vrot.lane.b32.xlu0 %v3322, 32
    %v3481 = vpop.permute.xlu0 %3480
    %3482 = vrot.lane.b32.xlu0 %v3325, 32
    %v3483 = vpop.permute.xlu0 %3482
    %3484 = vrot.lane.b32.xlu0 %v3366, 32
    %v3485 = vpop.permute.xlu0 %3484
    %3486 = vrot.lane.b32.xlu0 %v3369, 32
    %v3487 = vpop.permute.xlu0 %3486
    %3496 = vrot.lane.b32.xlu0 %v3410, 48
    %v3497 = vpop.permute.xlu0 %3496
    %3498 = vrot.lane.b32.xlu0 %v3413, 48
    %v3499 = vpop.permute.xlu0 %3498
    %3500 = vrot.lane.b32.xlu0 %v3454, 48
    %v3501 = vpop.permute.xlu0 %3500
    %3502 = vrot.lane.b32.xlu0 %v3457, 48
    %v3503 = vpop.permute.xlu0 %3502
    %v3508 = vsel %vm618, %v3146, %v3465
    %v3509 = vsel %vm618, %v3149, %v3467
    %v3510 = vsel %vm618, %v3190, %v3469
    %v3511 = vsel %vm618, %v3193, %v3471
    %v3512 = vsel %vm1636, %v3508, %v3481
    %v3513 = vsel %vm1636, %v3509, %v3483
    %v3514 = vsel %vm1636, %v3510, %v3485
    %v3515 = vsel %vm1636, %v3511, %v3487
    %v3516 = vsel %vm1641, %v3512, %v3497
    %v3517 = vsel %vm1641, %v3513, %v3499
    %v3518 = vsel %vm1641, %v3514, %v3501
    %v3519 = vsel %vm1641, %v3515, %v3503
    %v3520 = vpack.c.bf16 %v3517, %v3516
    %v3521 = vpack.c.bf16 %v3519, %v3518
    %v3522 = vld [vmem:[%s45] sm:$0xf]
    %v3523 = vld [vmem:[%s45 + $0x4] sm:$0xf]
    %v3524 = vld [vmem:[%s45 + $0x8] sm:$0xf]
    %v3525 = vld [vmem:[%s45 + $0xc] sm:$0xf]
    %v3526 = vld [vmem:[%s45 + $0x10] sm:$0xf]
    %v3527 = vld [vmem:[%s45 + $0x14] sm:$0xf]
    %v3528 = vld [vmem:[%s45 + $0x18] sm:$0xf]
    %v3529 = vld [vmem:[%s45 + $0x1c] sm:$0xf]
    %v3538 = vunpack.c.l.b16 %v3522
    %v3539 = vunpack.c.l.b16 %v3523
    %v3540 = vunpack.c.l.b16 %v3524
    %v3541 = vunpack.c.l.b16 %v3525
    %v3542 = vunpack.c.l.b16 %v3526
    %v3543 = vunpack.c.l.b16 %v3527
    %v3544 = vunpack.c.l.b16 %v3528
    %v3545 = vunpack.c.l.b16 %v3529
    %v3546 = vpack.c.b16 %v3539, %v3538
    %v3547 = vpack.c.b16 %v3541, %v3540
    %v3548 = vpack.c.b16 %v3543, %v3542
    %v3549 = vpack.c.b16 %v3545, %v3544
    %v3555 = vsel %vm332, %v3520, 0
    %v3558 = vsel %vm332, %v3521, 0
    %3560 = vmatprep.subr.bf16.mxu0 0
    %3561 = vmatpush1.bf16.msra.mxu0 %v3546
    %3562 = vmatprep.subr.bf16.mxu0 0
    %3563 = vmatpush1.bf16.msra.mxu0 %v3547
    %3564 = vmatprep.subr.bf16.mxu0 0
    %3565 = vmatpush1.bf16.msra.mxu0 %v3548
    %3566 = vmatprep.subr.bf16.mxu0 0
    %3567 = vmatpush1.bf16.msra.mxu0 %v3549
    %3568 = vmatprep.subr.bf16.mxu0 0
    %3569 = vmatpush1.bf16.msra.mxu0 0
    %3570 = vmatprep.subr.bf16.mxu0 0
    %3571 = vmatpush1.bf16.msra.mxu0 0
    %3572 = vmatprep.subr.bf16.mxu0 0
    %3573 = vmatpush1.bf16.msra.mxu0 0
    %3574 = vmatprep.subr.bf16.mxu0 0
    %3575 = vmatpush1.bf16.msra.mxu0 0
    %3576 = vmatprep.subr.bf16.mxu0 0
    %3577 = vmatpush1.bf16.msra.mxu0 0
    %3578 = vmatprep.subr.bf16.mxu0 0
    %3579 = vmatpush1.bf16.msra.mxu0 0
    %3580 = vmatprep.subr.bf16.mxu0 0
    %3581 = vmatpush1.bf16.msra.mxu0 0
    %3582 = vmatprep.subr.bf16.mxu0 0
    %3583 = vmatpush1.bf16.msra.mxu0 0
    %3584 = vmatprep.subr.bf16.mxu0 0
    %3585 = vmatpush1.bf16.msra.mxu0 0
    %3586 = vmatprep.subr.bf16.mxu0 0
    %3587 = vmatpush1.bf16.msra.mxu0 0
    %3588 = vmatprep.subr.bf16.mxu0 0
    %3589 = vmatpush1.bf16.msra.mxu0 0
    %3590 = vmatprep.subr.bf16.mxu0 0
    %3591 = vmatpush1.bf16.msra.mxu0 0
    %3592 = vmatprep.mubr.bf16.mxu0 0
    %3593 = vmatmul.mubr.bf16.gmra.mrb[0].mxu0 %v3555
    %v3594 = vpop.f32.mrb[0].mxu0
    %v3595 = vadd.f32 0.0, %v3594
    %v3596 = vpop.f32.mrb[0].mxu0
    %v3597 = vpop.f32.mrb[0].mxu0
    %v3598 = vadd.f32 0.0, %v3597
    %v3599 = vpop.f32.mrb[0].mxu0
    %3600 = vmatprep.mubr.bf16.mxu0 0
    %3601 = vmatmul.mubr.bf16.gmra.mrb[0].mxu0 %v3558
    %v3602 = vpop.f32.mrb[0].mxu0
    %v3603 = vadd.f32 0.0, %v3602
    %v3604 = vpop.f32.mrb[0].mxu0
    %v3605 = vpop.f32.mrb[0].mxu0
    %v3606 = vadd.f32 0.0, %v3605
    %v3607 = vpop.f32.mrb[0].mxu0
    %3608 = vdwg.mxu0
    %v3609 = vadd.f32 %v2205, %v3595
    %v3610 = vadd.f32 %v2206, %v3598
    %v3611 = vadd.f32 %v2207, %v3603
    %v3612 = vadd.f32 %v2208, %v3606
    %v3613 = vld [vmem:[%s47] sm:$0x1]
    %v3615 = vlaneseq
    %v3616 = vshrl.u32 %v3615, 7
    %v3617 = vsub.s32 0, %v3616
    %v3618 = vrot.slane %v3613, %v3617
    %v3620 = vadd.f32 %v3609, %v3618
    %v3621 = vadd.f32 %v3610, %v3618
    %v3622 = vadd.f32 %v3611, %v3618
    %v3623 = vadd.f32 %v3612, %v3618
    %v3624 = vld [vmem:[%s49] sm:$0x1]
    %v3625 = vld [vmem:[%s51] sm:$0x1]
    %v3626 = vsel %vm332, %v3620, 0.0
    %3627 = vadd.xlane.f32.xlu0 %v3626
    %v3628 = vpop.xlane.xlu0 %3627
    %v3629 = vsel %vm332, %v3621, 0.0
    %3630 = vadd.xlane.f32.xlu0 %v3629
    %v3631 = vpop.xlane.xlu0 %3630
    %v3632 = vsel %vm332, %v3622, 0.0
    %3633 = vadd.xlane.f32.xlu0 %v3632
    %v3634 = vpop.xlane.xlu0 %3633
    %v3635 = vsel %vm332, %v3623, 0.0
    %3636 = vadd.xlane.f32.xlu0 %v3635
    %v3637 = vpop.xlane.xlu0 %3636
    %v3638 = vmul.f32 %v3628, %v345
    %v3639 = vmul.f32 %v3631, %v345
    %v3640 = vmul.f32 %v3634, %v345
    %v3641 = vmul.f32 %v3637, %v345
    %v3642 = vsub.f32 %v3620, %v3638
    %v3643 = vsub.f32 %v3621, %v3639
    %v3644 = vsub.f32 %v3622, %v3640
    %v3645 = vsub.f32 %v3623, %v3641
    %v3646 = vmul.f32 %v3642, %v3642
    %v3647 = vmul.f32 %v3643, %v3643
    %v3648 = vmul.f32 %v3644, %v3644
    %v3649 = vmul.f32 %v3645, %v3645
    %v3650 = vsel %vm332, %v3646, 0.0
    %3651 = vadd.xlane.f32.xlu0 %v3650
    %v3652 = vpop.xlane.xlu0 %3651
    %v3653 = vsel %vm332, %v3647, 0.0
    %3654 = vadd.xlane.f32.xlu0 %v3653
    %v3655 = vpop.xlane.xlu0 %3654
    %v3656 = vsel %vm332, %v3648, 0.0
    %3657 = vadd.xlane.f32.xlu0 %v3656
    %v3658 = vpop.xlane.xlu0 %3657
    %v3659 = vsel %vm332, %v3649, 0.0
    %3660 = vadd.xlane.f32.xlu0 %v3659
    %v3661 = vpop.xlane.xlu0 %3660
    %v3662 = vmul.f32 %v3652, %v345
    %v3663 = vmul.f32 %v3655, %v345
    %v3664 = vmul.f32 %v3658, %v345
    %v3665 = vmul.f32 %v3661, %v345
    %v3666 = vadd.f32 %v3662, 1e-05
    %v3667 = vadd.f32 %v3663, 1e-05
    %v3668 = vadd.f32 %v3664, 1e-05
    %v3669 = vadd.f32 %v3665, 1e-05
    %v3670 = vrsqrt.pop %v3666
    %v3671 = vrsqrt.pop %v3667
    %v3672 = vrsqrt.pop %v3668
    %v3673 = vrsqrt.pop %v3669
    %v3674 = vmul.f32 %v3642, %v3670
    %v3675 = vmul.f32 %v3643, %v3671
    %v3676 = vmul.f32 %v3644, %v3672
    %v3677 = vmul.f32 %v3645, %v3673
    %v3679 = vlaneseq
    %v3680 = vshrl.u32 %v3679, 7
    %v3681 = vsub.s32 0, %v3680
    %v3682 = vrot.slane %v3624, %v3681
    %v3684 = vmul.f32 %v3674, %v3682
    %v3685 = vmul.f32 %v3675, %v3682
    %v3686 = vmul.f32 %v3676, %v3682
    %v3687 = vmul.f32 %v3677, %v3682
    %v3689 = vlaneseq
    %v3690 = vshrl.u32 %v3689, 7
    %v3691 = vsub.s32 0, %v3690
    %v3692 = vrot.slane %v3625, %v3691
    %v3694 = vadd.f32 %v3684, %v3692
    %v3695 = vadd.f32 %v3685, %v3692
    %v3696 = vadd.f32 %v3686, %v3692
    %v3697 = vadd.f32 %v3687, %v3692
    %v3698 = vpack.c.bf16 %v3695, %v3694
    %v3699 = vpack.c.bf16 %v3697, %v3696
    %v3700 = vld [vmem:[%s53] sm:$0xff]
    %v3701 = vld [vmem:[%s53 + $0x8] sm:$0xff]
    %v3702 = vld [vmem:[%s53 + $0x10] sm:$0xff]
    %v3703 = vld [vmem:[%s53 + $0x18] sm:$0xff]
    %v3704 = vld [vmem:[%s53 + $0x20] sm:$0xff]
    %v3705 = vld [vmem:[%s53 + $0x28] sm:$0xff]
    %v3706 = vld [vmem:[%s53 + $0x30] sm:$0xff]
    %v3707 = vld [vmem:[%s53 + $0x38] sm:$0xff]
    %v3708 = vld [vmem:[%s55] sm:$0x3]
    %v3710 = vlaneseq
    %v3711 = vshrl.u32 %v3710, 7
    %v3712 = vsub.s32 0, %v3711
    %v3713 = vrot.slane %v3708, %v3712
    %v3714 = vlaneseq
    %v3715 = vshrl.u32 %v3714, 7
    %v3716 = vsub.s32 1, %v3715
    %v3717 = vrot.slane %v3708, %v3716
    %v3728 = vunpack.c.l.b16 %v3700
    %v3729 = vunpack.c.h.b16 %v3700
    %v3730 = vunpack.c.l.b16 %v3701
    %v3731 = vunpack.c.h.b16 %v3701
    %v3732 = vunpack.c.l.b16 %v3702
    %v3733 = vunpack.c.h.b16 %v3702
    %v3734 = vunpack.c.l.b16 %v3703
    %v3735 = vunpack.c.h.b16 %v3703
    %v3736 = vunpack.c.l.b16 %v3704
    %v3737 = vunpack.c.h.b16 %v3704
    %v3738 = vunpack.c.l.b16 %v3705
    %v3739 = vunpack.c.h.b16 %v3705
    %v3740 = vunpack.c.l.b16 %v3706
    %v3741 = vunpack.c.h.b16 %v3706
    %v3742 = vunpack.c.l.b16 %v3707
    %v3743 = vunpack.c.h.b16 %v3707
    %v3744 = vpack.c.b16 %v3730, %v3728
    %v3745 = vpack.c.b16 %v3731, %v3729
    %v3746 = vpack.c.b16 %v3734, %v3732
    %v3747 = vpack.c.b16 %v3735, %v3733
    %v3748 = vpack.c.b16 %v3738, %v3736
    %v3749 = vpack.c.b16 %v3739, %v3737
    %v3750 = vpack.c.b16 %v3742, %v3740
    %v3751 = vpack.c.b16 %v3743, %v3741
    %v3761 = vsel %vm332, %v3698, 0
    %v3764 = vsel %vm332, %v3699, 0
    %3766 = vmatprep.subr.bf16.mxu0 %v3745
    %3767 = vmatpush1.bf16.msra.mxu0 %v3744
    %3768 = vmatprep.subr.bf16.mxu0 %v3747
    %3769 = vmatpush1.bf16.msra.mxu0 %v3746
    %3770 = vmatprep.subr.bf16.mxu0 %v3749
    %3771 = vmatpush1.bf16.msra.mxu0 %v3748
    %3772 = vmatprep.subr.bf16.mxu0 %v3751
    %3773 = vmatpush1.bf16.msra.mxu0 %v3750
    %3774 = vmatprep.subr.bf16.mxu0 0
    %3775 = vmatpush1.bf16.msra.mxu0 0
    %3776 = vmatprep.subr.bf16.mxu0 0
    %3777 = vmatpush1.bf16.msra.mxu0 0
    %3778 = vmatprep.subr.bf16.mxu0 0
    %3779 = vmatpush1.bf16.msra.mxu0 0
    %3780 = vmatprep.subr.bf16.mxu0 0
    %3781 = vmatpush1.bf16.msra.mxu0 0
    %3782 = vmatprep.subr.bf16.mxu0 0
    %3783 = vmatpush1.bf16.msra.mxu0 0
    %3784 = vmatprep.subr.bf16.mxu0 0
    %3785 = vmatpush1.bf16.msra.mxu0 0
    %3786 = vmatprep.subr.bf16.mxu0 0
    %3787 = vmatpush1.bf16.msra.mxu0 0
    %3788 = vmatprep.subr.bf16.mxu0 0
    %3789 = vmatpush1.bf16.msra.mxu0 0
    %3790 = vmatprep.subr.bf16.mxu0 0
    %3791 = vmatpush1.bf16.msra.mxu0 0
    %3792 = vmatprep.subr.bf16.mxu0 0
    %3793 = vmatpush1.bf16.msra.mxu0 0
    %3794 = vmatprep.subr.bf16.mxu0 0
    %3795 = vmatpush1.bf16.msra.mxu0 0
    %3796 = vmatprep.subr.bf16.mxu0 0
    %3797 = vmatpush1.bf16.msra.mxu0 0
    %3798 = vmatprep.mubr.bf16.mxu0 0
    %3799 = vmatmul.mubr.bf16.gmra.mrb[0].mxu0 %v3761
    %v3800 = vpop.f32.mrb[0].mxu0
    %v3801 = vadd.f32 %v3713, %v3800
    %v3802 = vpop.f32.mrb[0].mxu0
    %v3803 = vadd.f32 %v3717, %v3802
    %v3804 = vpop.f32.mrb[0].mxu0
    %v3805 = vadd.f32 %v3713, %v3804
    %v3806 = vpop.f32.mrb[0].mxu0
    %v3807 = vadd.f32 %v3717, %v3806
    %3808 = vmatprep.mubr.bf16.mxu0 0
    %3809 = vmatmul.mubr.bf16.gmra.mrb[0].mxu0 %v3764
    %v3810 = vpop.f32.mrb[0].mxu0
    %v3811 = vadd.f32 %v3713, %v3810
    %v3812 = vpop.f32.mrb[0].mxu0
    %v3813 = vadd.f32 %v3717, %v3812
    %v3814 = vpop.f32.mrb[0].mxu0
    %v3815 = vadd.f32 %v3713, %v3814
    %v3816 = vpop.f32.mrb[0].mxu0
    %v3817 = vadd.f32 %v3717, %v3816
    %3818 = vdwg.mxu0
    %v3819 = vmul.f32 %v3801, %v3801
    %v3820 = vmul.f32 %v3803, %v3803
    %v3821 = vmul.f32 %v3805, %v3805
    %v3822 = vmul.f32 %v3807, %v3807
    %v3823 = vmul.f32 %v3811, %v3811
    %v3824 = vmul.f32 %v3813, %v3813
    %v3825 = vmul.f32 %v3815, %v3815
    %v3826 = vmul.f32 %v3817, %v3817
    %v3827 = vmul.f32 %v3801, %v3819
    %v3828 = vmul.f32 %v3803, %v3820
    %v3829 = vmul.f32 %v3805, %v3821
    %v3830 = vmul.f32 %v3807, %v3822
    %v3831 = vmul.f32 %v3811, %v3823
    %v3832 = vmul.f32 %v3813, %v3824
    %v3833 = vmul.f32 %v3815, %v3825
    %v3834 = vmul.f32 %v3817, %v3826
    %v3835 = vmul.f32 %v3827, 0.044715
    %v3836 = vmul.f32 %v3828, 0.044715
    %v3837 = vmul.f32 %v3829, 0.044715
    %v3838 = vmul.f32 %v3830, 0.044715
    %v3839 = vmul.f32 %v3831, 0.044715
    %v3840 = vmul.f32 %v3832, 0.044715
    %v3841 = vmul.f32 %v3833, 0.044715
    %v3842 = vmul.f32 %v3834, 0.044715
    %v3843 = vadd.f32 %v3801, %v3835
    %v3844 = vadd.f32 %v3803, %v3836
    %v3845 = vadd.f32 %v3805, %v3837
    %v3846 = vadd.f32 %v3807, %v3838
    %v3847 = vadd.f32 %v3811, %v3839
    %v3848 = vadd.f32 %v3813, %v3840
    %v3849 = vadd.f32 %v3815, %v3841
    %v3850 = vadd.f32 %v3817, %v3842
    %v3851 = vmul.f32 %v3843, 0.7978846
    %v3852 = vmul.f32 %v3844, 0.7978846
    %v3853 = vmul.f32 %v3845, 0.7978846
    %v3854 = vmul.f32 %v3846, 0.7978846
    %v3855 = vmul.f32 %v3847, 0.7978846
    %v3856 = vmul.f32 %v3848, 0.7978846
    %v3857 = vmul.f32 %v3849, 0.7978846
    %v3858 = vmul.f32 %v3850, 0.7978846
    %v3859 = vtanh.pop %v3851
    %v3860 = vtanh.pop %v3852
    %v3861 = vtanh.pop %v3853
    %v3862 = vtanh.pop %v3854
    %v3863 = vtanh.pop %v3855
    %v3864 = vtanh.pop %v3856
    %v3865 = vtanh.pop %v3857
    %v3866 = vtanh.pop %v3858
    %v3867 = vadd.f32 %v3859, 1.0
    %v3868 = vadd.f32 %v3860, 1.0
    %v3869 = vadd.f32 %v3861, 1.0
    %v3870 = vadd.f32 %v3862, 1.0
    %v3871 = vadd.f32 %v3863, 1.0
    %v3872 = vadd.f32 %v3864, 1.0
    %v3873 = vadd.f32 %v3865, 1.0
    %v3874 = vadd.f32 %v3866, 1.0
    %v3875 = vmul.f32 %v3867, 0.5
    %v3876 = vmul.f32 %v3868, 0.5
    %v3877 = vmul.f32 %v3869, 0.5
    %v3878 = vmul.f32 %v3870, 0.5
    %v3879 = vmul.f32 %v3871, 0.5
    %v3880 = vmul.f32 %v3872, 0.5
    %v3881 = vmul.f32 %v3873, 0.5
    %v3882 = vmul.f32 %v3874, 0.5
    %v3883 = vmul.f32 %v3801, %v3875
    %v3884 = vmul.f32 %v3803, %v3876
    %v3885 = vmul.f32 %v3805, %v3877
    %v3886 = vmul.f32 %v3807, %v3878
    %v3887 = vmul.f32 %v3811, %v3879
    %v3888 = vmul.f32 %v3813, %v3880
    %v3889 = vmul.f32 %v3815, %v3881
    %v3890 = vmul.f32 %v3817, %v3882
    %v3891 = vpack.c.bf16 %v3885, %v3883
    %v3892 = vpack.c.bf16 %v3886, %v3884
    %v3893 = vpack.c.bf16 %v3889, %v3887
    %v3894 = vpack.c.bf16 %v3890, %v3888
    %v3895 = vld [vmem:[%s57] sm:$0xf]
    %v3896 = vld [vmem:[%s57 + $0x4] sm:$0xf]
    %v3897 = vld [vmem:[%s57 + $0x8] sm:$0xf]
    %v3898 = vld [vmem:[%s57 + $0xc] sm:$0xf]
    %v3899 = vld [vmem:[%s57 + $0x10] sm:$0xf]
    %v3900 = vld [vmem:[%s57 + $0x14] sm:$0xf]
    %v3901 = vld [vmem:[%s57 + $0x18] sm:$0xf]
    %v3902 = vld [vmem:[%s57 + $0x1c] sm:$0xf]
    %v3903 = vld [vmem:[%s57 + $0x20] sm:$0xf]
    %v3904 = vld [vmem:[%s57 + $0x24] sm:$0xf]
    %v3905 = vld [vmem:[%s57 + $0x28] sm:$0xf]
    %v3906 = vld [vmem:[%s57 + $0x2c] sm:$0xf]
    %v3907 = vld [vmem:[%s57 + $0x30] sm:$0xf]
    %v3908 = vld [vmem:[%s57 + $0x34] sm:$0xf]
    %v3909 = vld [vmem:[%s57 + $0x38] sm:$0xf]
    %v3910 = vld [vmem:[%s57 + $0x3c] sm:$0xf]
    %v3911 = vld [vmem:[%s57 + $0x40] sm:$0xf]
    %v3912 = vld [vmem:[%s57 + $0x44] sm:$0xf]
    %v3913 = vld [vmem:[%s57 + $0x48] sm:$0xf]
    %v3914 = vld [vmem:[%s57 + $0x4c] sm:$0xf]
    %v3915 = vld [vmem:[%s57 + $0x50] sm:$0xf]
    %v3916 = vld [vmem:[%s57 + $0x54] sm:$0xf]
    %v3917 = vld [vmem:[%s57 + $0x58] sm:$0xf]
    %v3918 = vld [vmem:[%s57 + $0x5c] sm:$0xf]
    %v3919 = vld [vmem:[%s57 + $0x60] sm:$0xf]
    %v3920 = vld [vmem:[%s57 + $0x64] sm:$0xf]
    %v3921 = vld [vmem:[%s57 + $0x68] sm:$0xf]
    %v3922 = vld [vmem:[%s57 + $0x6c] sm:$0xf]
    %v3923 = vld [vmem:[%s57 + $0x70] sm:$0xf]
    %v3924 = vld [vmem:[%s57 + $0x74] sm:$0xf]
    %v3925 = vld [vmem:[%s57 + $0x78] sm:$0xf]
    %v3926 = vld [vmem:[%s57 + $0x7c] sm:$0xf]
    %v3927 = vld [vmem:[%s59] sm:$0x1]
    %v3929 = vlaneseq
    %v3930 = vshrl.u32 %v3929, 7
    %v3931 = vsub.s32 0, %v3930
    %v3932 = vrot.slane %v3927, %v3931
    %v3966 = vunpack.c.l.b16 %v3895
    %v3967 = vunpack.c.l.b16 %v3896
    %v3968 = vunpack.c.l.b16 %v3897
    %v3969 = vunpack.c.l.b16 %v3898
    %v3970 = vunpack.c.l.b16 %v3899
    %v3971 = vunpack.c.l.b16 %v3900
    %v3972 = vunpack.c.l.b16 %v3901
    %v3973 = vunpack.c.l.b16 %v3902
    %v3974 = vunpack.c.l.b16 %v3903
    %v3975 = vunpack.c.l.b16 %v3904
    %v3976 = vunpack.c.l.b16 %v3905
    %v3977 = vunpack.c.l.b16 %v3906
    %v3978 = vunpack.c.l.b16 %v3907
    %v3979 = vunpack.c.l.b16 %v3908
    %v3980 = vunpack.c.l.b16 %v3909
    %v3981 = vunpack.c.l.b16 %v3910
    %v3982 = vunpack.c.l.b16 %v3911
    %v3983 = vunpack.c.l.b16 %v3912
    %v3984 = vunpack.c.l.b16 %v3913
    %v3985 = vunpack.c.l.b16 %v3914
    %v3986 = vunpack.c.l.b16 %v3915
    %v3987 = vunpack.c.l.b16 %v3916
    %v3988 = vunpack.c.l.b16 %v3917
    %v3989 = vunpack.c.l.b16 %v3918
    %v3990 = vunpack.c.l.b16 %v3919
    %v3991 = vunpack.c.l.b16 %v3920
    %v3992 = vunpack.c.l.b16 %v3921
    %v3993 = vunpack.c.l.b16 %v3922
    %v3994 = vunpack.c.l.b16 %v3923
    %v3995 = vunpack.c.l.b16 %v3924
    %v3996 = vunpack.c.l.b16 %v3925
    %v3997 = vunpack.c.l.b16 %v3926
    %v3998 = vpack.c.b16 %v3967, %v3966
    %v3999 = vpack.c.b16 %v3969, %v3968
    %v4000 = vpack.c.b16 %v3971, %v3970
    %v4001 = vpack.c.b16 %v3973, %v3972
    %v4002 = vpack.c.b16 %v3975, %v3974
    %v4003 = vpack.c.b16 %v3977, %v3976
    %v4004 = vpack.c.b16 %v3979, %v3978
    %v4005 = vpack.c.b16 %v3981, %v3980
    %v4006 = vpack.c.b16 %v3983, %v3982
    %v4007 = vpack.c.b16 %v3985, %v3984
    %v4008 = vpack.c.b16 %v3987, %v3986
    %v4009 = vpack.c.b16 %v3989, %v3988
    %v4010 = vpack.c.b16 %v3991, %v3990
    %v4011 = vpack.c.b16 %v3993, %v3992
    %v4012 = vpack.c.b16 %v3995, %v3994
    %v4013 = vpack.c.b16 %v3997, %v3996
    %4030 = vmatprep.subr.bf16.mxu0 0
    %4031 = vmatpush1.bf16.msra.mxu0 %v3998
    %4032 = vmatprep.subr.bf16.mxu0 0
    %4033 = vmatpush1.bf16.msra.mxu0 %v3999
    %4034 = vmatprep.subr.bf16.mxu0 0
    %4035 = vmatpush1.bf16.msra.mxu0 %v4000
    %4036 = vmatprep.subr.bf16.mxu0 0
    %4037 = vmatpush1.bf16.msra.mxu0 %v4001
    %4038 = vmatprep.subr.bf16.mxu0 0
    %4039 = vmatpush1.bf16.msra.mxu0 %v4002
    %4040 = vmatprep.subr.bf16.mxu0 0
    %4041 = vmatpush1.bf16.msra.mxu0 %v4003
    %4042 = vmatprep.subr.bf16.mxu0 0
    %4043 = vmatpush1.bf16.msra.mxu0 %v4004
    %4044 = vmatprep.subr.bf16.mxu0 0
    %4045 = vmatpush1.bf16.msra.mxu0 %v4005
    %4046 = vmatprep.subr.bf16.mxu0 0
    %4047 = vmatpush1.bf16.msra.mxu0 %v4006
    %4048 = vmatprep.subr.bf16.mxu0 0
    %4049 = vmatpush1.bf16.msra.mxu0 %v4007
    %4050 = vmatprep.subr.bf16.mxu0 0
    %4051 = vmatpush1.bf16.msra.mxu0 %v4008
    %4052 = vmatprep.subr.bf16.mxu0 0
    %4053 = vmatpush1.bf16.msra.mxu0 %v4009
    %4054 = vmatprep.subr.bf16.mxu0 0
    %4055 = vmatpush1.bf16.msra.mxu0 %v4010
    %4056 = vmatprep.subr.bf16.mxu0 0
    %4057 = vmatpush1.bf16.msra.mxu0 %v4011
    %4058 = vmatprep.subr.bf16.mxu0 0
    %4059 = vmatpush1.bf16.msra.mxu0 %v4012
    %4060 = vmatprep.subr.bf16.mxu0 0
    %4061 = vmatpush1.bf16.msra.mxu0 %v4013
    %4062 = vmatprep.mubr.bf16.mxu0 %v3892
    %4063 = vmatmul.mubr.bf16.gmra.mrb[0].mxu0 %v3891
    %v4064 = vpop.f32.mrb[0].mxu0
    %v4065 = vadd.f32 %v3932, %v4064
    %v4066 = vpop.f32.mrb[0].mxu0
    %v4067 = vpop.f32.mrb[0].mxu0
    %v4068 = vadd.f32 %v3932, %v4067
    %v4069 = vpop.f32.mrb[0].mxu0
    %4070 = vmatprep.mubr.bf16.mxu0 %v3894
    %4071 = vmatmul.mubr.bf16.gmra.mrb[0].mxu0 %v3893
    %v4072 = vpop.f32.mrb[0].mxu0
    %v4073 = vadd.f32 %v3932, %v4072
    %v4074 = vpop.f32.mrb[0].mxu0
    %v4075 = vpop.f32.mrb[0].mxu0
    %v4076 = vadd.f32 %v3932, %v4075
    %v4077 = vpop.f32.mrb[0].mxu0
    %4078 = vdwg.mxu0
    %v4079 = vadd.f32 %v3620, %v4065
    %v4080 = vadd.f32 %v3621, %v4068
    %v4081 = vadd.f32 %v3622, %v4073
    %v4082 = vadd.f32 %v3623, %v4076
    %v4083 = vld [vmem:[%s61] sm:$0x1]
    %v4084 = vld [vmem:[%s63] sm:$0x1]
    %v4085 = vsel %vm332, %v4079, 0.0
    %4086 = vadd.xlane.f32.xlu0 %v4085
    %v4087 = vpop.xlane.xlu0 %4086
    %v4088 = vsel %vm332, %v4080, 0.0
    %4089 = vadd.xlane.f32.xlu0 %v4088
    %v4090 = vpop.xlane.xlu0 %4089
    %v4091 = vsel %vm332, %v4081, 0.0
    %4092 = vadd.xlane.f32.xlu0 %v4091
    %v4093 = vpop.xlane.xlu0 %4092
    %v4094 = vsel %vm332, %v4082, 0.0
    %4095 = vadd.xlane.f32.xlu0 %v4094
    %v4096 = vpop.xlane.xlu0 %4095
    %v4097 = vmul.f32 %v4087, %v345
    %v4098 = vmul.f32 %v4090, %v345
    %v4099 = vmul.f32 %v4093, %v345
    %v4100 = vmul.f32 %v4096, %v345
    %v4101 = vsub.f32 %v4079, %v4097
    %v4102 = vsub.f32 %v4080, %v4098
    %v4103 = vsub.f32 %v4081, %v4099
    %v4104 = vsub.f32 %v4082, %v4100
    %v4105 = vmul.f32 %v4101, %v4101
    %v4106 = vmul.f32 %v4102, %v4102
    %v4107 = vmul.f32 %v4103, %v4103
    %v4108 = vmul.f32 %v4104, %v4104
    %v4109 = vsel %vm332, %v4105, 0.0
    %4110 = vadd.xlane.f32.xlu0 %v4109
    %v4111 = vpop.xlane.xlu0 %4110
    %v4112 = vsel %vm332, %v4106, 0.0
    %4113 = vadd.xlane.f32.xlu0 %v4112
    %v4114 = vpop.xlane.xlu0 %4113
    %v4115 = vsel %vm332, %v4107, 0.0
    %4116 = vadd.xlane.f32.xlu0 %v4115
    %v4117 = vpop.xlane.xlu0 %4116
    %v4118 = vsel %vm332, %v4108, 0.0
    %4119 = vadd.xlane.f32.xlu0 %v4118
    %v4120 = vpop.xlane.xlu0 %4119
    %v4121 = vmul.f32 %v4111, %v345
    %v4122 = vmul.f32 %v4114, %v345
    %v4123 = vmul.f32 %v4117, %v345
    %v4124 = vmul.f32 %v4120, %v345
    %v4125 = vadd.f32 %v4121, 1e-05
    %v4126 = vadd.f32 %v4122, 1e-05
    %v4127 = vadd.f32 %v4123, 1e-05
    %v4128 = vadd.f32 %v4124, 1e-05
    %v4129 = vrsqrt.pop %v4125
    %v4130 = vrsqrt.pop %v4126
    %v4131 = vrsqrt.pop %v4127
    %v4132 = vrsqrt.pop %v4128
    %v4133 = vmul.f32 %v4101, %v4129
    %v4134 = vmul.f32 %v4102, %v4130
    %v4135 = vmul.f32 %v4103, %v4131
    %v4136 = vmul.f32 %v4104, %v4132
    %v4138 = vlaneseq
    %v4139 = vshrl.u32 %v4138, 7
    %v4140 = vsub.s32 0, %v4139
    %v4141 = vrot.slane %v4083, %v4140
    %v4143 = vmul.f32 %v4133, %v4141
    %v4144 = vmul.f32 %v4134, %v4141
    %v4145 = vmul.f32 %v4135, %v4141
    %v4146 = vmul.f32 %v4136, %v4141
    %v4148 = vlaneseq
    %v4149 = vshrl.u32 %v4148, 7
    %v4150 = vsub.s32 0, %v4149
    %v4151 = vrot.slane %v4084, %v4150
    %v4153 = vadd.f32 %v4143, %v4151
    %v4154 = vadd.f32 %v4144, %v4151
    %v4155 = vadd.f32 %v4145, %v4151
    %v4156 = vadd.f32 %v4146, %v4151
    %v4157 = vsel %vm332, %v4153, 0.0
    %v4158 = vsel %vm332, %v4154, 0.0
    %v4159 = vadd.f32 %v4157, %v4158
    %v4160 = vrot.slane %v4159, 4
    %v4161 = vadd.f32 %v4159, %v4160
    %v4162 = vrot.slane %v4161, 2
    %v4163 = vadd.f32 %v4161, %v4162
    %v4164 = vrot.slane %v4163, 1
    %v4165 = vadd.f32 %v4163, %v4164
    %v4166 = vsel %vm332, %v4155, 0.0
    %v4167 = vsel %vm332, %v4156, 0.0
    %v4168 = vadd.f32 %v4166, %v4167
    %v4169 = vrot.slane %v4168, 4
    %v4170 = vadd.f32 %v4168, %v4169
    %v4171 = vrot.slane %v4170, 2
    %v4172 = vadd.f32 %v4170, %v4171
    %v4173 = vrot.slane %v4172, 1
    %v4174 = vadd.f32 %v4172, %v4173
    %v4175 = vrcp.pop 16.0
    %v4176 = vmul.f32 %v4165, %v4175
    %v4177 = vmul.f32 %v4174, %v4175
    %v4178 = vpack.c.bf16 %v4176, %v4176
    %v4179 = vpack.c.bf16 %v4177, %v4177
    %v4180 = vld [vmem:[%s65] sm:$0xf]
    %v4181 = vld [vmem:[%s65 + $0x4] sm:$0xf]
    %v4182 = vld [vmem:[%s65 + $0x8] sm:$0xf]
    %v4183 = vld [vmem:[%s65 + $0xc] sm:$0xf]
    %v4184 = vld [vmem:[%s65 + $0x10] sm:$0xf]
    %v4185 = vld [vmem:[%s65 + $0x14] sm:$0xf]
    %v4186 = vld [vmem:[%s65 + $0x18] sm:$0xf]
    %v4187 = vld [vmem:[%s65 + $0x1c] sm:$0xf]
    %v4188 = vld [vmem:[%s67] sm:$0x1]
    %v4190 = vlaneseq
    %v4191 = vshrl.u32 %v4190, 7
    %v4192 = vsub.s32 0, %v4191
    %v4193 = vrot.slane %v4188, %v4192
    %v4197 = vunpack.c.l.b16 %v4178
    %v4198 = vunpack.c.l.b16 %v4179
    %vm4199 = vcmask 1041409
    %v4200 = vsel %vm4199, %v4198, %v4197
    %v4201 = vpack.c.b16 %v4200, %v4200
    %v4210 = vunpack.c.l.b16 %v4180
    %v4211 = vunpack.c.l.b16 %v4181
    %v4212 = vunpack.c.l.b16 %v4182
    %v4213 = vunpack.c.l.b16 %v4183
    %v4214 = vunpack.c.l.b16 %v4184
    %v4215 = vunpack.c.l.b16 %v4185
    %v4216 = vunpack.c.l.b16 %v4186
    %v4217 = vunpack.c.l.b16 %v4187
    %v4218 = vpack.c.b16 %v4211, %v4210
    %v4219 = vpack.c.b16 %v4213, %v4212
    %v4220 = vpack.c.b16 %v4215, %v4214
    %v4221 = vpack.c.b16 %v4217, %v4216
    %v4227 = vsel %vm332, %v4201, 0
    %4229 = vmatprep.subr.bf16.mxu0 0
    %4230 = vmatpush1.bf16.msra.mxu0 %v4218
    %4231 = vmatprep.subr.bf16.mxu0 0
    %4232 = vmatpush1.bf16.msra.mxu0 %v4219
    %4233 = vmatprep.subr.bf16.mxu0 0
    %4234 = vmatpush1.bf16.msra.mxu0 %v4220
    %4235 = vmatprep.subr.bf16.mxu0 0
    %4236 = vmatpush1.bf16.msra.mxu0 %v4221
    %4237 = vmatprep.subr.bf16.mxu0 0
    %4238 = vmatpush1.bf16.msra.mxu0 0
    %4239 = vmatprep.subr.bf16.mxu0 0
    %4240 = vmatpush1.bf16.msra.mxu0 0
    %4241 = vmatprep.subr.bf16.mxu0 0
    %4242 = vmatpush1.bf16.msra.mxu0 0
    %4243 = vmatprep.subr.bf16.mxu0 0
    %4244 = vmatpush1.bf16.msra.mxu0 0
    %4245 = vmatprep.subr.bf16.mxu0 0
    %4246 = vmatpush1.bf16.msra.mxu0 0
    %4247 = vmatprep.subr.bf16.mxu0 0
    %4248 = vmatpush1.bf16.msra.mxu0 0
    %4249 = vmatprep.subr.bf16.mxu0 0
    %4250 = vmatpush1.bf16.msra.mxu0 0
    %4251 = vmatprep.subr.bf16.mxu0 0
    %4252 = vmatpush1.bf16.msra.mxu0 0
    %4253 = vmatprep.subr.bf16.mxu0 0
    %4254 = vmatpush1.bf16.msra.mxu0 0
    %4255 = vmatprep.subr.bf16.mxu0 0
    %4256 = vmatpush1.bf16.msra.mxu0 0
    %4257 = vmatprep.subr.bf16.mxu0 0
    %4258 = vmatpush1.bf16.msra.mxu0 0
    %4259 = vmatprep.subr.bf16.mxu0 0
    %4260 = vmatpush1.bf16.msra.mxu0 0
    %4261 = vmatprep.mubr.bf16.mxu0 0
    %4262 = vmatmul.mubr.bf16.gmra.mrb[0].mxu0 %v4227
    %v4263 = vpop.f32.mrb[0].mxu0
    %v4264 = vadd.f32 %v4193, %v4263
    %v4265 = vpop.f32.mrb[0].mxu0
    %v4266 = vpop.f32.mrb[0].mxu0
    %v4267 = vpop.f32.mrb[0].mxu0
    %4268 = vdwg.mxu0
    %v4269 = vmul.f32 %v4264, %v4264
    %vm4270 = vcmask 517120
    %v4271 = vsel %vm4270, %v4269, 0.0
    %4272 = vadd.xlane.f32.xlu0 %v4271
    %v4273 = vpop.xlane.xlu0 %4272
    %v4274 = vrsqrt.pop %v4273
    %v4275 = vmul.f32 %v4273, %v4274
    %vm4276 = vcmp.eq.f32.partialorder %v4273, inf
    %v4277 = vsel %vm4276, %v4273, %v4275
    %vm4278 = vcmp.eq.f32.partialorder %v4273, 0.0
    %v4279 = vand.u32 %v4273, 2147483648
    %v4280 = vsel %vm4278, %v4279, %v4277
    %v4281 = vmax.f32 %v4280, 1e-12
    %v4282 = vrcp.pop %v4281
    %v4283 = vmul.f32 %v4264, %v4282
    %v4286 = vunpack.c.l.s4 1966171168
    %v4287 = vunpack.c.0.s8 %v4286
    %v4288 = vlaneseq
    %v4289 = vshrl.u32 %v4288, 7
    %v4290 = vsub.s32 %v4287, %v4289
    %v4291 = vrot.slane %v4283, %v4290
    %v4292 = vcombine.high %v4291, %v4291
    %v4294 = vunpack.c.l.s4 1966171168
    %v4295 = vunpack.c.0.s8 %v4294
    %v4296 = vlaneseq
    %v4297 = vshrl.u32 %v4296, 7
    %v4298 = vsub.s32 %v4295, %v4297
    %v4299 = vrot.slane %v4291, %v4298
    %v4301 = vunpack.c.l.s4 1966171168
    %v4302 = vunpack.c.0.s8 %v4301
    %v4303 = vlaneseq
    %v4304 = vshrl.u32 %v4303, 7
    %v4305 = vsub.s32 %v4302, %v4304
    %v4306 = vrot.slane %v4292, %v4305
    %vm4309 = vcmask 516096
    %4310 = vst.msk [vmem:[#allocation2] sm:$0x1] %vm4309, %v4299
    %4311 = vst.msk [vmem:[#allocation2 + $0x1] sm:$0x1] %vm4309, %v4306
    // Predicated region
    $region138: #{swin_encoder_forward.3} parent=1 // pred_check
      _
    $region139: #{swin_encoder_forward.3} parent=1 // pred_check_branch
      %4313 = sbr.rel (0) target = $region141
    $region140: #{swin_encoder_forward.3} parent=1 // pred_region
      %s4315 = ssub.s32 32, 32
      %4316 = vsyncadd [#allocation3], %s4315
      %s4317 = sshll.u32 [#allocation2], 4
      %s4318 = int_to_ptr.vmem [resolvable:$true] %s4317
      %4323 = dma.vmem_to_hbm [thread:$0]  %s4318, 32, %s69, [#allocation3], 16, 16, 1
    $region141: #{swin_encoder_forward.3} parent=1 // pred_fallthru
      _
    // Predicated region
    $region142: #{swin_encoder_forward.3} parent=1 // pred_check
      _
    $region143: #{swin_encoder_forward.3} parent=1 // pred_check_branch
      %4325 = sbr.rel (0) target = $region145
    $region144: #{swin_encoder_forward.3} parent=1 // pred_region
      %4326 = dma.done [#allocation3], 32
    $region145: #{swin_encoder_forward.3} parent=1 // pred_fallthru
      _
    %4327 = vsyncpa [#allocation3], 1

// kernel: swin_encoder_forward.2
$region0: #{swin_encoder_forward.2}
  #allocation0 [shape = 'u32[]', space=smem, size = 0x4, offset = 0x4, fixed_abs, tag = 'smem constant byte address 0x4 - core index']
  #allocation1 [shape = 'u32[144,128]{1,0:T(1,128)}', space=vmem, size = 0x12000, scoped, tag = 'internal scratch']
  %s0 = inlined_call_operand.smem [shape: u32[32], index: -1, kind: input, shape index: {}]
  %s1 = sld [smem:[%s0]]
  %s2 = scalar_lea.smem %s0, 1
  %s3 = sld [smem:[%s2]]
  %s4 = scalar_lea.smem %s0, 2
  %s5 = sld [smem:[%s4]]
  %s6 = scalar_lea.smem %s0, 3
  %s7 = sld [smem:[%s6]]
  %s8 = scalar_lea.smem %s0, 4
  %s9 = sld [smem:[%s8]]
  %s10 = scalar_lea.smem %s0, 5
  %s11 = sld [smem:[%s10]]
  %s12 = scalar_lea.smem %s0, 6
  %s13 = sld [smem:[%s12]]
  %s14 = scalar_lea.smem %s0, 7
  %s15 = sld [smem:[%s14]]
  %s16 = scalar_lea.smem %s0, 8
  %s17 = sld [smem:[%s16]]
  %s18 = scalar_lea.smem %s0, 9
  %s19 = sld [smem:[%s18]]
  %s20 = scalar_lea.smem %s0, 10
  %s21 = sld [smem:[%s20]]
  %s22 = scalar_lea.smem %s0, 11
  %s23 = sld [smem:[%s22]]
  %s24 = scalar_lea.smem %s0, 12
  %s25 = sld [smem:[%s24]]
  %s26 = scalar_lea.smem %s0, 13
  %s27 = sld [smem:[%s26]]
  %s28 = scalar_lea.smem %s0, 14
  %s29 = sld [smem:[%s28]]
  %s30 = scalar_lea.smem %s0, 15
  %s31 = sld [smem:[%s30]]
  %s32 = scalar_lea.smem %s0, 16
  %s33 = sld [smem:[%s32]]
  %s34 = scalar_lea.smem %s0, 17
  %s35 = sld [smem:[%s34]]
  %s36 = scalar_lea.smem %s0, 18
  %s37 = sld [smem:[%s36]]
  %s38 = scalar_lea.smem %s0, 19
  %s39 = sld [smem:[%s38]]
  %s40 = scalar_lea.smem %s0, 20
  %s41 = sld [smem:[%s40]]
  %s42 = scalar_lea.smem %s0, 21
  %s43 = sld [smem:[%s42]]
  %s44 = scalar_lea.smem %s0, 22
  %s45 = sld [smem:[%s44]]
  %s46 = scalar_lea.smem %s0, 23
  %s47 = sld [smem:[%s46]]
  %s48 = scalar_lea.smem %s0, 24
  %s49 = sld [smem:[%s48]]
  %s50 = scalar_lea.smem %s0, 25
  %s51 = sld [smem:[%s50]]
  %s52 = scalar_lea.smem %s0, 26
  %s53 = sld [smem:[%s52]]
  %s54 = scalar_lea.smem %s0, 27
  %s55 = sld [smem:[%s54]]
  %s56 = scalar_lea.smem %s0, 28
  %s57 = sld [smem:[%s56]]
  %s58 = scalar_lea.smem %s0, 29
  %s59 = sld [smem:[%s58]]
  %s60 = scalar_lea.smem %s0, 30
  %s61 = sld [smem:[%s60]]
  %s62 = scalar_lea.smem %s0, 31
  %s63 = sld [smem:[%s62]]
  %s64 = sld [smem:[#allocation0]]
  $region134: #{swin_encoder_forward.2} parent=0
    _
  %s66 = ssub.s32 1, %s64
  %s67 = scalar_select 0, %s66, %s64
  // Predicated region
  $region2: #{swin_encoder_forward.2} parent=0 // pred_check
    _
  $region3: #{swin_encoder_forward.2} parent=0 // pred_check_branch
    %69 = sbr.rel (0) target = $region5
  $region4: #{swin_encoder_forward.2} parent=0 // pred_region
    _
  $region5: #{swin_encoder_forward.2} parent=0 // pred_fallthru
    _
  // Predicated region
  $region6: #{swin_encoder_forward.2} parent=0 // pred_check
    _
  $region7: #{swin_encoder_forward.2} parent=0 // pred_check_branch
    %71 = sbr.rel (0) target = $region9
  $region8: #{swin_encoder_forward.2} parent=0 // pred_region
    _
  $region9: #{swin_encoder_forward.2} parent=0 // pred_fallthru
    _
  // Predicated region
  $region10: #{swin_encoder_forward.2} parent=0 // pred_check
    _
  $region11: #{swin_encoder_forward.2} parent=0 // pred_check_branch
    %73 = sbr.rel (0) target = $region13
  $region12: #{swin_encoder_forward.2} parent=0 // pred_region
    _
  $region13: #{swin_encoder_forward.2} parent=0 // pred_fallthru
    _
  // Predicated region
  $region14: #{swin_encoder_forward.2} parent=0 // pred_check
    _
  $region15: #{swin_encoder_forward.2} parent=0 // pred_check_branch
    %75 = sbr.rel (0) target = $region17
  $region16: #{swin_encoder_forward.2} parent=0 // pred_region
    _
  $region17: #{swin_encoder_forward.2} parent=0 // pred_fallthru
    _
  // Predicated region
  $region18: #{swin_encoder_forward.2} parent=0 // pred_check
    _
  $region19: #{swin_encoder_forward.2} parent=0 // pred_check_branch
    %77 = sbr.rel (0) target = $region21
  $region20: #{swin_encoder_forward.2} parent=0 // pred_region
    _
  $region21: #{swin_encoder_forward.2} parent=0 // pred_fallthru
    _
  // Predicated region
  $region22: #{swin_encoder_forward.2} parent=0 // pred_check
    _
  $region23: #{swin_encoder_forward.2} parent=0 // pred_check_branch
    %79 = sbr.rel (0) target = $region25
  $region24: #{swin_encoder_forward.2} parent=0 // pred_region
    _
  $region25: #{swin_encoder_forward.2} parent=0 // pred_fallthru
    _
  // Predicated region
  $region26: #{swin_encoder_forward.2} parent=0 // pred_check
    _
  $region27: #{swin_encoder_forward.2} parent=0 // pred_check_branch
    %81 = sbr.rel (0) target = $region29
  $region28: #{swin_encoder_forward.2} parent=0 // pred_region
    _
  $region29: #{swin_encoder_forward.2} parent=0 // pred_fallthru
    _
  // Predicated region
  $region30: #{swin_encoder_forward.2} parent=0 // pred_check
    _
  $region31: #{swin_encoder_forward.2} parent=0 // pred_check_branch
    %83 = sbr.rel (0) target = $region33
  $region32: #{swin_encoder_forward.2} parent=0 // pred_region
    _
  $region33: #{swin_encoder_forward.2} parent=0 // pred_fallthru
    _
  // Predicated region
  $region34: #{swin_encoder_forward.2} parent=0 // pred_check
    _
  $region35: #{swin_encoder_forward.2} parent=0 // pred_check_branch
    %85 = sbr.rel (0) target = $region37
  $region36: #{swin_encoder_forward.2} parent=0 // pred_region
    _
  $region37: #{swin_encoder_forward.2} parent=0 // pred_fallthru
    _
  // Predicated region
  $region38: #{swin_encoder_forward.2} parent=0 // pred_check
    _
  $region39: #{swin_encoder_forward.2} parent=0 // pred_check_branch
    %87 = sbr.rel (0) target = $region41
  $region40: #{swin_encoder_forward.2} parent=0 // pred_region
    _
  $region41: #{swin_encoder_forward.2} parent=0 // pred_fallthru
    _
  // Predicated region
  $region42: #{swin_encoder_forward.2} parent=0 // pred_check
    _
  $region43: #{swin_encoder_forward.2} parent=0 // pred_check_branch
    %89 = sbr.rel (0) target = $region45
  $region44: #{swin_encoder_forward.2} parent=0 // pred_region
    _
  $region45: #{swin_encoder_forward.2} parent=0 // pred_fallthru
    _
  // Predicated region
  $region46: #{swin_encoder_forward.2} parent=0 // pred_check
    _
  $region47: #{swin_encoder_forward.2} parent=0 // pred_check_branch
    %91 = sbr.rel (0) target = $region49
  $region48: #{swin_encoder_forward.2} parent=0 // pred_region
    _
  $region49: #{swin_encoder_forward.2} parent=0 // pred_fallthru
    _
  // Predicated region
  $region50: #{swin_encoder_forward.2} parent=0 // pred_check
    _
  $region51: #{swin_encoder_forward.2} parent=0 // pred_check_branch
    %93 = sbr.rel (0) target = $region53
  $region52: #{swin_encoder_forward.2} parent=0 // pred_region
    _
  $region53: #{swin_encoder_forward.2} parent=0 // pred_fallthru
    _
  // Predicated region
  $region54: #{swin_encoder_forward.2} parent=0 // pred_check
    _
  $region55: #{swin_encoder_forward.2} parent=0 // pred_check_branch
    %95 = sbr.rel (0) target = $region57
  $region56: #{swin_encoder_forward.2} parent=0 // pred_region
    _
  $region57: #{swin_encoder_forward.2} parent=0 // pred_fallthru
    _
  // Predicated region
  $region58: #{swin_encoder_forward.2} parent=0 // pred_check
    _
  $region59: #{swin_encoder_forward.2} parent=0 // pred_check_branch
    %97 = sbr.rel (0) target = $region61
  $region60: #{swin_encoder_forward.2} parent=0 // pred_region
    _
  $region61: #{swin_encoder_forward.2} parent=0 // pred_fallthru
    _
  // Predicated region
  $region62: #{swin_encoder_forward.2} parent=0 // pred_check
    _
  $region63: #{swin_encoder_forward.2} parent=0 // pred_check_branch
    %99 = sbr.rel (0) target = $region65
  $region64: #{swin_encoder_forward.2} parent=0 // pred_region
    _
  $region65: #{swin_encoder_forward.2} parent=0 // pred_fallthru
    _
  // Predicated region
  $region66: #{swin_encoder_forward.2} parent=0 // pred_check
    _
  $region67: #{swin_encoder_forward.2} parent=0 // pred_check_branch
    %101 = sbr.rel (0) target = $region69
  $region68: #{swin_encoder_forward.2} parent=0 // pred_region
    _
  $region69: #{swin_encoder_forward.2} parent=0 // pred_fallthru
    _
  // Predicated region
  $region70: #{swin_encoder_forward.2} parent=0 // pred_check
    _
  $region71: #{swin_encoder_forward.2} parent=0 // pred_check_branch
    %103 = sbr.rel (0) target = $region73
  $region72: #{swin_encoder_forward.2} parent=0 // pred_region
    _
  $region73: #{swin_encoder_forward.2} parent=0 // pred_fallthru
    _
  // Predicated region
  $region74: #{swin_encoder_forward.2} parent=0 // pred_check
    _
  $region75: #{swin_encoder_forward.2} parent=0 // pred_check_branch
    %105 = sbr.rel (0) target = $region77
  $region76: #{swin_encoder_forward.2} parent=0 // pred_region
    _
  $region77: #{swin_encoder_forward.2} parent=0 // pred_fallthru
    _
  // Predicated region
  $region78: #{swin_encoder_forward.2} parent=0 // pred_check
    _
  $region79: #{swin_encoder_forward.2} parent=0 // pred_check_branch
    %107 = sbr.rel (0) target = $region81
  $region80: #{swin_encoder_forward.2} parent=0 // pred_region
    _
  $region81: #{swin_encoder_forward.2} parent=0 // pred_fallthru
    _
  // Predicated region
  $region82: #{swin_encoder_forward.2} parent=0 // pred_check
    _
  $region83: #{swin_encoder_forward.2} parent=0 // pred_check_branch
    %109 = sbr.rel (0) target = $region85
  $region84: #{swin_encoder_forward.2} parent=0 // pred_region
    _
  $region85: #{swin_encoder_forward.2} parent=0 // pred_fallthru
    _
  // Predicated region
  $region86: #{swin_encoder_forward.2} parent=0 // pred_check
    _
  $region87: #{swin_encoder_forward.2} parent=0 // pred_check_branch
    %111 = sbr.rel (0) target = $region89
  $region88: #{swin_encoder_forward.2} parent=0 // pred_region
    _
  $region89: #{swin_encoder_forward.2} parent=0 // pred_fallthru
    _
  // Predicated region
  $region90: #{swin_encoder_forward.2} parent=0 // pred_check
    _
  $region91: #{swin_encoder_forward.2} parent=0 // pred_check_branch
    %113 = sbr.rel (0) target = $region93
  $region92: #{swin_encoder_forward.2} parent=0 // pred_region
    _
  $region93: #{swin_encoder_forward.2} parent=0 // pred_fallthru
    _
  // Predicated region
  $region94: #{swin_encoder_forward.2} parent=0 // pred_check
    _
  $region95: #{swin_encoder_forward.2} parent=0 // pred_check_branch
    %115 = sbr.rel (0) target = $region97
  $region96: #{swin_encoder_forward.2} parent=0 // pred_region
    _
  $region97: #{swin_encoder_forward.2} parent=0 // pred_fallthru
    _
  // Predicated region
  $region98: #{swin_encoder_forward.2} parent=0 // pred_check
    _
  $region99: #{swin_encoder_forward.2} parent=0 // pred_check_branch
    %117 = sbr.rel (0) target = $region101
  $region100: #{swin_encoder_forward.2} parent=0 // pred_region
    _
  $region101: #{swin_encoder_forward.2} parent=0 // pred_fallthru
    _
  // Predicated region
  $region102: #{swin_encoder_forward.2} parent=0 // pred_check
    _
  $region103: #{swin_encoder_forward.2} parent=0 // pred_check_branch
    %119 = sbr.rel (0) target = $region105
  $region104: #{swin_encoder_forward.2} parent=0 // pred_region
    _
  $region105: #{swin_encoder_forward.2} parent=0 // pred_fallthru
    _
  // Predicated region
  $region106: #{swin_encoder_forward.2} parent=0 // pred_check
    _
  $region107: #{swin_encoder_forward.2} parent=0 // pred_check_branch
    %121 = sbr.rel (0) target = $region109
  $region108: #{swin_encoder_forward.2} parent=0 // pred_region
    _
  $region109: #{swin_encoder_forward.2} parent=0 // pred_fallthru
    _
  // Predicated region
  $region110: #{swin_encoder_forward.2} parent=0 // pred_check
    _
  $region111: #{swin_encoder_forward.2} parent=0 // pred_check_branch
    %123 = sbr.rel (0) target = $region113
  $region112: #{swin_encoder_forward.2} parent=0 // pred_region
    _
  $region113: #{swin_encoder_forward.2} parent=0 // pred_fallthru
    _
  // Predicated region
  $region114: #{swin_encoder_forward.2} parent=0 // pred_check
    _
  $region115: #{swin_encoder_forward.2} parent=0 // pred_check_branch
    %125 = sbr.rel (0) target = $region117
  $region116: #{swin_encoder_forward.2} parent=0 // pred_region
    _
  $region117: #{swin_encoder_forward.2} parent=0 // pred_fallthru
    _
  // Predicated region
  $region118: #{swin_encoder_forward.2} parent=0 // pred_check
    _
  $region119: #{swin_encoder_forward.2} parent=0 // pred_check_branch
    %127 = sbr.rel (0) target = $region121
  $region120: #{swin_encoder_forward.2} parent=0 // pred_region
    _
  $region121: #{swin_encoder_forward.2} parent=0 // pred_fallthru
    _
  // Predicated region
  $region122: #{swin_encoder_forward.2} parent=0 // pred_check
    _
  $region123: #{swin_encoder_forward.2} parent=0 // pred_check_branch
    %129 = sbr.rel (0) target = $region125
  $region124: #{swin_encoder_forward.2} parent=0 // pred_region
    _
  $region125: #{swin_encoder_forward.2} parent=0 // pred_fallthru
    _
  %v131 = vld [vmem:[%s1] sm:$0xff]
  %v132 = vld [vmem:[%s1 + $0x8] sm:$0xff]
  %v133 = vld [vmem:[%s1 + $0x10] sm:$0xff]
  %v134 = vld [vmem:[%s1 + $0x18] sm:$0xff]
  %v135 = vld [vmem:[%s1 + $0x20] sm:$0xff]
  %v136 = vld [vmem:[%s1 + $0x28] sm:$0xff]
  %v137 = vld [vmem:[%s1 + $0x30] sm:$0xff]
  %v138 = vld [vmem:[%s1 + $0x38] sm:$0xff]
  %v139 = vld [vmem:[%s1 + $0x40] sm:$0xff]
  %v140 = vld [vmem:[%s1 + $0x48] sm:$0xff]
  %v141 = vld [vmem:[%s1 + $0x50] sm:$0xff]
  %v142 = vld [vmem:[%s1 + $0x58] sm:$0xff]
  %v143 = vld [vmem:[%s1 + $0x60] sm:$0xff]
  %v144 = vld [vmem:[%s1 + $0x68] sm:$0xff]
  %v145 = vld [vmem:[%s1 + $0x70] sm:$0xff]
  %v146 = vld [vmem:[%s1 + $0x78] sm:$0xff]
  %v147 = vpack.c.bf16 %v132, %v131
  %v148 = vpack.c.bf16 %v134, %v133
  %v149 = vpack.c.bf16 %v136, %v135
  %v150 = vpack.c.bf16 %v138, %v137
  %v151 = vpack.c.bf16 %v140, %v139
  %v152 = vpack.c.bf16 %v142, %v141
  %v153 = vpack.c.bf16 %v144, %v143
  %v154 = vpack.c.bf16 %v146, %v145
  %v155 = vld [vmem:[%s3] sm:$0xf]
  %v156 = vld [vmem:[%s3 + $0x4] sm:$0xf]
  %v157 = vld [vmem:[%s3 + $0x8] sm:$0xf]
  %v158 = vld [vmem:[%s3 + $0xc] sm:$0xf]
  %v159 = vld [vmem:[%s3 + $0x10] sm:$0xf]
  %v160 = vld [vmem:[%s3 + $0x14] sm:$0xf]
  %v161 = vld [vmem:[%s5] sm:$0x1]
  %v163 = vlaneseq
  %v164 = vshrl.u32 %v163, 7
  %v165 = vsub.s32 0, %v164
  %v166 = vrot.slane %v161, %v165
  %v174 = vunpack.c.l.b16 %v155
  %v175 = vunpack.c.l.b16 %v156
  %v176 = vunpack.c.l.b16 %v157
  %v177 = vunpack.c.l.b16 %v158
  %v178 = vunpack.c.l.b16 %v159
  %v179 = vunpack.c.l.b16 %v160
  %v180 = vpack.c.b16 %v175, %v174
  %v181 = vpack.c.b16 %v177, %v176
  %v182 = vpack.c.b16 %v179, %v178
  %vm186 = vcmask 392192
  %v188 = vsel %vm186, %v147, 0
  %v191 = vsel %vm186, %v148, 0
  %v194 = vsel %vm186, %v149, 0
  %v197 = vsel %vm186, %v150, 0
  %v200 = vsel %vm186, %v151, 0
  %v203 = vsel %vm186, %v152, 0
  %v206 = vsel %vm186, %v153, 0
  %v209 = vsel %vm186, %v154, 0
  %211 = vmatprep.subr.bf16.mxu0 0
  %212 = vmatpush1.bf16.msra.mxu0 %v180
  %213 = vmatprep.subr.bf16.mxu0 0
  %214 = vmatpush1.bf16.msra.mxu0 %v181
  %215 = vmatprep.subr.bf16.mxu0 0
  %216 = vmatpush1.bf16.msra.mxu0 %v182
  %217 = vmatprep.subr.bf16.mxu0 0
  %218 = vmatpush1.bf16.msra.mxu0 0
  %219 = vmatprep.subr.bf16.mxu0 0
  %220 = vmatpush1.bf16.msra.mxu0 0
  %221 = vmatprep.subr.bf16.mxu0 0
  %222 = vmatpush1.bf16.msra.mxu0 0
  %223 = vmatprep.subr.bf16.mxu0 0
  %224 = vmatpush1.bf16.msra.mxu0 0
  %225 = vmatprep.subr.bf16.mxu0 0
  %226 = vmatpush1.bf16.msra.mxu0 0
  %227 = vmatprep.subr.bf16.mxu0 0
  %228 = vmatpush1.bf16.msra.mxu0 0
  %229 = vmatprep.subr.bf16.mxu0 0
  %230 = vmatpush1.bf16.msra.mxu0 0
  %231 = vmatprep.subr.bf16.mxu0 0
  %232 = vmatpush1.bf16.msra.mxu0 0
  %233 = vmatprep.subr.bf16.mxu0 0
  %234 = vmatpush1.bf16.msra.mxu0 0
  %235 = vmatprep.subr.bf16.mxu0 0
  %236 = vmatpush1.bf16.msra.mxu0 0
  %237 = vmatprep.subr.bf16.mxu0 0
  %238 = vmatpush1.bf16.msra.mxu0 0
  %239 = vmatprep.subr.bf16.mxu0 0
  %240 = vmatpush1.bf16.msra.mxu0 0
  %241 = vmatprep.subr.bf16.mxu0 0
  %242 = vmatpush1.bf16.msra.mxu0 0
  %243 = vmatprep.mubr.bf16.mxu0 0
  %244 = vmatmul.mubr.bf16.gmra.mrb[0].mxu0 %v188
  %v245 = vpop.f32.mrb[0].mxu0
  %v246 = vadd.f32 %v166, %v245
  %v247 = vpop.f32.mrb[0].mxu0
  %v248 = vpop.f32.mrb[0].mxu0
  %v249 = vadd.f32 %v166, %v248
  %v250 = vpop.f32.mrb[0].mxu0
  %251 = vmatprep.mubr.bf16.mxu0 0
  %252 = vmatmul.mubr.bf16.gmra.mrb[0].mxu0 %v191
  %v253 = vpop.f32.mrb[0].mxu0
  %v254 = vadd.f32 %v166, %v253
  %v255 = vpop.f32.mrb[0].mxu0
  %v256 = vpop.f32.mrb[0].mxu0
  %v257 = vadd.f32 %v166, %v256
  %v258 = vpop.f32.mrb[0].mxu0
  %259 = vmatprep.mubr.bf16.mxu0 0
  %260 = vmatmul.mubr.bf16.gmra.mrb[0].mxu0 %v194
  %v261 = vpop.f32.mrb[0].mxu0
  %v262 = vadd.f32 %v166, %v261
  %v263 = vpop.f32.mrb[0].mxu0
  %v264 = vpop.f32.mrb[0].mxu0
  %v265 = vadd.f32 %v166, %v264
  %v266 = vpop.f32.mrb[0].mxu0
  %267 = vmatprep.mubr.bf16.mxu0 0
  %268 = vmatmul.mubr.bf16.gmra.mrb[0].mxu0 %v197
  %v269 = vpop.f32.mrb[0].mxu0
  %v270 = vadd.f32 %v166, %v269
  %v271 = vpop.f32.mrb[0].mxu0
  %v272 = vpop.f32.mrb[0].mxu0
  %v273 = vadd.f32 %v166, %v272
  %v274 = vpop.f32.mrb[0].mxu0
  %275 = vmatprep.mubr.bf16.mxu0 0
  %276 = vmatmul.mubr.bf16.gmra.mrb[0].mxu0 %v200
  %v277 = vpop.f32.mrb[0].mxu0
  %v278 = vadd.f32 %v166, %v277
  %v279 = vpop.f32.mrb[0].mxu0
  %v280 = vpop.f32.mrb[0].mxu0
  %v281 = vadd.f32 %v166, %v280
  %v282 = vpop.f32.mrb[0].mxu0
  %283 = vmatprep.mubr.bf16.mxu0 0
  %284 = vmatmul.mubr.bf16.gmra.mrb[0].mxu0 %v203
  %v285 = vpop.f32.mrb[0].mxu0
  %v286 = vadd.f32 %v166, %v285
  %v287 = vpop.f32.mrb[0].mxu0
  %v288 = vpop.f32.mrb[0].mxu0
  %v289 = vadd.f32 %v166, %v288
  %v290 = vpop.f32.mrb[0].mxu0
  %291 = vmatprep.mubr.bf16.mxu0 0
  %292 = vmatmul.mubr.bf16.gmra.mrb[0].mxu0 %v206
  %v293 = vpop.f32.mrb[0].mxu0
  %v294 = vadd.f32 %v166, %v293
  %v295 = vpop.f32.mrb[0].mxu0
  %v296 = vpop.f32.mrb[0].mxu0
  %v297 = vadd.f32 %v166, %v296
  %v298 = vpop.f32.mrb[0].mxu0
  %299 = vmatprep.mubr.bf16.mxu0 0
  %300 = vmatmul.mubr.bf16.gmra.mrb[0].mxu0 %v209
  %v301 = vpop.f32.mrb[0].mxu0
  %v302 = vadd.f32 %v166, %v301
  %v303 = vpop.f32.mrb[0].mxu0
  %v304 = vpop.f32.mrb[0].mxu0
  %v305 = vadd.f32 %v166, %v304
  %v306 = vpop.f32.mrb[0].mxu0
  %307 = vdwg.mxu0
  %v308 = vld [vmem:[%s7] sm:$0x1]
  %v309 = vld [vmem:[%s9] sm:$0x1]
  %vm310 = vcmask 261120
  %v311 = vsel %vm310, %v246, 0.0
  %312 = vadd.xlane.f32.xlu0 %v311
  %v313 = vpop.xlane.xlu0 %312
  %v314 = vsel %vm310, %v249, 0.0
  %315 = vadd.xlane.f32.xlu0 %v314
  %v316 = vpop.xlane.xlu0 %315
  %v317 = vsel %vm310, %v254, 0.0
  %318 = vadd.xlane.f32.xlu0 %v317
  %v319 = vpop.xlane.xlu0 %318
  %v320 = vsel %vm310, %v257, 0.0
  %321 = vadd.xlane.f32.xlu0 %v320
  %v322 = vpop.xlane.xlu0 %321
  %v323 = vsel %vm310, %v262, 0.0
  %324 = vadd.xlane.f32.xlu0 %v323
  %v325 = vpop.xlane.xlu0 %324
  %v326 = vsel %vm310, %v265, 0.0
  %327 = vadd.xlane.f32.xlu0 %v326
  %v328 = vpop.xlane.xlu0 %327
  %v329 = vsel %vm310, %v270, 0.0
  %330 = vadd.xlane.f32.xlu0 %v329
  %v331 = vpop.xlane.xlu0 %330
  %v332 = vsel %vm310, %v273, 0.0
  %333 = vadd.xlane.f32.xlu0 %v332
  %v334 = vpop.xlane.xlu0 %333
  %v335 = vsel %vm310, %v278, 0.0
  %336 = vadd.xlane.f32.xlu0 %v335
  %v337 = vpop.xlane.xlu0 %336
  %v338 = vsel %vm310, %v281, 0.0
  %339 = vadd.xlane.f32.xlu0 %v338
  %v340 = vpop.xlane.xlu0 %339
  %v341 = vsel %vm310, %v286, 0.0
  %342 = vadd.xlane.f32.xlu0 %v341
  %v343 = vpop.xlane.xlu0 %342
  %v344 = vsel %vm310, %v289, 0.0
  %345 = vadd.xlane.f32.xlu0 %v344
  %v346 = vpop.xlane.xlu0 %345
  %v347 = vsel %vm310, %v294, 0.0
  %348 = vadd.xlane.f32.xlu0 %v347
  %v349 = vpop.xlane.xlu0 %348
  %v350 = vsel %vm310, %v297, 0.0
  %351 = vadd.xlane.f32.xlu0 %v350
  %v352 = vpop.xlane.xlu0 %351
  %v353 = vsel %vm310, %v302, 0.0
  %354 = vadd.xlane.f32.xlu0 %v353
  %v355 = vpop.xlane.xlu0 %354
  %v356 = vsel %vm310, %v305, 0.0
  %357 = vadd.xlane.f32.xlu0 %v356
  %v358 = vpop.xlane.xlu0 %357
  %v359 = vrcp.pop 32.0
  %v360 = vmul.f32 %v313, %v359
  %v361 = vmul.f32 %v316, %v359
  %v362 = vmul.f32 %v319, %v359
  %v363 = vmul.f32 %v322, %v359
  %v364 = vmul.f32 %v325, %v359
  %v365 = vmul.f32 %v328, %v359
  %v366 = vmul.f32 %v331, %v359
  %v367 = vmul.f32 %v334, %v359
  %v368 = vmul.f32 %v337, %v359
  %v369 = vmul.f32 %v340, %v359
  %v370 = vmul.f32 %v343, %v359
  %v371 = vmul.f32 %v346, %v359
  %v372 = vmul.f32 %v349, %v359
  %v373 = vmul.f32 %v352, %v359
  %v374 = vmul.f32 %v355, %v359
  %v375 = vmul.f32 %v358, %v359
  %v376 = vsub.f32 %v246, %v360
  %v377 = vsub.f32 %v249, %v361
  %v378 = vsub.f32 %v254, %v362
  %v379 = vsub.f32 %v257, %v363
  %v380 = vsub.f32 %v262, %v364
  %v381 = vsub.f32 %v265, %v365
  %v382 = vsub.f32 %v270, %v366
  %v383 = vsub.f32 %v273, %v367
  %v384 = vsub.f32 %v278, %v368
  %v385 = vsub.f32 %v281, %v369
  %v386 = vsub.f32 %v286, %v370
  %v387 = vsub.f32 %v289, %v371
  %v388 = vsub.f32 %v294, %v372
  %v389 = vsub.f32 %v297, %v373
  %v390 = vsub.f32 %v302, %v374
  %v391 = vsub.f32 %v305, %v375
  %v392 = vmul.f32 %v376, %v376
  %v393 = vmul.f32 %v377, %v377
  %v394 = vmul.f32 %v378, %v378
  %v395 = vmul.f32 %v379, %v379
  %v396 = vmul.f32 %v380, %v380
  %v397 = vmul.f32 %v381, %v381
  %v398 = vmul.f32 %v382, %v382
  %v399 = vmul.f32 %v383, %v383
  %v400 = vmul.f32 %v384, %v384
  %v401 = vmul.f32 %v385, %v385
  %v402 = vmul.f32 %v386, %v386
  %v403 = vmul.f32 %v387, %v387
  %v404 = vmul.f32 %v388, %v388
  %v405 = vmul.f32 %v389, %v389
  %v406 = vmul.f32 %v390, %v390
  %v407 = vmul.f32 %v391, %v391
  %v408 = vsel %vm310, %v392, 0.0
  %409 = vadd.xlane.f32.xlu0 %v408
  %v410 = vpop.xlane.xlu0 %409
  %v411 = vsel %vm310, %v393, 0.0
  %412 = vadd.xlane.f32.xlu0 %v411
  %v413 = vpop.xlane.xlu0 %412
  %v414 = vsel %vm310, %v394, 0.0
  %415 = vadd.xlane.f32.xlu0 %v414
  %v416 = vpop.xlane.xlu0 %415
  %v417 = vsel %vm310, %v395, 0.0
  %418 = vadd.xlane.f32.xlu0 %v417
  %v419 = vpop.xlane.xlu0 %418
  %v420 = vsel %vm310, %v396, 0.0
  %421 = vadd.xlane.f32.xlu0 %v420
  %v422 = vpop.xlane.xlu0 %421
  %v423 = vsel %vm310, %v397, 0.0
  %424 = vadd.xlane.f32.xlu0 %v423
  %v425 = vpop.xlane.xlu0 %424
  %v426 = vsel %vm310, %v398, 0.0
  %427 = vadd.xlane.f32.xlu0 %v426
  %v428 = vpop.xlane.xlu0 %427
  %v429 = vsel %vm310, %v399, 0.0
  %430 = vadd.xlane.f32.xlu0 %v429
  %v431 = vpop.xlane.xlu0 %430
  %v432 = vsel %vm310, %v400, 0.0
  %433 = vadd.xlane.f32.xlu0 %v432
  %v434 = vpop.xlane.xlu0 %433
  %v435 = vsel %vm310, %v401, 0.0
  %436 = vadd.xlane.f32.xlu0 %v435
  %v437 = vpop.xlane.xlu0 %436
  %v438 = vsel %vm310, %v402, 0.0
  %439 = vadd.xlane.f32.xlu0 %v438
  %v440 = vpop.xlane.xlu0 %439
  %v441 = vsel %vm310, %v403, 0.0
  %442 = vadd.xlane.f32.xlu0 %v441
  %v443 = vpop.xlane.xlu0 %442
  %v444 = vsel %vm310, %v404, 0.0
  %445 = vadd.xlane.f32.xlu0 %v444
  %v446 = vpop.xlane.xlu0 %445
  %v447 = vsel %vm310, %v405, 0.0
  %448 = vadd.xlane.f32.xlu0 %v447
  %v449 = vpop.xlane.xlu0 %448
  %v450 = vsel %vm310, %v406, 0.0
  %451 = vadd.xlane.f32.xlu0 %v450
  %v452 = vpop.xlane.xlu0 %451
  %v453 = vsel %vm310, %v407, 0.0
  %454 = vadd.xlane.f32.xlu0 %v453
  %v455 = vpop.xlane.xlu0 %454
  %v456 = vmul.f32 %v410, %v359
  %v457 = vmul.f32 %v413, %v359
  %v458 = vmul.f32 %v416, %v359
  %v459 = vmul.f32 %v419, %v359
  %v460 = vmul.f32 %v422, %v359
  %v461 = vmul.f32 %v425, %v359
  %v462 = vmul.f32 %v428, %v359
  %v463 = vmul.f32 %v431, %v359
  %v464 = vmul.f32 %v434, %v359
  %v465 = vmul.f32 %v437, %v359
  %v466 = vmul.f32 %v440, %v359
  %v467 = vmul.f32 %v443, %v359
  %v468 = vmul.f32 %v446, %v359
  %v469 = vmul.f32 %v449, %v359
  %v470 = vmul.f32 %v452, %v359
  %v471 = vmul.f32 %v455, %v359
  %v472 = vadd.f32 %v456, 1e-05
  %v473 = vadd.f32 %v457, 1e-05
  %v474 = vadd.f32 %v458, 1e-05
  %v475 = vadd.f32 %v459, 1e-05
  %v476 = vadd.f32 %v460, 1e-05
  %v477 = vadd.f32 %v461, 1e-05
  %v478 = vadd.f32 %v462, 1e-05
  %v479 = vadd.f32 %v463, 1e-05
  %v480 = vadd.f32 %v464, 1e-05
  %v481 = vadd.f32 %v465, 1e-05
  %v482 = vadd.f32 %v466, 1e-05
  %v483 = vadd.f32 %v467, 1e-05
  %v484 = vadd.f32 %v468, 1e-05
  %v485 = vadd.f32 %v469, 1e-05
  %v486 = vadd.f32 %v470, 1e-05
  %v487 = vadd.f32 %v471, 1e-05
  %v488 = vrsqrt.pop %v472
  %v489 = vrsqrt.pop %v473
  %v490 = vrsqrt.pop %v474
  %v491 = vrsqrt.pop %v475
  %v492 = vrsqrt.pop %v476
  %v493 = vrsqrt.pop %v477
  %v494 = vrsqrt.pop %v478
  %v495 = vrsqrt.pop %v479
  %v496 = vrsqrt.pop %v480
  %v497 = vrsqrt.pop %v481
  %v498 = vrsqrt.pop %v482
  %v499 = vrsqrt.pop %v483
  %v500 = vrsqrt.pop %v484
  %v501 = vrsqrt.pop %v485
  %v502 = vrsqrt.pop %v486
  %v503 = vrsqrt.pop %v487
  %v504 = vmul.f32 %v376, %v488
  %v505 = vmul.f32 %v377, %v489
  %v506 = vmul.f32 %v378, %v490
  %v507 = vmul.f32 %v379, %v491
  %v508 = vmul.f32 %v380, %v492
  %v509 = vmul.f32 %v381, %v493
  %v510 = vmul.f32 %v382, %v494
  %v511 = vmul.f32 %v383, %v495
  %v512 = vmul.f32 %v384, %v496
  %v513 = vmul.f32 %v385, %v497
  %v514 = vmul.f32 %v386, %v498
  %v515 = vmul.f32 %v387, %v499
  %v516 = vmul.f32 %v388, %v500
  %v517 = vmul.f32 %v389, %v501
  %v518 = vmul.f32 %v390, %v502
  %v519 = vmul.f32 %v391, %v503
  %v521 = vlaneseq
  %v522 = vshrl.u32 %v521, 7
  %v523 = vsub.s32 0, %v522
  %v524 = vrot.slane %v308, %v523
  %v526 = vmul.f32 %v504, %v524
  %v527 = vmul.f32 %v505, %v524
  %v528 = vmul.f32 %v506, %v524
  %v529 = vmul.f32 %v507, %v524
  %v530 = vmul.f32 %v508, %v524
  %v531 = vmul.f32 %v509, %v524
  %v532 = vmul.f32 %v510, %v524
  %v533 = vmul.f32 %v511, %v524
  %v534 = vmul.f32 %v512, %v524
  %v535 = vmul.f32 %v513, %v524
  %v536 = vmul.f32 %v514, %v524
  %v537 = vmul.f32 %v515, %v524
  %v538 = vmul.f32 %v516, %v524
  %v539 = vmul.f32 %v517, %v524
  %v540 = vmul.f32 %v518, %v524
  %v541 = vmul.f32 %v519, %v524
  %v543 = vlaneseq
  %v544 = vshrl.u32 %v543, 7
  %v545 = vsub.s32 0, %v544
  %v546 = vrot.slane %v309, %v545
  %v548 = vadd.f32 %v526, %v546
  %v549 = vadd.f32 %v527, %v546
  %v550 = vadd.f32 %v528, %v546
  %v551 = vadd.f32 %v529, %v546
  %v552 = vadd.f32 %v530, %v546
  %v553 = vadd.f32 %v531, %v546
  %v554 = vadd.f32 %v532, %v546
  %v555 = vadd.f32 %v533, %v546
  %v556 = vadd.f32 %v534, %v546
  %v557 = vadd.f32 %v535, %v546
  %v558 = vadd.f32 %v536, %v546
  %v559 = vadd.f32 %v537, %v546
  %v560 = vadd.f32 %v538, %v546
  %v561 = vadd.f32 %v539, %v546
  %v562 = vadd.f32 %v540, %v546
  %v563 = vadd.f32 %v541, %v546
  %v564 = vld [vmem:[%s11] sm:$0x1]
  %v565 = vld [vmem:[%s13] sm:$0x1]
  %v566 = vsel %vm310, %v548, 0.0
  %567 = vadd.xlane.f32.xlu0 %v566
  %v568 = vpop.xlane.xlu0 %567
  %v569 = vsel %vm310, %v549, 0.0
  %570 = vadd.xlane.f32.xlu0 %v569
  %v571 = vpop.xlane.xlu0 %570
  %v572 = vsel %vm310, %v550, 0.0
  %573 = vadd.xlane.f32.xlu0 %v572
  %v574 = vpop.xlane.xlu0 %573
  %v575 = vsel %vm310, %v551, 0.0
  %576 = vadd.xlane.f32.xlu0 %v575
  %v577 = vpop.xlane.xlu0 %576
  %v578 = vsel %vm310, %v552, 0.0
  %579 = vadd.xlane.f32.xlu0 %v578
  %v580 = vpop.xlane.xlu0 %579
  %v581 = vsel %vm310, %v553, 0.0
  %582 = vadd.xlane.f32.xlu0 %v581
  %v583 = vpop.xlane.xlu0 %582
  %v584 = vsel %vm310, %v554, 0.0
  %585 = vadd.xlane.f32.xlu0 %v584
  %v586 = vpop.xlane.xlu0 %585
  %v587 = vsel %vm310, %v555, 0.0
  %588 = vadd.xlane.f32.xlu0 %v587
  %v589 = vpop.xlane.xlu0 %588
  %v590 = vsel %vm310, %v556, 0.0
  %591 = vadd.xlane.f32.xlu0 %v590
  %v592 = vpop.xlane.xlu0 %591
  %v593 = vsel %vm310, %v557, 0.0
  %594 = vadd.xlane.f32.xlu0 %v593
  %v595 = vpop.xlane.xlu0 %594
  %v596 = vsel %vm310, %v558, 0.0
  %597 = vadd.xlane.f32.xlu0 %v596
  %v598 = vpop.xlane.xlu0 %597
  %v599 = vsel %vm310, %v559, 0.0
  %600 = vadd.xlane.f32.xlu0 %v599
  %v601 = vpop.xlane.xlu0 %600
  %v602 = vsel %vm310, %v560, 0.0
  %603 = vadd.xlane.f32.xlu0 %v602
  %v604 = vpop.xlane.xlu0 %603
  %v605 = vsel %vm310, %v561, 0.0
  %606 = vadd.xlane.f32.xlu0 %v605
  %v607 = vpop.xlane.xlu0 %606
  %v608 = vsel %vm310, %v562, 0.0
  %609 = vadd.xlane.f32.xlu0 %v608
  %v610 = vpop.xlane.xlu0 %609
  %v611 = vsel %vm310, %v563, 0.0
  %612 = vadd.xlane.f32.xlu0 %v611
  %v613 = vpop.xlane.xlu0 %612
  %v614 = vmul.f32 %v568, %v359
  %v615 = vmul.f32 %v571, %v359
  %v616 = vmul.f32 %v574, %v359
  %v617 = vmul.f32 %v577, %v359
  %v618 = vmul.f32 %v580, %v359
  %v619 = vmul.f32 %v583, %v359
  %v620 = vmul.f32 %v586, %v359
  %v621 = vmul.f32 %v589, %v359
  %v622 = vmul.f32 %v592, %v359
  %v623 = vmul.f32 %v595, %v359
  %v624 = vmul.f32 %v598, %v359
  %v625 = vmul.f32 %v601, %v359
  %v626 = vmul.f32 %v604, %v359
  %v627 = vmul.f32 %v607, %v359
  %v628 = vmul.f32 %v610, %v359
  %v629 = vmul.f32 %v613, %v359
  %v630 = vsub.f32 %v548, %v614
  %v631 = vsub.f32 %v549, %v615
  %v632 = vsub.f32 %v550, %v616
  %v633 = vsub.f32 %v551, %v617
  %v634 = vsub.f32 %v552, %v618
  %v635 = vsub.f32 %v553, %v619
  %v636 = vsub.f32 %v554, %v620
  %v637 = vsub.f32 %v555, %v621
  %v638 = vsub.f32 %v556, %v622
  %v639 = vsub.f32 %v557, %v623
  %v640 = vsub.f32 %v558, %v624
  %v641 = vsub.f32 %v559, %v625
  %v642 = vsub.f32 %v560, %v626
  %v643 = vsub.f32 %v561, %v627
  %v644 = vsub.f32 %v562, %v628
  %v645 = vsub.f32 %v563, %v629
  %v646 = vmul.f32 %v630, %v630
  %v647 = vmul.f32 %v631, %v631
  %v648 = vmul.f32 %v632, %v632
  %v649 = vmul.f32 %v633, %v633
  %v650 = vmul.f32 %v634, %v634
  %v651 = vmul.f32 %v635, %v635
  %v652 = vmul.f32 %v636, %v636
  %v653 = vmul.f32 %v637, %v637
  %v654 = vmul.f32 %v638, %v638
  %v655 = vmul.f32 %v639, %v639
  %v656 = vmul.f32 %v640, %v640
  %v657 = vmul.f32 %v641, %v641
  %v658 = vmul.f32 %v642, %v642
  %v659 = vmul.f32 %v643, %v643
  %v660 = vmul.f32 %v644, %v644
  %v661 = vmul.f32 %v645, %v645
  %v662 = vsel %vm310, %v646, 0.0
  %663 = vadd.xlane.f32.xlu0 %v662
  %v664 = vpop.xlane.xlu0 %663
  %v665 = vsel %vm310, %v647, 0.0
  %666 = vadd.xlane.f32.xlu0 %v665
  %v667 = vpop.xlane.xlu0 %666
  %v668 = vsel %vm310, %v648, 0.0
  %669 = vadd.xlane.f32.xlu0 %v668
  %v670 = vpop.xlane.xlu0 %669
  %v671 = vsel %vm310, %v649, 0.0
  %672 = vadd.xlane.f32.xlu0 %v671
  %v673 = vpop.xlane.xlu0 %672
  %v674 = vsel %vm310, %v650, 0.0
  %675 = vadd.xlane.f32.xlu0 %v674
  %v676 = vpop.xlane.xlu0 %675
  %v677 = vsel %vm310, %v651, 0.0
  %678 = vadd.xlane.f32.xlu0 %v677
  %v679 = vpop.xlane.xlu0 %678
  %v680 = vsel %vm310, %v652, 0.0
  %681 = vadd.xlane.f32.xlu0 %v680
  %v682 = vpop.xlane.xlu0 %681
  %v683 = vsel %vm310, %v653, 0.0
  %684 = vadd.xlane.f32.xlu0 %v683
  %v685 = vpop.xlane.xlu0 %684
  %v686 = vsel %vm310, %v654, 0.0
  %687 = vadd.xlane.f32.xlu0 %v686
  %v688 = vpop.xlane.xlu0 %687
  %v689 = vsel %vm310, %v655, 0.0
  %690 = vadd.xlane.f32.xlu0 %v689
  %v691 = vpop.xlane.xlu0 %690
  %v692 = vsel %vm310, %v656, 0.0
  %693 = vadd.xlane.f32.xlu0 %v692
  %v694 = vpop.xlane.xlu0 %693
  %v695 = vsel %vm310, %v657, 0.0
  %696 = vadd.xlane.f32.xlu0 %v695
  %v697 = vpop.xlane.xlu0 %696
  %v698 = vsel %vm310, %v658, 0.0
  %699 = vadd.xlane.f32.xlu0 %v698
  %v700 = vpop.xlane.xlu0 %699
  %v701 = vsel %vm310, %v659, 0.0
  %702 = vadd.xlane.f32.xlu0 %v701
  %v703 = vpop.xlane.xlu0 %702
  %v704 = vsel %vm310, %v660, 0.0
  %705 = vadd.xlane.f32.xlu0 %v704
  %v706 = vpop.xlane.xlu0 %705
  %v707 = vsel %vm310, %v661, 0.0
  %708 = vadd.xlane.f32.xlu0 %v707
  %v709 = vpop.xlane.xlu0 %708
  %v710 = vmul.f32 %v664, %v359
  %v711 = vmul.f32 %v667, %v359
  %v712 = vmul.f32 %v670, %v359
  %v713 = vmul.f32 %v673, %v359
  %v714 = vmul.f32 %v676, %v359
  %v715 = vmul.f32 %v679, %v359
  %v716 = vmul.f32 %v682, %v359
  %v717 = vmul.f32 %v685, %v359
  %v718 = vmul.f32 %v688, %v359
  %v719 = vmul.f32 %v691, %v359
  %v720 = vmul.f32 %v694, %v359
  %v721 = vmul.f32 %v697, %v359
  %v722 = vmul.f32 %v700, %v359
  %v723 = vmul.f32 %v703, %v359
  %v724 = vmul.f32 %v706, %v359
  %v725 = vmul.f32 %v709, %v359
  %v726 = vadd.f32 %v710, 1e-05
  %v727 = vadd.f32 %v711, 1e-05
  %v728 = vadd.f32 %v712, 1e-05
  %v729 = vadd.f32 %v713, 1e-05
  %v730 = vadd.f32 %v714, 1e-05
  %v731 = vadd.f32 %v715, 1e-05
  %v732 = vadd.f32 %v716, 1e-05
  %v733 = vadd.f32 %v717, 1e-05
  %v734 = vadd.f32 %v718, 1e-05
  %v735 = vadd.f32 %v719, 1e-05
  %v736 = vadd.f32 %v720, 1e-05
  %v737 = vadd.f32 %v721, 1e-05
  %v738 = vadd.f32 %v722, 1e-05
  %v739 = vadd.f32 %v723, 1e-05
  %v740 = vadd.f32 %v724, 1e-05
  %v741 = vadd.f32 %v725, 1e-05
  %v742 = vrsqrt.pop %v726
  %v743 = vrsqrt.pop %v727
  %v744 = vrsqrt.pop %v728
  %v745 = vrsqrt.pop %v729
  %v746 = vrsqrt.pop %v730
  %v747 = vrsqrt.pop %v731
  %v748 = vrsqrt.pop %v732
  %v749 = vrsqrt.pop %v733
  %v750 = vrsqrt.pop %v734
  %v751 = vrsqrt.pop %v735
  %v752 = vrsqrt.pop %v736
  %v753 = vrsqrt.pop %v737
  %v754 = vrsqrt.pop %v738
  %v755 = vrsqrt.pop %v739
  %v756 = vrsqrt.pop %v740
  %v757 = vrsqrt.pop %v741
  %v758 = vmul.f32 %v630, %v742
  %v759 = vmul.f32 %v631, %v743
  %v760 = vmul.f32 %v632, %v744
  %v761 = vmul.f32 %v633, %v745
  %v762 = vmul.f32 %v634, %v746
  %v763 = vmul.f32 %v635, %v747
  %v764 = vmul.f32 %v636, %v748
  %v765 = vmul.f32 %v637, %v749
  %v766 = vmul.f32 %v638, %v750
  %v767 = vmul.f32 %v639, %v751
  %v768 = vmul.f32 %v640, %v752
  %v769 = vmul.f32 %v641, %v753
  %v770 = vmul.f32 %v642, %v754
  %v771 = vmul.f32 %v643, %v755
  %v772 = vmul.f32 %v644, %v756
  %v773 = vmul.f32 %v645, %v757
  %v775 = vlaneseq
  %v776 = vshrl.u32 %v775, 7
  %v777 = vsub.s32 0, %v776
  %v778 = vrot.slane %v564, %v777
  %v780 = vmul.f32 %v758, %v778
  %v781 = vmul.f32 %v759, %v778
  %v782 = vmul.f32 %v760, %v778
  %v783 = vmul.f32 %v761, %v778
  %v784 = vmul.f32 %v762, %v778
  %v785 = vmul.f32 %v763, %v778
  %v786 = vmul.f32 %v764, %v778
  %v787 = vmul.f32 %v765, %v778
  %v788 = vmul.f32 %v766, %v778
  %v789 = vmul.f32 %v767, %v778
  %v790 = vmul.f32 %v768, %v778
  %v791 = vmul.f32 %v769, %v778
  %v792 = vmul.f32 %v770, %v778
  %v793 = vmul.f32 %v771, %v778
  %v794 = vmul.f32 %v772, %v778
  %v795 = vmul.f32 %v773, %v778
  %v797 = vlaneseq
  %v798 = vshrl.u32 %v797, 7
  %v799 = vsub.s32 0, %v798
  %v800 = vrot.slane %v565, %v799
  %v802 = vadd.f32 %v780, %v800
  %v803 = vadd.f32 %v781, %v800
  %v804 = vadd.f32 %v782, %v800
  %v805 = vadd.f32 %v783, %v800
  %v806 = vadd.f32 %v784, %v800
  %v807 = vadd.f32 %v785, %v800
  %v808 = vadd.f32 %v786, %v800
  %v809 = vadd.f32 %v787, %v800
  %v810 = vadd.f32 %v788, %v800
  %v811 = vadd.f32 %v789, %v800
  %v812 = vadd.f32 %v790, %v800
  %v813 = vadd.f32 %v791, %v800
  %v814 = vadd.f32 %v792, %v800
  %v815 = vadd.f32 %v793, %v800
  %v816 = vadd.f32 %v794, %v800
  %v817 = vadd.f32 %v795, %v800
  %v818 = vpack.c.bf16 %v803, %v802
  %v819 = vpack.c.bf16 %v805, %v804
  %v820 = vpack.c.bf16 %v807, %v806
  %v821 = vpack.c.bf16 %v809, %v808
  %v822 = vpack.c.bf16 %v811, %v810
  %v823 = vpack.c.bf16 %v813, %v812
  %v824 = vpack.c.bf16 %v815, %v814
  %v825 = vpack.c.bf16 %v817, %v816
  %v826 = vld [vmem:[%s15] sm:$0xf]
  %v827 = vld [vmem:[%s15 + $0x4] sm:$0xf]
  %v828 = vld [vmem:[%s15 + $0x8] sm:$0xf]
  %v829 = vld [vmem:[%s15 + $0xc] sm:$0xf]
  %v830 = vld [vmem:[%s17] sm:$0x1]
  %v832 = vlaneseq
  %v833 = vshrl.u32 %v832, 7
  %v834 = vsub.s32 0, %v833
  %v835 = vrot.slane %v830, %v834
  %v841 = vunpack.c.l.b16 %v826
  %v842 = vunpack.c.l.b16 %v827
  %v843 = vunpack.c.l.b16 %v828
  %v844 = vunpack.c.l.b16 %v829
  %v845 = vpack.c.b16 %v842, %v841
  %v846 = vpack.c.b16 %v844, %v843
  %v850 = vsel %vm310, %v818, 0
  %v853 = vsel %vm310, %v819, 0
  %v856 = vsel %vm310, %v820, 0
  %v859 = vsel %vm310, %v821, 0
  %v862 = vsel %vm310, %v822, 0
  %v865 = vsel %vm310, %v823, 0
  %v868 = vsel %vm310, %v824, 0
  %v871 = vsel %vm310, %v825, 0
  %873 = vmatprep.subr.bf16.mxu0 0
  %874 = vmatpush1.bf16.msra.mxu0 %v845
  %875 = vmatprep.subr.bf16.mxu0 0
  %876 = vmatpush1.bf16.msra.mxu0 %v846
  %877 = vmatprep.subr.bf16.mxu0 0
  %878 = vmatpush1.bf16.msra.mxu0 0
  %879 = vmatprep.subr.bf16.mxu0 0
  %880 = vmatpush1.bf16.msra.mxu0 0
  %881 = vmatprep.subr.bf16.mxu0 0
  %882 = vmatpush1.bf16.msra.mxu0 0
  %883 = vmatprep.subr.bf16.mxu0 0
  %884 = vmatpush1.bf16.msra.mxu0 0
  %885 = vmatprep.subr.bf16.mxu0 0
  %886 = vmatpush1.bf16.msra.mxu0 0
  %887 = vmatprep.subr.bf16.mxu0 0
  %888 = vmatpush1.bf16.msra.mxu0 0
  %889 = vmatprep.subr.bf16.mxu0 0
  %890 = vmatpush1.bf16.msra.mxu0 0
  %891 = vmatprep.subr.bf16.mxu0 0
  %892 = vmatpush1.bf16.msra.mxu0 0
  %893 = vmatprep.subr.bf16.mxu0 0
  %894 = vmatpush1.bf16.msra.mxu0 0
  %895 = vmatprep.subr.bf16.mxu0 0
  %896 = vmatpush1.bf16.msra.mxu0 0
  %897 = vmatprep.subr.bf16.mxu0 0
  %898 = vmatpush1.bf16.msra.mxu0 0
  %899 = vmatprep.subr.bf16.mxu0 0
  %900 = vmatpush1.bf16.msra.mxu0 0
  %901 = vmatprep.subr.bf16.mxu0 0
  %902 = vmatpush1.bf16.msra.mxu0 0
  %903 = vmatprep.subr.bf16.mxu0 0
  %904 = vmatpush1.bf16.msra.mxu0 0
  %905 = vmatprep.mubr.bf16.mxu0 0
  %906 = vmatmul.mubr.bf16.gmra.mrb[0].mxu0 %v850
  %v907 = vpop.f32.mrb[0].mxu0
  %v908 = vadd.f32 %v835, %v907
  %v909 = vpop.f32.mrb[0].mxu0
  %v910 = vpop.f32.mrb[0].mxu0
  %v911 = vadd.f32 %v835, %v910
  %v912 = vpop.f32.mrb[0].mxu0
  %913 = vmatprep.mubr.bf16.mxu0 0
  %914 = vmatmul.mubr.bf16.gmra.mrb[0].mxu0 %v853
  %v915 = vpop.f32.mrb[0].mxu0
  %v916 = vadd.f32 %v835, %v915
  %v917 = vpop.f32.mrb[0].mxu0
  %v918 = vpop.f32.mrb[0].mxu0
  %v919 = vadd.f32 %v835, %v918
  %v920 = vpop.f32.mrb[0].mxu0
  %921 = vmatprep.mubr.bf16.mxu0 0
  %922 = vmatmul.mubr.bf16.gmra.mrb[0].mxu0 %v856
  %v923 = vpop.f32.mrb[0].mxu0
  %v924 = vadd.f32 %v835, %v923
  %v925 = vpop.f32.mrb[0].mxu0
  %v926 = vpop.f32.mrb[0].mxu0
  %v927 = vadd.f32 %v835, %v926
  %v928 = vpop.f32.mrb[0].mxu0
  %929 = vmatprep.mubr.bf16.mxu0 0
  %930 = vmatmul.mubr.bf16.gmra.mrb[0].mxu0 %v859
  %v931 = vpop.f32.mrb[0].mxu0
  %v932 = vadd.f32 %v835, %v931
  %v933 = vpop.f32.mrb[0].mxu0
  %v934 = vpop.f32.mrb[0].mxu0
  %v935 = vadd.f32 %v835, %v934
  %v936 = vpop.f32.mrb[0].mxu0
  %937 = vmatprep.mubr.bf16.mxu0 0
  %938 = vmatmul.mubr.bf16.gmra.mrb[0].mxu0 %v862
  %v939 = vpop.f32.mrb[0].mxu0
  %v940 = vadd.f32 %v835, %v939
  %v941 = vpop.f32.mrb[0].mxu0
  %v942 = vpop.f32.mrb[0].mxu0
  %v943 = vadd.f32 %v835, %v942
  %v944 = vpop.f32.mrb[0].mxu0
  %945 = vmatprep.mubr.bf16.mxu0 0
  %946 = vmatmul.mubr.bf16.gmra.mrb[0].mxu0 %v865
  %v947 = vpop.f32.mrb[0].mxu0
  %v948 = vadd.f32 %v835, %v947
  %v949 = vpop.f32.mrb[0].mxu0
  %v950 = vpop.f32.mrb[0].mxu0
  %v951 = vadd.f32 %v835, %v950
  %v952 = vpop.f32.mrb[0].mxu0
  %953 = vmatprep.mubr.bf16.mxu0 0
  %954 = vmatmul.mubr.bf16.gmra.mrb[0].mxu0 %v868
  %v955 = vpop.f32.mrb[0].mxu0
  %v956 = vadd.f32 %v835, %v955
  %v957 = vpop.f32.mrb[0].mxu0
  %v958 = vpop.f32.mrb[0].mxu0
  %v959 = vadd.f32 %v835, %v958
  %v960 = vpop.f32.mrb[0].mxu0
  %961 = vmatprep.mubr.bf16.mxu0 0
  %962 = vmatmul.mubr.bf16.gmra.mrb[0].mxu0 %v871
  %v963 = vpop.f32.mrb[0].mxu0
  %v964 = vadd.f32 %v835, %v963
  %v965 = vpop.f32.mrb[0].mxu0
  %v966 = vpop.f32.mrb[0].mxu0
  %v967 = vadd.f32 %v835, %v966
  %v968 = vpop.f32.mrb[0].mxu0
  %969 = vdwg.mxu0
  %986 = vrot.lane.b32.xlu0 %v908, 112
  %v987 = vpop.permute.xlu0 %986
  %988 = vrot.lane.b32.xlu0 %v911, 112
  %v989 = vpop.permute.xlu0 %988
  %990 = vrot.lane.b32.xlu0 %v916, 112
  %v991 = vpop.permute.xlu0 %990
  %992 = vrot.lane.b32.xlu0 %v919, 112
  %v993 = vpop.permute.xlu0 %992
  %994 = vrot.lane.b32.xlu0 %v924, 112
  %v995 = vpop.permute.xlu0 %994
  %996 = vrot.lane.b32.xlu0 %v927, 112
  %v997 = vpop.permute.xlu0 %996
  %998 = vrot.lane.b32.xlu0 %v932, 112
  %v999 = vpop.permute.xlu0 %998
  %1000 = vrot.lane.b32.xlu0 %v935, 112
  %v1001 = vpop.permute.xlu0 %1000
  %1002 = vrot.lane.b32.xlu0 %v940, 112
  %v1003 = vpop.permute.xlu0 %1002
  %1004 = vrot.lane.b32.xlu0 %v943, 112
  %v1005 = vpop.permute.xlu0 %1004
  %1006 = vrot.lane.b32.xlu0 %v948, 112
  %v1007 = vpop.permute.xlu0 %1006
  %1008 = vrot.lane.b32.xlu0 %v951, 112
  %v1009 = vpop.permute.xlu0 %1008
  %1010 = vrot.lane.b32.xlu0 %v956, 112
  %v1011 = vpop.permute.xlu0 %1010
  %1012 = vrot.lane.b32.xlu0 %v959, 112
  %v1013 = vpop.permute.xlu0 %1012
  %1014 = vrot.lane.b32.xlu0 %v964, 112
  %v1015 = vpop.permute.xlu0 %1014
  %1016 = vrot.lane.b32.xlu0 %v967, 112
  %v1017 = vpop.permute.xlu0 %1016
  %v1034 = vpack.c.bf16 %v911, %v908
  %v1035 = vpack.c.bf16 %v919, %v916
  %v1036 = vpack.c.bf16 %v927, %v924
  %v1037 = vpack.c.bf16 %v935, %v932
  %v1038 = vpack.c.bf16 %v943, %v940
  %v1039 = vpack.c.bf16 %v951, %v948
  %v1040 = vpack.c.bf16 %v959, %v956
  %v1041 = vpack.c.bf16 %v967, %v964
  %v1042 = vpack.c.bf16 %v989, %v987
  %v1043 = vpack.c.bf16 %v993, %v991
  %v1044 = vpack.c.bf16 %v997, %v995
  %v1045 = vpack.c.bf16 %v1001, %v999
  %v1046 = vpack.c.bf16 %v1005, %v1003
  %v1047 = vpack.c.bf16 %v1009, %v1007
  %v1048 = vpack.c.bf16 %v1013, %v1011
  %v1049 = vpack.c.bf16 %v1017, %v1015
  %1054 = vrot.lane.b32.xlu0 %v1034, 96
  %v1055 = vpop.permute.xlu0 %1054
  %1056 = vrot.lane.b32.xlu0 %v1035, 96
  %v1057 = vpop.permute.xlu0 %1056
  %1058 = vrot.lane.b32.xlu0 %v1036, 96
  %v1059 = vpop.permute.xlu0 %1058
  %1060 = vrot.lane.b32.xlu0 %v1037, 96
  %v1061 = vpop.permute.xlu0 %1060
  %vm1062 = vcmask 130048
  %v1064 = vsel %vm1062, %v1034, 0
  %v1067 = vsel %vm1062, %v1035, 0
  %v1070 = vsel %vm1062, %v1036, 0
  %v1073 = vsel %vm1062, %v1037, 0
  %v1076 = vsel %vm1062, %v1055, 0
  %v1079 = vsel %vm1062, %v1057, 0
  %v1082 = vsel %vm1062, %v1059, 0
  %v1085 = vsel %vm1062, %v1061, 0
  %1087 = vmatprep.subr.bf16.mxu0 0
  %1088 = vmatpush1.bf16.xpose.msra.mxu0 %v1076
  %1089 = vmatprep.subr.bf16.mxu0 0
  %1090 = vmatpush1.bf16.xpose.msra.mxu0 %v1079
  %1091 = vmatprep.subr.bf16.mxu0 0
  %1092 = vmatpush1.bf16.xpose.msra.mxu0 %v1082
  %1093 = vmatprep.subr.bf16.mxu0 0
  %1094 = vmatpush1.bf16.xpose.msra.mxu0 %v1085
  %1095 = vmatprep.subr.bf16.mxu0 0
  %1096 = vmatpush1.bf16.xpose.msra.mxu0 0
  %1097 = vmatprep.subr.bf16.mxu0 0
  %1098 = vmatpush1.bf16.xpose.msra.mxu0 0
  %1099 = vmatprep.subr.bf16.mxu0 0
  %1100 = vmatpush1.bf16.xpose.msra.mxu0 0
  %1101 = vmatprep.subr.bf16.mxu0 0
  %1102 = vmatpush1.bf16.xpose.msra.mxu0 0
  %1103 = vmatprep.subr.bf16.mxu0 0
  %1104 = vmatpush1.bf16.xpose.msra.mxu0 0
  %1105 = vmatprep.subr.bf16.mxu0 0
  %1106 = vmatpush1.bf16.xpose.msra.mxu0 0
  %1107 = vmatprep.subr.bf16.mxu0 0
  %1108 = vmatpush1.bf16.xpose.msra.mxu0 0
  %1109 = vmatprep.subr.bf16.mxu0 0
  %1110 = vmatpush1.bf16.xpose.msra.mxu0 0
  %1111 = vmatprep.subr.bf16.mxu0 0
  %1112 = vmatpush1.bf16.xpose.msra.mxu0 0
  %1113 = vmatprep.subr.bf16.mxu0 0
  %1114 = vmatpush1.bf16.xpose.msra.mxu0 0
  %1115 = vmatprep.subr.bf16.mxu0 0
  %1116 = vmatpush1.bf16.xpose.msra.mxu0 0
  %1117 = vmatprep.subr.bf16.mxu0 0
  %1118 = vmatpush1.bf16.xpose.msra.mxu0 0
  %1119 = vmatprep.mubr.bf16.mxu0 0
  %1120 = vmatmul.mubr.bf16.gmra.mrb[0].mxu0 %v1064
  %v1121 = vpop.f32.mrb[0].mxu0
  %v1122 = vadd.f32 0.0, %v1121
  %v1123 = vpop.f32.mrb[0].mxu0
  %v1124 = vpop.f32.mrb[0].mxu0
  %v1125 = vadd.f32 0.0, %v1124
  %v1126 = vpop.f32.mrb[0].mxu0
  %1127 = vmatprep.mubr.bf16.mxu0 0
  %1128 = vmatmul.mubr.bf16.gmra.mrb[0].mxu0 %v1067
  %v1129 = vpop.f32.mrb[0].mxu0
  %v1130 = vadd.f32 0.0, %v1129
  %v1131 = vpop.f32.mrb[0].mxu0
  %v1132 = vpop.f32.mrb[0].mxu0
  %v1133 = vadd.f32 0.0, %v1132
  %v1134 = vpop.f32.mrb[0].mxu0
  %1135 = vmatprep.mubr.bf16.mxu0 0
  %1136 = vmatmul.mubr.bf16.gmra.mrb[0].mxu0 %v1070
  %v1137 = vpop.f32.mrb[0].mxu0
  %v1138 = vadd.f32 0.0, %v1137
  %v1139 = vpop.f32.mrb[0].mxu0
  %v1140 = vpop.f32.mrb[0].mxu0
  %v1141 = vadd.f32 0.0, %v1140
  %v1142 = vpop.f32.mrb[0].mxu0
  %1143 = vmatprep.mubr.bf16.mxu0 0
  %1144 = vmatmul.mubr.bf16.gmra.mrb[0].mxu0 %v1073
  %v1145 = vpop.f32.mrb[0].mxu0
  %v1146 = vadd.f32 0.0, %v1145
  %v1147 = vpop.f32.mrb[0].mxu0
  %v1148 = vpop.f32.mrb[0].mxu0
  %v1149 = vadd.f32 0.0, %v1148
  %v1150 = vpop.f32.mrb[0].mxu0
  %1151 = vdwg.mxu0
  %1156 = vrot.lane.b32.xlu0 %v1038, 96
  %v1157 = vpop.permute.xlu0 %1156
  %1158 = vrot.lane.b32.xlu0 %v1039, 96
  %v1159 = vpop.permute.xlu0 %1158
  %1160 = vrot.lane.b32.xlu0 %v1040, 96
  %v1161 = vpop.permute.xlu0 %1160
  %1162 = vrot.lane.b32.xlu0 %v1041, 96
  %v1163 = vpop.permute.xlu0 %1162
  %v1165 = vsel %vm1062, %v1038, 0
  %v1168 = vsel %vm1062, %v1039, 0
  %v1171 = vsel %vm1062, %v1040, 0
  %v1174 = vsel %vm1062, %v1041, 0
  %v1177 = vsel %vm1062, %v1157, 0
  %v1180 = vsel %vm1062, %v1159, 0
  %v1183 = vsel %vm1062, %v1161, 0
  %v1186 = vsel %vm1062, %v1163, 0
  %1188 = vmatprep.subr.bf16.mxu0 0
  %1189 = vmatpush1.bf16.xpose.msra.mxu0 %v1177
  %1190 = vmatprep.subr.bf16.mxu0 0
  %1191 = vmatpush1.bf16.xpose.msra.mxu0 %v1180
  %1192 = vmatprep.subr.bf16.mxu0 0
  %1193 = vmatpush1.bf16.xpose.msra.mxu0 %v1183
  %1194 = vmatprep.subr.bf16.mxu0 0
  %1195 = vmatpush1.bf16.xpose.msra.mxu0 %v1186
  %1196 = vmatprep.subr.bf16.mxu0 0
  %1197 = vmatpush1.bf16.xpose.msra.mxu0 0
  %1198 = vmatprep.subr.bf16.mxu0 0
  %1199 = vmatpush1.bf16.xpose.msra.mxu0 0
  %1200 = vmatprep.subr.bf16.mxu0 0
  %1201 = vmatpush1.bf16.xpose.msra.mxu0 0
  %1202 = vmatprep.subr.bf16.mxu0 0
  %1203 = vmatpush1.bf16.xpose.msra.mxu0 0
  %1204 = vmatprep.subr.bf16.mxu0 0
  %1205 = vmatpush1.bf16.xpose.msra.mxu0 0
  %1206 = vmatprep.subr.bf16.mxu0 0
  %1207 = vmatpush1.bf16.xpose.msra.mxu0 0
  %1208 = vmatprep.subr.bf16.mxu0 0
  %1209 = vmatpush1.bf16.xpose.msra.mxu0 0
  %1210 = vmatprep.subr.bf16.mxu0 0
  %1211 = vmatpush1.bf16.xpose.msra.mxu0 0
  %1212 = vmatprep.subr.bf16.mxu0 0
  %1213 = vmatpush1.bf16.xpose.msra.mxu0 0
  %1214 = vmatprep.subr.bf16.mxu0 0
  %1215 = vmatpush1.bf16.xpose.msra.mxu0 0
  %1216 = vmatprep.subr.bf16.mxu0 0
  %1217 = vmatpush1.bf16.xpose.msra.mxu0 0
  %1218 = vmatprep.subr.bf16.mxu0 0
  %1219 = vmatpush1.bf16.xpose.msra.mxu0 0
  %1220 = vmatprep.mubr.bf16.mxu0 0
  %1221 = vmatmul.mubr.bf16.gmra.mrb[0].mxu0 %v1165
  %v1222 = vpop.f32.mrb[0].mxu0
  %v1223 = vadd.f32 0.0, %v1222
  %v1224 = vpop.f32.mrb[0].mxu0
  %v1225 = vpop.f32.mrb[0].mxu0
  %v1226 = vadd.f32 0.0, %v1225
  %v1227 = vpop.f32.mrb[0].mxu0
  %1228 = vmatprep.mubr.bf16.mxu0 0
  %1229 = vmatmul.mubr.bf16.gmra.mrb[0].mxu0 %v1168
  %v1230 = vpop.f32.mrb[0].mxu0
  %v1231 = vadd.f32 0.0, %v1230
  %v1232 = vpop.f32.mrb[0].mxu0
  %v1233 = vpop.f32.mrb[0].mxu0
  %v1234 = vadd.f32 0.0, %v1233
  %v1235 = vpop.f32.mrb[0].mxu0
  %1236 = vmatprep.mubr.bf16.mxu0 0
  %1237 = vmatmul.mubr.bf16.gmra.mrb[0].mxu0 %v1171
  %v1238 = vpop.f32.mrb[0].mxu0
  %v1239 = vadd.f32 0.0, %v1238
  %v1240 = vpop.f32.mrb[0].mxu0
  %v1241 = vpop.f32.mrb[0].mxu0
  %v1242 = vadd.f32 0.0, %v1241
  %v1243 = vpop.f32.mrb[0].mxu0
  %1244 = vmatprep.mubr.bf16.mxu0 0
  %1245 = vmatmul.mubr.bf16.gmra.mrb[0].mxu0 %v1174
  %v1246 = vpop.f32.mrb[0].mxu0
  %v1247 = vadd.f32 0.0, %v1246
  %v1248 = vpop.f32.mrb[0].mxu0
  %v1249 = vpop.f32.mrb[0].mxu0
  %v1250 = vadd.f32 0.0, %v1249
  %v1251 = vpop.f32.mrb[0].mxu0
  %1252 = vdwg.mxu0
  %1257 = vrot.lane.b32.xlu0 %v1042, 96
  %v1258 = vpop.permute.xlu0 %1257
  %1259 = vrot.lane.b32.xlu0 %v1043, 96
  %v1260 = vpop.permute.xlu0 %1259
  %1261 = vrot.lane.b32.xlu0 %v1044, 96
  %v1262 = vpop.permute.xlu0 %1261
  %1263 = vrot.lane.b32.xlu0 %v1045, 96
  %v1264 = vpop.permute.xlu0 %1263
  %v1266 = vsel %vm1062, %v1042, 0
  %v1269 = vsel %vm1062, %v1043, 0
  %v1272 = vsel %vm1062, %v1044, 0
  %v1275 = vsel %vm1062, %v1045, 0
  %v1278 = vsel %vm1062, %v1258, 0
  %v1281 = vsel %vm1062, %v1260, 0
  %v1284 = vsel %vm1062, %v1262, 0
  %v1287 = vsel %vm1062, %v1264, 0
  %1289 = vmatprep.subr.bf16.mxu0 0
  %1290 = vmatpush1.bf16.xpose.msra.mxu0 %v1278
  %1291 = vmatprep.subr.bf16.mxu0 0
  %1292 = vmatpush1.bf16.xpose.msra.mxu0 %v1281
  %1293 = vmatprep.subr.bf16.mxu0 0
  %1294 = vmatpush1.bf16.xpose.msra.mxu0 %v1284
  %1295 = vmatprep.subr.bf16.mxu0 0
  %1296 = vmatpush1.bf16.xpose.msra.mxu0 %v1287
  %1297 = vmatprep.subr.bf16.mxu0 0
  %1298 = vmatpush1.bf16.xpose.msra.mxu0 0
  %1299 = vmatprep.subr.bf16.mxu0 0
  %1300 = vmatpush1.bf16.xpose.msra.mxu0 0
  %1301 = vmatprep.subr.bf16.mxu0 0
  %1302 = vmatpush1.bf16.xpose.msra.mxu0 0
  %1303 = vmatprep.subr.bf16.mxu0 0
  %1304 = vmatpush1.bf16.xpose.msra.mxu0 0
  %1305 = vmatprep.subr.bf16.mxu0 0
  %1306 = vmatpush1.bf16.xpose.msra.mxu0 0
  %1307 = vmatprep.subr.bf16.mxu0 0
  %1308 = vmatpush1.bf16.xpose.msra.mxu0 0
  %1309 = vmatprep.subr.bf16.mxu0 0
  %1310 = vmatpush1.bf16.xpose.msra.mxu0 0
  %1311 = vmatprep.subr.bf16.mxu0 0
  %1312 = vmatpush1.bf16.xpose.msra.mxu0 0
  %1313 = vmatprep.subr.bf16.mxu0 0
  %1314 = vmatpush1.bf16.xpose.msra.mxu0 0
  %1315 = vmatprep.subr.bf16.mxu0 0
  %1316 = vmatpush1.bf16.xpose.msra.mxu0 0
  %1317 = vmatprep.subr.bf16.mxu0 0
  %1318 = vmatpush1.bf16.xpose.msra.mxu0 0
  %1319 = vmatprep.subr.bf16.mxu0 0
  %1320 = vmatpush1.bf16.xpose.msra.mxu0 0
  %1321 = vmatprep.mubr.bf16.mxu0 0
  %1322 = vmatmul.mubr.bf16.gmra.mrb[0].mxu0 %v1266
  %v1323 = vpop.f32.mrb[0].mxu0
  %v1324 = vadd.f32 0.0, %v1323
  %v1325 = vpop.f32.mrb[0].mxu0
  %v1326 = vpop.f32.mrb[0].mxu0
  %v1327 = vadd.f32 0.0, %v1326
  %v1328 = vpop.f32.mrb[0].mxu0
  %1329 = vmatprep.mubr.bf16.mxu0 0
  %1330 = vmatmul.mubr.bf16.gmra.mrb[0].mxu0 %v1269
  %v1331 = vpop.f32.mrb[0].mxu0
  %v1332 = vadd.f32 0.0, %v1331
  %v1333 = vpop.f32.mrb[0].mxu0
  %v1334 = vpop.f32.mrb[0].mxu0
  %v1335 = vadd.f32 0.0, %v1334
  %v1336 = vpop.f32.mrb[0].mxu0
  %1337 = vmatprep.mubr.bf16.mxu0 0
  %1338 = vmatmul.mubr.bf16.gmra.mrb[0].mxu0 %v1272
  %v1339 = vpop.f32.mrb[0].mxu0
  %v1340 = vadd.f32 0.0, %v1339
  %v1341 = vpop.f32.mrb[0].mxu0
  %v1342 = vpop.f32.mrb[0].mxu0
  %v1343 = vadd.f32 0.0, %v1342
  %v1344 = vpop.f32.mrb[0].mxu0
  %1345 = vmatprep.mubr.bf16.mxu0 0
  %1346 = vmatmul.mubr.bf16.gmra.mrb[0].mxu0 %v1275
  %v1347 = vpop.f32.mrb[0].mxu0
  %v1348 = vadd.f32 0.0, %v1347
  %v1349 = vpop.f32.mrb[0].mxu0
  %v1350 = vpop.f32.mrb[0].mxu0
  %v1351 = vadd.f32 0.0, %v1350
  %v1352 = vpop.f32.mrb[0].mxu0
  %1353 = vdwg.mxu0
  %1358 = vrot.lane.b32.xlu0 %v1046, 96
  %v1359 = vpop.permute.xlu0 %1358
  %1360 = vrot.lane.b32.xlu0 %v1047, 96
  %v1361 = vpop.permute.xlu0 %1360
  %1362 = vrot.lane.b32.xlu0 %v1048, 96
  %v1363 = vpop.permute.xlu0 %1362
  %1364 = vrot.lane.b32.xlu0 %v1049, 96
  %v1365 = vpop.permute.xlu0 %1364
  %v1367 = vsel %vm1062, %v1046, 0
  %v1370 = vsel %vm1062, %v1047, 0
  %v1373 = vsel %vm1062, %v1048, 0
  %v1376 = vsel %vm1062, %v1049, 0
  %v1379 = vsel %vm1062, %v1359, 0
  %v1382 = vsel %vm1062, %v1361, 0
  %v1385 = vsel %vm1062, %v1363, 0
  %v1388 = vsel %vm1062, %v1365, 0
  %1390 = vmatprep.subr.bf16.mxu0 0
  %1391 = vmatpush1.bf16.xpose.msra.mxu0 %v1379
  %1392 = vmatprep.subr.bf16.mxu0 0
  %1393 = vmatpush1.bf16.xpose.msra.mxu0 %v1382
  %1394 = vmatprep.subr.bf16.mxu0 0
  %1395 = vmatpush1.bf16.xpose.msra.mxu0 %v1385
  %1396 = vmatprep.subr.bf16.mxu0 0
  %1397 = vmatpush1.bf16.xpose.msra.mxu0 %v1388
  %1398 = vmatprep.subr.bf16.mxu0 0
  %1399 = vmatpush1.bf16.xpose.msra.mxu0 0
  %1400 = vmatprep.subr.bf16.mxu0 0
  %1401 = vmatpush1.bf16.xpose.msra.mxu0 0
  %1402 = vmatprep.subr.bf16.mxu0 0
  %1403 = vmatpush1.bf16.xpose.msra.mxu0 0
  %1404 = vmatprep.subr.bf16.mxu0 0
  %1405 = vmatpush1.bf16.xpose.msra.mxu0 0
  %1406 = vmatprep.subr.bf16.mxu0 0
  %1407 = vmatpush1.bf16.xpose.msra.mxu0 0
  %1408 = vmatprep.subr.bf16.mxu0 0
  %1409 = vmatpush1.bf16.xpose.msra.mxu0 0
  %1410 = vmatprep.subr.bf16.mxu0 0
  %1411 = vmatpush1.bf16.xpose.msra.mxu0 0
  %1412 = vmatprep.subr.bf16.mxu0 0
  %1413 = vmatpush1.bf16.xpose.msra.mxu0 0
  %1414 = vmatprep.subr.bf16.mxu0 0
  %1415 = vmatpush1.bf16.xpose.msra.mxu0 0
  %1416 = vmatprep.subr.bf16.mxu0 0
  %1417 = vmatpush1.bf16.xpose.msra.mxu0 0
  %1418 = vmatprep.subr.bf16.mxu0 0
  %1419 = vmatpush1.bf16.xpose.msra.mxu0 0
  %1420 = vmatprep.subr.bf16.mxu0 0
  %1421 = vmatpush1.bf16.xpose.msra.mxu0 0
  %1422 = vmatprep.mubr.bf16.mxu0 0
  %1423 = vmatmul.mubr.bf16.gmra.mrb[0].mxu0 %v1367
  %v1424 = vpop.f32.mrb[0].mxu0
  %v1425 = vadd.f32 0.0, %v1424
  %v1426 = vpop.f32.mrb[0].mxu0
  %v1427 = vpop.f32.mrb[0].mxu0
  %v1428 = vadd.f32 0.0, %v1427
  %v1429 = vpop.f32.mrb[0].mxu0
  %1430 = vmatprep.mubr.bf16.mxu0 0
  %1431 = vmatmul.mubr.bf16.gmra.mrb[0].mxu0 %v1370
  %v1432 = vpop.f32.mrb[0].mxu0
  %v1433 = vadd.f32 0.0, %v1432
  %v1434 = vpop.f32.mrb[0].mxu0
  %v1435 = vpop.f32.mrb[0].mxu0
  %v1436 = vadd.f32 0.0, %v1435
  %v1437 = vpop.f32.mrb[0].mxu0
  %1438 = vmatprep.mubr.bf16.mxu0 0
  %1439 = vmatmul.mubr.bf16.gmra.mrb[0].mxu0 %v1373
  %v1440 = vpop.f32.mrb[0].mxu0
  %v1441 = vadd.f32 0.0, %v1440
  %v1442 = vpop.f32.mrb[0].mxu0
  %v1443 = vpop.f32.mrb[0].mxu0
  %v1444 = vadd.f32 0.0, %v1443
  %v1445 = vpop.f32.mrb[0].mxu0
  %1446 = vmatprep.mubr.bf16.mxu0 0
  %1447 = vmatmul.mubr.bf16.gmra.mrb[0].mxu0 %v1376
  %v1448 = vpop.f32.mrb[0].mxu0
  %v1449 = vadd.f32 0.0, %v1448
  %v1450 = vpop.f32.mrb[0].mxu0
  %v1451 = vpop.f32.mrb[0].mxu0
  %v1452 = vadd.f32 0.0, %v1451
  %v1453 = vpop.f32.mrb[0].mxu0
  %1454 = vdwg.mxu0
  %v1455 = vld [vmem:[%s19] sm:$0xff]
  %v1456 = vld [vmem:[%s19 + $0x8] sm:$0xff]
  %v1457 = vld [vmem:[%s19 + $0x10] sm:$0xff]
  %v1458 = vld [vmem:[%s19 + $0x18] sm:$0xff]
  %v1459 = vld [vmem:[%s19 + $0x20] sm:$0xff]
  %v1460 = vld [vmem:[%s19 + $0x28] sm:$0xff]
  %v1461 = vld [vmem:[%s19 + $0x30] sm:$0xff]
  %v1462 = vld [vmem:[%s19 + $0x38] sm:$0xff]
  %v1463 = vld [vmem:[%s19 + $0x40] sm:$0xff]
  %v1464 = vld [vmem:[%s19 + $0x48] sm:$0xff]
  %v1465 = vld [vmem:[%s19 + $0x50] sm:$0xff]
  %v1466 = vld [vmem:[%s19 + $0x58] sm:$0xff]
  %v1467 = vld [vmem:[%s19 + $0x60] sm:$0xff]
  %v1468 = vld [vmem:[%s19 + $0x68] sm:$0xff]
  %v1469 = vld [vmem:[%s19 + $0x70] sm:$0xff]
  %v1470 = vld [vmem:[%s19 + $0x78] sm:$0xff]
  %v1471 = vadd.f32 %v1122, %v1455
  %v1472 = vadd.f32 %v1125, %v1456
  %v1473 = vadd.f32 %v1130, %v1457
  %v1474 = vadd.f32 %v1133, %v1458
  %v1475 = vadd.f32 %v1138, %v1459
  %v1476 = vadd.f32 %v1141, %v1460
  %v1477 = vadd.f32 %v1146, %v1461
  %v1478 = vadd.f32 %v1149, %v1462
  %v1479 = vadd.f32 %v1223, %v1455
  %v1480 = vadd.f32 %v1226, %v1456
  %v1481 = vadd.f32 %v1231, %v1457
  %v1482 = vadd.f32 %v1234, %v1458
  %v1483 = vadd.f32 %v1239, %v1459
  %v1484 = vadd.f32 %v1242, %v1460
  %v1485 = vadd.f32 %v1247, %v1461
  %v1486 = vadd.f32 %v1250, %v1462
  %v1487 = vadd.f32 %v1324, %v1463
  %v1488 = vadd.f32 %v1327, %v1464
  %v1489 = vadd.f32 %v1332, %v1465
  %v1490 = vadd.f32 %v1335, %v1466
  %v1491 = vadd.f32 %v1340, %v1467
  %v1492 = vadd.f32 %v1343, %v1468
  %v1493 = vadd.f32 %v1348, %v1469
  %v1494 = vadd.f32 %v1351, %v1470
  %v1495 = vadd.f32 %v1425, %v1463
  %v1496 = vadd.f32 %v1428, %v1464
  %v1497 = vadd.f32 %v1433, %v1465
  %v1498 = vadd.f32 %v1436, %v1466
  %v1499 = vadd.f32 %v1441, %v1467
  %v1500 = vadd.f32 %v1444, %v1468
  %v1501 = vadd.f32 %v1449, %v1469
  %v1502 = vadd.f32 %v1452, %v1470
  %vm1503 = vcmask 523264
  %v1504 = vsel %vm1503, %v1471, -inf
  %1505 = vmax.xlane.f32.xlu0 %v1504
  %v1506 = vpop.xlane.xlu0 %1505
  %v1507 = vsel %vm1503, %v1472, -inf
  %1508 = vmax.xlane.f32.xlu0 %v1507
  %v1509 = vpop.xlane.xlu0 %1508
  %v1510 = vsel %vm1503, %v1473, -inf
  %1511 = vmax.xlane.f32.xlu0 %v1510
  %v1512 = vpop.xlane.xlu0 %1511
  %v1513 = vsel %vm1503, %v1474, -inf
  %1514 = vmax.xlane.f32.xlu0 %v1513
  %v1515 = vpop.xlane.xlu0 %1514
  %v1516 = vsel %vm1503, %v1475, -inf
  %1517 = vmax.xlane.f32.xlu0 %v1516
  %v1518 = vpop.xlane.xlu0 %1517
  %v1519 = vsel %vm1503, %v1476, -inf
  %1520 = vmax.xlane.f32.xlu0 %v1519
  %v1521 = vpop.xlane.xlu0 %1520
  %v1522 = vsel %vm1503, %v1477, -inf
  %1523 = vmax.xlane.f32.xlu0 %v1522
  %v1524 = vpop.xlane.xlu0 %1523
  %v1525 = vsel %vm1503, %v1478, -inf
  %1526 = vmax.xlane.f32.xlu0 %v1525
  %v1527 = vpop.xlane.xlu0 %1526
  %v1528 = vsel %vm1503, %v1479, -inf
  %1529 = vmax.xlane.f32.xlu0 %v1528
  %v1530 = vpop.xlane.xlu0 %1529
  %v1531 = vsel %vm1503, %v1480, -inf
  %1532 = vmax.xlane.f32.xlu0 %v1531
  %v1533 = vpop.xlane.xlu0 %1532
  %v1534 = vsel %vm1503, %v1481, -inf
  %1535 = vmax.xlane.f32.xlu0 %v1534
  %v1536 = vpop.xlane.xlu0 %1535
  %v1537 = vsel %vm1503, %v1482, -inf
  %1538 = vmax.xlane.f32.xlu0 %v1537
  %v1539 = vpop.xlane.xlu0 %1538
  %v1540 = vsel %vm1503, %v1483, -inf
  %1541 = vmax.xlane.f32.xlu0 %v1540
  %v1542 = vpop.xlane.xlu0 %1541
  %v1543 = vsel %vm1503, %v1484, -inf
  %1544 = vmax.xlane.f32.xlu0 %v1543
  %v1545 = vpop.xlane.xlu0 %1544
  %v1546 = vsel %vm1503, %v1485, -inf
  %1547 = vmax.xlane.f32.xlu0 %v1546
  %v1548 = vpop.xlane.xlu0 %1547
  %v1549 = vsel %vm1503, %v1486, -inf
  %1550 = vmax.xlane.f32.xlu0 %v1549
  %v1551 = vpop.xlane.xlu0 %1550
  %v1552 = vsel %vm1503, %v1487, -inf
  %1553 = vmax.xlane.f32.xlu0 %v1552
  %v1554 = vpop.xlane.xlu0 %1553
  %v1555 = vsel %vm1503, %v1488, -inf
  %1556 = vmax.xlane.f32.xlu0 %v1555
  %v1557 = vpop.xlane.xlu0 %1556
  %v1558 = vsel %vm1503, %v1489, -inf
  %1559 = vmax.xlane.f32.xlu0 %v1558
  %v1560 = vpop.xlane.xlu0 %1559
  %v1561 = vsel %vm1503, %v1490, -inf
  %1562 = vmax.xlane.f32.xlu0 %v1561
  %v1563 = vpop.xlane.xlu0 %1562
  %v1564 = vsel %vm1503, %v1491, -inf
  %1565 = vmax.xlane.f32.xlu0 %v1564
  %v1566 = vpop.xlane.xlu0 %1565
  %v1567 = vsel %vm1503, %v1492, -inf
  %1568 = vmax.xlane.f32.xlu0 %v1567
  %v1569 = vpop.xlane.xlu0 %1568
  %v1570 = vsel %vm1503, %v1493, -inf
  %1571 = vmax.xlane.f32.xlu0 %v1570
  %v1572 = vpop.xlane.xlu0 %1571
  %v1573 = vsel %vm1503, %v1494, -inf
  %1574 = vmax.xlane.f32.xlu0 %v1573
  %v1575 = vpop.xlane.xlu0 %1574
  %v1576 = vsel %vm1503, %v1495, -inf
  %1577 = vmax.xlane.f32.xlu0 %v1576
  %v1578 = vpop.xlane.xlu0 %1577
  %v1579 = vsel %vm1503, %v1496, -inf
  %1580 = vmax.xlane.f32.xlu0 %v1579
  %v1581 = vpop.xlane.xlu0 %1580
  %v1582 = vsel %vm1503, %v1497, -inf
  %1583 = vmax.xlane.f32.xlu0 %v1582
  %v1584 = vpop.xlane.xlu0 %1583
  %v1585 = vsel %vm1503, %v1498, -inf
  %1586 = vmax.xlane.f32.xlu0 %v1585
  %v1587 = vpop.xlane.xlu0 %1586
  %v1588 = vsel %vm1503, %v1499, -inf
  %1589 = vmax.xlane.f32.xlu0 %v1588
  %v1590 = vpop.xlane.xlu0 %1589
  %v1591 = vsel %vm1503, %v1500, -inf
  %1592 = vmax.xlane.f32.xlu0 %v1591
  %v1593 = vpop.xlane.xlu0 %1592
  %v1594 = vsel %vm1503, %v1501, -inf
  %1595 = vmax.xlane.f32.xlu0 %v1594
  %v1596 = vpop.xlane.xlu0 %1595
  %v1597 = vsel %vm1503, %v1502, -inf
  %1598 = vmax.xlane.f32.xlu0 %v1597
  %v1599 = vpop.xlane.xlu0 %1598
  %v1600 = vsub.f32 %v1471, %v1506
  %v1601 = vsub.f32 %v1472, %v1509
  %v1602 = vsub.f32 %v1473, %v1512
  %v1603 = vsub.f32 %v1474, %v1515
  %v1604 = vsub.f32 %v1475, %v1518
  %v1605 = vsub.f32 %v1476, %v1521
  %v1606 = vsub.f32 %v1477, %v1524
  %v1607 = vsub.f32 %v1478, %v1527
  %v1608 = vsub.f32 %v1479, %v1530
  %v1609 = vsub.f32 %v1480, %v1533
  %v1610 = vsub.f32 %v1481, %v1536
  %v1611 = vsub.f32 %v1482, %v1539
  %v1612 = vsub.f32 %v1483, %v1542
  %v1613 = vsub.f32 %v1484, %v1545
  %v1614 = vsub.f32 %v1485, %v1548
  %v1615 = vsub.f32 %v1486, %v1551
  %v1616 = vsub.f32 %v1487, %v1554
  %v1617 = vsub.f32 %v1488, %v1557
  %v1618 = vsub.f32 %v1489, %v1560
  %v1619 = vsub.f32 %v1490, %v1563
  %v1620 = vsub.f32 %v1491, %v1566
  %v1621 = vsub.f32 %v1492, %v1569
  %v1622 = vsub.f32 %v1493, %v1572
  %v1623 = vsub.f32 %v1494, %v1575
  %v1624 = vsub.f32 %v1495, %v1578
  %v1625 = vsub.f32 %v1496, %v1581
  %v1626 = vsub.f32 %v1497, %v1584
  %v1627 = vsub.f32 %v1498, %v1587
  %v1628 = vsub.f32 %v1499, %v1590
  %v1629 = vsub.f32 %v1500, %v1593
  %v1630 = vsub.f32 %v1501, %v1596
  %v1631 = vsub.f32 %v1502, %v1599
  %v1632 = vmul.f32 %v1600, 1.442695
  %v1633 = vpow.pop %v1632
  %v1634 = vmul.f32 %v1601, 1.442695
  %v1635 = vpow.pop %v1634
  %v1636 = vmul.f32 %v1602, 1.442695
  %v1637 = vpow.pop %v1636
  %v1638 = vmul.f32 %v1603, 1.442695
  %v1639 = vpow.pop %v1638
  %v1640 = vmul.f32 %v1604, 1.442695
  %v1641 = vpow.pop %v1640
  %v1642 = vmul.f32 %v1605, 1.442695
  %v1643 = vpow.pop %v1642
  %v1644 = vmul.f32 %v1606, 1.442695
  %v1645 = vpow.pop %v1644
  %v1646 = vmul.f32 %v1607, 1.442695
  %v1647 = vpow.pop %v1646
  %v1648 = vmul.f32 %v1608, 1.442695
  %v1649 = vpow.pop %v1648
  %v1650 = vmul.f32 %v1609, 1.442695
  %v1651 = vpow.pop %v1650
  %v1652 = vmul.f32 %v1610, 1.442695
  %v1653 = vpow.pop %v1652
  %v1654 = vmul.f32 %v1611, 1.442695
  %v1655 = vpow.pop %v1654
  %v1656 = vmul.f32 %v1612, 1.442695
  %v1657 = vpow.pop %v1656
  %v1658 = vmul.f32 %v1613, 1.442695
  %v1659 = vpow.pop %v1658
  %v1660 = vmul.f32 %v1614, 1.442695
  %v1661 = vpow.pop %v1660
  %v1662 = vmul.f32 %v1615, 1.442695
  %v1663 = vpow.pop %v1662
  %v1664 = vmul.f32 %v1616, 1.442695
  %v1665 = vpow.pop %v1664
  %v1666 = vmul.f32 %v1617, 1.442695
  %v1667 = vpow.pop %v1666
  %v1668 = vmul.f32 %v1618, 1.442695
  %v1669 = vpow.pop %v1668
  %v1670 = vmul.f32 %v1619, 1.442695
  %v1671 = vpow.pop %v1670
  %v1672 = vmul.f32 %v1620, 1.442695
  %v1673 = vpow.pop %v1672
  %v1674 = vmul.f32 %v1621, 1.442695
  %v1675 = vpow.pop %v1674
  %v1676 = vmul.f32 %v1622, 1.442695
  %v1677 = vpow.pop %v1676
  %v1678 = vmul.f32 %v1623, 1.442695
  %v1679 = vpow.pop %v1678
  %v1680 = vmul.f32 %v1624, 1.442695
  %v1681 = vpow.pop %v1680
  %v1682 = vmul.f32 %v1625, 1.442695
  %v1683 = vpow.pop %v1682
  %v1684 = vmul.f32 %v1626, 1.442695
  %v1685 = vpow.pop %v1684
  %v1686 = vmul.f32 %v1627, 1.442695
  %v1687 = vpow.pop %v1686
  %v1688 = vmul.f32 %v1628, 1.442695
  %v1689 = vpow.pop %v1688
  %v1690 = vmul.f32 %v1629, 1.442695
  %v1691 = vpow.pop %v1690
  %v1692 = vmul.f32 %v1630, 1.442695
  %v1693 = vpow.pop %v1692
  %v1694 = vmul.f32 %v1631, 1.442695
  %v1695 = vpow.pop %v1694
  %v1696 = vsel %vm1503, %v1633, 0.0
  %1697 = vadd.xlane.f32.xlu0 %v1696
  %v1698 = vpop.xlane.xlu0 %1697
  %v1699 = vsel %vm1503, %v1635, 0.0
  %1700 = vadd.xlane.f32.xlu0 %v1699
  %v1701 = vpop.xlane.xlu0 %1700
  %v1702 = vsel %vm1503, %v1637, 0.0
  %1703 = vadd.xlane.f32.xlu0 %v1702
  %v1704 = vpop.xlane.xlu0 %1703
  %v1705 = vsel %vm1503, %v1639, 0.0
  %1706 = vadd.xlane.f32.xlu0 %v1705
  %v1707 = vpop.xlane.xlu0 %1706
  %v1708 = vsel %vm1503, %v1641, 0.0
  %1709 = vadd.xlane.f32.xlu0 %v1708
  %v1710 = vpop.xlane.xlu0 %1709
  %v1711 = vsel %vm1503, %v1643, 0.0
  %1712 = vadd.xlane.f32.xlu0 %v1711
  %v1713 = vpop.xlane.xlu0 %1712
  %v1714 = vsel %vm1503, %v1645, 0.0
  %1715 = vadd.xlane.f32.xlu0 %v1714
  %v1716 = vpop.xlane.xlu0 %1715
  %v1717 = vsel %vm1503, %v1647, 0.0
  %1718 = vadd.xlane.f32.xlu0 %v1717
  %v1719 = vpop.xlane.xlu0 %1718
  %v1720 = vsel %vm1503, %v1649, 0.0
  %1721 = vadd.xlane.f32.xlu0 %v1720
  %v1722 = vpop.xlane.xlu0 %1721
  %v1723 = vsel %vm1503, %v1651, 0.0
  %1724 = vadd.xlane.f32.xlu0 %v1723
  %v1725 = vpop.xlane.xlu0 %1724
  %v1726 = vsel %vm1503, %v1653, 0.0
  %1727 = vadd.xlane.f32.xlu0 %v1726
  %v1728 = vpop.xlane.xlu0 %1727
  %v1729 = vsel %vm1503, %v1655, 0.0
  %1730 = vadd.xlane.f32.xlu0 %v1729
  %v1731 = vpop.xlane.xlu0 %1730
  %v1732 = vsel %vm1503, %v1657, 0.0
  %1733 = vadd.xlane.f32.xlu0 %v1732
  %v1734 = vpop.xlane.xlu0 %1733
  %v1735 = vsel %vm1503, %v1659, 0.0
  %1736 = vadd.xlane.f32.xlu0 %v1735
  %v1737 = vpop.xlane.xlu0 %1736
  %v1738 = vsel %vm1503, %v1661, 0.0
  %1739 = vadd.xlane.f32.xlu0 %v1738
  %v1740 = vpop.xlane.xlu0 %1739
  %v1741 = vsel %vm1503, %v1663, 0.0
  %1742 = vadd.xlane.f32.xlu0 %v1741
  %v1743 = vpop.xlane.xlu0 %1742
  %v1744 = vsel %vm1503, %v1665, 0.0
  %1745 = vadd.xlane.f32.xlu0 %v1744
  %v1746 = vpop.xlane.xlu0 %1745
  %v1747 = vsel %vm1503, %v1667, 0.0
  %1748 = vadd.xlane.f32.xlu0 %v1747
  %v1749 = vpop.xlane.xlu0 %1748
  %v1750 = vsel %vm1503, %v1669, 0.0
  %1751 = vadd.xlane.f32.xlu0 %v1750
  %v1752 = vpop.xlane.xlu0 %1751
  %v1753 = vsel %vm1503, %v1671, 0.0
  %1754 = vadd.xlane.f32.xlu0 %v1753
  %v1755 = vpop.xlane.xlu0 %1754
  %v1756 = vsel %vm1503, %v1673, 0.0
  %1757 = vadd.xlane.f32.xlu0 %v1756
  %v1758 = vpop.xlane.xlu0 %1757
  %v1759 = vsel %vm1503, %v1675, 0.0
  %1760 = vadd.xlane.f32.xlu0 %v1759
  %v1761 = vpop.xlane.xlu0 %1760
  %v1762 = vsel %vm1503, %v1677, 0.0
  %1763 = vadd.xlane.f32.xlu0 %v1762
  %v1764 = vpop.xlane.xlu0 %1763
  %v1765 = vsel %vm1503, %v1679, 0.0
  %1766 = vadd.xlane.f32.xlu0 %v1765
  %v1767 = vpop.xlane.xlu0 %1766
  %v1768 = vsel %vm1503, %v1681, 0.0
  %1769 = vadd.xlane.f32.xlu0 %v1768
  %v1770 = vpop.xlane.xlu0 %1769
  %v1771 = vsel %vm1503, %v1683, 0.0
  %1772 = vadd.xlane.f32.xlu0 %v1771
  %v1773 = vpop.xlane.xlu0 %1772
  %v1774 = vsel %vm1503, %v1685, 0.0
  %1775 = vadd.xlane.f32.xlu0 %v1774
  %v1776 = vpop.xlane.xlu0 %1775
  %v1777 = vsel %vm1503, %v1687, 0.0
  %1778 = vadd.xlane.f32.xlu0 %v1777
  %v1779 = vpop.xlane.xlu0 %1778
  %v1780 = vsel %vm1503, %v1689, 0.0
  %1781 = vadd.xlane.f32.xlu0 %v1780
  %v1782 = vpop.xlane.xlu0 %1781
  %v1783 = vsel %vm1503, %v1691, 0.0
  %1784 = vadd.xlane.f32.xlu0 %v1783
  %v1785 = vpop.xlane.xlu0 %1784
  %v1786 = vsel %vm1503, %v1693, 0.0
  %1787 = vadd.xlane.f32.xlu0 %v1786
  %v1788 = vpop.xlane.xlu0 %1787
  %v1789 = vsel %vm1503, %v1695, 0.0
  %1790 = vadd.xlane.f32.xlu0 %v1789
  %v1791 = vpop.xlane.xlu0 %1790
  %v1792 = vrcp.pop %v1698
  %v1793 = vrcp.pop %v1701
  %v1794 = vrcp.pop %v1704
  %v1795 = vrcp.pop %v1707
  %v1796 = vrcp.pop %v1710
  %v1797 = vrcp.pop %v1713
  %v1798 = vrcp.pop %v1716
  %v1799 = vrcp.pop %v1719
  %v1800 = vrcp.pop %v1722
  %v1801 = vrcp.pop %v1725
  %v1802 = vrcp.pop %v1728
  %v1803 = vrcp.pop %v1731
  %v1804 = vrcp.pop %v1734
  %v1805 = vrcp.pop %v1737
  %v1806 = vrcp.pop %v1740
  %v1807 = vrcp.pop %v1743
  %v1808 = vrcp.pop %v1746
  %v1809 = vrcp.pop %v1749
  %v1810 = vrcp.pop %v1752
  %v1811 = vrcp.pop %v1755
  %v1812 = vrcp.pop %v1758
  %v1813 = vrcp.pop %v1761
  %v1814 = vrcp.pop %v1764
  %v1815 = vrcp.pop %v1767
  %v1816 = vrcp.pop %v1770
  %v1817 = vrcp.pop %v1773
  %v1818 = vrcp.pop %v1776
  %v1819 = vrcp.pop %v1779
  %v1820 = vrcp.pop %v1782
  %v1821 = vrcp.pop %v1785
  %v1822 = vrcp.pop %v1788
  %v1823 = vrcp.pop %v1791
  %v1824 = vmul.f32 %v1633, %v1792
  %v1825 = vmul.f32 %v1635, %v1793
  %v1826 = vmul.f32 %v1637, %v1794
  %v1827 = vmul.f32 %v1639, %v1795
  %v1828 = vmul.f32 %v1641, %v1796
  %v1829 = vmul.f32 %v1643, %v1797
  %v1830 = vmul.f32 %v1645, %v1798
  %v1831 = vmul.f32 %v1647, %v1799
  %v1832 = vmul.f32 %v1649, %v1800
  %v1833 = vmul.f32 %v1651, %v1801
  %v1834 = vmul.f32 %v1653, %v1802
  %v1835 = vmul.f32 %v1655, %v1803
  %v1836 = vmul.f32 %v1657, %v1804
  %v1837 = vmul.f32 %v1659, %v1805
  %v1838 = vmul.f32 %v1661, %v1806
  %v1839 = vmul.f32 %v1663, %v1807
  %v1840 = vmul.f32 %v1665, %v1808
  %v1841 = vmul.f32 %v1667, %v1809
  %v1842 = vmul.f32 %v1669, %v1810
  %v1843 = vmul.f32 %v1671, %v1811
  %v1844 = vmul.f32 %v1673, %v1812
  %v1845 = vmul.f32 %v1675, %v1813
  %v1846 = vmul.f32 %v1677, %v1814
  %v1847 = vmul.f32 %v1679, %v1815
  %v1848 = vmul.f32 %v1681, %v1816
  %v1849 = vmul.f32 %v1683, %v1817
  %v1850 = vmul.f32 %v1685, %v1818
  %v1851 = vmul.f32 %v1687, %v1819
  %v1852 = vmul.f32 %v1689, %v1820
  %v1853 = vmul.f32 %v1691, %v1821
  %v1854 = vmul.f32 %v1693, %v1822
  %v1855 = vmul.f32 %v1695, %v1823
  %v1856 = vpack.c.bf16 %v1825, %v1824
  %v1857 = vpack.c.bf16 %v1827, %v1826
  %v1858 = vpack.c.bf16 %v1829, %v1828
  %v1859 = vpack.c.bf16 %v1831, %v1830
  %v1860 = vpack.c.bf16 %v1833, %v1832
  %v1861 = vpack.c.bf16 %v1835, %v1834
  %v1862 = vpack.c.bf16 %v1837, %v1836
  %v1863 = vpack.c.bf16 %v1839, %v1838
  %v1864 = vpack.c.bf16 %v1841, %v1840
  %v1865 = vpack.c.bf16 %v1843, %v1842
  %v1866 = vpack.c.bf16 %v1845, %v1844
  %v1867 = vpack.c.bf16 %v1847, %v1846
  %v1868 = vpack.c.bf16 %v1849, %v1848
  %v1869 = vpack.c.bf16 %v1851, %v1850
  %v1870 = vpack.c.bf16 %v1853, %v1852
  %v1871 = vpack.c.bf16 %v1855, %v1854
  %1872 = vrot.lane.b32.xlu0 %v1034, 64
  %v1873 = vpop.permute.xlu0 %1872
  %1874 = vrot.lane.b32.xlu0 %v1035, 64
  %v1875 = vpop.permute.xlu0 %1874
  %1876 = vrot.lane.b32.xlu0 %v1036, 64
  %v1877 = vpop.permute.xlu0 %1876
  %1878 = vrot.lane.b32.xlu0 %v1037, 64
  %v1879 = vpop.permute.xlu0 %1878
  %v1885 = vsel %vm1503, %v1856, 0
  %v1888 = vsel %vm1503, %v1857, 0
  %v1891 = vsel %vm1503, %v1858, 0
  %v1894 = vsel %vm1503, %v1859, 0
  %1896 = vmatprep.subr.bf16.mxu0 0
  %1897 = vmatpush1.bf16.msra.mxu0 %v1873
  %1898 = vmatprep.subr.bf16.mxu0 0
  %1899 = vmatpush1.bf16.msra.mxu0 %v1875
  %1900 = vmatprep.subr.bf16.mxu0 0
  %1901 = vmatpush1.bf16.msra.mxu0 %v1877
  %1902 = vmatprep.subr.bf16.mxu0 0
  %1903 = vmatpush1.bf16.msra.mxu0 %v1879
  %1904 = vmatprep.subr.bf16.mxu0 0
  %1905 = vmatpush1.bf16.msra.mxu0 0
  %1906 = vmatprep.subr.bf16.mxu0 0
  %1907 = vmatpush1.bf16.msra.mxu0 0
  %1908 = vmatprep.subr.bf16.mxu0 0
  %1909 = vmatpush1.bf16.msra.mxu0 0
  %1910 = vmatprep.subr.bf16.mxu0 0
  %1911 = vmatpush1.bf16.msra.mxu0 0
  %1912 = vmatprep.subr.bf16.mxu0 0
  %1913 = vmatpush1.bf16.msra.mxu0 0
  %1914 = vmatprep.subr.bf16.mxu0 0
  %1915 = vmatpush1.bf16.msra.mxu0 0
  %1916 = vmatprep.subr.bf16.mxu0 0
  %1917 = vmatpush1.bf16.msra.mxu0 0
  %1918 = vmatprep.subr.bf16.mxu0 0
  %1919 = vmatpush1.bf16.msra.mxu0 0
  %1920 = vmatprep.subr.bf16.mxu0 0
  %1921 = vmatpush1.bf16.msra.mxu0 0
  %1922 = vmatprep.subr.bf16.mxu0 0
  %1923 = vmatpush1.bf16.msra.mxu0 0
  %1924 = vmatprep.subr.bf16.mxu0 0
  %1925 = vmatpush1.bf16.msra.mxu0 0
  %1926 = vmatprep.subr.bf16.mxu0 0
  %1927 = vmatpush1.bf16.msra.mxu0 0
  %1928 = vmatprep.mubr.bf16.mxu0 0
  %1929 = vmatmul.mubr.bf16.gmra.mrb[0].mxu0 %v1885
  %v1930 = vpop.f32.mrb[0].mxu0
  %v1931 = vadd.f32 0.0, %v1930
  %v1932 = vpop.f32.mrb[0].mxu0
  %v1933 = vpop.f32.mrb[0].mxu0
  %v1934 = vadd.f32 0.0, %v1933
  %v1935 = vpop.f32.mrb[0].mxu0
  %1936 = vmatprep.mubr.bf16.mxu0 0
  %1937 = vmatmul.mubr.bf16.gmra.mrb[0].mxu0 %v1888
  %v1938 = vpop.f32.mrb[0].mxu0
  %v1939 = vadd.f32 0.0, %v1938
  %v1940 = vpop.f32.mrb[0].mxu0
  %v1941 = vpop.f32.mrb[0].mxu0
  %v1942 = vadd.f32 0.0, %v1941
  %v1943 = vpop.f32.mrb[0].mxu0
  %1944 = vmatprep.mubr.bf16.mxu0 0
  %1945 = vmatmul.mubr.bf16.gmra.mrb[0].mxu0 %v1891
  %v1946 = vpop.f32.mrb[0].mxu0
  %v1947 = vadd.f32 0.0, %v1946
  %v1948 = vpop.f32.mrb[0].mxu0
  %v1949 = vpop.f32.mrb[0].mxu0
  %v1950 = vadd.f32 0.0, %v1949
  %v1951 = vpop.f32.mrb[0].mxu0
  %1952 = vmatprep.mubr.bf16.mxu0 0
  %1953 = vmatmul.mubr.bf16.gmra.mrb[0].mxu0 %v1894
  %v1954 = vpop.f32.mrb[0].mxu0
  %v1955 = vadd.f32 0.0, %v1954
  %v1956 = vpop.f32.mrb[0].mxu0
  %v1957 = vpop.f32.mrb[0].mxu0
  %v1958 = vadd.f32 0.0, %v1957
  %v1959 = vpop.f32.mrb[0].mxu0
  %1960 = vdwg.mxu0
  %1961 = vrot.lane.b32.xlu0 %v1038, 64
  %v1962 = vpop.permute.xlu0 %1961
  %1963 = vrot.lane.b32.xlu0 %v1039, 64
  %v1964 = vpop.permute.xlu0 %1963
  %1965 = vrot.lane.b32.xlu0 %v1040, 64
  %v1966 = vpop.permute.xlu0 %1965
  %1967 = vrot.lane.b32.xlu0 %v1041, 64
  %v1968 = vpop.permute.xlu0 %1967
  %v1974 = vsel %vm1503, %v1860, 0
  %v1977 = vsel %vm1503, %v1861, 0
  %v1980 = vsel %vm1503, %v1862, 0
  %v1983 = vsel %vm1503, %v1863, 0
  %1985 = vmatprep.subr.bf16.mxu0 0
  %1986 = vmatpush1.bf16.msra.mxu0 %v1962
  %1987 = vmatprep.subr.bf16.mxu0 0
  %1988 = vmatpush1.bf16.msra.mxu0 %v1964
  %1989 = vmatprep.subr.bf16.mxu0 0
  %1990 = vmatpush1.bf16.msra.mxu0 %v1966
  %1991 = vmatprep.subr.bf16.mxu0 0
  %1992 = vmatpush1.bf16.msra.mxu0 %v1968
  %1993 = vmatprep.subr.bf16.mxu0 0
  %1994 = vmatpush1.bf16.msra.mxu0 0
  %1995 = vmatprep.subr.bf16.mxu0 0
  %1996 = vmatpush1.bf16.msra.mxu0 0
  %1997 = vmatprep.subr.bf16.mxu0 0
  %1998 = vmatpush1.bf16.msra.mxu0 0
  %1999 = vmatprep.subr.bf16.mxu0 0
  %2000 = vmatpush1.bf16.msra.mxu0 0
  %2001 = vmatprep.subr.bf16.mxu0 0
  %2002 = vmatpush1.bf16.msra.mxu0 0
  %2003 = vmatprep.subr.bf16.mxu0 0
  %2004 = vmatpush1.bf16.msra.mxu0 0
  %2005 = vmatprep.subr.bf16.mxu0 0
  %2006 = vmatpush1.bf16.msra.mxu0 0
  %2007 = vmatprep.subr.bf16.mxu0 0
  %2008 = vmatpush1.bf16.msra.mxu0 0
  %2009 = vmatprep.subr.bf16.mxu0 0
  %2010 = vmatpush1.bf16.msra.mxu0 0
  %2011 = vmatprep.subr.bf16.mxu0 0
  %2012 = vmatpush1.bf16.msra.mxu0 0
  %2013 = vmatprep.subr.bf16.mxu0 0
  %2014 = vmatpush1.bf16.msra.mxu0 0
  %2015 = vmatprep.subr.bf16.mxu0 0
  %2016 = vmatpush1.bf16.msra.mxu0 0
  %2017 = vmatprep.mubr.bf16.mxu0 0
  %2018 = vmatmul.mubr.bf16.gmra.mrb[0].mxu0 %v1974
  %v2019 = vpop.f32.mrb[0].mxu0
  %v2020 = vadd.f32 0.0, %v2019
  %v2021 = vpop.f32.mrb[0].mxu0
  %v2022 = vpop.f32.mrb[0].mxu0
  %v2023 = vadd.f32 0.0, %v2022
  %v2024 = vpop.f32.mrb[0].mxu0
  %2025 = vmatprep.mubr.bf16.mxu0 0
  %2026 = vmatmul.mubr.bf16.gmra.mrb[0].mxu0 %v1977
  %v2027 = vpop.f32.mrb[0].mxu0
  %v2028 = vadd.f32 0.0, %v2027
  %v2029 = vpop.f32.mrb[0].mxu0
  %v2030 = vpop.f32.mrb[0].mxu0
  %v2031 = vadd.f32 0.0, %v2030
  %v2032 = vpop.f32.mrb[0].mxu0
  %2033 = vmatprep.mubr.bf16.mxu0 0
  %2034 = vmatmul.mubr.bf16.gmra.mrb[0].mxu0 %v1980
  %v2035 = vpop.f32.mrb[0].mxu0
  %v2036 = vadd.f32 0.0, %v2035
  %v2037 = vpop.f32.mrb[0].mxu0
  %v2038 = vpop.f32.mrb[0].mxu0
  %v2039 = vadd.f32 0.0, %v2038
  %v2040 = vpop.f32.mrb[0].mxu0
  %2041 = vmatprep.mubr.bf16.mxu0 0
  %2042 = vmatmul.mubr.bf16.gmra.mrb[0].mxu0 %v1983
  %v2043 = vpop.f32.mrb[0].mxu0
  %v2044 = vadd.f32 0.0, %v2043
  %v2045 = vpop.f32.mrb[0].mxu0
  %v2046 = vpop.f32.mrb[0].mxu0
  %v2047 = vadd.f32 0.0, %v2046
  %v2048 = vpop.f32.mrb[0].mxu0
  %2049 = vdwg.mxu0
  %2050 = vrot.lane.b32.xlu0 %v1042, 64
  %v2051 = vpop.permute.xlu0 %2050
  %2052 = vrot.lane.b32.xlu0 %v1043, 64
  %v2053 = vpop.permute.xlu0 %2052
  %2054 = vrot.lane.b32.xlu0 %v1044, 64
  %v2055 = vpop.permute.xlu0 %2054
  %2056 = vrot.lane.b32.xlu0 %v1045, 64
  %v2057 = vpop.permute.xlu0 %2056
  %v2063 = vsel %vm1503, %v1864, 0
  %v2066 = vsel %vm1503, %v1865, 0
  %v2069 = vsel %vm1503, %v1866, 0
  %v2072 = vsel %vm1503, %v1867, 0
  %2074 = vmatprep.subr.bf16.mxu0 0
  %2075 = vmatpush1.bf16.msra.mxu0 %v2051
  %2076 = vmatprep.subr.bf16.mxu0 0
  %2077 = vmatpush1.bf16.msra.mxu0 %v2053
  %2078 = vmatprep.subr.bf16.mxu0 0
  %2079 = vmatpush1.bf16.msra.mxu0 %v2055
  %2080 = vmatprep.subr.bf16.mxu0 0
  %2081 = vmatpush1.bf16.msra.mxu0 %v2057
  %2082 = vmatprep.subr.bf16.mxu0 0
  %2083 = vmatpush1.bf16.msra.mxu0 0
  %2084 = vmatprep.subr.bf16.mxu0 0
  %2085 = vmatpush1.bf16.msra.mxu0 0
  %2086 = vmatprep.subr.bf16.mxu0 0
  %2087 = vmatpush1.bf16.msra.mxu0 0
  %2088 = vmatprep.subr.bf16.mxu0 0
  %2089 = vmatpush1.bf16.msra.mxu0 0
  %2090 = vmatprep.subr.bf16.mxu0 0
  %2091 = vmatpush1.bf16.msra.mxu0 0
  %2092 = vmatprep.subr.bf16.mxu0 0
  %2093 = vmatpush1.bf16.msra.mxu0 0
  %2094 = vmatprep.subr.bf16.mxu0 0
  %2095 = vmatpush1.bf16.msra.mxu0 0
  %2096 = vmatprep.subr.bf16.mxu0 0
  %2097 = vmatpush1.bf16.msra.mxu0 0
  %2098 = vmatprep.subr.bf16.mxu0 0
  %2099 = vmatpush1.bf16.msra.mxu0 0
  %2100 = vmatprep.subr.bf16.mxu0 0
  %2101 = vmatpush1.bf16.msra.mxu0 0
  %2102 = vmatprep.subr.bf16.mxu0 0
  %2103 = vmatpush1.bf16.msra.mxu0 0
  %2104 = vmatprep.subr.bf16.mxu0 0
  %2105 = vmatpush1.bf16.msra.mxu0 0
  %2106 = vmatprep.mubr.bf16.mxu0 0
  %2107 = vmatmul.mubr.bf16.gmra.mrb[0].mxu0 %v2063
  %v2108 = vpop.f32.mrb[0].mxu0
  %v2109 = vadd.f32 0.0, %v2108
  %v2110 = vpop.f32.mrb[0].mxu0
  %v2111 = vpop.f32.mrb[0].mxu0
  %v2112 = vadd.f32 0.0, %v2111
  %v2113 = vpop.f32.mrb[0].mxu0
  %2114 = vmatprep.mubr.bf16.mxu0 0
  %2115 = vmatmul.mubr.bf16.gmra.mrb[0].mxu0 %v2066
  %v2116 = vpop.f32.mrb[0].mxu0
  %v2117 = vadd.f32 0.0, %v2116
  %v2118 = vpop.f32.mrb[0].mxu0
  %v2119 = vpop.f32.mrb[0].mxu0
  %v2120 = vadd.f32 0.0, %v2119
  %v2121 = vpop.f32.mrb[0].mxu0
  %2122 = vmatprep.mubr.bf16.mxu0 0
  %2123 = vmatmul.mubr.bf16.gmra.mrb[0].mxu0 %v2069
  %v2124 = vpop.f32.mrb[0].mxu0
  %v2125 = vadd.f32 0.0, %v2124
  %v2126 = vpop.f32.mrb[0].mxu0
  %v2127 = vpop.f32.mrb[0].mxu0
  %v2128 = vadd.f32 0.0, %v2127
  %v2129 = vpop.f32.mrb[0].mxu0
  %2130 = vmatprep.mubr.bf16.mxu0 0
  %2131 = vmatmul.mubr.bf16.gmra.mrb[0].mxu0 %v2072
  %v2132 = vpop.f32.mrb[0].mxu0
  %v2133 = vadd.f32 0.0, %v2132
  %v2134 = vpop.f32.mrb[0].mxu0
  %v2135 = vpop.f32.mrb[0].mxu0
  %v2136 = vadd.f32 0.0, %v2135
  %v2137 = vpop.f32.mrb[0].mxu0
  %2138 = vdwg.mxu0
  %2139 = vrot.lane.b32.xlu0 %v1046, 64
  %v2140 = vpop.permute.xlu0 %2139
  %2141 = vrot.lane.b32.xlu0 %v1047, 64
  %v2142 = vpop.permute.xlu0 %2141
  %2143 = vrot.lane.b32.xlu0 %v1048, 64
  %v2144 = vpop.permute.xlu0 %2143
  %2145 = vrot.lane.b32.xlu0 %v1049, 64
  %v2146 = vpop.permute.xlu0 %2145
  %v2152 = vsel %vm1503, %v1868, 0
  %v2155 = vsel %vm1503, %v1869, 0
  %v2158 = vsel %vm1503, %v1870, 0
  %v2161 = vsel %vm1503, %v1871, 0
  %2163 = vmatprep.subr.bf16.mxu0 0
  %2164 = vmatpush1.bf16.msra.mxu0 %v2140
  %2165 = vmatprep.subr.bf16.mxu0 0
  %2166 = vmatpush1.bf16.msra.mxu0 %v2142
  %2167 = vmatprep.subr.bf16.mxu0 0
  %2168 = vmatpush1.bf16.msra.mxu0 %v2144
  %2169 = vmatprep.subr.bf16.mxu0 0
  %2170 = vmatpush1.bf16.msra.mxu0 %v2146
  %2171 = vmatprep.subr.bf16.mxu0 0
  %2172 = vmatpush1.bf16.msra.mxu0 0
  %2173 = vmatprep.subr.bf16.mxu0 0
  %2174 = vmatpush1.bf16.msra.mxu0 0
  %2175 = vmatprep.subr.bf16.mxu0 0
  %2176 = vmatpush1.bf16.msra.mxu0 0
  %2177 = vmatprep.subr.bf16.mxu0 0
  %2178 = vmatpush1.bf16.msra.mxu0 0
  %2179 = vmatprep.subr.bf16.mxu0 0
  %2180 = vmatpush1.bf16.msra.mxu0 0
  %2181 = vmatprep.subr.bf16.mxu0 0
  %2182 = vmatpush1.bf16.msra.mxu0 0
  %2183 = vmatprep.subr.bf16.mxu0 0
  %2184 = vmatpush1.bf16.msra.mxu0 0
  %2185 = vmatprep.subr.bf16.mxu0 0
  %2186 = vmatpush1.bf16.msra.mxu0 0
  %2187 = vmatprep.subr.bf16.mxu0 0
  %2188 = vmatpush1.bf16.msra.mxu0 0
  %2189 = vmatprep.subr.bf16.mxu0 0
  %2190 = vmatpush1.bf16.msra.mxu0 0
  %2191 = vmatprep.subr.bf16.mxu0 0
  %2192 = vmatpush1.bf16.msra.mxu0 0
  %2193 = vmatprep.subr.bf16.mxu0 0
  %2194 = vmatpush1.bf16.msra.mxu0 0
  %2195 = vmatprep.mubr.bf16.mxu0 0
  %2196 = vmatmul.mubr.bf16.gmra.mrb[0].mxu0 %v2152
  %v2197 = vpop.f32.mrb[0].mxu0
  %v2198 = vadd.f32 0.0, %v2197
  %v2199 = vpop.f32.mrb[0].mxu0
  %v2200 = vpop.f32.mrb[0].mxu0
  %v2201 = vadd.f32 0.0, %v2200
  %v2202 = vpop.f32.mrb[0].mxu0
  %2203 = vmatprep.mubr.bf16.mxu0 0
  %2204 = vmatmul.mubr.bf16.gmra.mrb[0].mxu0 %v2155
  %v2205 = vpop.f32.mrb[0].mxu0
  %v2206 = vadd.f32 0.0, %v2205
  %v2207 = vpop.f32.mrb[0].mxu0
  %v2208 = vpop.f32.mrb[0].mxu0
  %v2209 = vadd.f32 0.0, %v2208
  %v2210 = vpop.f32.mrb[0].mxu0
  %2211 = vmatprep.mubr.bf16.mxu0 0
  %2212 = vmatmul.mubr.bf16.gmra.mrb[0].mxu0 %v2158
  %v2213 = vpop.f32.mrb[0].mxu0
  %v2214 = vadd.f32 0.0, %v2213
  %v2215 = vpop.f32.mrb[0].mxu0
  %v2216 = vpop.f32.mrb[0].mxu0
  %v2217 = vadd.f32 0.0, %v2216
  %v2218 = vpop.f32.mrb[0].mxu0
  %2219 = vmatprep.mubr.bf16.mxu0 0
  %2220 = vmatmul.mubr.bf16.gmra.mrb[0].mxu0 %v2161
  %v2221 = vpop.f32.mrb[0].mxu0
  %v2222 = vadd.f32 0.0, %v2221
  %v2223 = vpop.f32.mrb[0].mxu0
  %v2224 = vpop.f32.mrb[0].mxu0
  %v2225 = vadd.f32 0.0, %v2224
  %v2226 = vpop.f32.mrb[0].mxu0
  %2227 = vdwg.mxu0
  %2244 = vrot.lane.b32.xlu0 %v2109, 16
  %v2245 = vpop.permute.xlu0 %2244
  %2246 = vrot.lane.b32.xlu0 %v2112, 16
  %v2247 = vpop.permute.xlu0 %2246
  %2248 = vrot.lane.b32.xlu0 %v2117, 16
  %v2249 = vpop.permute.xlu0 %2248
  %2250 = vrot.lane.b32.xlu0 %v2120, 16
  %v2251 = vpop.permute.xlu0 %2250
  %2252 = vrot.lane.b32.xlu0 %v2125, 16
  %v2253 = vpop.permute.xlu0 %2252
  %2254 = vrot.lane.b32.xlu0 %v2128, 16
  %v2255 = vpop.permute.xlu0 %2254
  %2256 = vrot.lane.b32.xlu0 %v2133, 16
  %v2257 = vpop.permute.xlu0 %2256
  %2258 = vrot.lane.b32.xlu0 %v2136, 16
  %v2259 = vpop.permute.xlu0 %2258
  %2260 = vrot.lane.b32.xlu0 %v2198, 16
  %v2261 = vpop.permute.xlu0 %2260
  %2262 = vrot.lane.b32.xlu0 %v2201, 16
  %v2263 = vpop.permute.xlu0 %2262
  %2264 = vrot.lane.b32.xlu0 %v2206, 16
  %v2265 = vpop.permute.xlu0 %2264
  %2266 = vrot.lane.b32.xlu0 %v2209, 16
  %v2267 = vpop.permute.xlu0 %2266
  %2268 = vrot.lane.b32.xlu0 %v2214, 16
  %v2269 = vpop.permute.xlu0 %2268
  %2270 = vrot.lane.b32.xlu0 %v2217, 16
  %v2271 = vpop.permute.xlu0 %2270
  %2272 = vrot.lane.b32.xlu0 %v2222, 16
  %v2273 = vpop.permute.xlu0 %2272
  %2274 = vrot.lane.b32.xlu0 %v2225, 16
  %v2275 = vpop.permute.xlu0 %2274
  %v2292 = vsel %vm1062, %v1931, %v2245
  %v2293 = vsel %vm1062, %v1934, %v2247
  %v2294 = vsel %vm1062, %v1939, %v2249
  %v2295 = vsel %vm1062, %v1942, %v2251
  %v2296 = vsel %vm1062, %v1947, %v2253
  %v2297 = vsel %vm1062, %v1950, %v2255
  %v2298 = vsel %vm1062, %v1955, %v2257
  %v2299 = vsel %vm1062, %v1958, %v2259
  %v2300 = vsel %vm1062, %v2020, %v2261
  %v2301 = vsel %vm1062, %v2023, %v2263
  %v2302 = vsel %vm1062, %v2028, %v2265
  %v2303 = vsel %vm1062, %v2031, %v2267
  %v2304 = vsel %vm1062, %v2036, %v2269
  %v2305 = vsel %vm1062, %v2039, %v2271
  %v2306 = vsel %vm1062, %v2044, %v2273
  %v2307 = vsel %vm1062, %v2047, %v2275
  %v2308 = vpack.c.bf16 %v2293, %v2292
  %v2309 = vpack.c.bf16 %v2295, %v2294
  %v2310 = vpack.c.bf16 %v2297, %v2296
  %v2311 = vpack.c.bf16 %v2299, %v2298
  %v2312 = vpack.c.bf16 %v2301, %v2300
  %v2313 = vpack.c.bf16 %v2303, %v2302
  %v2314 = vpack.c.bf16 %v2305, %v2304
  %v2315 = vpack.c.bf16 %v2307, %v2306
  %v2316 = vld [vmem:[%s21] sm:$0xf]
  %v2317 = vld [vmem:[%s21 + $0x4] sm:$0xf]
  %v2318 = vld [vmem:[%s21 + $0x8] sm:$0xf]
  %v2319 = vld [vmem:[%s21 + $0xc] sm:$0xf]
  %v2324 = vunpack.c.l.b16 %v2316
  %v2325 = vunpack.c.l.b16 %v2317
  %v2326 = vunpack.c.l.b16 %v2318
  %v2327 = vunpack.c.l.b16 %v2319
  %v2328 = vpack.c.b16 %v2325, %v2324
  %v2329 = vpack.c.b16 %v2327, %v2326
  %v2333 = vsel %vm310, %v2308, 0
  %v2336 = vsel %vm310, %v2309, 0
  %v2339 = vsel %vm310, %v2310, 0
  %v2342 = vsel %vm310, %v2311, 0
  %v2345 = vsel %vm310, %v2312, 0
  %v2348 = vsel %vm310, %v2313, 0
  %v2351 = vsel %vm310, %v2314, 0
  %v2354 = vsel %vm310, %v2315, 0
  %2356 = vmatprep.subr.bf16.mxu0 0
  %2357 = vmatpush1.bf16.msra.mxu0 %v2328
  %2358 = vmatprep.subr.bf16.mxu0 0
  %2359 = vmatpush1.bf16.msra.mxu0 %v2329
  %2360 = vmatprep.subr.bf16.mxu0 0
  %2361 = vmatpush1.bf16.msra.mxu0 0
  %2362 = vmatprep.subr.bf16.mxu0 0
  %2363 = vmatpush1.bf16.msra.mxu0 0
  %2364 = vmatprep.subr.bf16.mxu0 0
  %2365 = vmatpush1.bf16.msra.mxu0 0
  %2366 = vmatprep.subr.bf16.mxu0 0
  %2367 = vmatpush1.bf16.msra.mxu0 0
  %2368 = vmatprep.subr.bf16.mxu0 0
  %2369 = vmatpush1.bf16.msra.mxu0 0
  %2370 = vmatprep.subr.bf16.mxu0 0
  %2371 = vmatpush1.bf16.msra.mxu0 0
  %2372 = vmatprep.subr.bf16.mxu0 0
  %2373 = vmatpush1.bf16.msra.mxu0 0
  %2374 = vmatprep.subr.bf16.mxu0 0
  %2375 = vmatpush1.bf16.msra.mxu0 0
  %2376 = vmatprep.subr.bf16.mxu0 0
  %2377 = vmatpush1.bf16.msra.mxu0 0
  %2378 = vmatprep.subr.bf16.mxu0 0
  %2379 = vmatpush1.bf16.msra.mxu0 0
  %2380 = vmatprep.subr.bf16.mxu0 0
  %2381 = vmatpush1.bf16.msra.mxu0 0
  %2382 = vmatprep.subr.bf16.mxu0 0
  %2383 = vmatpush1.bf16.msra.mxu0 0
  %2384 = vmatprep.subr.bf16.mxu0 0
  %2385 = vmatpush1.bf16.msra.mxu0 0
  %2386 = vmatprep.subr.bf16.mxu0 0
  %2387 = vmatpush1.bf16.msra.mxu0 0
  %2388 = vmatprep.mubr.bf16.mxu0 0
  %2389 = vmatmul.mubr.bf16.gmra.mrb[0].mxu0 %v2333
  %v2390 = vpop.f32.mrb[0].mxu0
  %v2391 = vadd.f32 0.0, %v2390
  %v2392 = vpop.f32.mrb[0].mxu0
  %v2393 = vpop.f32.mrb[0].mxu0
  %v2394 = vadd.f32 0.0, %v2393
  %v2395 = vpop.f32.mrb[0].mxu0
  %2396 = vmatprep.mubr.bf16.mxu0 0
  %2397 = vmatmul.mubr.bf16.gmra.mrb[0].mxu0 %v2336
  %v2398 = vpop.f32.mrb[0].mxu0
  %v2399 = vadd.f32 0.0, %v2398
  %v2400 = vpop.f32.mrb[0].mxu0
  %v2401 = vpop.f32.mrb[0].mxu0
  %v2402 = vadd.f32 0.0, %v2401
  %v2403 = vpop.f32.mrb[0].mxu0
  %2404 = vmatprep.mubr.bf16.mxu0 0
  %2405 = vmatmul.mubr.bf16.gmra.mrb[0].mxu0 %v2339
  %v2406 = vpop.f32.mrb[0].mxu0
  %v2407 = vadd.f32 0.0, %v2406
  %v2408 = vpop.f32.mrb[0].mxu0
  %v2409 = vpop.f32.mrb[0].mxu0
  %v2410 = vadd.f32 0.0, %v2409
  %v2411 = vpop.f32.mrb[0].mxu0
  %2412 = vmatprep.mubr.bf16.mxu0 0
  %2413 = vmatmul.mubr.bf16.gmra.mrb[0].mxu0 %v2342
  %v2414 = vpop.f32.mrb[0].mxu0
  %v2415 = vadd.f32 0.0, %v2414
  %v2416 = vpop.f32.mrb[0].mxu0
  %v2417 = vpop.f32.mrb[0].mxu0
  %v2418 = vadd.f32 0.0, %v2417
  %v2419 = vpop.f32.mrb[0].mxu0
  %2420 = vmatprep.mubr.bf16.mxu0 0
  %2421 = vmatmul.mubr.bf16.gmra.mrb[0].mxu0 %v2345
  %v2422 = vpop.f32.mrb[0].mxu0
  %v2423 = vadd.f32 0.0, %v2422
  %v2424 = vpop.f32.mrb[0].mxu0
  %v2425 = vpop.f32.mrb[0].mxu0
  %v2426 = vadd.f32 0.0, %v2425
  %v2427 = vpop.f32.mrb[0].mxu0
  %2428 = vmatprep.mubr.bf16.mxu0 0
  %2429 = vmatmul.mubr.bf16.gmra.mrb[0].mxu0 %v2348
  %v2430 = vpop.f32.mrb[0].mxu0
  %v2431 = vadd.f32 0.0, %v2430
  %v2432 = vpop.f32.mrb[0].mxu0
  %v2433 = vpop.f32.mrb[0].mxu0
  %v2434 = vadd.f32 0.0, %v2433
  %v2435 = vpop.f32.mrb[0].mxu0
  %2436 = vmatprep.mubr.bf16.mxu0 0
  %2437 = vmatmul.mubr.bf16.gmra.mrb[0].mxu0 %v2351
  %v2438 = vpop.f32.mrb[0].mxu0
  %v2439 = vadd.f32 0.0, %v2438
  %v2440 = vpop.f32.mrb[0].mxu0
  %v2441 = vpop.f32.mrb[0].mxu0
  %v2442 = vadd.f32 0.0, %v2441
  %v2443 = vpop.f32.mrb[0].mxu0
  %2444 = vmatprep.mubr.bf16.mxu0 0
  %2445 = vmatmul.mubr.bf16.gmra.mrb[0].mxu0 %v2354
  %v2446 = vpop.f32.mrb[0].mxu0
  %v2447 = vadd.f32 0.0, %v2446
  %v2448 = vpop.f32.mrb[0].mxu0
  %v2449 = vpop.f32.mrb[0].mxu0
  %v2450 = vadd.f32 0.0, %v2449
  %v2451 = vpop.f32.mrb[0].mxu0
  %2452 = vdwg.mxu0
  %v2453 = vadd.f32 %v548, %v2391
  %v2454 = vadd.f32 %v549, %v2394
  %v2455 = vadd.f32 %v550, %v2399
  %v2456 = vadd.f32 %v551, %v2402
  %v2457 = vadd.f32 %v552, %v2407
  %v2458 = vadd.f32 %v553, %v2410
  %v2459 = vadd.f32 %v554, %v2415
  %v2460 = vadd.f32 %v555, %v2418
  %v2461 = vadd.f32 %v556, %v2423
  %v2462 = vadd.f32 %v557, %v2426
  %v2463 = vadd.f32 %v558, %v2431
  %v2464 = vadd.f32 %v559, %v2434
  %v2465 = vadd.f32 %v560, %v2439
  %v2466 = vadd.f32 %v561, %v2442
  %v2467 = vadd.f32 %v562, %v2447
  %v2468 = vadd.f32 %v563, %v2450
  %v2469 = vld [vmem:[%s23] sm:$0x1]
  %v2471 = vlaneseq
  %v2472 = vshrl.u32 %v2471, 7
  %v2473 = vsub.s32 0, %v2472
  %v2474 = vrot.slane %v2469, %v2473
  %v2476 = vadd.f32 %v2453, %v2474
  %v2477 = vadd.f32 %v2454, %v2474
  %v2478 = vadd.f32 %v2455, %v2474
  %v2479 = vadd.f32 %v2456, %v2474
  %v2480 = vadd.f32 %v2457, %v2474
  %v2481 = vadd.f32 %v2458, %v2474
  %v2482 = vadd.f32 %v2459, %v2474
  %v2483 = vadd.f32 %v2460, %v2474
  %v2484 = vadd.f32 %v2461, %v2474
  %v2485 = vadd.f32 %v2462, %v2474
  %v2486 = vadd.f32 %v2463, %v2474
  %v2487 = vadd.f32 %v2464, %v2474
  %v2488 = vadd.f32 %v2465, %v2474
  %v2489 = vadd.f32 %v2466, %v2474
  %v2490 = vadd.f32 %v2467, %v2474
  %v2491 = vadd.f32 %v2468, %v2474
  %v2492 = vld [vmem:[%s25] sm:$0x1]
  %v2493 = vld [vmem:[%s27] sm:$0x1]
  %v2494 = vsel %vm310, %v2476, 0.0
  %2495 = vadd.xlane.f32.xlu0 %v2494
  %v2496 = vpop.xlane.xlu0 %2495
  %v2497 = vsel %vm310, %v2477, 0.0
  %2498 = vadd.xlane.f32.xlu0 %v2497
  %v2499 = vpop.xlane.xlu0 %2498
  %v2500 = vsel %vm310, %v2478, 0.0
  %2501 = vadd.xlane.f32.xlu0 %v2500
  %v2502 = vpop.xlane.xlu0 %2501
  %v2503 = vsel %vm310, %v2479, 0.0
  %2504 = vadd.xlane.f32.xlu0 %v2503
  %v2505 = vpop.xlane.xlu0 %2504
  %v2506 = vsel %vm310, %v2480, 0.0
  %2507 = vadd.xlane.f32.xlu0 %v2506
  %v2508 = vpop.xlane.xlu0 %2507
  %v2509 = vsel %vm310, %v2481, 0.0
  %2510 = vadd.xlane.f32.xlu0 %v2509
  %v2511 = vpop.xlane.xlu0 %2510
  %v2512 = vsel %vm310, %v2482, 0.0
  %2513 = vadd.xlane.f32.xlu0 %v2512
  %v2514 = vpop.xlane.xlu0 %2513
  %v2515 = vsel %vm310, %v2483, 0.0
  %2516 = vadd.xlane.f32.xlu0 %v2515
  %v2517 = vpop.xlane.xlu0 %2516
  %v2518 = vsel %vm310, %v2484, 0.0
  %2519 = vadd.xlane.f32.xlu0 %v2518
  %v2520 = vpop.xlane.xlu0 %2519
  %v2521 = vsel %vm310, %v2485, 0.0
  %2522 = vadd.xlane.f32.xlu0 %v2521
  %v2523 = vpop.xlane.xlu0 %2522
  %v2524 = vsel %vm310, %v2486, 0.0
  %2525 = vadd.xlane.f32.xlu0 %v2524
  %v2526 = vpop.xlane.xlu0 %2525
  %v2527 = vsel %vm310, %v2487, 0.0
  %2528 = vadd.xlane.f32.xlu0 %v2527
  %v2529 = vpop.xlane.xlu0 %2528
  %v2530 = vsel %vm310, %v2488, 0.0
  %2531 = vadd.xlane.f32.xlu0 %v2530
  %v2532 = vpop.xlane.xlu0 %2531
  %v2533 = vsel %vm310, %v2489, 0.0
  %2534 = vadd.xlane.f32.xlu0 %v2533
  %v2535 = vpop.xlane.xlu0 %2534
  %v2536 = vsel %vm310, %v2490, 0.0
  %2537 = vadd.xlane.f32.xlu0 %v2536
  %v2538 = vpop.xlane.xlu0 %2537
  %v2539 = vsel %vm310, %v2491, 0.0
  %2540 = vadd.xlane.f32.xlu0 %v2539
  %v2541 = vpop.xlane.xlu0 %2540
  %v2542 = vmul.f32 %v2496, %v359
  %v2543 = vmul.f32 %v2499, %v359
  %v2544 = vmul.f32 %v2502, %v359
  %v2545 = vmul.f32 %v2505, %v359
  %v2546 = vmul.f32 %v2508, %v359
  %v2547 = vmul.f32 %v2511, %v359
  %v2548 = vmul.f32 %v2514, %v359
  %v2549 = vmul.f32 %v2517, %v359
  %v2550 = vmul.f32 %v2520, %v359
  %v2551 = vmul.f32 %v2523, %v359
  %v2552 = vmul.f32 %v2526, %v359
  %v2553 = vmul.f32 %v2529, %v359
  %v2554 = vmul.f32 %v2532, %v359
  %v2555 = vmul.f32 %v2535, %v359
  %v2556 = vmul.f32 %v2538, %v359
  %v2557 = vmul.f32 %v2541, %v359
  %v2558 = vsub.f32 %v2476, %v2542
  %v2559 = vsub.f32 %v2477, %v2543
  %v2560 = vsub.f32 %v2478, %v2544
  %v2561 = vsub.f32 %v2479, %v2545
  %v2562 = vsub.f32 %v2480, %v2546
  %v2563 = vsub.f32 %v2481, %v2547
  %v2564 = vsub.f32 %v2482, %v2548
  %v2565 = vsub.f32 %v2483, %v2549
  %v2566 = vsub.f32 %v2484, %v2550
  %v2567 = vsub.f32 %v2485, %v2551
  %v2568 = vsub.f32 %v2486, %v2552
  %v2569 = vsub.f32 %v2487, %v2553
  %v2570 = vsub.f32 %v2488, %v2554
  %v2571 = vsub.f32 %v2489, %v2555
  %v2572 = vsub.f32 %v2490, %v2556
  %v2573 = vsub.f32 %v2491, %v2557
  %v2574 = vmul.f32 %v2558, %v2558
  %v2575 = vmul.f32 %v2559, %v2559
  %v2576 = vmul.f32 %v2560, %v2560
  %v2577 = vmul.f32 %v2561, %v2561
  %v2578 = vmul.f32 %v2562, %v2562
  %v2579 = vmul.f32 %v2563, %v2563
  %v2580 = vmul.f32 %v2564, %v2564
  %v2581 = vmul.f32 %v2565, %v2565
  %v2582 = vmul.f32 %v2566, %v2566
  %v2583 = vmul.f32 %v2567, %v2567
  %v2584 = vmul.f32 %v2568, %v2568
  %v2585 = vmul.f32 %v2569, %v2569
  %v2586 = vmul.f32 %v2570, %v2570
  %v2587 = vmul.f32 %v2571, %v2571
  %v2588 = vmul.f32 %v2572, %v2572
  %v2589 = vmul.f32 %v2573, %v2573
  %v2590 = vsel %vm310, %v2574, 0.0
  %2591 = vadd.xlane.f32.xlu0 %v2590
  %v2592 = vpop.xlane.xlu0 %2591
  %v2593 = vsel %vm310, %v2575, 0.0
  %2594 = vadd.xlane.f32.xlu0 %v2593
  %v2595 = vpop.xlane.xlu0 %2594
  %v2596 = vsel %vm310, %v2576, 0.0
  %2597 = vadd.xlane.f32.xlu0 %v2596
  %v2598 = vpop.xlane.xlu0 %2597
  %v2599 = vsel %vm310, %v2577, 0.0
  %2600 = vadd.xlane.f32.xlu0 %v2599
  %v2601 = vpop.xlane.xlu0 %2600
  %v2602 = vsel %vm310, %v2578, 0.0
  %2603 = vadd.xlane.f32.xlu0 %v2602
  %v2604 = vpop.xlane.xlu0 %2603
  %v2605 = vsel %vm310, %v2579, 0.0
  %2606 = vadd.xlane.f32.xlu0 %v2605
  %v2607 = vpop.xlane.xlu0 %2606
  %v2608 = vsel %vm310, %v2580, 0.0
  %2609 = vadd.xlane.f32.xlu0 %v2608
  %v2610 = vpop.xlane.xlu0 %2609
  %v2611 = vsel %vm310, %v2581, 0.0
  %2612 = vadd.xlane.f32.xlu0 %v2611
  %v2613 = vpop.xlane.xlu0 %2612
  %v2614 = vsel %vm310, %v2582, 0.0
  %2615 = vadd.xlane.f32.xlu0 %v2614
  %v2616 = vpop.xlane.xlu0 %2615
  %v2617 = vsel %vm310, %v2583, 0.0
  %2618 = vadd.xlane.f32.xlu0 %v2617
  %v2619 = vpop.xlane.xlu0 %2618
  %v2620 = vsel %vm310, %v2584, 0.0
  %2621 = vadd.xlane.f32.xlu0 %v2620
  %v2622 = vpop.xlane.xlu0 %2621
  %v2623 = vsel %vm310, %v2585, 0.0
  %2624 = vadd.xlane.f32.xlu0 %v2623
  %v2625 = vpop.xlane.xlu0 %2624
  %v2626 = vsel %vm310, %v2586, 0.0
  %2627 = vadd.xlane.f32.xlu0 %v2626
  %v2628 = vpop.xlane.xlu0 %2627
  %v2629 = vsel %vm310, %v2587, 0.0
  %2630 = vadd.xlane.f32.xlu0 %v2629
  %v2631 = vpop.xlane.xlu0 %2630
  %v2632 = vsel %vm310, %v2588, 0.0
  %2633 = vadd.xlane.f32.xlu0 %v2632
  %v2634 = vpop.xlane.xlu0 %2633
  %v2635 = vsel %vm310, %v2589, 0.0
  %2636 = vadd.xlane.f32.xlu0 %v2635
  %v2637 = vpop.xlane.xlu0 %2636
  %v2638 = vmul.f32 %v2592, %v359
  %v2639 = vmul.f32 %v2595, %v359
  %v2640 = vmul.f32 %v2598, %v359
  %v2641 = vmul.f32 %v2601, %v359
  %v2642 = vmul.f32 %v2604, %v359
  %v2643 = vmul.f32 %v2607, %v359
  %v2644 = vmul.f32 %v2610, %v359
  %v2645 = vmul.f32 %v2613, %v359
  %v2646 = vmul.f32 %v2616, %v359
  %v2647 = vmul.f32 %v2619, %v359
  %v2648 = vmul.f32 %v2622, %v359
  %v2649 = vmul.f32 %v2625, %v359
  %v2650 = vmul.f32 %v2628, %v359
  %v2651 = vmul.f32 %v2631, %v359
  %v2652 = vmul.f32 %v2634, %v359
  %v2653 = vmul.f32 %v2637, %v359
  %v2654 = vadd.f32 %v2638, 1e-05
  %v2655 = vadd.f32 %v2639, 1e-05
  %v2656 = vadd.f32 %v2640, 1e-05
  %v2657 = vadd.f32 %v2641, 1e-05
  %v2658 = vadd.f32 %v2642, 1e-05
  %v2659 = vadd.f32 %v2643, 1e-05
  %v2660 = vadd.f32 %v2644, 1e-05
  %v2661 = vadd.f32 %v2645, 1e-05
  %v2662 = vadd.f32 %v2646, 1e-05
  %v2663 = vadd.f32 %v2647, 1e-05
  %v2664 = vadd.f32 %v2648, 1e-05
  %v2665 = vadd.f32 %v2649, 1e-05
  %v2666 = vadd.f32 %v2650, 1e-05
  %v2667 = vadd.f32 %v2651, 1e-05
  %v2668 = vadd.f32 %v2652, 1e-05
  %v2669 = vadd.f32 %v2653, 1e-05
  %v2670 = vrsqrt.pop %v2654
  %v2671 = vrsqrt.pop %v2655
  %v2672 = vrsqrt.pop %v2656
  %v2673 = vrsqrt.pop %v2657
  %v2674 = vrsqrt.pop %v2658
  %v2675 = vrsqrt.pop %v2659
  %v2676 = vrsqrt.pop %v2660
  %v2677 = vrsqrt.pop %v2661
  %v2678 = vrsqrt.pop %v2662
  %v2679 = vrsqrt.pop %v2663
  %v2680 = vrsqrt.pop %v2664
  %v2681 = vrsqrt.pop %v2665
  %v2682 = vrsqrt.pop %v2666
  %v2683 = vrsqrt.pop %v2667
  %v2684 = vrsqrt.pop %v2668
  %v2685 = vrsqrt.pop %v2669
  %v2686 = vmul.f32 %v2558, %v2670
  %v2687 = vmul.f32 %v2559, %v2671
  %v2688 = vmul.f32 %v2560, %v2672
  %v2689 = vmul.f32 %v2561, %v2673
  %v2690 = vmul.f32 %v2562, %v2674
  %v2691 = vmul.f32 %v2563, %v2675
  %v2692 = vmul.f32 %v2564, %v2676
  %v2693 = vmul.f32 %v2565, %v2677
  %v2694 = vmul.f32 %v2566, %v2678
  %v2695 = vmul.f32 %v2567, %v2679
  %v2696 = vmul.f32 %v2568, %v2680
  %v2697 = vmul.f32 %v2569, %v2681
  %v2698 = vmul.f32 %v2570, %v2682
  %v2699 = vmul.f32 %v2571, %v2683
  %v2700 = vmul.f32 %v2572, %v2684
  %v2701 = vmul.f32 %v2573, %v2685
  %v2703 = vlaneseq
  %v2704 = vshrl.u32 %v2703, 7
  %v2705 = vsub.s32 0, %v2704
  %v2706 = vrot.slane %v2492, %v2705
  %v2708 = vmul.f32 %v2686, %v2706
  %v2709 = vmul.f32 %v2687, %v2706
  %v2710 = vmul.f32 %v2688, %v2706
  %v2711 = vmul.f32 %v2689, %v2706
  %v2712 = vmul.f32 %v2690, %v2706
  %v2713 = vmul.f32 %v2691, %v2706
  %v2714 = vmul.f32 %v2692, %v2706
  %v2715 = vmul.f32 %v2693, %v2706
  %v2716 = vmul.f32 %v2694, %v2706
  %v2717 = vmul.f32 %v2695, %v2706
  %v2718 = vmul.f32 %v2696, %v2706
  %v2719 = vmul.f32 %v2697, %v2706
  %v2720 = vmul.f32 %v2698, %v2706
  %v2721 = vmul.f32 %v2699, %v2706
  %v2722 = vmul.f32 %v2700, %v2706
  %v2723 = vmul.f32 %v2701, %v2706
  %v2725 = vlaneseq
  %v2726 = vshrl.u32 %v2725, 7
  %v2727 = vsub.s32 0, %v2726
  %v2728 = vrot.slane %v2493, %v2727
  %v2730 = vadd.f32 %v2708, %v2728
  %v2731 = vadd.f32 %v2709, %v2728
  %v2732 = vadd.f32 %v2710, %v2728
  %v2733 = vadd.f32 %v2711, %v2728
  %v2734 = vadd.f32 %v2712, %v2728
  %v2735 = vadd.f32 %v2713, %v2728
  %v2736 = vadd.f32 %v2714, %v2728
  %v2737 = vadd.f32 %v2715, %v2728
  %v2738 = vadd.f32 %v2716, %v2728
  %v2739 = vadd.f32 %v2717, %v2728
  %v2740 = vadd.f32 %v2718, %v2728
  %v2741 = vadd.f32 %v2719, %v2728
  %v2742 = vadd.f32 %v2720, %v2728
  %v2743 = vadd.f32 %v2721, %v2728
  %v2744 = vadd.f32 %v2722, %v2728
  %v2745 = vadd.f32 %v2723, %v2728
  %v2746 = vpack.c.bf16 %v2731, %v2730
  %v2747 = vpack.c.bf16 %v2733, %v2732
  %v2748 = vpack.c.bf16 %v2735, %v2734
  %v2749 = vpack.c.bf16 %v2737, %v2736
  %v2750 = vpack.c.bf16 %v2739, %v2738
  %v2751 = vpack.c.bf16 %v2741, %v2740
  %v2752 = vpack.c.bf16 %v2743, %v2742
  %v2753 = vpack.c.bf16 %v2745, %v2744
  %v2754 = vld [vmem:[%s29] sm:$0xf]
  %v2755 = vld [vmem:[%s29 + $0x4] sm:$0xf]
  %v2756 = vld [vmem:[%s29 + $0x8] sm:$0xf]
  %v2757 = vld [vmem:[%s29 + $0xc] sm:$0xf]
  %v2758 = vld [vmem:[%s31] sm:$0x1]
  %v2760 = vlaneseq
  %v2761 = vshrl.u32 %v2760, 7
  %v2762 = vsub.s32 0, %v2761
  %v2763 = vrot.slane %v2758, %v2762
  %v2769 = vunpack.c.l.b16 %v2754
  %v2770 = vunpack.c.l.b16 %v2755
  %v2771 = vunpack.c.l.b16 %v2756
  %v2772 = vunpack.c.l.b16 %v2757
  %v2773 = vpack.c.b16 %v2770, %v2769
  %v2774 = vpack.c.b16 %v2772, %v2771
  %v2778 = vsel %vm310, %v2746, 0
  %v2781 = vsel %vm310, %v2747, 0
  %v2784 = vsel %vm310, %v2748, 0
  %v2787 = vsel %vm310, %v2749, 0
  %v2790 = vsel %vm310, %v2750, 0
  %v2793 = vsel %vm310, %v2751, 0
  %v2796 = vsel %vm310, %v2752, 0
  %v2799 = vsel %vm310, %v2753, 0
  %2801 = vmatprep.subr.bf16.mxu0 0
  %2802 = vmatpush1.bf16.msra.mxu0 %v2773
  %2803 = vmatprep.subr.bf16.mxu0 0
  %2804 = vmatpush1.bf16.msra.mxu0 %v2774
  %2805 = vmatprep.subr.bf16.mxu0 0
  %2806 = vmatpush1.bf16.msra.mxu0 0
  %2807 = vmatprep.subr.bf16.mxu0 0
  %2808 = vmatpush1.bf16.msra.mxu0 0
  %2809 = vmatprep.subr.bf16.mxu0 0
  %2810 = vmatpush1.bf16.msra.mxu0 0
  %2811 = vmatprep.subr.bf16.mxu0 0
  %2812 = vmatpush1.bf16.msra.mxu0 0
  %2813 = vmatprep.subr.bf16.mxu0 0
  %2814 = vmatpush1.bf16.msra.mxu0 0
  %2815 = vmatprep.subr.bf16.mxu0 0
  %2816 = vmatpush1.bf16.msra.mxu0 0
  %2817 = vmatprep.subr.bf16.mxu0 0
  %2818 = vmatpush1.bf16.msra.mxu0 0
  %2819 = vmatprep.subr.bf16.mxu0 0
  %2820 = vmatpush1.bf16.msra.mxu0 0
  %2821 = vmatprep.subr.bf16.mxu0 0
  %2822 = vmatpush1.bf16.msra.mxu0 0
  %2823 = vmatprep.subr.bf16.mxu0 0
  %2824 = vmatpush1.bf16.msra.mxu0 0
  %2825 = vmatprep.subr.bf16.mxu0 0
  %2826 = vmatpush1.bf16.msra.mxu0 0
  %2827 = vmatprep.subr.bf16.mxu0 0
  %2828 = vmatpush1.bf16.msra.mxu0 0
  %2829 = vmatprep.subr.bf16.mxu0 0
  %2830 = vmatpush1.bf16.msra.mxu0 0
  %2831 = vmatprep.subr.bf16.mxu0 0
  %2832 = vmatpush1.bf16.msra.mxu0 0
  %2833 = vmatprep.mubr.bf16.mxu0 0
  %2834 = vmatmul.mubr.bf16.gmra.mrb[0].mxu0 %v2778
  %v2835 = vpop.f32.mrb[0].mxu0
  %v2836 = vadd.f32 %v2763, %v2835
  %v2837 = vpop.f32.mrb[0].mxu0
  %v2838 = vpop.f32.mrb[0].mxu0
  %v2839 = vadd.f32 %v2763, %v2838
  %v2840 = vpop.f32.mrb[0].mxu0
  %2841 = vmatprep.mubr.bf16.mxu0 0
  %2842 = vmatmul.mubr.bf16.gmra.mrb[0].mxu0 %v2781
  %v2843 = vpop.f32.mrb[0].mxu0
  %v2844 = vadd.f32 %v2763, %v2843
  %v2845 = vpop.f32.mrb[0].mxu0
  %v2846 = vpop.f32.mrb[0].mxu0
  %v2847 = vadd.f32 %v2763, %v2846
  %v2848 = vpop.f32.mrb[0].mxu0
  %2849 = vmatprep.mubr.bf16.mxu0 0
  %2850 = vmatmul.mubr.bf16.gmra.mrb[0].mxu0 %v2784
  %v2851 = vpop.f32.mrb[0].mxu0
  %v2852 = vadd.f32 %v2763, %v2851
  %v2853 = vpop.f32.mrb[0].mxu0
  %v2854 = vpop.f32.mrb[0].mxu0
  %v2855 = vadd.f32 %v2763, %v2854
  %v2856 = vpop.f32.mrb[0].mxu0
  %2857 = vmatprep.mubr.bf16.mxu0 0
  %2858 = vmatmul.mubr.bf16.gmra.mrb[0].mxu0 %v2787
  %v2859 = vpop.f32.mrb[0].mxu0
  %v2860 = vadd.f32 %v2763, %v2859
  %v2861 = vpop.f32.mrb[0].mxu0
  %v2862 = vpop.f32.mrb[0].mxu0
  %v2863 = vadd.f32 %v2763, %v2862
  %v2864 = vpop.f32.mrb[0].mxu0
  %2865 = vmatprep.mubr.bf16.mxu0 0
  %2866 = vmatmul.mubr.bf16.gmra.mrb[0].mxu0 %v2790
  %v2867 = vpop.f32.mrb[0].mxu0
  %v2868 = vadd.f32 %v2763, %v2867
  %v2869 = vpop.f32.mrb[0].mxu0
  %v2870 = vpop.f32.mrb[0].mxu0
  %v2871 = vadd.f32 %v2763, %v2870
  %v2872 = vpop.f32.mrb[0].mxu0
  %2873 = vmatprep.mubr.bf16.mxu0 0
  %2874 = vmatmul.mubr.bf16.gmra.mrb[0].mxu0 %v2793
  %v2875 = vpop.f32.mrb[0].mxu0
  %v2876 = vadd.f32 %v2763, %v2875
  %v2877 = vpop.f32.mrb[0].mxu0
  %v2878 = vpop.f32.mrb[0].mxu0
  %v2879 = vadd.f32 %v2763, %v2878
  %v2880 = vpop.f32.mrb[0].mxu0
  %2881 = vmatprep.mubr.bf16.mxu0 0
  %2882 = vmatmul.mubr.bf16.gmra.mrb[0].mxu0 %v2796
  %v2883 = vpop.f32.mrb[0].mxu0
  %v2884 = vadd.f32 %v2763, %v2883
  %v2885 = vpop.f32.mrb[0].mxu0
  %v2886 = vpop.f32.mrb[0].mxu0
  %v2887 = vadd.f32 %v2763, %v2886
  %v2888 = vpop.f32.mrb[0].mxu0
  %2889 = vmatprep.mubr.bf16.mxu0 0
  %2890 = vmatmul.mubr.bf16.gmra.mrb[0].mxu0 %v2799
  %v2891 = vpop.f32.mrb[0].mxu0
  %v2892 = vadd.f32 %v2763, %v2891
  %v2893 = vpop.f32.mrb[0].mxu0
  %v2894 = vpop.f32.mrb[0].mxu0
  %v2895 = vadd.f32 %v2763, %v2894
  %v2896 = vpop.f32.mrb[0].mxu0
  %2897 = vdwg.mxu0
  %v2898 = vmul.f32 %v2836, %v2836
  %v2899 = vmul.f32 %v2839, %v2839
  %v2900 = vmul.f32 %v2844, %v2844
  %v2901 = vmul.f32 %v2847, %v2847
  %v2902 = vmul.f32 %v2852, %v2852
  %v2903 = vmul.f32 %v2855, %v2855
  %v2904 = vmul.f32 %v2860, %v2860
  %v2905 = vmul.f32 %v2863, %v2863
  %v2906 = vmul.f32 %v2868, %v2868
  %v2907 = vmul.f32 %v2871, %v2871
  %v2908 = vmul.f32 %v2876, %v2876
  %v2909 = vmul.f32 %v2879, %v2879
  %v2910 = vmul.f32 %v2884, %v2884
  %v2911 = vmul.f32 %v2887, %v2887
  %v2912 = vmul.f32 %v2892, %v2892
  %v2913 = vmul.f32 %v2895, %v2895
  %v2914 = vmul.f32 %v2836, %v2898
  %v2915 = vmul.f32 %v2839, %v2899
  %v2916 = vmul.f32 %v2844, %v2900
  %v2917 = vmul.f32 %v2847, %v2901
  %v2918 = vmul.f32 %v2852, %v2902
  %v2919 = vmul.f32 %v2855, %v2903
  %v2920 = vmul.f32 %v2860, %v2904
  %v2921 = vmul.f32 %v2863, %v2905
  %v2922 = vmul.f32 %v2868, %v2906
  %v2923 = vmul.f32 %v2871, %v2907
  %v2924 = vmul.f32 %v2876, %v2908
  %v2925 = vmul.f32 %v2879, %v2909
  %v2926 = vmul.f32 %v2884, %v2910
  %v2927 = vmul.f32 %v2887, %v2911
  %v2928 = vmul.f32 %v2892, %v2912
  %v2929 = vmul.f32 %v2895, %v2913
  %v2930 = vmul.f32 %v2914, 0.044715
  %v2931 = vmul.f32 %v2915, 0.044715
  %v2932 = vmul.f32 %v2916, 0.044715
  %v2933 = vmul.f32 %v2917, 0.044715
  %v2934 = vmul.f32 %v2918, 0.044715
  %v2935 = vmul.f32 %v2919, 0.044715
  %v2936 = vmul.f32 %v2920, 0.044715
  %v2937 = vmul.f32 %v2921, 0.044715
  %v2938 = vmul.f32 %v2922, 0.044715
  %v2939 = vmul.f32 %v2923, 0.044715
  %v2940 = vmul.f32 %v2924, 0.044715
  %v2941 = vmul.f32 %v2925, 0.044715
  %v2942 = vmul.f32 %v2926, 0.044715
  %v2943 = vmul.f32 %v2927, 0.044715
  %v2944 = vmul.f32 %v2928, 0.044715
  %v2945 = vmul.f32 %v2929, 0.044715
  %v2946 = vadd.f32 %v2836, %v2930
  %v2947 = vadd.f32 %v2839, %v2931
  %v2948 = vadd.f32 %v2844, %v2932
  %v2949 = vadd.f32 %v2847, %v2933
  %v2950 = vadd.f32 %v2852, %v2934
  %v2951 = vadd.f32 %v2855, %v2935
  %v2952 = vadd.f32 %v2860, %v2936
  %v2953 = vadd.f32 %v2863, %v2937
  %v2954 = vadd.f32 %v2868, %v2938
  %v2955 = vadd.f32 %v2871, %v2939
  %v2956 = vadd.f32 %v2876, %v2940
  %v2957 = vadd.f32 %v2879, %v2941
  %v2958 = vadd.f32 %v2884, %v2942
  %v2959 = vadd.f32 %v2887, %v2943
  %v2960 = vadd.f32 %v2892, %v2944
  %v2961 = vadd.f32 %v2895, %v2945
  %v2962 = vmul.f32 %v2946, 0.7978846
  %v2963 = vmul.f32 %v2947, 0.7978846
  %v2964 = vmul.f32 %v2948, 0.7978846
  %v2965 = vmul.f32 %v2949, 0.7978846
  %v2966 = vmul.f32 %v2950, 0.7978846
  %v2967 = vmul.f32 %v2951, 0.7978846
  %v2968 = vmul.f32 %v2952, 0.7978846
  %v2969 = vmul.f32 %v2953, 0.7978846
  %v2970 = vmul.f32 %v2954, 0.7978846
  %v2971 = vmul.f32 %v2955, 0.7978846
  %v2972 = vmul.f32 %v2956, 0.7978846
  %v2973 = vmul.f32 %v2957, 0.7978846
  %v2974 = vmul.f32 %v2958, 0.7978846
  %v2975 = vmul.f32 %v2959, 0.7978846
  %v2976 = vmul.f32 %v2960, 0.7978846
  %v2977 = vmul.f32 %v2961, 0.7978846
  %v2978 = vtanh.pop %v2962
  %v2979 = vtanh.pop %v2963
  %v2980 = vtanh.pop %v2964
  %v2981 = vtanh.pop %v2965
  %v2982 = vtanh.pop %v2966
  %v2983 = vtanh.pop %v2967
  %v2984 = vtanh.pop %v2968
  %v2985 = vtanh.pop %v2969
  %v2986 = vtanh.pop %v2970
  %v2987 = vtanh.pop %v2971
  %v2988 = vtanh.pop %v2972
  %v2989 = vtanh.pop %v2973
  %v2990 = vtanh.pop %v2974
  %v2991 = vtanh.pop %v2975
  %v2992 = vtanh.pop %v2976
  %v2993 = vtanh.pop %v2977
  %v2994 = vadd.f32 %v2978, 1.0
  %v2995 = vadd.f32 %v2979, 1.0
  %v2996 = vadd.f32 %v2980, 1.0
  %v2997 = vadd.f32 %v2981, 1.0
  %v2998 = vadd.f32 %v2982, 1.0
  %v2999 = vadd.f32 %v2983, 1.0
  %v3000 = vadd.f32 %v2984, 1.0
  %v3001 = vadd.f32 %v2985, 1.0
  %v3002 = vadd.f32 %v2986, 1.0
  %v3003 = vadd.f32 %v2987, 1.0
  %v3004 = vadd.f32 %v2988, 1.0
  %v3005 = vadd.f32 %v2989, 1.0
  %v3006 = vadd.f32 %v2990, 1.0
  %v3007 = vadd.f32 %v2991, 1.0
  %v3008 = vadd.f32 %v2992, 1.0
  %v3009 = vadd.f32 %v2993, 1.0
  %v3010 = vmul.f32 %v2994, 0.5
  %v3011 = vmul.f32 %v2995, 0.5
  %v3012 = vmul.f32 %v2996, 0.5
  %v3013 = vmul.f32 %v2997, 0.5
  %v3014 = vmul.f32 %v2998, 0.5
  %v3015 = vmul.f32 %v2999, 0.5
  %v3016 = vmul.f32 %v3000, 0.5
  %v3017 = vmul.f32 %v3001, 0.5
  %v3018 = vmul.f32 %v3002, 0.5
  %v3019 = vmul.f32 %v3003, 0.5
  %v3020 = vmul.f32 %v3004, 0.5
  %v3021 = vmul.f32 %v3005, 0.5
  %v3022 = vmul.f32 %v3006, 0.5
  %v3023 = vmul.f32 %v3007, 0.5
  %v3024 = vmul.f32 %v3008, 0.5
  %v3025 = vmul.f32 %v3009, 0.5
  %v3026 = vmul.f32 %v2836, %v3010
  %v3027 = vmul.f32 %v2839, %v3011
  %v3028 = vmul.f32 %v2844, %v3012
  %v3029 = vmul.f32 %v2847, %v3013
  %v3030 = vmul.f32 %v2852, %v3014
  %v3031 = vmul.f32 %v2855, %v3015
  %v3032 = vmul.f32 %v2860, %v3016
  %v3033 = vmul.f32 %v2863, %v3017
  %v3034 = vmul.f32 %v2868, %v3018
  %v3035 = vmul.f32 %v2871, %v3019
  %v3036 = vmul.f32 %v2876, %v3020
  %v3037 = vmul.f32 %v2879, %v3021
  %v3038 = vmul.f32 %v2884, %v3022
  %v3039 = vmul.f32 %v2887, %v3023
  %v3040 = vmul.f32 %v2892, %v3024
  %v3041 = vmul.f32 %v2895, %v3025
  %v3042 = vpack.c.bf16 %v3027, %v3026
  %v3043 = vpack.c.bf16 %v3029, %v3028
  %v3044 = vpack.c.bf16 %v3031, %v3030
  %v3045 = vpack.c.bf16 %v3033, %v3032
  %v3046 = vpack.c.bf16 %v3035, %v3034
  %v3047 = vpack.c.bf16 %v3037, %v3036
  %v3048 = vpack.c.bf16 %v3039, %v3038
  %v3049 = vpack.c.bf16 %v3041, %v3040
  %v3050 = vld [vmem:[%s33] sm:$0xf]
  %v3051 = vld [vmem:[%s33 + $0x4] sm:$0xf]
  %v3052 = vld [vmem:[%s33 + $0x8] sm:$0xf]
  %v3053 = vld [vmem:[%s33 + $0xc] sm:$0xf]
  %v3054 = vld [vmem:[%s33 + $0x10] sm:$0xf]
  %v3055 = vld [vmem:[%s33 + $0x14] sm:$0xf]
  %v3056 = vld [vmem:[%s33 + $0x18] sm:$0xf]
  %v3057 = vld [vmem:[%s33 + $0x1c] sm:$0xf]
  %v3058 = vld [vmem:[%s33 + $0x20] sm:$0xf]
  %v3059 = vld [vmem:[%s33 + $0x24] sm:$0xf]
  %v3060 = vld [vmem:[%s33 + $0x28] sm:$0xf]
  %v3061 = vld [vmem:[%s33 + $0x2c] sm:$0xf]
  %v3062 = vld [vmem:[%s33 + $0x30] sm:$0xf]
  %v3063 = vld [vmem:[%s33 + $0x34] sm:$0xf]
  %v3064 = vld [vmem:[%s33 + $0x38] sm:$0xf]
  %v3065 = vld [vmem:[%s33 + $0x3c] sm:$0xf]
  %v3066 = vld [vmem:[%s35] sm:$0x1]
  %v3068 = vlaneseq
  %v3069 = vshrl.u32 %v3068, 7
  %v3070 = vsub.s32 0, %v3069
  %v3071 = vrot.slane %v3066, %v3070
  %v3089 = vunpack.c.l.b16 %v3050
  %v3090 = vunpack.c.l.b16 %v3051
  %v3091 = vunpack.c.l.b16 %v3052
  %v3092 = vunpack.c.l.b16 %v3053
  %v3093 = vunpack.c.l.b16 %v3054
  %v3094 = vunpack.c.l.b16 %v3055
  %v3095 = vunpack.c.l.b16 %v3056
  %v3096 = vunpack.c.l.b16 %v3057
  %v3097 = vunpack.c.l.b16 %v3058
  %v3098 = vunpack.c.l.b16 %v3059
  %v3099 = vunpack.c.l.b16 %v3060
  %v3100 = vunpack.c.l.b16 %v3061
  %v3101 = vunpack.c.l.b16 %v3062
  %v3102 = vunpack.c.l.b16 %v3063
  %v3103 = vunpack.c.l.b16 %v3064
  %v3104 = vunpack.c.l.b16 %v3065
  %v3105 = vpack.c.b16 %v3090, %v3089
  %v3106 = vpack.c.b16 %v3092, %v3091
  %v3107 = vpack.c.b16 %v3094, %v3093
  %v3108 = vpack.c.b16 %v3096, %v3095
  %v3109 = vpack.c.b16 %v3098, %v3097
  %v3110 = vpack.c.b16 %v3100, %v3099
  %v3111 = vpack.c.b16 %v3102, %v3101
  %v3112 = vpack.c.b16 %v3104, %v3103
  %3121 = vmatprep.subr.bf16.mxu0 0
  %3122 = vmatpush1.bf16.msra.mxu0 %v3105
  %3123 = vmatprep.subr.bf16.mxu0 0
  %3124 = vmatpush1.bf16.msra.mxu0 %v3106
  %3125 = vmatprep.subr.bf16.mxu0 0
  %3126 = vmatpush1.bf16.msra.mxu0 %v3107
  %3127 = vmatprep.subr.bf16.mxu0 0
  %3128 = vmatpush1.bf16.msra.mxu0 %v3108
  %3129 = vmatprep.subr.bf16.mxu0 0
  %3130 = vmatpush1.bf16.msra.mxu0 %v3109
  %3131 = vmatprep.subr.bf16.mxu0 0
  %3132 = vmatpush1.bf16.msra.mxu0 %v3110
  %3133 = vmatprep.subr.bf16.mxu0 0
  %3134 = vmatpush1.bf16.msra.mxu0 %v3111
  %3135 = vmatprep.subr.bf16.mxu0 0
  %3136 = vmatpush1.bf16.msra.mxu0 %v3112
  %3137 = vmatprep.subr.bf16.mxu0 0
  %3138 = vmatpush1.bf16.msra.mxu0 0
  %3139 = vmatprep.subr.bf16.mxu0 0
  %3140 = vmatpush1.bf16.msra.mxu0 0
  %3141 = vmatprep.subr.bf16.mxu0 0
  %3142 = vmatpush1.bf16.msra.mxu0 0
  %3143 = vmatprep.subr.bf16.mxu0 0
  %3144 = vmatpush1.bf16.msra.mxu0 0
  %3145 = vmatprep.subr.bf16.mxu0 0
  %3146 = vmatpush1.bf16.msra.mxu0 0
  %3147 = vmatprep.subr.bf16.mxu0 0
  %3148 = vmatpush1.bf16.msra.mxu0 0
  %3149 = vmatprep.subr.bf16.mxu0 0
  %3150 = vmatpush1.bf16.msra.mxu0 0
  %3151 = vmatprep.subr.bf16.mxu0 0
  %3152 = vmatpush1.bf16.msra.mxu0 0
  %3153 = vmatprep.mubr.bf16.mxu0 0
  %3154 = vmatmul.mubr.bf16.gmra.mrb[0].mxu0 %v3042
  %v3155 = vpop.f32.mrb[0].mxu0
  %v3156 = vadd.f32 %v3071, %v3155
  %v3157 = vpop.f32.mrb[0].mxu0
  %v3158 = vpop.f32.mrb[0].mxu0
  %v3159 = vadd.f32 %v3071, %v3158
  %v3160 = vpop.f32.mrb[0].mxu0
  %3161 = vmatprep.mubr.bf16.mxu0 0
  %3162 = vmatmul.mubr.bf16.gmra.mrb[0].mxu0 %v3043
  %v3163 = vpop.f32.mrb[0].mxu0
  %v3164 = vadd.f32 %v3071, %v3163
  %v3165 = vpop.f32.mrb[0].mxu0
  %v3166 = vpop.f32.mrb[0].mxu0
  %v3167 = vadd.f32 %v3071, %v3166
  %v3168 = vpop.f32.mrb[0].mxu0
  %3169 = vmatprep.mubr.bf16.mxu0 0
  %3170 = vmatmul.mubr.bf16.gmra.mrb[0].mxu0 %v3044
  %v3171 = vpop.f32.mrb[0].mxu0
  %v3172 = vadd.f32 %v3071, %v3171
  %v3173 = vpop.f32.mrb[0].mxu0
  %v3174 = vpop.f32.mrb[0].mxu0
  %v3175 = vadd.f32 %v3071, %v3174
  %v3176 = vpop.f32.mrb[0].mxu0
  %3177 = vmatprep.mubr.bf16.mxu0 0
  %3178 = vmatmul.mubr.bf16.gmra.mrb[0].mxu0 %v3045
  %v3179 = vpop.f32.mrb[0].mxu0
  %v3180 = vadd.f32 %v3071, %v3179
  %v3181 = vpop.f32.mrb[0].mxu0
  %v3182 = vpop.f32.mrb[0].mxu0
  %v3183 = vadd.f32 %v3071, %v3182
  %v3184 = vpop.f32.mrb[0].mxu0
  %3185 = vmatprep.mubr.bf16.mxu0 0
  %3186 = vmatmul.mubr.bf16.gmra.mrb[0].mxu0 %v3046
  %v3187 = vpop.f32.mrb[0].mxu0
  %v3188 = vadd.f32 %v3071, %v3187
  %v3189 = vpop.f32.mrb[0].mxu0
  %v3190 = vpop.f32.mrb[0].mxu0
  %v3191 = vadd.f32 %v3071, %v3190
  %v3192 = vpop.f32.mrb[0].mxu0
  %3193 = vmatprep.mubr.bf16.mxu0 0
  %3194 = vmatmul.mubr.bf16.gmra.mrb[0].mxu0 %v3047
  %v3195 = vpop.f32.mrb[0].mxu0
  %v3196 = vadd.f32 %v3071, %v3195
  %v3197 = vpop.f32.mrb[0].mxu0
  %v3198 = vpop.f32.mrb[0].mxu0
  %v3199 = vadd.f32 %v3071, %v3198
  %v3200 = vpop.f32.mrb[0].mxu0
  %3201 = vmatprep.mubr.bf16.mxu0 0
  %3202 = vmatmul.mubr.bf16.gmra.mrb[0].mxu0 %v3048
  %v3203 = vpop.f32.mrb[0].mxu0
  %v3204 = vadd.f32 %v3071, %v3203
  %v3205 = vpop.f32.mrb[0].mxu0
  %v3206 = vpop.f32.mrb[0].mxu0
  %v3207 = vadd.f32 %v3071, %v3206
  %v3208 = vpop.f32.mrb[0].mxu0
  %3209 = vmatprep.mubr.bf16.mxu0 0
  %3210 = vmatmul.mubr.bf16.gmra.mrb[0].mxu0 %v3049
  %v3211 = vpop.f32.mrb[0].mxu0
  %v3212 = vadd.f32 %v3071, %v3211
  %v3213 = vpop.f32.mrb[0].mxu0
  %v3214 = vpop.f32.mrb[0].mxu0
  %v3215 = vadd.f32 %v3071, %v3214
  %v3216 = vpop.f32.mrb[0].mxu0
  %3217 = vdwg.mxu0
  %v3218 = vadd.f32 %v2476, %v3156
  %v3219 = vadd.f32 %v2477, %v3159
  %v3220 = vadd.f32 %v2478, %v3164
  %v3221 = vadd.f32 %v2479, %v3167
  %v3222 = vadd.f32 %v2480, %v3172
  %v3223 = vadd.f32 %v2481, %v3175
  %v3224 = vadd.f32 %v2482, %v3180
  %v3225 = vadd.f32 %v2483, %v3183
  %v3226 = vadd.f32 %v2484, %v3188
  %v3227 = vadd.f32 %v2485, %v3191
  %v3228 = vadd.f32 %v2486, %v3196
  %v3229 = vadd.f32 %v2487, %v3199
  %v3230 = vadd.f32 %v2488, %v3204
  %v3231 = vadd.f32 %v2489, %v3207
  %v3232 = vadd.f32 %v2490, %v3212
  %v3233 = vadd.f32 %v2491, %v3215
  %v3234 = vld [vmem:[%s37] sm:$0x1]
  %v3235 = vld [vmem:[%s39] sm:$0x1]
  %v3236 = vsel %vm310, %v3218, 0.0
  %3237 = vadd.xlane.f32.xlu0 %v3236
  %v3238 = vpop.xlane.xlu0 %3237
  %v3239 = vsel %vm310, %v3219, 0.0
  %3240 = vadd.xlane.f32.xlu0 %v3239
  %v3241 = vpop.xlane.xlu0 %3240
  %v3242 = vsel %vm310, %v3220, 0.0
  %3243 = vadd.xlane.f32.xlu0 %v3242
  %v3244 = vpop.xlane.xlu0 %3243
  %v3245 = vsel %vm310, %v3221, 0.0
  %3246 = vadd.xlane.f32.xlu0 %v3245
  %v3247 = vpop.xlane.xlu0 %3246
  %v3248 = vsel %vm310, %v3222, 0.0
  %3249 = vadd.xlane.f32.xlu0 %v3248
  %v3250 = vpop.xlane.xlu0 %3249
  %v3251 = vsel %vm310, %v3223, 0.0
  %3252 = vadd.xlane.f32.xlu0 %v3251
  %v3253 = vpop.xlane.xlu0 %3252
  %v3254 = vsel %vm310, %v3224, 0.0
  %3255 = vadd.xlane.f32.xlu0 %v3254
  %v3256 = vpop.xlane.xlu0 %3255
  %v3257 = vsel %vm310, %v3225, 0.0
  %3258 = vadd.xlane.f32.xlu0 %v3257
  %v3259 = vpop.xlane.xlu0 %3258
  %v3260 = vsel %vm310, %v3226, 0.0
  %3261 = vadd.xlane.f32.xlu0 %v3260
  %v3262 = vpop.xlane.xlu0 %3261
  %v3263 = vsel %vm310, %v3227, 0.0
  %3264 = vadd.xlane.f32.xlu0 %v3263
  %v3265 = vpop.xlane.xlu0 %3264
  %v3266 = vsel %vm310, %v3228, 0.0
  %3267 = vadd.xlane.f32.xlu0 %v3266
  %v3268 = vpop.xlane.xlu0 %3267
  %v3269 = vsel %vm310, %v3229, 0.0
  %3270 = vadd.xlane.f32.xlu0 %v3269
  %v3271 = vpop.xlane.xlu0 %3270
  %v3272 = vsel %vm310, %v3230, 0.0
  %3273 = vadd.xlane.f32.xlu0 %v3272
  %v3274 = vpop.xlane.xlu0 %3273
  %v3275 = vsel %vm310, %v3231, 0.0
  %3276 = vadd.xlane.f32.xlu0 %v3275
  %v3277 = vpop.xlane.xlu0 %3276
  %v3278 = vsel %vm310, %v3232, 0.0
  %3279 = vadd.xlane.f32.xlu0 %v3278
  %v3280 = vpop.xlane.xlu0 %3279
  %v3281 = vsel %vm310, %v3233, 0.0
  %3282 = vadd.xlane.f32.xlu0 %v3281
  %v3283 = vpop.xlane.xlu0 %3282
  %v3284 = vmul.f32 %v3238, %v359
  %v3285 = vmul.f32 %v3241, %v359
  %v3286 = vmul.f32 %v3244, %v359
  %v3287 = vmul.f32 %v3247, %v359
  %v3288 = vmul.f32 %v3250, %v359
  %v3289 = vmul.f32 %v3253, %v359
  %v3290 = vmul.f32 %v3256, %v359
  %v3291 = vmul.f32 %v3259, %v359
  %v3292 = vmul.f32 %v3262, %v359
  %v3293 = vmul.f32 %v3265, %v359
  %v3294 = vmul.f32 %v3268, %v359
  %v3295 = vmul.f32 %v3271, %v359
  %v3296 = vmul.f32 %v3274, %v359
  %v3297 = vmul.f32 %v3277, %v359
  %v3298 = vmul.f32 %v3280, %v359
  %v3299 = vmul.f32 %v3283, %v359
  %v3300 = vsub.f32 %v3218, %v3284
  %v3301 = vsub.f32 %v3219, %v3285
  %v3302 = vsub.f32 %v3220, %v3286
  %v3303 = vsub.f32 %v3221, %v3287
  %v3304 = vsub.f32 %v3222, %v3288
  %v3305 = vsub.f32 %v3223, %v3289
  %v3306 = vsub.f32 %v3224, %v3290
  %v3307 = vsub.f32 %v3225, %v3291
  %v3308 = vsub.f32 %v3226, %v3292
  %v3309 = vsub.f32 %v3227, %v3293
  %v3310 = vsub.f32 %v3228, %v3294
  %v3311 = vsub.f32 %v3229, %v3295
  %v3312 = vsub.f32 %v3230, %v3296
  %v3313 = vsub.f32 %v3231, %v3297
  %v3314 = vsub.f32 %v3232, %v3298
  %v3315 = vsub.f32 %v3233, %v3299
  %v3316 = vmul.f32 %v3300, %v3300
  %v3317 = vmul.f32 %v3301, %v3301
  %v3318 = vmul.f32 %v3302, %v3302
  %v3319 = vmul.f32 %v3303, %v3303
  %v3320 = vmul.f32 %v3304, %v3304
  %v3321 = vmul.f32 %v3305, %v3305
  %v3322 = vmul.f32 %v3306, %v3306
  %v3323 = vmul.f32 %v3307, %v3307
  %v3324 = vmul.f32 %v3308, %v3308
  %v3325 = vmul.f32 %v3309, %v3309
  %v3326 = vmul.f32 %v3310, %v3310
  %v3327 = vmul.f32 %v3311, %v3311
  %v3328 = vmul.f32 %v3312, %v3312
  %v3329 = vmul.f32 %v3313, %v3313
  %v3330 = vmul.f32 %v3314, %v3314
  %v3331 = vmul.f32 %v3315, %v3315
  %v3332 = vsel %vm310, %v3316, 0.0
  %3333 = vadd.xlane.f32.xlu0 %v3332
  %v3334 = vpop.xlane.xlu0 %3333
  %v3335 = vsel %vm310, %v3317, 0.0
  %3336 = vadd.xlane.f32.xlu0 %v3335
  %v3337 = vpop.xlane.xlu0 %3336
  %v3338 = vsel %vm310, %v3318, 0.0
  %3339 = vadd.xlane.f32.xlu0 %v3338
  %v3340 = vpop.xlane.xlu0 %3339
  %v3341 = vsel %vm310, %v3319, 0.0
  %3342 = vadd.xlane.f32.xlu0 %v3341
  %v3343 = vpop.xlane.xlu0 %3342
  %v3344 = vsel %vm310, %v3320, 0.0
  %3345 = vadd.xlane.f32.xlu0 %v3344
  %v3346 = vpop.xlane.xlu0 %3345
  %v3347 = vsel %vm310, %v3321, 0.0
  %3348 = vadd.xlane.f32.xlu0 %v3347
  %v3349 = vpop.xlane.xlu0 %3348
  %v3350 = vsel %vm310, %v3322, 0.0
  %3351 = vadd.xlane.f32.xlu0 %v3350
  %v3352 = vpop.xlane.xlu0 %3351
  %v3353 = vsel %vm310, %v3323, 0.0
  %3354 = vadd.xlane.f32.xlu0 %v3353
  %v3355 = vpop.xlane.xlu0 %3354
  %v3356 = vsel %vm310, %v3324, 0.0
  %3357 = vadd.xlane.f32.xlu0 %v3356
  %v3358 = vpop.xlane.xlu0 %3357
  %v3359 = vsel %vm310, %v3325, 0.0
  %3360 = vadd.xlane.f32.xlu0 %v3359
  %v3361 = vpop.xlane.xlu0 %3360
  %v3362 = vsel %vm310, %v3326, 0.0
  %3363 = vadd.xlane.f32.xlu0 %v3362
  %v3364 = vpop.xlane.xlu0 %3363
  %v3365 = vsel %vm310, %v3327, 0.0
  %3366 = vadd.xlane.f32.xlu0 %v3365
  %v3367 = vpop.xlane.xlu0 %3366
  %v3368 = vsel %vm310, %v3328, 0.0
  %3369 = vadd.xlane.f32.xlu0 %v3368
  %v3370 = vpop.xlane.xlu0 %3369
  %v3371 = vsel %vm310, %v3329, 0.0
  %3372 = vadd.xlane.f32.xlu0 %v3371
  %v3373 = vpop.xlane.xlu0 %3372
  %v3374 = vsel %vm310, %v3330, 0.0
  %3375 = vadd.xlane.f32.xlu0 %v3374
  %v3376 = vpop.xlane.xlu0 %3375
  %v3377 = vsel %vm310, %v3331, 0.0
  %3378 = vadd.xlane.f32.xlu0 %v3377
  %v3379 = vpop.xlane.xlu0 %3378
  %v3380 = vmul.f32 %v3334, %v359
  %v3381 = vmul.f32 %v3337, %v359
  %v3382 = vmul.f32 %v3340, %v359
  %v3383 = vmul.f32 %v3343, %v359
  %v3384 = vmul.f32 %v3346, %v359
  %v3385 = vmul.f32 %v3349, %v359
  %v3386 = vmul.f32 %v3352, %v359
  %v3387 = vmul.f32 %v3355, %v359
  %v3388 = vmul.f32 %v3358, %v359
  %v3389 = vmul.f32 %v3361, %v359
  %v3390 = vmul.f32 %v3364, %v359
  %v3391 = vmul.f32 %v3367, %v359
  %v3392 = vmul.f32 %v3370, %v359
  %v3393 = vmul.f32 %v3373, %v359
  %v3394 = vmul.f32 %v3376, %v359
  %v3395 = vmul.f32 %v3379, %v359
  %v3396 = vadd.f32 %v3380, 1e-05
  %v3397 = vadd.f32 %v3381, 1e-05
  %v3398 = vadd.f32 %v3382, 1e-05
  %v3399 = vadd.f32 %v3383, 1e-05
  %v3400 = vadd.f32 %v3384, 1e-05
  %v3401 = vadd.f32 %v3385, 1e-05
  %v3402 = vadd.f32 %v3386, 1e-05
  %v3403 = vadd.f32 %v3387, 1e-05
  %v3404 = vadd.f32 %v3388, 1e-05
  %v3405 = vadd.f32 %v3389, 1e-05
  %v3406 = vadd.f32 %v3390, 1e-05
  %v3407 = vadd.f32 %v3391, 1e-05
  %v3408 = vadd.f32 %v3392, 1e-05
  %v3409 = vadd.f32 %v3393, 1e-05
  %v3410 = vadd.f32 %v3394, 1e-05
  %v3411 = vadd.f32 %v3395, 1e-05
  %v3412 = vrsqrt.pop %v3396
  %v3413 = vrsqrt.pop %v3397
  %v3414 = vrsqrt.pop %v3398
  %v3415 = vrsqrt.pop %v3399
  %v3416 = vrsqrt.pop %v3400
  %v3417 = vrsqrt.pop %v3401
  %v3418 = vrsqrt.pop %v3402
  %v3419 = vrsqrt.pop %v3403
  %v3420 = vrsqrt.pop %v3404
  %v3421 = vrsqrt.pop %v3405
  %v3422 = vrsqrt.pop %v3406
  %v3423 = vrsqrt.pop %v3407
  %v3424 = vrsqrt.pop %v3408
  %v3425 = vrsqrt.pop %v3409
  %v3426 = vrsqrt.pop %v3410
  %v3427 = vrsqrt.pop %v3411
  %v3428 = vmul.f32 %v3300, %v3412
  %v3429 = vmul.f32 %v3301, %v3413
  %v3430 = vmul.f32 %v3302, %v3414
  %v3431 = vmul.f32 %v3303, %v3415
  %v3432 = vmul.f32 %v3304, %v3416
  %v3433 = vmul.f32 %v3305, %v3417
  %v3434 = vmul.f32 %v3306, %v3418
  %v3435 = vmul.f32 %v3307, %v3419
  %v3436 = vmul.f32 %v3308, %v3420
  %v3437 = vmul.f32 %v3309, %v3421
  %v3438 = vmul.f32 %v3310, %v3422
  %v3439 = vmul.f32 %v3311, %v3423
  %v3440 = vmul.f32 %v3312, %v3424
  %v3441 = vmul.f32 %v3313, %v3425
  %v3442 = vmul.f32 %v3314, %v3426
  %v3443 = vmul.f32 %v3315, %v3427
  %v3445 = vlaneseq
  %v3446 = vshrl.u32 %v3445, 7
  %v3447 = vsub.s32 0, %v3446
  %v3448 = vrot.slane %v3234, %v3447
  %v3450 = vmul.f32 %v3428, %v3448
  %v3451 = vmul.f32 %v3429, %v3448
  %v3452 = vmul.f32 %v3430, %v3448
  %v3453 = vmul.f32 %v3431, %v3448
  %v3454 = vmul.f32 %v3432, %v3448
  %v3455 = vmul.f32 %v3433, %v3448
  %v3456 = vmul.f32 %v3434, %v3448
  %v3457 = vmul.f32 %v3435, %v3448
  %v3458 = vmul.f32 %v3436, %v3448
  %v3459 = vmul.f32 %v3437, %v3448
  %v3460 = vmul.f32 %v3438, %v3448
  %v3461 = vmul.f32 %v3439, %v3448
  %v3462 = vmul.f32 %v3440, %v3448
  %v3463 = vmul.f32 %v3441, %v3448
  %v3464 = vmul.f32 %v3442, %v3448
  %v3465 = vmul.f32 %v3443, %v3448
  %v3467 = vlaneseq
  %v3468 = vshrl.u32 %v3467, 7
  %v3469 = vsub.s32 0, %v3468
  %v3470 = vrot.slane %v3235, %v3469
  %v3472 = vadd.f32 %v3450, %v3470
  %v3473 = vadd.f32 %v3451, %v3470
  %v3474 = vadd.f32 %v3452, %v3470
  %v3475 = vadd.f32 %v3453, %v3470
  %v3476 = vadd.f32 %v3454, %v3470
  %v3477 = vadd.f32 %v3455, %v3470
  %v3478 = vadd.f32 %v3456, %v3470
  %v3479 = vadd.f32 %v3457, %v3470
  %v3480 = vadd.f32 %v3458, %v3470
  %v3481 = vadd.f32 %v3459, %v3470
  %v3482 = vadd.f32 %v3460, %v3470
  %v3483 = vadd.f32 %v3461, %v3470
  %v3484 = vadd.f32 %v3462, %v3470
  %v3485 = vadd.f32 %v3463, %v3470
  %v3486 = vadd.f32 %v3464, %v3470
  %v3487 = vadd.f32 %v3465, %v3470
  %v3488 = vpack.c.bf16 %v3473, %v3472
  %v3489 = vpack.c.bf16 %v3475, %v3474
  %v3490 = vpack.c.bf16 %v3477, %v3476
  %v3491 = vpack.c.bf16 %v3479, %v3478
  %v3492 = vpack.c.bf16 %v3481, %v3480
  %v3493 = vpack.c.bf16 %v3483, %v3482
  %v3494 = vpack.c.bf16 %v3485, %v3484
  %v3495 = vpack.c.bf16 %v3487, %v3486
  %v3496 = vld [vmem:[%s41] sm:$0xf]
  %v3497 = vld [vmem:[%s41 + $0x4] sm:$0xf]
  %v3498 = vld [vmem:[%s41 + $0x8] sm:$0xf]
  %v3499 = vld [vmem:[%s41 + $0xc] sm:$0xf]
  %v3500 = vld [vmem:[%s43] sm:$0x1]
  %v3502 = vlaneseq
  %v3503 = vshrl.u32 %v3502, 7
  %v3504 = vsub.s32 0, %v3503
  %v3505 = vrot.slane %v3500, %v3504
  %v3511 = vunpack.c.l.b16 %v3496
  %v3512 = vunpack.c.l.b16 %v3497
  %v3513 = vunpack.c.l.b16 %v3498
  %v3514 = vunpack.c.l.b16 %v3499
  %v3515 = vpack.c.b16 %v3512, %v3511
  %v3516 = vpack.c.b16 %v3514, %v3513
  %v3520 = vsel %vm310, %v3488, 0
  %v3523 = vsel %vm310, %v3489, 0
  %v3526 = vsel %vm310, %v3490, 0
  %v3529 = vsel %vm310, %v3491, 0
  %v3532 = vsel %vm310, %v3492, 0
  %v3535 = vsel %vm310, %v3493, 0
  %v3538 = vsel %vm310, %v3494, 0
  %v3541 = vsel %vm310, %v3495, 0
  %3543 = vmatprep.subr.bf16.mxu0 0
  %3544 = vmatpush1.bf16.msra.mxu0 %v3515
  %3545 = vmatprep.subr.bf16.mxu0 0
  %3546 = vmatpush1.bf16.msra.mxu0 %v3516
  %3547 = vmatprep.subr.bf16.mxu0 0
  %3548 = vmatpush1.bf16.msra.mxu0 0
  %3549 = vmatprep.subr.bf16.mxu0 0
  %3550 = vmatpush1.bf16.msra.mxu0 0
  %3551 = vmatprep.subr.bf16.mxu0 0
  %3552 = vmatpush1.bf16.msra.mxu0 0
  %3553 = vmatprep.subr.bf16.mxu0 0
  %3554 = vmatpush1.bf16.msra.mxu0 0
  %3555 = vmatprep.subr.bf16.mxu0 0
  %3556 = vmatpush1.bf16.msra.mxu0 0
  %3557 = vmatprep.subr.bf16.mxu0 0
  %3558 = vmatpush1.bf16.msra.mxu0 0
  %3559 = vmatprep.subr.bf16.mxu0 0
  %3560 = vmatpush1.bf16.msra.mxu0 0
  %3561 = vmatprep.subr.bf16.mxu0 0
  %3562 = vmatpush1.bf16.msra.mxu0 0
  %3563 = vmatprep.subr.bf16.mxu0 0
  %3564 = vmatpush1.bf16.msra.mxu0 0
  %3565 = vmatprep.subr.bf16.mxu0 0
  %3566 = vmatpush1.bf16.msra.mxu0 0
  %3567 = vmatprep.subr.bf16.mxu0 0
  %3568 = vmatpush1.bf16.msra.mxu0 0
  %3569 = vmatprep.subr.bf16.mxu0 0
  %3570 = vmatpush1.bf16.msra.mxu0 0
  %3571 = vmatprep.subr.bf16.mxu0 0
  %3572 = vmatpush1.bf16.msra.mxu0 0
  %3573 = vmatprep.subr.bf16.mxu0 0
  %3574 = vmatpush1.bf16.msra.mxu0 0
  %3575 = vmatprep.mubr.bf16.mxu0 0
  %3576 = vmatmul.mubr.bf16.gmra.mrb[0].mxu0 %v3520
  %v3577 = vpop.f32.mrb[0].mxu0
  %v3578 = vadd.f32 %v3505, %v3577
  %v3579 = vpop.f32.mrb[0].mxu0
  %v3580 = vpop.f32.mrb[0].mxu0
  %v3581 = vadd.f32 %v3505, %v3580
  %v3582 = vpop.f32.mrb[0].mxu0
  %3583 = vmatprep.mubr.bf16.mxu0 0
  %3584 = vmatmul.mubr.bf16.gmra.mrb[0].mxu0 %v3523
  %v3585 = vpop.f32.mrb[0].mxu0
  %v3586 = vadd.f32 %v3505, %v3585
  %v3587 = vpop.f32.mrb[0].mxu0
  %v3588 = vpop.f32.mrb[0].mxu0
  %v3589 = vadd.f32 %v3505, %v3588
  %v3590 = vpop.f32.mrb[0].mxu0
  %3591 = vmatprep.mubr.bf16.mxu0 0
  %3592 = vmatmul.mubr.bf16.gmra.mrb[0].mxu0 %v3526
  %v3593 = vpop.f32.mrb[0].mxu0
  %v3594 = vadd.f32 %v3505, %v3593
  %v3595 = vpop.f32.mrb[0].mxu0
  %v3596 = vpop.f32.mrb[0].mxu0
  %v3597 = vadd.f32 %v3505, %v3596
  %v3598 = vpop.f32.mrb[0].mxu0
  %3599 = vmatprep.mubr.bf16.mxu0 0
  %3600 = vmatmul.mubr.bf16.gmra.mrb[0].mxu0 %v3529
  %v3601 = vpop.f32.mrb[0].mxu0
  %v3602 = vadd.f32 %v3505, %v3601
  %v3603 = vpop.f32.mrb[0].mxu0
  %v3604 = vpop.f32.mrb[0].mxu0
  %v3605 = vadd.f32 %v3505, %v3604
  %v3606 = vpop.f32.mrb[0].mxu0
  %3607 = vmatprep.mubr.bf16.mxu0 0
  %3608 = vmatmul.mubr.bf16.gmra.mrb[0].mxu0 %v3532
  %v3609 = vpop.f32.mrb[0].mxu0
  %v3610 = vadd.f32 %v3505, %v3609
  %v3611 = vpop.f32.mrb[0].mxu0
  %v3612 = vpop.f32.mrb[0].mxu0
  %v3613 = vadd.f32 %v3505, %v3612
  %v3614 = vpop.f32.mrb[0].mxu0
  %3615 = vmatprep.mubr.bf16.mxu0 0
  %3616 = vmatmul.mubr.bf16.gmra.mrb[0].mxu0 %v3535
  %v3617 = vpop.f32.mrb[0].mxu0
  %v3618 = vadd.f32 %v3505, %v3617
  %v3619 = vpop.f32.mrb[0].mxu0
  %v3620 = vpop.f32.mrb[0].mxu0
  %v3621 = vadd.f32 %v3505, %v3620
  %v3622 = vpop.f32.mrb[0].mxu0
  %3623 = vmatprep.mubr.bf16.mxu0 0
  %3624 = vmatmul.mubr.bf16.gmra.mrb[0].mxu0 %v3538
  %v3625 = vpop.f32.mrb[0].mxu0
  %v3626 = vadd.f32 %v3505, %v3625
  %v3627 = vpop.f32.mrb[0].mxu0
  %v3628 = vpop.f32.mrb[0].mxu0
  %v3629 = vadd.f32 %v3505, %v3628
  %v3630 = vpop.f32.mrb[0].mxu0
  %3631 = vmatprep.mubr.bf16.mxu0 0
  %3632 = vmatmul.mubr.bf16.gmra.mrb[0].mxu0 %v3541
  %v3633 = vpop.f32.mrb[0].mxu0
  %v3634 = vadd.f32 %v3505, %v3633
  %v3635 = vpop.f32.mrb[0].mxu0
  %v3636 = vpop.f32.mrb[0].mxu0
  %v3637 = vadd.f32 %v3505, %v3636
  %v3638 = vpop.f32.mrb[0].mxu0
  %3639 = vdwg.mxu0
  %3656 = vrot.lane.b32.xlu0 %v3578, 112
  %v3657 = vpop.permute.xlu0 %3656
  %3658 = vrot.lane.b32.xlu0 %v3581, 112
  %v3659 = vpop.permute.xlu0 %3658
  %3660 = vrot.lane.b32.xlu0 %v3586, 112
  %v3661 = vpop.permute.xlu0 %3660
  %3662 = vrot.lane.b32.xlu0 %v3589, 112
  %v3663 = vpop.permute.xlu0 %3662
  %3664 = vrot.lane.b32.xlu0 %v3594, 112
  %v3665 = vpop.permute.xlu0 %3664
  %3666 = vrot.lane.b32.xlu0 %v3597, 112
  %v3667 = vpop.permute.xlu0 %3666
  %3668 = vrot.lane.b32.xlu0 %v3602, 112
  %v3669 = vpop.permute.xlu0 %3668
  %3670 = vrot.lane.b32.xlu0 %v3605, 112
  %v3671 = vpop.permute.xlu0 %3670
  %3672 = vrot.lane.b32.xlu0 %v3610, 112
  %v3673 = vpop.permute.xlu0 %3672
  %3674 = vrot.lane.b32.xlu0 %v3613, 112
  %v3675 = vpop.permute.xlu0 %3674
  %3676 = vrot.lane.b32.xlu0 %v3618, 112
  %v3677 = vpop.permute.xlu0 %3676
  %3678 = vrot.lane.b32.xlu0 %v3621, 112
  %v3679 = vpop.permute.xlu0 %3678
  %3680 = vrot.lane.b32.xlu0 %v3626, 112
  %v3681 = vpop.permute.xlu0 %3680
  %3682 = vrot.lane.b32.xlu0 %v3629, 112
  %v3683 = vpop.permute.xlu0 %3682
  %3684 = vrot.lane.b32.xlu0 %v3634, 112
  %v3685 = vpop.permute.xlu0 %3684
  %3686 = vrot.lane.b32.xlu0 %v3637, 112
  %v3687 = vpop.permute.xlu0 %3686
  %v3704 = vpack.c.bf16 %v3581, %v3578
  %v3705 = vpack.c.bf16 %v3589, %v3586
  %v3706 = vpack.c.bf16 %v3597, %v3594
  %v3707 = vpack.c.bf16 %v3605, %v3602
  %v3708 = vpack.c.bf16 %v3613, %v3610
  %v3709 = vpack.c.bf16 %v3621, %v3618
  %v3710 = vpack.c.bf16 %v3629, %v3626
  %v3711 = vpack.c.bf16 %v3637, %v3634
  %v3712 = vpack.c.bf16 %v3659, %v3657
  %v3713 = vpack.c.bf16 %v3663, %v3661
  %v3714 = vpack.c.bf16 %v3667, %v3665
  %v3715 = vpack.c.bf16 %v3671, %v3669
  %v3716 = vpack.c.bf16 %v3675, %v3673
  %v3717 = vpack.c.bf16 %v3679, %v3677
  %v3718 = vpack.c.bf16 %v3683, %v3681
  %v3719 = vpack.c.bf16 %v3687, %v3685
  %3724 = vrot.lane.b32.xlu0 %v3704, 96
  %v3725 = vpop.permute.xlu0 %3724
  %3726 = vrot.lane.b32.xlu0 %v3705, 96
  %v3727 = vpop.permute.xlu0 %3726
  %3728 = vrot.lane.b32.xlu0 %v3706, 96
  %v3729 = vpop.permute.xlu0 %3728
  %3730 = vrot.lane.b32.xlu0 %v3707, 96
  %v3731 = vpop.permute.xlu0 %3730
  %v3733 = vsel %vm1062, %v3704, 0
  %v3736 = vsel %vm1062, %v3705, 0
  %v3739 = vsel %vm1062, %v3706, 0
  %v3742 = vsel %vm1062, %v3707, 0
  %v3745 = vsel %vm1062, %v3725, 0
  %v3748 = vsel %vm1062, %v3727, 0
  %v3751 = vsel %vm1062, %v3729, 0
  %v3754 = vsel %vm1062, %v3731, 0
  %3756 = vmatprep.subr.bf16.mxu0 0
  %3757 = vmatpush1.bf16.xpose.msra.mxu0 %v3745
  %3758 = vmatprep.subr.bf16.mxu0 0
  %3759 = vmatpush1.bf16.xpose.msra.mxu0 %v3748
  %3760 = vmatprep.subr.bf16.mxu0 0
  %3761 = vmatpush1.bf16.xpose.msra.mxu0 %v3751
  %3762 = vmatprep.subr.bf16.mxu0 0
  %3763 = vmatpush1.bf16.xpose.msra.mxu0 %v3754
  %3764 = vmatprep.subr.bf16.mxu0 0
  %3765 = vmatpush1.bf16.xpose.msra.mxu0 0
  %3766 = vmatprep.subr.bf16.mxu0 0
  %3767 = vmatpush1.bf16.xpose.msra.mxu0 0
  %3768 = vmatprep.subr.bf16.mxu0 0
  %3769 = vmatpush1.bf16.xpose.msra.mxu0 0
  %3770 = vmatprep.subr.bf16.mxu0 0
  %3771 = vmatpush1.bf16.xpose.msra.mxu0 0
  %3772 = vmatprep.subr.bf16.mxu0 0
  %3773 = vmatpush1.bf16.xpose.msra.mxu0 0
  %3774 = vmatprep.subr.bf16.mxu0 0
  %3775 = vmatpush1.bf16.xpose.msra.mxu0 0
  %3776 = vmatprep.subr.bf16.mxu0 0
  %3777 = vmatpush1.bf16.xpose.msra.mxu0 0
  %3778 = vmatprep.subr.bf16.mxu0 0
  %3779 = vmatpush1.bf16.xpose.msra.mxu0 0
  %3780 = vmatprep.subr.bf16.mxu0 0
  %3781 = vmatpush1.bf16.xpose.msra.mxu0 0
  %3782 = vmatprep.subr.bf16.mxu0 0
  %3783 = vmatpush1.bf16.xpose.msra.mxu0 0
  %3784 = vmatprep.subr.bf16.mxu0 0
  %3785 = vmatpush1.bf16.xpose.msra.mxu0 0
  %3786 = vmatprep.subr.bf16.mxu0 0
  %3787 = vmatpush1.bf16.xpose.msra.mxu0 0
  %3788 = vmatprep.mubr.bf16.mxu0 0
  %3789 = vmatmul.mubr.bf16.gmra.mrb[0].mxu0 %v3733
  %v3790 = vpop.f32.mrb[0].mxu0
  %v3791 = vadd.f32 0.0, %v3790
  %v3792 = vpop.f32.mrb[0].mxu0
  %v3793 = vpop.f32.mrb[0].mxu0
  %v3794 = vadd.f32 0.0, %v3793
  %v3795 = vpop.f32.mrb[0].mxu0
  %3796 = vmatprep.mubr.bf16.mxu0 0
  %3797 = vmatmul.mubr.bf16.gmra.mrb[0].mxu0 %v3736
  %v3798 = vpop.f32.mrb[0].mxu0
  %v3799 = vadd.f32 0.0, %v3798
  %v3800 = vpop.f32.mrb[0].mxu0
  %v3801 = vpop.f32.mrb[0].mxu0
  %v3802 = vadd.f32 0.0, %v3801
  %v3803 = vpop.f32.mrb[0].mxu0
  %3804 = vmatprep.mubr.bf16.mxu0 0
  %3805 = vmatmul.mubr.bf16.gmra.mrb[0].mxu0 %v3739
  %v3806 = vpop.f32.mrb[0].mxu0
  %v3807 = vadd.f32 0.0, %v3806
  %v3808 = vpop.f32.mrb[0].mxu0
  %v3809 = vpop.f32.mrb[0].mxu0
  %v3810 = vadd.f32 0.0, %v3809
  %v3811 = vpop.f32.mrb[0].mxu0
  %3812 = vmatprep.mubr.bf16.mxu0 0
  %3813 = vmatmul.mubr.bf16.gmra.mrb[0].mxu0 %v3742
  %v3814 = vpop.f32.mrb[0].mxu0
  %v3815 = vadd.f32 0.0, %v3814
  %v3816 = vpop.f32.mrb[0].mxu0
  %v3817 = vpop.f32.mrb[0].mxu0
  %v3818 = vadd.f32 0.0, %v3817
  %v3819 = vpop.f32.mrb[0].mxu0
  %3820 = vdwg.mxu0
  %3825 = vrot.lane.b32.xlu0 %v3708, 96
  %v3826 = vpop.permute.xlu0 %3825
  %3827 = vrot.lane.b32.xlu0 %v3709, 96
  %v3828 = vpop.permute.xlu0 %3827
  %3829 = vrot.lane.b32.xlu0 %v3710, 96
  %v3830 = vpop.permute.xlu0 %3829
  %3831 = vrot.lane.b32.xlu0 %v3711, 96
  %v3832 = vpop.permute.xlu0 %3831
  %v3834 = vsel %vm1062, %v3708, 0
  %v3837 = vsel %vm1062, %v3709, 0
  %v3840 = vsel %vm1062, %v3710, 0
  %v3843 = vsel %vm1062, %v3711, 0
  %v3846 = vsel %vm1062, %v3826, 0
  %v3849 = vsel %vm1062, %v3828, 0
  %v3852 = vsel %vm1062, %v3830, 0
  %v3855 = vsel %vm1062, %v3832, 0
  %3857 = vmatprep.subr.bf16.mxu0 0
  %3858 = vmatpush1.bf16.xpose.msra.mxu0 %v3846
  %3859 = vmatprep.subr.bf16.mxu0 0
  %3860 = vmatpush1.bf16.xpose.msra.mxu0 %v3849
  %3861 = vmatprep.subr.bf16.mxu0 0
  %3862 = vmatpush1.bf16.xpose.msra.mxu0 %v3852
  %3863 = vmatprep.subr.bf16.mxu0 0
  %3864 = vmatpush1.bf16.xpose.msra.mxu0 %v3855
  %3865 = vmatprep.subr.bf16.mxu0 0
  %3866 = vmatpush1.bf16.xpose.msra.mxu0 0
  %3867 = vmatprep.subr.bf16.mxu0 0
  %3868 = vmatpush1.bf16.xpose.msra.mxu0 0
  %3869 = vmatprep.subr.bf16.mxu0 0
  %3870 = vmatpush1.bf16.xpose.msra.mxu0 0
  %3871 = vmatprep.subr.bf16.mxu0 0
  %3872 = vmatpush1.bf16.xpose.msra.mxu0 0
  %3873 = vmatprep.subr.bf16.mxu0 0
  %3874 = vmatpush1.bf16.xpose.msra.mxu0 0
  %3875 = vmatprep.subr.bf16.mxu0 0
  %3876 = vmatpush1.bf16.xpose.msra.mxu0 0
  %3877 = vmatprep.subr.bf16.mxu0 0
  %3878 = vmatpush1.bf16.xpose.msra.mxu0 0
  %3879 = vmatprep.subr.bf16.mxu0 0
  %3880 = vmatpush1.bf16.xpose.msra.mxu0 0
  %3881 = vmatprep.subr.bf16.mxu0 0
  %3882 = vmatpush1.bf16.xpose.msra.mxu0 0
  %3883 = vmatprep.subr.bf16.mxu0 0
  %3884 = vmatpush1.bf16.xpose.msra.mxu0 0
  %3885 = vmatprep.subr.bf16.mxu0 0
  %3886 = vmatpush1.bf16.xpose.msra.mxu0 0
  %3887 = vmatprep.subr.bf16.mxu0 0
  %3888 = vmatpush1.bf16.xpose.msra.mxu0 0
  %3889 = vmatprep.mubr.bf16.mxu0 0
  %3890 = vmatmul.mubr.bf16.gmra.mrb[0].mxu0 %v3834
  %v3891 = vpop.f32.mrb[0].mxu0
  %v3892 = vadd.f32 0.0, %v3891
  %v3893 = vpop.f32.mrb[0].mxu0
  %v3894 = vpop.f32.mrb[0].mxu0
  %v3895 = vadd.f32 0.0, %v3894
  %v3896 = vpop.f32.mrb[0].mxu0
  %3897 = vmatprep.mubr.bf16.mxu0 0
  %3898 = vmatmul.mubr.bf16.gmra.mrb[0].mxu0 %v3837
  %v3899 = vpop.f32.mrb[0].mxu0
  %v3900 = vadd.f32 0.0, %v3899
  %v3901 = vpop.f32.mrb[0].mxu0
  %v3902 = vpop.f32.mrb[0].mxu0
  %v3903 = vadd.f32 0.0, %v3902
  %v3904 = vpop.f32.mrb[0].mxu0
  %3905 = vmatprep.mubr.bf16.mxu0 0
  %3906 = vmatmul.mubr.bf16.gmra.mrb[0].mxu0 %v3840
  %v3907 = vpop.f32.mrb[0].mxu0
  %v3908 = vadd.f32 0.0, %v3907
  %v3909 = vpop.f32.mrb[0].mxu0
  %v3910 = vpop.f32.mrb[0].mxu0
  %v3911 = vadd.f32 0.0, %v3910
  %v3912 = vpop.f32.mrb[0].mxu0
  %3913 = vmatprep.mubr.bf16.mxu0 0
  %3914 = vmatmul.mubr.bf16.gmra.mrb[0].mxu0 %v3843
  %v3915 = vpop.f32.mrb[0].mxu0
  %v3916 = vadd.f32 0.0, %v3915
  %v3917 = vpop.f32.mrb[0].mxu0
  %v3918 = vpop.f32.mrb[0].mxu0
  %v3919 = vadd.f32 0.0, %v3918
  %v3920 = vpop.f32.mrb[0].mxu0
  %3921 = vdwg.mxu0
  %3926 = vrot.lane.b32.xlu0 %v3712, 96
  %v3927 = vpop.permute.xlu0 %3926
  %3928 = vrot.lane.b32.xlu0 %v3713, 96
  %v3929 = vpop.permute.xlu0 %3928
  %3930 = vrot.lane.b32.xlu0 %v3714, 96
  %v3931 = vpop.permute.xlu0 %3930
  %3932 = vrot.lane.b32.xlu0 %v3715, 96
  %v3933 = vpop.permute.xlu0 %3932
  %v3935 = vsel %vm1062, %v3712, 0
  %v3938 = vsel %vm1062, %v3713, 0
  %v3941 = vsel %vm1062, %v3714, 0
  %v3944 = vsel %vm1062, %v3715, 0
  %v3947 = vsel %vm1062, %v3927, 0
  %v3950 = vsel %vm1062, %v3929, 0
  %v3953 = vsel %vm1062, %v3931, 0
  %v3956 = vsel %vm1062, %v3933, 0
  %3958 = vmatprep.subr.bf16.mxu0 0
  %3959 = vmatpush1.bf16.xpose.msra.mxu0 %v3947
  %3960 = vmatprep.subr.bf16.mxu0 0
  %3961 = vmatpush1.bf16.xpose.msra.mxu0 %v3950
  %3962 = vmatprep.subr.bf16.mxu0 0
  %3963 = vmatpush1.bf16.xpose.msra.mxu0 %v3953
  %3964 = vmatprep.subr.bf16.mxu0 0
  %3965 = vmatpush1.bf16.xpose.msra.mxu0 %v3956
  %3966 = vmatprep.subr.bf16.mxu0 0
  %3967 = vmatpush1.bf16.xpose.msra.mxu0 0
  %3968 = vmatprep.subr.bf16.mxu0 0
  %3969 = vmatpush1.bf16.xpose.msra.mxu0 0
  %3970 = vmatprep.subr.bf16.mxu0 0
  %3971 = vmatpush1.bf16.xpose.msra.mxu0 0
  %3972 = vmatprep.subr.bf16.mxu0 0
  %3973 = vmatpush1.bf16.xpose.msra.mxu0 0
  %3974 = vmatprep.subr.bf16.mxu0 0
  %3975 = vmatpush1.bf16.xpose.msra.mxu0 0
  %3976 = vmatprep.subr.bf16.mxu0 0
  %3977 = vmatpush1.bf16.xpose.msra.mxu0 0
  %3978 = vmatprep.subr.bf16.mxu0 0
  %3979 = vmatpush1.bf16.xpose.msra.mxu0 0
  %3980 = vmatprep.subr.bf16.mxu0 0
  %3981 = vmatpush1.bf16.xpose.msra.mxu0 0
  %3982 = vmatprep.subr.bf16.mxu0 0
  %3983 = vmatpush1.bf16.xpose.msra.mxu0 0
  %3984 = vmatprep.subr.bf16.mxu0 0
  %3985 = vmatpush1.bf16.xpose.msra.mxu0 0
  %3986 = vmatprep.subr.bf16.mxu0 0
  %3987 = vmatpush1.bf16.xpose.msra.mxu0 0
  %3988 = vmatprep.subr.bf16.mxu0 0
  %3989 = vmatpush1.bf16.xpose.msra.mxu0 0
  %3990 = vmatprep.mubr.bf16.mxu0 0
  %3991 = vmatmul.mubr.bf16.gmra.mrb[0].mxu0 %v3935
  %v3992 = vpop.f32.mrb[0].mxu0
  %v3993 = vadd.f32 0.0, %v3992
  %v3994 = vpop.f32.mrb[0].mxu0
  %v3995 = vpop.f32.mrb[0].mxu0
  %v3996 = vadd.f32 0.0, %v3995
  %v3997 = vpop.f32.mrb[0].mxu0
  %3998 = vmatprep.mubr.bf16.mxu0 0
  %3999 = vmatmul.mubr.bf16.gmra.mrb[0].mxu0 %v3938
  %v4000 = vpop.f32.mrb[0].mxu0
  %v4001 = vadd.f32 0.0, %v4000
  %v4002 = vpop.f32.mrb[0].mxu0
  %v4003 = vpop.f32.mrb[0].mxu0
  %v4004 = vadd.f32 0.0, %v4003
  %v4005 = vpop.f32.mrb[0].mxu0
  %4006 = vmatprep.mubr.bf16.mxu0 0
  %4007 = vmatmul.mubr.bf16.gmra.mrb[0].mxu0 %v3941
  %v4008 = vpop.f32.mrb[0].mxu0
  %v4009 = vadd.f32 0.0, %v4008
  %v4010 = vpop.f32.mrb[0].mxu0
  %v4011 = vpop.f32.mrb[0].mxu0
  %v4012 = vadd.f32 0.0, %v4011
  %v4013 = vpop.f32.mrb[0].mxu0
  %4014 = vmatprep.mubr.bf16.mxu0 0
  %4015 = vmatmul.mubr.bf16.gmra.mrb[0].mxu0 %v3944
  %v4016 = vpop.f32.mrb[0].mxu0
  %v4017 = vadd.f32 0.0, %v4016
  %v4018 = vpop.f32.mrb[0].mxu0
  %v4019 = vpop.f32.mrb[0].mxu0
  %v4020 = vadd.f32 0.0, %v4019
  %v4021 = vpop.f32.mrb[0].mxu0
  %4022 = vdwg.mxu0
  %4027 = vrot.lane.b32.xlu0 %v3716, 96
  %v4028 = vpop.permute.xlu0 %4027
  %4029 = vrot.lane.b32.xlu0 %v3717, 96
  %v4030 = vpop.permute.xlu0 %4029
  %4031 = vrot.lane.b32.xlu0 %v3718, 96
  %v4032 = vpop.permute.xlu0 %4031
  %4033 = vrot.lane.b32.xlu0 %v3719, 96
  %v4034 = vpop.permute.xlu0 %4033
  %v4036 = vsel %vm1062, %v3716, 0
  %v4039 = vsel %vm1062, %v3717, 0
  %v4042 = vsel %vm1062, %v3718, 0
  %v4045 = vsel %vm1062, %v3719, 0
  %v4048 = vsel %vm1062, %v4028, 0
  %v4051 = vsel %vm1062, %v4030, 0
  %v4054 = vsel %vm1062, %v4032, 0
  %v4057 = vsel %vm1062, %v4034, 0
  %4059 = vmatprep.subr.bf16.mxu0 0
  %4060 = vmatpush1.bf16.xpose.msra.mxu0 %v4048
  %4061 = vmatprep.subr.bf16.mxu0 0
  %4062 = vmatpush1.bf16.xpose.msra.mxu0 %v4051
  %4063 = vmatprep.subr.bf16.mxu0 0
  %4064 = vmatpush1.bf16.xpose.msra.mxu0 %v4054
  %4065 = vmatprep.subr.bf16.mxu0 0
  %4066 = vmatpush1.bf16.xpose.msra.mxu0 %v4057
  %4067 = vmatprep.subr.bf16.mxu0 0
  %4068 = vmatpush1.bf16.xpose.msra.mxu0 0
  %4069 = vmatprep.subr.bf16.mxu0 0
  %4070 = vmatpush1.bf16.xpose.msra.mxu0 0
  %4071 = vmatprep.subr.bf16.mxu0 0
  %4072 = vmatpush1.bf16.xpose.msra.mxu0 0
  %4073 = vmatprep.subr.bf16.mxu0 0
  %4074 = vmatpush1.bf16.xpose.msra.mxu0 0
  %4075 = vmatprep.subr.bf16.mxu0 0
  %4076 = vmatpush1.bf16.xpose.msra.mxu0 0
  %4077 = vmatprep.subr.bf16.mxu0 0
  %4078 = vmatpush1.bf16.xpose.msra.mxu0 0
  %4079 = vmatprep.subr.bf16.mxu0 0
  %4080 = vmatpush1.bf16.xpose.msra.mxu0 0
  %4081 = vmatprep.subr.bf16.mxu0 0
  %4082 = vmatpush1.bf16.xpose.msra.mxu0 0
  %4083 = vmatprep.subr.bf16.mxu0 0
  %4084 = vmatpush1.bf16.xpose.msra.mxu0 0
  %4085 = vmatprep.subr.bf16.mxu0 0
  %4086 = vmatpush1.bf16.xpose.msra.mxu0 0
  %4087 = vmatprep.subr.bf16.mxu0 0
  %4088 = vmatpush1.bf16.xpose.msra.mxu0 0
  %4089 = vmatprep.subr.bf16.mxu0 0
  %4090 = vmatpush1.bf16.xpose.msra.mxu0 0
  %4091 = vmatprep.mubr.bf16.mxu0 0
  %4092 = vmatmul.mubr.bf16.gmra.mrb[0].mxu0 %v4036
  %v4093 = vpop.f32.mrb[0].mxu0
  %v4094 = vadd.f32 0.0, %v4093
  %v4095 = vpop.f32.mrb[0].mxu0
  %v4096 = vpop.f32.mrb[0].mxu0
  %v4097 = vadd.f32 0.0, %v4096
  %v4098 = vpop.f32.mrb[0].mxu0
  %4099 = vmatprep.mubr.bf16.mxu0 0
  %4100 = vmatmul.mubr.bf16.gmra.mrb[0].mxu0 %v4039
  %v4101 = vpop.f32.mrb[0].mxu0
  %v4102 = vadd.f32 0.0, %v4101
  %v4103 = vpop.f32.mrb[0].mxu0
  %v4104 = vpop.f32.mrb[0].mxu0
  %v4105 = vadd.f32 0.0, %v4104
  %v4106 = vpop.f32.mrb[0].mxu0
  %4107 = vmatprep.mubr.bf16.mxu0 0
  %4108 = vmatmul.mubr.bf16.gmra.mrb[0].mxu0 %v4042
  %v4109 = vpop.f32.mrb[0].mxu0
  %v4110 = vadd.f32 0.0, %v4109
  %v4111 = vpop.f32.mrb[0].mxu0
  %v4112 = vpop.f32.mrb[0].mxu0
  %v4113 = vadd.f32 0.0, %v4112
  %v4114 = vpop.f32.mrb[0].mxu0
  %4115 = vmatprep.mubr.bf16.mxu0 0
  %4116 = vmatmul.mubr.bf16.gmra.mrb[0].mxu0 %v4045
  %v4117 = vpop.f32.mrb[0].mxu0
  %v4118 = vadd.f32 0.0, %v4117
  %v4119 = vpop.f32.mrb[0].mxu0
  %v4120 = vpop.f32.mrb[0].mxu0
  %v4121 = vadd.f32 0.0, %v4120
  %v4122 = vpop.f32.mrb[0].mxu0
  %4123 = vdwg.mxu0
  %v4124 = vld [vmem:[%s45] sm:$0xff]
  %v4125 = vld [vmem:[%s45 + $0x8] sm:$0xff]
  %v4126 = vld [vmem:[%s45 + $0x10] sm:$0xff]
  %v4127 = vld [vmem:[%s45 + $0x18] sm:$0xff]
  %v4128 = vld [vmem:[%s45 + $0x20] sm:$0xff]
  %v4129 = vld [vmem:[%s45 + $0x28] sm:$0xff]
  %v4130 = vld [vmem:[%s45 + $0x30] sm:$0xff]
  %v4131 = vld [vmem:[%s45 + $0x38] sm:$0xff]
  %v4132 = vld [vmem:[%s45 + $0x40] sm:$0xff]
  %v4133 = vld [vmem:[%s45 + $0x48] sm:$0xff]
  %v4134 = vld [vmem:[%s45 + $0x50] sm:$0xff]
  %v4135 = vld [vmem:[%s45 + $0x58] sm:$0xff]
  %v4136 = vld [vmem:[%s45 + $0x60] sm:$0xff]
  %v4137 = vld [vmem:[%s45 + $0x68] sm:$0xff]
  %v4138 = vld [vmem:[%s45 + $0x70] sm:$0xff]
  %v4139 = vld [vmem:[%s45 + $0x78] sm:$0xff]
  %v4140 = vadd.f32 %v3791, %v4124
  %v4141 = vadd.f32 %v3794, %v4125
  %v4142 = vadd.f32 %v3799, %v4126
  %v4143 = vadd.f32 %v3802, %v4127
  %v4144 = vadd.f32 %v3807, %v4128
  %v4145 = vadd.f32 %v3810, %v4129
  %v4146 = vadd.f32 %v3815, %v4130
  %v4147 = vadd.f32 %v3818, %v4131
  %v4148 = vadd.f32 %v3892, %v4124
  %v4149 = vadd.f32 %v3895, %v4125
  %v4150 = vadd.f32 %v3900, %v4126
  %v4151 = vadd.f32 %v3903, %v4127
  %v4152 = vadd.f32 %v3908, %v4128
  %v4153 = vadd.f32 %v3911, %v4129
  %v4154 = vadd.f32 %v3916, %v4130
  %v4155 = vadd.f32 %v3919, %v4131
  %v4156 = vadd.f32 %v3993, %v4132
  %v4157 = vadd.f32 %v3996, %v4133
  %v4158 = vadd.f32 %v4001, %v4134
  %v4159 = vadd.f32 %v4004, %v4135
  %v4160 = vadd.f32 %v4009, %v4136
  %v4161 = vadd.f32 %v4012, %v4137
  %v4162 = vadd.f32 %v4017, %v4138
  %v4163 = vadd.f32 %v4020, %v4139
  %v4164 = vadd.f32 %v4094, %v4132
  %v4165 = vadd.f32 %v4097, %v4133
  %v4166 = vadd.f32 %v4102, %v4134
  %v4167 = vadd.f32 %v4105, %v4135
  %v4168 = vadd.f32 %v4110, %v4136
  %v4169 = vadd.f32 %v4113, %v4137
  %v4170 = vadd.f32 %v4118, %v4138
  %v4171 = vadd.f32 %v4121, %v4139
  %v4172 = vsel %vm1503, %v4140, -inf
  %4173 = vmax.xlane.f32.xlu0 %v4172
  %v4174 = vpop.xlane.xlu0 %4173
  %v4175 = vsel %vm1503, %v4141, -inf
  %4176 = vmax.xlane.f32.xlu0 %v4175
  %v4177 = vpop.xlane.xlu0 %4176
  %v4178 = vsel %vm1503, %v4142, -inf
  %4179 = vmax.xlane.f32.xlu0 %v4178
  %v4180 = vpop.xlane.xlu0 %4179
  %v4181 = vsel %vm1503, %v4143, -inf
  %4182 = vmax.xlane.f32.xlu0 %v4181
  %v4183 = vpop.xlane.xlu0 %4182
  %v4184 = vsel %vm1503, %v4144, -inf
  %4185 = vmax.xlane.f32.xlu0 %v4184
  %v4186 = vpop.xlane.xlu0 %4185
  %v4187 = vsel %vm1503, %v4145, -inf
  %4188 = vmax.xlane.f32.xlu0 %v4187
  %v4189 = vpop.xlane.xlu0 %4188
  %v4190 = vsel %vm1503, %v4146, -inf
  %4191 = vmax.xlane.f32.xlu0 %v4190
  %v4192 = vpop.xlane.xlu0 %4191
  %v4193 = vsel %vm1503, %v4147, -inf
  %4194 = vmax.xlane.f32.xlu0 %v4193
  %v4195 = vpop.xlane.xlu0 %4194
  %v4196 = vsel %vm1503, %v4148, -inf
  %4197 = vmax.xlane.f32.xlu0 %v4196
  %v4198 = vpop.xlane.xlu0 %4197
  %v4199 = vsel %vm1503, %v4149, -inf
  %4200 = vmax.xlane.f32.xlu0 %v4199
  %v4201 = vpop.xlane.xlu0 %4200
  %v4202 = vsel %vm1503, %v4150, -inf
  %4203 = vmax.xlane.f32.xlu0 %v4202
  %v4204 = vpop.xlane.xlu0 %4203
  %v4205 = vsel %vm1503, %v4151, -inf
  %4206 = vmax.xlane.f32.xlu0 %v4205
  %v4207 = vpop.xlane.xlu0 %4206
  %v4208 = vsel %vm1503, %v4152, -inf
  %4209 = vmax.xlane.f32.xlu0 %v4208
  %v4210 = vpop.xlane.xlu0 %4209
  %v4211 = vsel %vm1503, %v4153, -inf
  %4212 = vmax.xlane.f32.xlu0 %v4211
  %v4213 = vpop.xlane.xlu0 %4212
  %v4214 = vsel %vm1503, %v4154, -inf
  %4215 = vmax.xlane.f32.xlu0 %v4214
  %v4216 = vpop.xlane.xlu0 %4215
  %v4217 = vsel %vm1503, %v4155, -inf
  %4218 = vmax.xlane.f32.xlu0 %v4217
  %v4219 = vpop.xlane.xlu0 %4218
  %v4220 = vsel %vm1503, %v4156, -inf
  %4221 = vmax.xlane.f32.xlu0 %v4220
  %v4222 = vpop.xlane.xlu0 %4221
  %v4223 = vsel %vm1503, %v4157, -inf
  %4224 = vmax.xlane.f32.xlu0 %v4223
  %v4225 = vpop.xlane.xlu0 %4224
  %v4226 = vsel %vm1503, %v4158, -inf
  %4227 = vmax.xlane.f32.xlu0 %v4226
  %v4228 = vpop.xlane.xlu0 %4227
  %v4229 = vsel %vm1503, %v4159, -inf
  %4230 = vmax.xlane.f32.xlu0 %v4229
  %v4231 = vpop.xlane.xlu0 %4230
  %v4232 = vsel %vm1503, %v4160, -inf
  %4233 = vmax.xlane.f32.xlu0 %v4232
  %v4234 = vpop.xlane.xlu0 %4233
  %v4235 = vsel %vm1503, %v4161, -inf
  %4236 = vmax.xlane.f32.xlu0 %v4235
  %v4237 = vpop.xlane.xlu0 %4236
  %v4238 = vsel %vm1503, %v4162, -inf
  %4239 = vmax.xlane.f32.xlu0 %v4238
  %v4240 = vpop.xlane.xlu0 %4239
  %v4241 = vsel %vm1503, %v4163, -inf
  %4242 = vmax.xlane.f32.xlu0 %v4241
  %v4243 = vpop.xlane.xlu0 %4242
  %v4244 = vsel %vm1503, %v4164, -inf
  %4245 = vmax.xlane.f32.xlu0 %v4244
  %v4246 = vpop.xlane.xlu0 %4245
  %v4247 = vsel %vm1503, %v4165, -inf
  %4248 = vmax.xlane.f32.xlu0 %v4247
  %v4249 = vpop.xlane.xlu0 %4248
  %v4250 = vsel %vm1503, %v4166, -inf
  %4251 = vmax.xlane.f32.xlu0 %v4250
  %v4252 = vpop.xlane.xlu0 %4251
  %v4253 = vsel %vm1503, %v4167, -inf
  %4254 = vmax.xlane.f32.xlu0 %v4253
  %v4255 = vpop.xlane.xlu0 %4254
  %v4256 = vsel %vm1503, %v4168, -inf
  %4257 = vmax.xlane.f32.xlu0 %v4256
  %v4258 = vpop.xlane.xlu0 %4257
  %v4259 = vsel %vm1503, %v4169, -inf
  %4260 = vmax.xlane.f32.xlu0 %v4259
  %v4261 = vpop.xlane.xlu0 %4260
  %v4262 = vsel %vm1503, %v4170, -inf
  %4263 = vmax.xlane.f32.xlu0 %v4262
  %v4264 = vpop.xlane.xlu0 %4263
  %v4265 = vsel %vm1503, %v4171, -inf
  %4266 = vmax.xlane.f32.xlu0 %v4265
  %v4267 = vpop.xlane.xlu0 %4266
  %v4268 = vsub.f32 %v4140, %v4174
  %v4269 = vsub.f32 %v4141, %v4177
  %v4270 = vsub.f32 %v4142, %v4180
  %v4271 = vsub.f32 %v4143, %v4183
  %v4272 = vsub.f32 %v4144, %v4186
  %v4273 = vsub.f32 %v4145, %v4189
  %v4274 = vsub.f32 %v4146, %v4192
  %v4275 = vsub.f32 %v4147, %v4195
  %v4276 = vsub.f32 %v4148, %v4198
  %v4277 = vsub.f32 %v4149, %v4201
  %v4278 = vsub.f32 %v4150, %v4204
  %v4279 = vsub.f32 %v4151, %v4207
  %v4280 = vsub.f32 %v4152, %v4210
  %v4281 = vsub.f32 %v4153, %v4213
  %v4282 = vsub.f32 %v4154, %v4216
  %v4283 = vsub.f32 %v4155, %v4219
  %v4284 = vsub.f32 %v4156, %v4222
  %v4285 = vsub.f32 %v4157, %v4225
  %v4286 = vsub.f32 %v4158, %v4228
  %v4287 = vsub.f32 %v4159, %v4231
  %v4288 = vsub.f32 %v4160, %v4234
  %v4289 = vsub.f32 %v4161, %v4237
  %v4290 = vsub.f32 %v4162, %v4240
  %v4291 = vsub.f32 %v4163, %v4243
  %v4292 = vsub.f32 %v4164, %v4246
  %v4293 = vsub.f32 %v4165, %v4249
  %v4294 = vsub.f32 %v4166, %v4252
  %v4295 = vsub.f32 %v4167, %v4255
  %v4296 = vsub.f32 %v4168, %v4258
  %v4297 = vsub.f32 %v4169, %v4261
  %v4298 = vsub.f32 %v4170, %v4264
  %v4299 = vsub.f32 %v4171, %v4267
  %v4300 = vmul.f32 %v4268, 1.442695
  %v4301 = vpow.pop %v4300
  %v4302 = vmul.f32 %v4269, 1.442695
  %v4303 = vpow.pop %v4302
  %v4304 = vmul.f32 %v4270, 1.442695
  %v4305 = vpow.pop %v4304
  %v4306 = vmul.f32 %v4271, 1.442695
  %v4307 = vpow.pop %v4306
  %v4308 = vmul.f32 %v4272, 1.442695
  %v4309 = vpow.pop %v4308
  %v4310 = vmul.f32 %v4273, 1.442695
  %v4311 = vpow.pop %v4310
  %v4312 = vmul.f32 %v4274, 1.442695
  %v4313 = vpow.pop %v4312
  %v4314 = vmul.f32 %v4275, 1.442695
  %v4315 = vpow.pop %v4314
  %v4316 = vmul.f32 %v4276, 1.442695
  %v4317 = vpow.pop %v4316
  %v4318 = vmul.f32 %v4277, 1.442695
  %v4319 = vpow.pop %v4318
  %v4320 = vmul.f32 %v4278, 1.442695
  %v4321 = vpow.pop %v4320
  %v4322 = vmul.f32 %v4279, 1.442695
  %v4323 = vpow.pop %v4322
  %v4324 = vmul.f32 %v4280, 1.442695
  %v4325 = vpow.pop %v4324
  %v4326 = vmul.f32 %v4281, 1.442695
  %v4327 = vpow.pop %v4326
  %v4328 = vmul.f32 %v4282, 1.442695
  %v4329 = vpow.pop %v4328
  %v4330 = vmul.f32 %v4283, 1.442695
  %v4331 = vpow.pop %v4330
  %v4332 = vmul.f32 %v4284, 1.442695
  %v4333 = vpow.pop %v4332
  %v4334 = vmul.f32 %v4285, 1.442695
  %v4335 = vpow.pop %v4334
  %v4336 = vmul.f32 %v4286, 1.442695
  %v4337 = vpow.pop %v4336
  %v4338 = vmul.f32 %v4287, 1.442695
  %v4339 = vpow.pop %v4338
  %v4340 = vmul.f32 %v4288, 1.442695
  %v4341 = vpow.pop %v4340
  %v4342 = vmul.f32 %v4289, 1.442695
  %v4343 = vpow.pop %v4342
  %v4344 = vmul.f32 %v4290, 1.442695
  %v4345 = vpow.pop %v4344
  %v4346 = vmul.f32 %v4291, 1.442695
  %v4347 = vpow.pop %v4346
  %v4348 = vmul.f32 %v4292, 1.442695
  %v4349 = vpow.pop %v4348
  %v4350 = vmul.f32 %v4293, 1.442695
  %v4351 = vpow.pop %v4350
  %v4352 = vmul.f32 %v4294, 1.442695
  %v4353 = vpow.pop %v4352
  %v4354 = vmul.f32 %v4295, 1.442695
  %v4355 = vpow.pop %v4354
  %v4356 = vmul.f32 %v4296, 1.442695
  %v4357 = vpow.pop %v4356
  %v4358 = vmul.f32 %v4297, 1.442695
  %v4359 = vpow.pop %v4358
  %v4360 = vmul.f32 %v4298, 1.442695
  %v4361 = vpow.pop %v4360
  %v4362 = vmul.f32 %v4299, 1.442695
  %v4363 = vpow.pop %v4362
  %v4364 = vsel %vm1503, %v4301, 0.0
  %4365 = vadd.xlane.f32.xlu0 %v4364
  %v4366 = vpop.xlane.xlu0 %4365
  %v4367 = vsel %vm1503, %v4303, 0.0
  %4368 = vadd.xlane.f32.xlu0 %v4367
  %v4369 = vpop.xlane.xlu0 %4368
  %v4370 = vsel %vm1503, %v4305, 0.0
  %4371 = vadd.xlane.f32.xlu0 %v4370
  %v4372 = vpop.xlane.xlu0 %4371
  %v4373 = vsel %vm1503, %v4307, 0.0
  %4374 = vadd.xlane.f32.xlu0 %v4373
  %v4375 = vpop.xlane.xlu0 %4374
  %v4376 = vsel %vm1503, %v4309, 0.0
  %4377 = vadd.xlane.f32.xlu0 %v4376
  %v4378 = vpop.xlane.xlu0 %4377
  %v4379 = vsel %vm1503, %v4311, 0.0
  %4380 = vadd.xlane.f32.xlu0 %v4379
  %v4381 = vpop.xlane.xlu0 %4380
  %v4382 = vsel %vm1503, %v4313, 0.0
  %4383 = vadd.xlane.f32.xlu0 %v4382
  %v4384 = vpop.xlane.xlu0 %4383
  %v4385 = vsel %vm1503, %v4315, 0.0
  %4386 = vadd.xlane.f32.xlu0 %v4385
  %v4387 = vpop.xlane.xlu0 %4386
  %v4388 = vsel %vm1503, %v4317, 0.0
  %4389 = vadd.xlane.f32.xlu0 %v4388
  %v4390 = vpop.xlane.xlu0 %4389
  %v4391 = vsel %vm1503, %v4319, 0.0
  %4392 = vadd.xlane.f32.xlu0 %v4391
  %v4393 = vpop.xlane.xlu0 %4392
  %v4394 = vsel %vm1503, %v4321, 0.0
  %4395 = vadd.xlane.f32.xlu0 %v4394
  %v4396 = vpop.xlane.xlu0 %4395
  %v4397 = vsel %vm1503, %v4323, 0.0
  %4398 = vadd.xlane.f32.xlu0 %v4397
  %v4399 = vpop.xlane.xlu0 %4398
  %v4400 = vsel %vm1503, %v4325, 0.0
  %4401 = vadd.xlane.f32.xlu0 %v4400
  %v4402 = vpop.xlane.xlu0 %4401
  %v4403 = vsel %vm1503, %v4327, 0.0
  %4404 = vadd.xlane.f32.xlu0 %v4403
  %v4405 = vpop.xlane.xlu0 %4404
  %v4406 = vsel %vm1503, %v4329, 0.0
  %4407 = vadd.xlane.f32.xlu0 %v4406
  %v4408 = vpop.xlane.xlu0 %4407
  %v4409 = vsel %vm1503, %v4331, 0.0
  %4410 = vadd.xlane.f32.xlu0 %v4409
  %v4411 = vpop.xlane.xlu0 %4410
  %v4412 = vsel %vm1503, %v4333, 0.0
  %4413 = vadd.xlane.f32.xlu0 %v4412
  %v4414 = vpop.xlane.xlu0 %4413
  %v4415 = vsel %vm1503, %v4335, 0.0
  %4416 = vadd.xlane.f32.xlu0 %v4415
  %v4417 = vpop.xlane.xlu0 %4416
  %v4418 = vsel %vm1503, %v4337, 0.0
  %4419 = vadd.xlane.f32.xlu0 %v4418
  %v4420 = vpop.xlane.xlu0 %4419
  %v4421 = vsel %vm1503, %v4339, 0.0
  %4422 = vadd.xlane.f32.xlu0 %v4421
  %v4423 = vpop.xlane.xlu0 %4422
  %v4424 = vsel %vm1503, %v4341, 0.0
  %4425 = vadd.xlane.f32.xlu0 %v4424
  %v4426 = vpop.xlane.xlu0 %4425
  %v4427 = vsel %vm1503, %v4343, 0.0
  %4428 = vadd.xlane.f32.xlu0 %v4427
  %v4429 = vpop.xlane.xlu0 %4428
  %v4430 = vsel %vm1503, %v4345, 0.0
  %4431 = vadd.xlane.f32.xlu0 %v4430
  %v4432 = vpop.xlane.xlu0 %4431
  %v4433 = vsel %vm1503, %v4347, 0.0
  %4434 = vadd.xlane.f32.xlu0 %v4433
  %v4435 = vpop.xlane.xlu0 %4434
  %v4436 = vsel %vm1503, %v4349, 0.0
  %4437 = vadd.xlane.f32.xlu0 %v4436
  %v4438 = vpop.xlane.xlu0 %4437
  %v4439 = vsel %vm1503, %v4351, 0.0
  %4440 = vadd.xlane.f32.xlu0 %v4439
  %v4441 = vpop.xlane.xlu0 %4440
  %v4442 = vsel %vm1503, %v4353, 0.0
  %4443 = vadd.xlane.f32.xlu0 %v4442
  %v4444 = vpop.xlane.xlu0 %4443
  %v4445 = vsel %vm1503, %v4355, 0.0
  %4446 = vadd.xlane.f32.xlu0 %v4445
  %v4447 = vpop.xlane.xlu0 %4446
  %v4448 = vsel %vm1503, %v4357, 0.0
  %4449 = vadd.xlane.f32.xlu0 %v4448
  %v4450 = vpop.xlane.xlu0 %4449
  %v4451 = vsel %vm1503, %v4359, 0.0
  %4452 = vadd.xlane.f32.xlu0 %v4451
  %v4453 = vpop.xlane.xlu0 %4452
  %v4454 = vsel %vm1503, %v4361, 0.0
  %4455 = vadd.xlane.f32.xlu0 %v4454
  %v4456 = vpop.xlane.xlu0 %4455
  %v4457 = vsel %vm1503, %v4363, 0.0
  %4458 = vadd.xlane.f32.xlu0 %v4457
  %v4459 = vpop.xlane.xlu0 %4458
  %v4460 = vrcp.pop %v4366
  %v4461 = vrcp.pop %v4369
  %v4462 = vrcp.pop %v4372
  %v4463 = vrcp.pop %v4375
  %v4464 = vrcp.pop %v4378
  %v4465 = vrcp.pop %v4381
  %v4466 = vrcp.pop %v4384
  %v4467 = vrcp.pop %v4387
  %v4468 = vrcp.pop %v4390
  %v4469 = vrcp.pop %v4393
  %v4470 = vrcp.pop %v4396
  %v4471 = vrcp.pop %v4399
  %v4472 = vrcp.pop %v4402
  %v4473 = vrcp.pop %v4405
  %v4474 = vrcp.pop %v4408
  %v4475 = vrcp.pop %v4411
  %v4476 = vrcp.pop %v4414
  %v4477 = vrcp.pop %v4417
  %v4478 = vrcp.pop %v4420
  %v4479 = vrcp.pop %v4423
  %v4480 = vrcp.pop %v4426
  %v4481 = vrcp.pop %v4429
  %v4482 = vrcp.pop %v4432
  %v4483 = vrcp.pop %v4435
  %v4484 = vrcp.pop %v4438
  %v4485 = vrcp.pop %v4441
  %v4486 = vrcp.pop %v4444
  %v4487 = vrcp.pop %v4447
  %v4488 = vrcp.pop %v4450
  %v4489 = vrcp.pop %v4453
  %v4490 = vrcp.pop %v4456
  %v4491 = vrcp.pop %v4459
  %v4492 = vmul.f32 %v4301, %v4460
  %v4493 = vmul.f32 %v4303, %v4461
  %v4494 = vmul.f32 %v4305, %v4462
  %v4495 = vmul.f32 %v4307, %v4463
  %v4496 = vmul.f32 %v4309, %v4464
  %v4497 = vmul.f32 %v4311, %v4465
  %v4498 = vmul.f32 %v4313, %v4466
  %v4499 = vmul.f32 %v4315, %v4467
  %v4500 = vmul.f32 %v4317, %v4468
  %v4501 = vmul.f32 %v4319, %v4469
  %v4502 = vmul.f32 %v4321, %v4470
  %v4503 = vmul.f32 %v4323, %v4471
  %v4504 = vmul.f32 %v4325, %v4472
  %v4505 = vmul.f32 %v4327, %v4473
  %v4506 = vmul.f32 %v4329, %v4474
  %v4507 = vmul.f32 %v4331, %v4475
  %v4508 = vmul.f32 %v4333, %v4476
  %v4509 = vmul.f32 %v4335, %v4477
  %v4510 = vmul.f32 %v4337, %v4478
  %v4511 = vmul.f32 %v4339, %v4479
  %v4512 = vmul.f32 %v4341, %v4480
  %v4513 = vmul.f32 %v4343, %v4481
  %v4514 = vmul.f32 %v4345, %v4482
  %v4515 = vmul.f32 %v4347, %v4483
  %v4516 = vmul.f32 %v4349, %v4484
  %v4517 = vmul.f32 %v4351, %v4485
  %v4518 = vmul.f32 %v4353, %v4486
  %v4519 = vmul.f32 %v4355, %v4487
  %v4520 = vmul.f32 %v4357, %v4488
  %v4521 = vmul.f32 %v4359, %v4489
  %v4522 = vmul.f32 %v4361, %v4490
  %v4523 = vmul.f32 %v4363, %v4491
  %v4524 = vpack.c.bf16 %v4493, %v4492
  %v4525 = vpack.c.bf16 %v4495, %v4494
  %v4526 = vpack.c.bf16 %v4497, %v4496
  %v4527 = vpack.c.bf16 %v4499, %v4498
  %v4528 = vpack.c.bf16 %v4501, %v4500
  %v4529 = vpack.c.bf16 %v4503, %v4502
  %v4530 = vpack.c.bf16 %v4505, %v4504
  %v4531 = vpack.c.bf16 %v4507, %v4506
  %v4532 = vpack.c.bf16 %v4509, %v4508
  %v4533 = vpack.c.bf16 %v4511, %v4510
  %v4534 = vpack.c.bf16 %v4513, %v4512
  %v4535 = vpack.c.bf16 %v4515, %v4514
  %v4536 = vpack.c.bf16 %v4517, %v4516
  %v4537 = vpack.c.bf16 %v4519, %v4518
  %v4538 = vpack.c.bf16 %v4521, %v4520
  %v4539 = vpack.c.bf16 %v4523, %v4522
  %4540 = vrot.lane.b32.xlu0 %v3704, 64
  %v4541 = vpop.permute.xlu0 %4540
  %4542 = vrot.lane.b32.xlu0 %v3705, 64
  %v4543 = vpop.permute.xlu0 %4542
  %4544 = vrot.lane.b32.xlu0 %v3706, 64
  %v4545 = vpop.permute.xlu0 %4544
  %4546 = vrot.lane.b32.xlu0 %v3707, 64
  %v4547 = vpop.permute.xlu0 %4546
  %v4553 = vsel %vm1503, %v4524, 0
  %v4556 = vsel %vm1503, %v4525, 0
  %v4559 = vsel %vm1503, %v4526, 0
  %v4562 = vsel %vm1503, %v4527, 0
  %4564 = vmatprep.subr.bf16.mxu0 0
  %4565 = vmatpush1.bf16.msra.mxu0 %v4541
  %4566 = vmatprep.subr.bf16.mxu0 0
  %4567 = vmatpush1.bf16.msra.mxu0 %v4543
  %4568 = vmatprep.subr.bf16.mxu0 0
  %4569 = vmatpush1.bf16.msra.mxu0 %v4545
  %4570 = vmatprep.subr.bf16.mxu0 0
  %4571 = vmatpush1.bf16.msra.mxu0 %v4547
  %4572 = vmatprep.subr.bf16.mxu0 0
  %4573 = vmatpush1.bf16.msra.mxu0 0
  %4574 = vmatprep.subr.bf16.mxu0 0
  %4575 = vmatpush1.bf16.msra.mxu0 0
  %4576 = vmatprep.subr.bf16.mxu0 0
  %4577 = vmatpush1.bf16.msra.mxu0 0
  %4578 = vmatprep.subr.bf16.mxu0 0
  %4579 = vmatpush1.bf16.msra.mxu0 0
  %4580 = vmatprep.subr.bf16.mxu0 0
  %4581 = vmatpush1.bf16.msra.mxu0 0
  %4582 = vmatprep.subr.bf16.mxu0 0
  %4583 = vmatpush1.bf16.msra.mxu0 0
  %4584 = vmatprep.subr.bf16.mxu0 0
  %4585 = vmatpush1.bf16.msra.mxu0 0
  %4586 = vmatprep.subr.bf16.mxu0 0
  %4587 = vmatpush1.bf16.msra.mxu0 0
  %4588 = vmatprep.subr.bf16.mxu0 0
  %4589 = vmatpush1.bf16.msra.mxu0 0
  %4590 = vmatprep.subr.bf16.mxu0 0
  %4591 = vmatpush1.bf16.msra.mxu0 0
  %4592 = vmatprep.subr.bf16.mxu0 0
  %4593 = vmatpush1.bf16.msra.mxu0 0
  %4594 = vmatprep.subr.bf16.mxu0 0
  %4595 = vmatpush1.bf16.msra.mxu0 0
  %4596 = vmatprep.mubr.bf16.mxu0 0
  %4597 = vmatmul.mubr.bf16.gmra.mrb[0].mxu0 %v4553
  %v4598 = vpop.f32.mrb[0].mxu0
  %v4599 = vadd.f32 0.0, %v4598
  %v4600 = vpop.f32.mrb[0].mxu0
  %v4601 = vpop.f32.mrb[0].mxu0
  %v4602 = vadd.f32 0.0, %v4601
  %v4603 = vpop.f32.mrb[0].mxu0
  %4604 = vmatprep.mubr.bf16.mxu0 0
  %4605 = vmatmul.mubr.bf16.gmra.mrb[0].mxu0 %v4556
  %v4606 = vpop.f32.mrb[0].mxu0
  %v4607 = vadd.f32 0.0, %v4606
  %v4608 = vpop.f32.mrb[0].mxu0
  %v4609 = vpop.f32.mrb[0].mxu0
  %v4610 = vadd.f32 0.0, %v4609
  %v4611 = vpop.f32.mrb[0].mxu0
  %4612 = vmatprep.mubr.bf16.mxu0 0
  %4613 = vmatmul.mubr.bf16.gmra.mrb[0].mxu0 %v4559
  %v4614 = vpop.f32.mrb[0].mxu0
  %v4615 = vadd.f32 0.0, %v4614
  %v4616 = vpop.f32.mrb[0].mxu0
  %v4617 = vpop.f32.mrb[0].mxu0
  %v4618 = vadd.f32 0.0, %v4617
  %v4619 = vpop.f32.mrb[0].mxu0
  %4620 = vmatprep.mubr.bf16.mxu0 0
  %4621 = vmatmul.mubr.bf16.gmra.mrb[0].mxu0 %v4562
  %v4622 = vpop.f32.mrb[0].mxu0
  %v4623 = vadd.f32 0.0, %v4622
  %v4624 = vpop.f32.mrb[0].mxu0
  %v4625 = vpop.f32.mrb[0].mxu0
  %v4626 = vadd.f32 0.0, %v4625
  %v4627 = vpop.f32.mrb[0].mxu0
  %4628 = vdwg.mxu0
  %4629 = vrot.lane.b32.xlu0 %v3708, 64
  %v4630 = vpop.permute.xlu0 %4629
  %4631 = vrot.lane.b32.xlu0 %v3709, 64
  %v4632 = vpop.permute.xlu0 %4631
  %4633 = vrot.lane.b32.xlu0 %v3710, 64
  %v4634 = vpop.permute.xlu0 %4633
  %4635 = vrot.lane.b32.xlu0 %v3711, 64
  %v4636 = vpop.permute.xlu0 %4635
  %v4642 = vsel %vm1503, %v4528, 0
  %v4645 = vsel %vm1503, %v4529, 0
  %v4648 = vsel %vm1503, %v4530, 0
  %v4651 = vsel %vm1503, %v4531, 0
  %4653 = vmatprep.subr.bf16.mxu0 0
  %4654 = vmatpush1.bf16.msra.mxu0 %v4630
  %4655 = vmatprep.subr.bf16.mxu0 0
  %4656 = vmatpush1.bf16.msra.mxu0 %v4632
  %4657 = vmatprep.subr.bf16.mxu0 0
  %4658 = vmatpush1.bf16.msra.mxu0 %v4634
  %4659 = vmatprep.subr.bf16.mxu0 0
  %4660 = vmatpush1.bf16.msra.mxu0 %v4636
  %4661 = vmatprep.subr.bf16.mxu0 0
  %4662 = vmatpush1.bf16.msra.mxu0 0
  %4663 = vmatprep.subr.bf16.mxu0 0
  %4664 = vmatpush1.bf16.msra.mxu0 0
  %4665 = vmatprep.subr.bf16.mxu0 0
  %4666 = vmatpush1.bf16.msra.mxu0 0
  %4667 = vmatprep.subr.bf16.mxu0 0
  %4668 = vmatpush1.bf16.msra.mxu0 0
  %4669 = vmatprep.subr.bf16.mxu0 0
  %4670 = vmatpush1.bf16.msra.mxu0 0
  %4671 = vmatprep.subr.bf16.mxu0 0
  %4672 = vmatpush1.bf16.msra.mxu0 0
  %4673 = vmatprep.subr.bf16.mxu0 0
  %4674 = vmatpush1.bf16.msra.mxu0 0
  %4675 = vmatprep.subr.bf16.mxu0 0
  %4676 = vmatpush1.bf16.msra.mxu0 0
  %4677 = vmatprep.subr.bf16.mxu0 0
  %4678 = vmatpush1.bf16.msra.mxu0 0
  %4679 = vmatprep.subr.bf16.mxu0 0
  %4680 = vmatpush1.bf16.msra.mxu0 0
  %4681 = vmatprep.subr.bf16.mxu0 0
  %4682 = vmatpush1.bf16.msra.mxu0 0
  %4683 = vmatprep.subr.bf16.mxu0 0
  %4684 = vmatpush1.bf16.msra.mxu0 0
  %4685 = vmatprep.mubr.bf16.mxu0 0
  %4686 = vmatmul.mubr.bf16.gmra.mrb[0].mxu0 %v4642
  %v4687 = vpop.f32.mrb[0].mxu0
  %v4688 = vadd.f32 0.0, %v4687
  %v4689 = vpop.f32.mrb[0].mxu0
  %v4690 = vpop.f32.mrb[0].mxu0
  %v4691 = vadd.f32 0.0, %v4690
  %v4692 = vpop.f32.mrb[0].mxu0
  %4693 = vmatprep.mubr.bf16.mxu0 0
  %4694 = vmatmul.mubr.bf16.gmra.mrb[0].mxu0 %v4645
  %v4695 = vpop.f32.mrb[0].mxu0
  %v4696 = vadd.f32 0.0, %v4695
  %v4697 = vpop.f32.mrb[0].mxu0
  %v4698 = vpop.f32.mrb[0].mxu0
  %v4699 = vadd.f32 0.0, %v4698
  %v4700 = vpop.f32.mrb[0].mxu0
  %4701 = vmatprep.mubr.bf16.mxu0 0
  %4702 = vmatmul.mubr.bf16.gmra.mrb[0].mxu0 %v4648
  %v4703 = vpop.f32.mrb[0].mxu0
  %v4704 = vadd.f32 0.0, %v4703
  %v4705 = vpop.f32.mrb[0].mxu0
  %v4706 = vpop.f32.mrb[0].mxu0
  %v4707 = vadd.f32 0.0, %v4706
  %v4708 = vpop.f32.mrb[0].mxu0
  %4709 = vmatprep.mubr.bf16.mxu0 0
  %4710 = vmatmul.mubr.bf16.gmra.mrb[0].mxu0 %v4651
  %v4711 = vpop.f32.mrb[0].mxu0
  %v4712 = vadd.f32 0.0, %v4711
  %v4713 = vpop.f32.mrb[0].mxu0
  %v4714 = vpop.f32.mrb[0].mxu0
  %v4715 = vadd.f32 0.0, %v4714
  %v4716 = vpop.f32.mrb[0].mxu0
  %4717 = vdwg.mxu0
  %4718 = vrot.lane.b32.xlu0 %v3712, 64
  %v4719 = vpop.permute.xlu0 %4718
  %4720 = vrot.lane.b32.xlu0 %v3713, 64
  %v4721 = vpop.permute.xlu0 %4720
  %4722 = vrot.lane.b32.xlu0 %v3714, 64
  %v4723 = vpop.permute.xlu0 %4722
  %4724 = vrot.lane.b32.xlu0 %v3715, 64
  %v4725 = vpop.permute.xlu0 %4724
  %v4731 = vsel %vm1503, %v4532, 0
  %v4734 = vsel %vm1503, %v4533, 0
  %v4737 = vsel %vm1503, %v4534, 0
  %v4740 = vsel %vm1503, %v4535, 0
  %4742 = vmatprep.subr.bf16.mxu0 0
  %4743 = vmatpush1.bf16.msra.mxu0 %v4719
  %4744 = vmatprep.subr.bf16.mxu0 0
  %4745 = vmatpush1.bf16.msra.mxu0 %v4721
  %4746 = vmatprep.subr.bf16.mxu0 0
  %4747 = vmatpush1.bf16.msra.mxu0 %v4723
  %4748 = vmatprep.subr.bf16.mxu0 0
  %4749 = vmatpush1.bf16.msra.mxu0 %v4725
  %4750 = vmatprep.subr.bf16.mxu0 0
  %4751 = vmatpush1.bf16.msra.mxu0 0
  %4752 = vmatprep.subr.bf16.mxu0 0
  %4753 = vmatpush1.bf16.msra.mxu0 0
  %4754 = vmatprep.subr.bf16.mxu0 0
  %4755 = vmatpush1.bf16.msra.mxu0 0
  %4756 = vmatprep.subr.bf16.mxu0 0
  %4757 = vmatpush1.bf16.msra.mxu0 0
  %4758 = vmatprep.subr.bf16.mxu0 0
  %4759 = vmatpush1.bf16.msra.mxu0 0
  %4760 = vmatprep.subr.bf16.mxu0 0
  %4761 = vmatpush1.bf16.msra.mxu0 0
  %4762 = vmatprep.subr.bf16.mxu0 0
  %4763 = vmatpush1.bf16.msra.mxu0 0
  %4764 = vmatprep.subr.bf16.mxu0 0
  %4765 = vmatpush1.bf16.msra.mxu0 0
  %4766 = vmatprep.subr.bf16.mxu0 0
  %4767 = vmatpush1.bf16.msra.mxu0 0
  %4768 = vmatprep.subr.bf16.mxu0 0
  %4769 = vmatpush1.bf16.msra.mxu0 0
  %4770 = vmatprep.subr.bf16.mxu0 0
  %4771 = vmatpush1.bf16.msra.mxu0 0
  %4772 = vmatprep.subr.bf16.mxu0 0
  %4773 = vmatpush1.bf16.msra.mxu0 0
  %4774 = vmatprep.mubr.bf16.mxu0 0
  %4775 = vmatmul.mubr.bf16.gmra.mrb[0].mxu0 %v4731
  %v4776 = vpop.f32.mrb[0].mxu0
  %v4777 = vadd.f32 0.0, %v4776
  %v4778 = vpop.f32.mrb[0].mxu0
  %v4779 = vpop.f32.mrb[0].mxu0
  %v4780 = vadd.f32 0.0, %v4779
  %v4781 = vpop.f32.mrb[0].mxu0
  %4782 = vmatprep.mubr.bf16.mxu0 0
  %4783 = vmatmul.mubr.bf16.gmra.mrb[0].mxu0 %v4734
  %v4784 = vpop.f32.mrb[0].mxu0
  %v4785 = vadd.f32 0.0, %v4784
  %v4786 = vpop.f32.mrb[0].mxu0
  %v4787 = vpop.f32.mrb[0].mxu0
  %v4788 = vadd.f32 0.0, %v4787
  %v4789 = vpop.f32.mrb[0].mxu0
  %4790 = vmatprep.mubr.bf16.mxu0 0
  %4791 = vmatmul.mubr.bf16.gmra.mrb[0].mxu0 %v4737
  %v4792 = vpop.f32.mrb[0].mxu0
  %v4793 = vadd.f32 0.0, %v4792
  %v4794 = vpop.f32.mrb[0].mxu0
  %v4795 = vpop.f32.mrb[0].mxu0
  %v4796 = vadd.f32 0.0, %v4795
  %v4797 = vpop.f32.mrb[0].mxu0
  %4798 = vmatprep.mubr.bf16.mxu0 0
  %4799 = vmatmul.mubr.bf16.gmra.mrb[0].mxu0 %v4740
  %v4800 = vpop.f32.mrb[0].mxu0
  %v4801 = vadd.f32 0.0, %v4800
  %v4802 = vpop.f32.mrb[0].mxu0
  %v4803 = vpop.f32.mrb[0].mxu0
  %v4804 = vadd.f32 0.0, %v4803
  %v4805 = vpop.f32.mrb[0].mxu0
  %4806 = vdwg.mxu0
  %4807 = vrot.lane.b32.xlu0 %v3716, 64
  %v4808 = vpop.permute.xlu0 %4807
  %4809 = vrot.lane.b32.xlu0 %v3717, 64
  %v4810 = vpop.permute.xlu0 %4809
  %4811 = vrot.lane.b32.xlu0 %v3718, 64
  %v4812 = vpop.permute.xlu0 %4811
  %4813 = vrot.lane.b32.xlu0 %v3719, 64
  %v4814 = vpop.permute.xlu0 %4813
  %v4820 = vsel %vm1503, %v4536, 0
  %v4823 = vsel %vm1503, %v4537, 0
  %v4826 = vsel %vm1503, %v4538, 0
  %v4829 = vsel %vm1503, %v4539, 0
  %4831 = vmatprep.subr.bf16.mxu0 0
  %4832 = vmatpush1.bf16.msra.mxu0 %v4808
  %4833 = vmatprep.subr.bf16.mxu0 0
  %4834 = vmatpush1.bf16.msra.mxu0 %v4810
  %4835 = vmatprep.subr.bf16.mxu0 0
  %4836 = vmatpush1.bf16.msra.mxu0 %v4812
  %4837 = vmatprep.subr.bf16.mxu0 0
  %4838 = vmatpush1.bf16.msra.mxu0 %v4814
  %4839 = vmatprep.subr.bf16.mxu0 0
  %4840 = vmatpush1.bf16.msra.mxu0 0
  %4841 = vmatprep.subr.bf16.mxu0 0
  %4842 = vmatpush1.bf16.msra.mxu0 0
  %4843 = vmatprep.subr.bf16.mxu0 0
  %4844 = vmatpush1.bf16.msra.mxu0 0
  %4845 = vmatprep.subr.bf16.mxu0 0
  %4846 = vmatpush1.bf16.msra.mxu0 0
  %4847 = vmatprep.subr.bf16.mxu0 0
  %4848 = vmatpush1.bf16.msra.mxu0 0
  %4849 = vmatprep.subr.bf16.mxu0 0
  %4850 = vmatpush1.bf16.msra.mxu0 0
  %4851 = vmatprep.subr.bf16.mxu0 0
  %4852 = vmatpush1.bf16.msra.mxu0 0
  %4853 = vmatprep.subr.bf16.mxu0 0
  %4854 = vmatpush1.bf16.msra.mxu0 0
  %4855 = vmatprep.subr.bf16.mxu0 0
  %4856 = vmatpush1.bf16.msra.mxu0 0
  %4857 = vmatprep.subr.bf16.mxu0 0
  %4858 = vmatpush1.bf16.msra.mxu0 0
  %4859 = vmatprep.subr.bf16.mxu0 0
  %4860 = vmatpush1.bf16.msra.mxu0 0
  %4861 = vmatprep.subr.bf16.mxu0 0
  %4862 = vmatpush1.bf16.msra.mxu0 0
  %4863 = vmatprep.mubr.bf16.mxu0 0
  %4864 = vmatmul.mubr.bf16.gmra.mrb[0].mxu0 %v4820
  %v4865 = vpop.f32.mrb[0].mxu0
  %v4866 = vadd.f32 0.0, %v4865
  %v4867 = vpop.f32.mrb[0].mxu0
  %v4868 = vpop.f32.mrb[0].mxu0
  %v4869 = vadd.f32 0.0, %v4868
  %v4870 = vpop.f32.mrb[0].mxu0
  %4871 = vmatprep.mubr.bf16.mxu0 0
  %4872 = vmatmul.mubr.bf16.gmra.mrb[0].mxu0 %v4823
  %v4873 = vpop.f32.mrb[0].mxu0
  %v4874 = vadd.f32 0.0, %v4873
  %v4875 = vpop.f32.mrb[0].mxu0
  %v4876 = vpop.f32.mrb[0].mxu0
  %v4877 = vadd.f32 0.0, %v4876
  %v4878 = vpop.f32.mrb[0].mxu0
  %4879 = vmatprep.mubr.bf16.mxu0 0
  %4880 = vmatmul.mubr.bf16.gmra.mrb[0].mxu0 %v4826
  %v4881 = vpop.f32.mrb[0].mxu0
  %v4882 = vadd.f32 0.0, %v4881
  %v4883 = vpop.f32.mrb[0].mxu0
  %v4884 = vpop.f32.mrb[0].mxu0
  %v4885 = vadd.f32 0.0, %v4884
  %v4886 = vpop.f32.mrb[0].mxu0
  %4887 = vmatprep.mubr.bf16.mxu0 0
  %4888 = vmatmul.mubr.bf16.gmra.mrb[0].mxu0 %v4829
  %v4889 = vpop.f32.mrb[0].mxu0
  %v4890 = vadd.f32 0.0, %v4889
  %v4891 = vpop.f32.mrb[0].mxu0
  %v4892 = vpop.f32.mrb[0].mxu0
  %v4893 = vadd.f32 0.0, %v4892
  %v4894 = vpop.f32.mrb[0].mxu0
  %4895 = vdwg.mxu0
  %4912 = vrot.lane.b32.xlu0 %v4777, 16
  %v4913 = vpop.permute.xlu0 %4912
  %4914 = vrot.lane.b32.xlu0 %v4780, 16
  %v4915 = vpop.permute.xlu0 %4914
  %4916 = vrot.lane.b32.xlu0 %v4785, 16
  %v4917 = vpop.permute.xlu0 %4916
  %4918 = vrot.lane.b32.xlu0 %v4788, 16
  %v4919 = vpop.permute.xlu0 %4918
  %4920 = vrot.lane.b32.xlu0 %v4793, 16
  %v4921 = vpop.permute.xlu0 %4920
  %4922 = vrot.lane.b32.xlu0 %v4796, 16
  %v4923 = vpop.permute.xlu0 %4922
  %4924 = vrot.lane.b32.xlu0 %v4801, 16
  %v4925 = vpop.permute.xlu0 %4924
  %4926 = vrot.lane.b32.xlu0 %v4804, 16
  %v4927 = vpop.permute.xlu0 %4926
  %4928 = vrot.lane.b32.xlu0 %v4866, 16
  %v4929 = vpop.permute.xlu0 %4928
  %4930 = vrot.lane.b32.xlu0 %v4869, 16
  %v4931 = vpop.permute.xlu0 %4930
  %4932 = vrot.lane.b32.xlu0 %v4874, 16
  %v4933 = vpop.permute.xlu0 %4932
  %4934 = vrot.lane.b32.xlu0 %v4877, 16
  %v4935 = vpop.permute.xlu0 %4934
  %4936 = vrot.lane.b32.xlu0 %v4882, 16
  %v4937 = vpop.permute.xlu0 %4936
  %4938 = vrot.lane.b32.xlu0 %v4885, 16
  %v4939 = vpop.permute.xlu0 %4938
  %4940 = vrot.lane.b32.xlu0 %v4890, 16
  %v4941 = vpop.permute.xlu0 %4940
  %4942 = vrot.lane.b32.xlu0 %v4893, 16
  %v4943 = vpop.permute.xlu0 %4942
  %v4960 = vsel %vm1062, %v4599, %v4913
  %v4961 = vsel %vm1062, %v4602, %v4915
  %v4962 = vsel %vm1062, %v4607, %v4917
  %v4963 = vsel %vm1062, %v4610, %v4919
  %v4964 = vsel %vm1062, %v4615, %v4921
  %v4965 = vsel %vm1062, %v4618, %v4923
  %v4966 = vsel %vm1062, %v4623, %v4925
  %v4967 = vsel %vm1062, %v4626, %v4927
  %v4968 = vsel %vm1062, %v4688, %v4929
  %v4969 = vsel %vm1062, %v4691, %v4931
  %v4970 = vsel %vm1062, %v4696, %v4933
  %v4971 = vsel %vm1062, %v4699, %v4935
  %v4972 = vsel %vm1062, %v4704, %v4937
  %v4973 = vsel %vm1062, %v4707, %v4939
  %v4974 = vsel %vm1062, %v4712, %v4941
  %v4975 = vsel %vm1062, %v4715, %v4943
  %v4976 = vpack.c.bf16 %v4961, %v4960
  %v4977 = vpack.c.bf16 %v4963, %v4962
  %v4978 = vpack.c.bf16 %v4965, %v4964
  %v4979 = vpack.c.bf16 %v4967, %v4966
  %v4980 = vpack.c.bf16 %v4969, %v4968
  %v4981 = vpack.c.bf16 %v4971, %v4970
  %v4982 = vpack.c.bf16 %v4973, %v4972
  %v4983 = vpack.c.bf16 %v4975, %v4974
  %v4984 = vld [vmem:[%s47] sm:$0xf]
  %v4985 = vld [vmem:[%s47 + $0x4] sm:$0xf]
  %v4986 = vld [vmem:[%s47 + $0x8] sm:$0xf]
  %v4987 = vld [vmem:[%s47 + $0xc] sm:$0xf]
  %v4992 = vunpack.c.l.b16 %v4984
  %v4993 = vunpack.c.l.b16 %v4985
  %v4994 = vunpack.c.l.b16 %v4986
  %v4995 = vunpack.c.l.b16 %v4987
  %v4996 = vpack.c.b16 %v4993, %v4992
  %v4997 = vpack.c.b16 %v4995, %v4994
  %v5001 = vsel %vm310, %v4976, 0
  %v5004 = vsel %vm310, %v4977, 0
  %v5007 = vsel %vm310, %v4978, 0
  %v5010 = vsel %vm310, %v4979, 0
  %v5013 = vsel %vm310, %v4980, 0
  %v5016 = vsel %vm310, %v4981, 0
  %v5019 = vsel %vm310, %v4982, 0
  %v5022 = vsel %vm310, %v4983, 0
  %5024 = vmatprep.subr.bf16.mxu0 0
  %5025 = vmatpush1.bf16.msra.mxu0 %v4996
  %5026 = vmatprep.subr.bf16.mxu0 0
  %5027 = vmatpush1.bf16.msra.mxu0 %v4997
  %5028 = vmatprep.subr.bf16.mxu0 0
  %5029 = vmatpush1.bf16.msra.mxu0 0
  %5030 = vmatprep.subr.bf16.mxu0 0
  %5031 = vmatpush1.bf16.msra.mxu0 0
  %5032 = vmatprep.subr.bf16.mxu0 0
  %5033 = vmatpush1.bf16.msra.mxu0 0
  %5034 = vmatprep.subr.bf16.mxu0 0
  %5035 = vmatpush1.bf16.msra.mxu0 0
  %5036 = vmatprep.subr.bf16.mxu0 0
  %5037 = vmatpush1.bf16.msra.mxu0 0
  %5038 = vmatprep.subr.bf16.mxu0 0
  %5039 = vmatpush1.bf16.msra.mxu0 0
  %5040 = vmatprep.subr.bf16.mxu0 0
  %5041 = vmatpush1.bf16.msra.mxu0 0
  %5042 = vmatprep.subr.bf16.mxu0 0
  %5043 = vmatpush1.bf16.msra.mxu0 0
  %5044 = vmatprep.subr.bf16.mxu0 0
  %5045 = vmatpush1.bf16.msra.mxu0 0
  %5046 = vmatprep.subr.bf16.mxu0 0
  %5047 = vmatpush1.bf16.msra.mxu0 0
  %5048 = vmatprep.subr.bf16.mxu0 0
  %5049 = vmatpush1.bf16.msra.mxu0 0
  %5050 = vmatprep.subr.bf16.mxu0 0
  %5051 = vmatpush1.bf16.msra.mxu0 0
  %5052 = vmatprep.subr.bf16.mxu0 0
  %5053 = vmatpush1.bf16.msra.mxu0 0
  %5054 = vmatprep.subr.bf16.mxu0 0
  %5055 = vmatpush1.bf16.msra.mxu0 0
  %5056 = vmatprep.mubr.bf16.mxu0 0
  %5057 = vmatmul.mubr.bf16.gmra.mrb[0].mxu0 %v5001
  %v5058 = vpop.f32.mrb[0].mxu0
  %v5059 = vadd.f32 0.0, %v5058
  %v5060 = vpop.f32.mrb[0].mxu0
  %v5061 = vpop.f32.mrb[0].mxu0
  %v5062 = vadd.f32 0.0, %v5061
  %v5063 = vpop.f32.mrb[0].mxu0
  %5064 = vmatprep.mubr.bf16.mxu0 0
  %5065 = vmatmul.mubr.bf16.gmra.mrb[0].mxu0 %v5004
  %v5066 = vpop.f32.mrb[0].mxu0
  %v5067 = vadd.f32 0.0, %v5066
  %v5068 = vpop.f32.mrb[0].mxu0
  %v5069 = vpop.f32.mrb[0].mxu0
  %v5070 = vadd.f32 0.0, %v5069
  %v5071 = vpop.f32.mrb[0].mxu0
  %5072 = vmatprep.mubr.bf16.mxu0 0
  %5073 = vmatmul.mubr.bf16.gmra.mrb[0].mxu0 %v5007
  %v5074 = vpop.f32.mrb[0].mxu0
  %v5075 = vadd.f32 0.0, %v5074
  %v5076 = vpop.f32.mrb[0].mxu0
  %v5077 = vpop.f32.mrb[0].mxu0
  %v5078 = vadd.f32 0.0, %v5077
  %v5079 = vpop.f32.mrb[0].mxu0
  %5080 = vmatprep.mubr.bf16.mxu0 0
  %5081 = vmatmul.mubr.bf16.gmra.mrb[0].mxu0 %v5010
  %v5082 = vpop.f32.mrb[0].mxu0
  %v5083 = vadd.f32 0.0, %v5082
  %v5084 = vpop.f32.mrb[0].mxu0
  %v5085 = vpop.f32.mrb[0].mxu0
  %v5086 = vadd.f32 0.0, %v5085
  %v5087 = vpop.f32.mrb[0].mxu0
  %5088 = vmatprep.mubr.bf16.mxu0 0
  %5089 = vmatmul.mubr.bf16.gmra.mrb[0].mxu0 %v5013
  %v5090 = vpop.f32.mrb[0].mxu0
  %v5091 = vadd.f32 0.0, %v5090
  %v5092 = vpop.f32.mrb[0].mxu0
  %v5093 = vpop.f32.mrb[0].mxu0
  %v5094 = vadd.f32 0.0, %v5093
  %v5095 = vpop.f32.mrb[0].mxu0
  %5096 = vmatprep.mubr.bf16.mxu0 0
  %5097 = vmatmul.mubr.bf16.gmra.mrb[0].mxu0 %v5016
  %v5098 = vpop.f32.mrb[0].mxu0
  %v5099 = vadd.f32 0.0, %v5098
  %v5100 = vpop.f32.mrb[0].mxu0
  %v5101 = vpop.f32.mrb[0].mxu0
  %v5102 = vadd.f32 0.0, %v5101
  %v5103 = vpop.f32.mrb[0].mxu0
  %5104 = vmatprep.mubr.bf16.mxu0 0
  %5105 = vmatmul.mubr.bf16.gmra.mrb[0].mxu0 %v5019
  %v5106 = vpop.f32.mrb[0].mxu0
  %v5107 = vadd.f32 0.0, %v5106
  %v5108 = vpop.f32.mrb[0].mxu0
  %v5109 = vpop.f32.mrb[0].mxu0
  %v5110 = vadd.f32 0.0, %v5109
  %v5111 = vpop.f32.mrb[0].mxu0
  %5112 = vmatprep.mubr.bf16.mxu0 0
  %5113 = vmatmul.mubr.bf16.gmra.mrb[0].mxu0 %v5022
  %v5114 = vpop.f32.mrb[0].mxu0
  %v5115 = vadd.f32 0.0, %v5114
  %v5116 = vpop.f32.mrb[0].mxu0
  %v5117 = vpop.f32.mrb[0].mxu0
  %v5118 = vadd.f32 0.0, %v5117
  %v5119 = vpop.f32.mrb[0].mxu0
  %5120 = vdwg.mxu0
  %v5121 = vadd.f32 %v3218, %v5059
  %v5122 = vadd.f32 %v3219, %v5062
  %v5123 = vadd.f32 %v3220, %v5067
  %v5124 = vadd.f32 %v3221, %v5070
  %v5125 = vadd.f32 %v3222, %v5075
  %v5126 = vadd.f32 %v3223, %v5078
  %v5127 = vadd.f32 %v3224, %v5083
  %v5128 = vadd.f32 %v3225, %v5086
  %v5129 = vadd.f32 %v3226, %v5091
  %v5130 = vadd.f32 %v3227, %v5094
  %v5131 = vadd.f32 %v3228, %v5099
  %v5132 = vadd.f32 %v3229, %v5102
  %v5133 = vadd.f32 %v3230, %v5107
  %v5134 = vadd.f32 %v3231, %v5110
  %v5135 = vadd.f32 %v3232, %v5115
  %v5136 = vadd.f32 %v3233, %v5118
  %v5137 = vld [vmem:[%s49] sm:$0x1]
  %v5139 = vlaneseq
  %v5140 = vshrl.u32 %v5139, 7
  %v5141 = vsub.s32 0, %v5140
  %v5142 = vrot.slane %v5137, %v5141
  %v5144 = vadd.f32 %v5121, %v5142
  %v5145 = vadd.f32 %v5122, %v5142
  %v5146 = vadd.f32 %v5123, %v5142
  %v5147 = vadd.f32 %v5124, %v5142
  %v5148 = vadd.f32 %v5125, %v5142
  %v5149 = vadd.f32 %v5126, %v5142
  %v5150 = vadd.f32 %v5127, %v5142
  %v5151 = vadd.f32 %v5128, %v5142
  %v5152 = vadd.f32 %v5129, %v5142
  %v5153 = vadd.f32 %v5130, %v5142
  %v5154 = vadd.f32 %v5131, %v5142
  %v5155 = vadd.f32 %v5132, %v5142
  %v5156 = vadd.f32 %v5133, %v5142
  %v5157 = vadd.f32 %v5134, %v5142
  %v5158 = vadd.f32 %v5135, %v5142
  %v5159 = vadd.f32 %v5136, %v5142
  %v5160 = vld [vmem:[%s51] sm:$0x1]
  %v5161 = vld [vmem:[%s53] sm:$0x1]
  %v5162 = vsel %vm310, %v5144, 0.0
  %5163 = vadd.xlane.f32.xlu0 %v5162
  %v5164 = vpop.xlane.xlu0 %5163
  %v5165 = vsel %vm310, %v5145, 0.0
  %5166 = vadd.xlane.f32.xlu0 %v5165
  %v5167 = vpop.xlane.xlu0 %5166
  %v5168 = vsel %vm310, %v5146, 0.0
  %5169 = vadd.xlane.f32.xlu0 %v5168
  %v5170 = vpop.xlane.xlu0 %5169
  %v5171 = vsel %vm310, %v5147, 0.0
  %5172 = vadd.xlane.f32.xlu0 %v5171
  %v5173 = vpop.xlane.xlu0 %5172
  %v5174 = vsel %vm310, %v5148, 0.0
  %5175 = vadd.xlane.f32.xlu0 %v5174
  %v5176 = vpop.xlane.xlu0 %5175
  %v5177 = vsel %vm310, %v5149, 0.0
  %5178 = vadd.xlane.f32.xlu0 %v5177
  %v5179 = vpop.xlane.xlu0 %5178
  %v5180 = vsel %vm310, %v5150, 0.0
  %5181 = vadd.xlane.f32.xlu0 %v5180
  %v5182 = vpop.xlane.xlu0 %5181
  %v5183 = vsel %vm310, %v5151, 0.0
  %5184 = vadd.xlane.f32.xlu0 %v5183
  %v5185 = vpop.xlane.xlu0 %5184
  %v5186 = vsel %vm310, %v5152, 0.0
  %5187 = vadd.xlane.f32.xlu0 %v5186
  %v5188 = vpop.xlane.xlu0 %5187
  %v5189 = vsel %vm310, %v5153, 0.0
  %5190 = vadd.xlane.f32.xlu0 %v5189
  %v5191 = vpop.xlane.xlu0 %5190
  %v5192 = vsel %vm310, %v5154, 0.0
  %5193 = vadd.xlane.f32.xlu0 %v5192
  %v5194 = vpop.xlane.xlu0 %5193
  %v5195 = vsel %vm310, %v5155, 0.0
  %5196 = vadd.xlane.f32.xlu0 %v5195
  %v5197 = vpop.xlane.xlu0 %5196
  %v5198 = vsel %vm310, %v5156, 0.0
  %5199 = vadd.xlane.f32.xlu0 %v5198
  %v5200 = vpop.xlane.xlu0 %5199
  %v5201 = vsel %vm310, %v5157, 0.0
  %5202 = vadd.xlane.f32.xlu0 %v5201
  %v5203 = vpop.xlane.xlu0 %5202
  %v5204 = vsel %vm310, %v5158, 0.0
  %5205 = vadd.xlane.f32.xlu0 %v5204
  %v5206 = vpop.xlane.xlu0 %5205
  %v5207 = vsel %vm310, %v5159, 0.0
  %5208 = vadd.xlane.f32.xlu0 %v5207
  %v5209 = vpop.xlane.xlu0 %5208
  %v5210 = vmul.f32 %v5164, %v359
  %v5211 = vmul.f32 %v5167, %v359
  %v5212 = vmul.f32 %v5170, %v359
  %v5213 = vmul.f32 %v5173, %v359
  %v5214 = vmul.f32 %v5176, %v359
  %v5215 = vmul.f32 %v5179, %v359
  %v5216 = vmul.f32 %v5182, %v359
  %v5217 = vmul.f32 %v5185, %v359
  %v5218 = vmul.f32 %v5188, %v359
  %v5219 = vmul.f32 %v5191, %v359
  %v5220 = vmul.f32 %v5194, %v359
  %v5221 = vmul.f32 %v5197, %v359
  %v5222 = vmul.f32 %v5200, %v359
  %v5223 = vmul.f32 %v5203, %v359
  %v5224 = vmul.f32 %v5206, %v359
  %v5225 = vmul.f32 %v5209, %v359
  %v5226 = vsub.f32 %v5144, %v5210
  %v5227 = vsub.f32 %v5145, %v5211
  %v5228 = vsub.f32 %v5146, %v5212
  %v5229 = vsub.f32 %v5147, %v5213
  %v5230 = vsub.f32 %v5148, %v5214
  %v5231 = vsub.f32 %v5149, %v5215
  %v5232 = vsub.f32 %v5150, %v5216
  %v5233 = vsub.f32 %v5151, %v5217
  %v5234 = vsub.f32 %v5152, %v5218
  %v5235 = vsub.f32 %v5153, %v5219
  %v5236 = vsub.f32 %v5154, %v5220
  %v5237 = vsub.f32 %v5155, %v5221
  %v5238 = vsub.f32 %v5156, %v5222
  %v5239 = vsub.f32 %v5157, %v5223
  %v5240 = vsub.f32 %v5158, %v5224
  %v5241 = vsub.f32 %v5159, %v5225
  %v5242 = vmul.f32 %v5226, %v5226
  %v5243 = vmul.f32 %v5227, %v5227
  %v5244 = vmul.f32 %v5228, %v5228
  %v5245 = vmul.f32 %v5229, %v5229
  %v5246 = vmul.f32 %v5230, %v5230
  %v5247 = vmul.f32 %v5231, %v5231
  %v5248 = vmul.f32 %v5232, %v5232
  %v5249 = vmul.f32 %v5233, %v5233
  %v5250 = vmul.f32 %v5234, %v5234
  %v5251 = vmul.f32 %v5235, %v5235
  %v5252 = vmul.f32 %v5236, %v5236
  %v5253 = vmul.f32 %v5237, %v5237
  %v5254 = vmul.f32 %v5238, %v5238
  %v5255 = vmul.f32 %v5239, %v5239
  %v5256 = vmul.f32 %v5240, %v5240
  %v5257 = vmul.f32 %v5241, %v5241
  %v5258 = vsel %vm310, %v5242, 0.0
  %5259 = vadd.xlane.f32.xlu0 %v5258
  %v5260 = vpop.xlane.xlu0 %5259
  %v5261 = vsel %vm310, %v5243, 0.0
  %5262 = vadd.xlane.f32.xlu0 %v5261
  %v5263 = vpop.xlane.xlu0 %5262
  %v5264 = vsel %vm310, %v5244, 0.0
  %5265 = vadd.xlane.f32.xlu0 %v5264
  %v5266 = vpop.xlane.xlu0 %5265
  %v5267 = vsel %vm310, %v5245, 0.0
  %5268 = vadd.xlane.f32.xlu0 %v5267
  %v5269 = vpop.xlane.xlu0 %5268
  %v5270 = vsel %vm310, %v5246, 0.0
  %5271 = vadd.xlane.f32.xlu0 %v5270
  %v5272 = vpop.xlane.xlu0 %5271
  %v5273 = vsel %vm310, %v5247, 0.0
  %5274 = vadd.xlane.f32.xlu0 %v5273
  %v5275 = vpop.xlane.xlu0 %5274
  %v5276 = vsel %vm310, %v5248, 0.0
  %5277 = vadd.xlane.f32.xlu0 %v5276
  %v5278 = vpop.xlane.xlu0 %5277
  %v5279 = vsel %vm310, %v5249, 0.0
  %5280 = vadd.xlane.f32.xlu0 %v5279
  %v5281 = vpop.xlane.xlu0 %5280
  %v5282 = vsel %vm310, %v5250, 0.0
  %5283 = vadd.xlane.f32.xlu0 %v5282
  %v5284 = vpop.xlane.xlu0 %5283
  %v5285 = vsel %vm310, %v5251, 0.0
  %5286 = vadd.xlane.f32.xlu0 %v5285
  %v5287 = vpop.xlane.xlu0 %5286
  %v5288 = vsel %vm310, %v5252, 0.0
  %5289 = vadd.xlane.f32.xlu0 %v5288
  %v5290 = vpop.xlane.xlu0 %5289
  %v5291 = vsel %vm310, %v5253, 0.0
  %5292 = vadd.xlane.f32.xlu0 %v5291
  %v5293 = vpop.xlane.xlu0 %5292
  %v5294 = vsel %vm310, %v5254, 0.0
  %5295 = vadd.xlane.f32.xlu0 %v5294
  %v5296 = vpop.xlane.xlu0 %5295
  %v5297 = vsel %vm310, %v5255, 0.0
  %5298 = vadd.xlane.f32.xlu0 %v5297
  %v5299 = vpop.xlane.xlu0 %5298
  %v5300 = vsel %vm310, %v5256, 0.0
  %5301 = vadd.xlane.f32.xlu0 %v5300
  %v5302 = vpop.xlane.xlu0 %5301
  %v5303 = vsel %vm310, %v5257, 0.0
  %5304 = vadd.xlane.f32.xlu0 %v5303
  %v5305 = vpop.xlane.xlu0 %5304
  %v5306 = vmul.f32 %v5260, %v359
  %v5307 = vmul.f32 %v5263, %v359
  %v5308 = vmul.f32 %v5266, %v359
  %v5309 = vmul.f32 %v5269, %v359
  %v5310 = vmul.f32 %v5272, %v359
  %v5311 = vmul.f32 %v5275, %v359
  %v5312 = vmul.f32 %v5278, %v359
  %v5313 = vmul.f32 %v5281, %v359
  %v5314 = vmul.f32 %v5284, %v359
  %v5315 = vmul.f32 %v5287, %v359
  %v5316 = vmul.f32 %v5290, %v359
  %v5317 = vmul.f32 %v5293, %v359
  %v5318 = vmul.f32 %v5296, %v359
  %v5319 = vmul.f32 %v5299, %v359
  %v5320 = vmul.f32 %v5302, %v359
  %v5321 = vmul.f32 %v5305, %v359
  %v5322 = vadd.f32 %v5306, 1e-05
  %v5323 = vadd.f32 %v5307, 1e-05
  %v5324 = vadd.f32 %v5308, 1e-05
  %v5325 = vadd.f32 %v5309, 1e-05
  %v5326 = vadd.f32 %v5310, 1e-05
  %v5327 = vadd.f32 %v5311, 1e-05
  %v5328 = vadd.f32 %v5312, 1e-05
  %v5329 = vadd.f32 %v5313, 1e-05
  %v5330 = vadd.f32 %v5314, 1e-05
  %v5331 = vadd.f32 %v5315, 1e-05
  %v5332 = vadd.f32 %v5316, 1e-05
  %v5333 = vadd.f32 %v5317, 1e-05
  %v5334 = vadd.f32 %v5318, 1e-05
  %v5335 = vadd.f32 %v5319, 1e-05
  %v5336 = vadd.f32 %v5320, 1e-05
  %v5337 = vadd.f32 %v5321, 1e-05
  %v5338 = vrsqrt.pop %v5322
  %v5339 = vrsqrt.pop %v5323
  %v5340 = vrsqrt.pop %v5324
  %v5341 = vrsqrt.pop %v5325
  %v5342 = vrsqrt.pop %v5326
  %v5343 = vrsqrt.pop %v5327
  %v5344 = vrsqrt.pop %v5328
  %v5345 = vrsqrt.pop %v5329
  %v5346 = vrsqrt.pop %v5330
  %v5347 = vrsqrt.pop %v5331
  %v5348 = vrsqrt.pop %v5332
  %v5349 = vrsqrt.pop %v5333
  %v5350 = vrsqrt.pop %v5334
  %v5351 = vrsqrt.pop %v5335
  %v5352 = vrsqrt.pop %v5336
  %v5353 = vrsqrt.pop %v5337
  %v5354 = vmul.f32 %v5226, %v5338
  %v5355 = vmul.f32 %v5227, %v5339
  %v5356 = vmul.f32 %v5228, %v5340
  %v5357 = vmul.f32 %v5229, %v5341
  %v5358 = vmul.f32 %v5230, %v5342
  %v5359 = vmul.f32 %v5231, %v5343
  %v5360 = vmul.f32 %v5232, %v5344
  %v5361 = vmul.f32 %v5233, %v5345
  %v5362 = vmul.f32 %v5234, %v5346
  %v5363 = vmul.f32 %v5235, %v5347
  %v5364 = vmul.f32 %v5236, %v5348
  %v5365 = vmul.f32 %v5237, %v5349
  %v5366 = vmul.f32 %v5238, %v5350
  %v5367 = vmul.f32 %v5239, %v5351
  %v5368 = vmul.f32 %v5240, %v5352
  %v5369 = vmul.f32 %v5241, %v5353
  %v5371 = vlaneseq
  %v5372 = vshrl.u32 %v5371, 7
  %v5373 = vsub.s32 0, %v5372
  %v5374 = vrot.slane %v5160, %v5373
  %v5376 = vmul.f32 %v5354, %v5374
  %v5377 = vmul.f32 %v5355, %v5374
  %v5378 = vmul.f32 %v5356, %v5374
  %v5379 = vmul.f32 %v5357, %v5374
  %v5380 = vmul.f32 %v5358, %v5374
  %v5381 = vmul.f32 %v5359, %v5374
  %v5382 = vmul.f32 %v5360, %v5374
  %v5383 = vmul.f32 %v5361, %v5374
  %v5384 = vmul.f32 %v5362, %v5374
  %v5385 = vmul.f32 %v5363, %v5374
  %v5386 = vmul.f32 %v5364, %v5374
  %v5387 = vmul.f32 %v5365, %v5374
  %v5388 = vmul.f32 %v5366, %v5374
  %v5389 = vmul.f32 %v5367, %v5374
  %v5390 = vmul.f32 %v5368, %v5374
  %v5391 = vmul.f32 %v5369, %v5374
  %v5393 = vlaneseq
  %v5394 = vshrl.u32 %v5393, 7
  %v5395 = vsub.s32 0, %v5394
  %v5396 = vrot.slane %v5161, %v5395
  %v5398 = vadd.f32 %v5376, %v5396
  %v5399 = vadd.f32 %v5377, %v5396
  %v5400 = vadd.f32 %v5378, %v5396
  %v5401 = vadd.f32 %v5379, %v5396
  %v5402 = vadd.f32 %v5380, %v5396
  %v5403 = vadd.f32 %v5381, %v5396
  %v5404 = vadd.f32 %v5382, %v5396
  %v5405 = vadd.f32 %v5383, %v5396
  %v5406 = vadd.f32 %v5384, %v5396
  %v5407 = vadd.f32 %v5385, %v5396
  %v5408 = vadd.f32 %v5386, %v5396
  %v5409 = vadd.f32 %v5387, %v5396
  %v5410 = vadd.f32 %v5388, %v5396
  %v5411 = vadd.f32 %v5389, %v5396
  %v5412 = vadd.f32 %v5390, %v5396
  %v5413 = vadd.f32 %v5391, %v5396
  %v5414 = vpack.c.bf16 %v5399, %v5398
  %v5415 = vpack.c.bf16 %v5401, %v5400
  %v5416 = vpack.c.bf16 %v5403, %v5402
  %v5417 = vpack.c.bf16 %v5405, %v5404
  %v5418 = vpack.c.bf16 %v5407, %v5406
  %v5419 = vpack.c.bf16 %v5409, %v5408
  %v5420 = vpack.c.bf16 %v5411, %v5410
  %v5421 = vpack.c.bf16 %v5413, %v5412
  %v5422 = vld [vmem:[%s55] sm:$0xf]
  %v5423 = vld [vmem:[%s55 + $0x4] sm:$0xf]
  %v5424 = vld [vmem:[%s55 + $0x8] sm:$0xf]
  %v5425 = vld [vmem:[%s55 + $0xc] sm:$0xf]
  %v5426 = vld [vmem:[%s57] sm:$0x1]
  %v5428 = vlaneseq
  %v5429 = vshrl.u32 %v5428, 7
  %v5430 = vsub.s32 0, %v5429
  %v5431 = vrot.slane %v5426, %v5430
  %v5437 = vunpack.c.l.b16 %v5422
  %v5438 = vunpack.c.l.b16 %v5423
  %v5439 = vunpack.c.l.b16 %v5424
  %v5440 = vunpack.c.l.b16 %v5425
  %v5441 = vpack.c.b16 %v5438, %v5437
  %v5442 = vpack.c.b16 %v5440, %v5439
  %v5446 = vsel %vm310, %v5414, 0
  %v5449 = vsel %vm310, %v5415, 0
  %v5452 = vsel %vm310, %v5416, 0
  %v5455 = vsel %vm310, %v5417, 0
  %v5458 = vsel %vm310, %v5418, 0
  %v5461 = vsel %vm310, %v5419, 0
  %v5464 = vsel %vm310, %v5420, 0
  %v5467 = vsel %vm310, %v5421, 0
  %5469 = vmatprep.subr.bf16.mxu0 0
  %5470 = vmatpush1.bf16.msra.mxu0 %v5441
  %5471 = vmatprep.subr.bf16.mxu0 0
  %5472 = vmatpush1.bf16.msra.mxu0 %v5442
  %5473 = vmatprep.subr.bf16.mxu0 0
  %5474 = vmatpush1.bf16.msra.mxu0 0
  %5475 = vmatprep.subr.bf16.mxu0 0
  %5476 = vmatpush1.bf16.msra.mxu0 0
  %5477 = vmatprep.subr.bf16.mxu0 0
  %5478 = vmatpush1.bf16.msra.mxu0 0
  %5479 = vmatprep.subr.bf16.mxu0 0
  %5480 = vmatpush1.bf16.msra.mxu0 0
  %5481 = vmatprep.subr.bf16.mxu0 0
  %5482 = vmatpush1.bf16.msra.mxu0 0
  %5483 = vmatprep.subr.bf16.mxu0 0
  %5484 = vmatpush1.bf16.msra.mxu0 0
  %5485 = vmatprep.subr.bf16.mxu0 0
  %5486 = vmatpush1.bf16.msra.mxu0 0
  %5487 = vmatprep.subr.bf16.mxu0 0
  %5488 = vmatpush1.bf16.msra.mxu0 0
  %5489 = vmatprep.subr.bf16.mxu0 0
  %5490 = vmatpush1.bf16.msra.mxu0 0
  %5491 = vmatprep.subr.bf16.mxu0 0
  %5492 = vmatpush1.bf16.msra.mxu0 0
  %5493 = vmatprep.subr.bf16.mxu0 0
  %5494 = vmatpush1.bf16.msra.mxu0 0
  %5495 = vmatprep.subr.bf16.mxu0 0
  %5496 = vmatpush1.bf16.msra.mxu0 0
  %5497 = vmatprep.subr.bf16.mxu0 0
  %5498 = vmatpush1.bf16.msra.mxu0 0
  %5499 = vmatprep.subr.bf16.mxu0 0
  %5500 = vmatpush1.bf16.msra.mxu0 0
  %5501 = vmatprep.mubr.bf16.mxu0 0
  %5502 = vmatmul.mubr.bf16.gmra.mrb[0].mxu0 %v5446
  %v5503 = vpop.f32.mrb[0].mxu0
  %v5504 = vadd.f32 %v5431, %v5503
  %v5505 = vpop.f32.mrb[0].mxu0
  %v5506 = vpop.f32.mrb[0].mxu0
  %v5507 = vadd.f32 %v5431, %v5506
  %v5508 = vpop.f32.mrb[0].mxu0
  %5509 = vmatprep.mubr.bf16.mxu0 0
  %5510 = vmatmul.mubr.bf16.gmra.mrb[0].mxu0 %v5449
  %v5511 = vpop.f32.mrb[0].mxu0
  %v5512 = vadd.f32 %v5431, %v5511
  %v5513 = vpop.f32.mrb[0].mxu0
  %v5514 = vpop.f32.mrb[0].mxu0
  %v5515 = vadd.f32 %v5431, %v5514
  %v5516 = vpop.f32.mrb[0].mxu0
  %5517 = vmatprep.mubr.bf16.mxu0 0
  %5518 = vmatmul.mubr.bf16.gmra.mrb[0].mxu0 %v5452
  %v5519 = vpop.f32.mrb[0].mxu0
  %v5520 = vadd.f32 %v5431, %v5519
  %v5521 = vpop.f32.mrb[0].mxu0
  %v5522 = vpop.f32.mrb[0].mxu0
  %v5523 = vadd.f32 %v5431, %v5522
  %v5524 = vpop.f32.mrb[0].mxu0
  %5525 = vmatprep.mubr.bf16.mxu0 0
  %5526 = vmatmul.mubr.bf16.gmra.mrb[0].mxu0 %v5455
  %v5527 = vpop.f32.mrb[0].mxu0
  %v5528 = vadd.f32 %v5431, %v5527
  %v5529 = vpop.f32.mrb[0].mxu0
  %v5530 = vpop.f32.mrb[0].mxu0
  %v5531 = vadd.f32 %v5431, %v5530
  %v5532 = vpop.f32.mrb[0].mxu0
  %5533 = vmatprep.mubr.bf16.mxu0 0
  %5534 = vmatmul.mubr.bf16.gmra.mrb[0].mxu0 %v5458
  %v5535 = vpop.f32.mrb[0].mxu0
  %v5536 = vadd.f32 %v5431, %v5535
  %v5537 = vpop.f32.mrb[0].mxu0
  %v5538 = vpop.f32.mrb[0].mxu0
  %v5539 = vadd.f32 %v5431, %v5538
  %v5540 = vpop.f32.mrb[0].mxu0
  %5541 = vmatprep.mubr.bf16.mxu0 0
  %5542 = vmatmul.mubr.bf16.gmra.mrb[0].mxu0 %v5461
  %v5543 = vpop.f32.mrb[0].mxu0
  %v5544 = vadd.f32 %v5431, %v5543
  %v5545 = vpop.f32.mrb[0].mxu0
  %v5546 = vpop.f32.mrb[0].mxu0
  %v5547 = vadd.f32 %v5431, %v5546
  %v5548 = vpop.f32.mrb[0].mxu0
  %5549 = vmatprep.mubr.bf16.mxu0 0
  %5550 = vmatmul.mubr.bf16.gmra.mrb[0].mxu0 %v5464
  %v5551 = vpop.f32.mrb[0].mxu0
  %v5552 = vadd.f32 %v5431, %v5551
  %v5553 = vpop.f32.mrb[0].mxu0
  %v5554 = vpop.f32.mrb[0].mxu0
  %v5555 = vadd.f32 %v5431, %v5554
  %v5556 = vpop.f32.mrb[0].mxu0
  %5557 = vmatprep.mubr.bf16.mxu0 0
  %5558 = vmatmul.mubr.bf16.gmra.mrb[0].mxu0 %v5467
  %v5559 = vpop.f32.mrb[0].mxu0
  %v5560 = vadd.f32 %v5431, %v5559
  %v5561 = vpop.f32.mrb[0].mxu0
  %v5562 = vpop.f32.mrb[0].mxu0
  %v5563 = vadd.f32 %v5431, %v5562
  %v5564 = vpop.f32.mrb[0].mxu0
  %5565 = vdwg.mxu0
  %v5566 = vmul.f32 %v5504, %v5504
  %v5567 = vmul.f32 %v5507, %v5507
  %v5568 = vmul.f32 %v5512, %v5512
  %v5569 = vmul.f32 %v5515, %v5515
  %v5570 = vmul.f32 %v5520, %v5520
  %v5571 = vmul.f32 %v5523, %v5523
  %v5572 = vmul.f32 %v5528, %v5528
  %v5573 = vmul.f32 %v5531, %v5531
  %v5574 = vmul.f32 %v5536, %v5536
  %v5575 = vmul.f32 %v5539, %v5539
  %v5576 = vmul.f32 %v5544, %v5544
  %v5577 = vmul.f32 %v5547, %v5547
  %v5578 = vmul.f32 %v5552, %v5552
  %v5579 = vmul.f32 %v5555, %v5555
  %v5580 = vmul.f32 %v5560, %v5560
  %v5581 = vmul.f32 %v5563, %v5563
  %v5582 = vmul.f32 %v5504, %v5566
  %v5583 = vmul.f32 %v5507, %v5567
  %v5584 = vmul.f32 %v5512, %v5568
  %v5585 = vmul.f32 %v5515, %v5569
  %v5586 = vmul.f32 %v5520, %v5570
  %v5587 = vmul.f32 %v5523, %v5571
  %v5588 = vmul.f32 %v5528, %v5572
  %v5589 = vmul.f32 %v5531, %v5573
  %v5590 = vmul.f32 %v5536, %v5574
  %v5591 = vmul.f32 %v5539, %v5575
  %v5592 = vmul.f32 %v5544, %v5576
  %v5593 = vmul.f32 %v5547, %v5577
  %v5594 = vmul.f32 %v5552, %v5578
  %v5595 = vmul.f32 %v5555, %v5579
  %v5596 = vmul.f32 %v5560, %v5580
  %v5597 = vmul.f32 %v5563, %v5581
  %v5598 = vmul.f32 %v5582, 0.044715
  %v5599 = vmul.f32 %v5583, 0.044715
  %v5600 = vmul.f32 %v5584, 0.044715
  %v5601 = vmul.f32 %v5585, 0.044715
  %v5602 = vmul.f32 %v5586, 0.044715
  %v5603 = vmul.f32 %v5587, 0.044715
  %v5604 = vmul.f32 %v5588, 0.044715
  %v5605 = vmul.f32 %v5589, 0.044715
  %v5606 = vmul.f32 %v5590, 0.044715
  %v5607 = vmul.f32 %v5591, 0.044715
  %v5608 = vmul.f32 %v5592, 0.044715
  %v5609 = vmul.f32 %v5593, 0.044715
  %v5610 = vmul.f32 %v5594, 0.044715
  %v5611 = vmul.f32 %v5595, 0.044715
  %v5612 = vmul.f32 %v5596, 0.044715
  %v5613 = vmul.f32 %v5597, 0.044715
  %v5614 = vadd.f32 %v5504, %v5598
  %v5615 = vadd.f32 %v5507, %v5599
  %v5616 = vadd.f32 %v5512, %v5600
  %v5617 = vadd.f32 %v5515, %v5601
  %v5618 = vadd.f32 %v5520, %v5602
  %v5619 = vadd.f32 %v5523, %v5603
  %v5620 = vadd.f32 %v5528, %v5604
  %v5621 = vadd.f32 %v5531, %v5605
  %v5622 = vadd.f32 %v5536, %v5606
  %v5623 = vadd.f32 %v5539, %v5607
  %v5624 = vadd.f32 %v5544, %v5608
  %v5625 = vadd.f32 %v5547, %v5609
  %v5626 = vadd.f32 %v5552, %v5610
  %v5627 = vadd.f32 %v5555, %v5611
  %v5628 = vadd.f32 %v5560, %v5612
  %v5629 = vadd.f32 %v5563, %v5613
  %v5630 = vmul.f32 %v5614, 0.7978846
  %v5631 = vmul.f32 %v5615, 0.7978846
  %v5632 = vmul.f32 %v5616, 0.7978846
  %v5633 = vmul.f32 %v5617, 0.7978846
  %v5634 = vmul.f32 %v5618, 0.7978846
  %v5635 = vmul.f32 %v5619, 0.7978846
  %v5636 = vmul.f32 %v5620, 0.7978846
  %v5637 = vmul.f32 %v5621, 0.7978846
  %v5638 = vmul.f32 %v5622, 0.7978846
  %v5639 = vmul.f32 %v5623, 0.7978846
  %v5640 = vmul.f32 %v5624, 0.7978846
  %v5641 = vmul.f32 %v5625, 0.7978846
  %v5642 = vmul.f32 %v5626, 0.7978846
  %v5643 = vmul.f32 %v5627, 0.7978846
  %v5644 = vmul.f32 %v5628, 0.7978846
  %v5645 = vmul.f32 %v5629, 0.7978846
  %v5646 = vtanh.pop %v5630
  %v5647 = vtanh.pop %v5631
  %v5648 = vtanh.pop %v5632
  %v5649 = vtanh.pop %v5633
  %v5650 = vtanh.pop %v5634
  %v5651 = vtanh.pop %v5635
  %v5652 = vtanh.pop %v5636
  %v5653 = vtanh.pop %v5637
  %v5654 = vtanh.pop %v5638
  %v5655 = vtanh.pop %v5639
  %v5656 = vtanh.pop %v5640
  %v5657 = vtanh.pop %v5641
  %v5658 = vtanh.pop %v5642
  %v5659 = vtanh.pop %v5643
  %v5660 = vtanh.pop %v5644
  %v5661 = vtanh.pop %v5645
  %v5662 = vadd.f32 %v5646, 1.0
  %v5663 = vadd.f32 %v5647, 1.0
  %v5664 = vadd.f32 %v5648, 1.0
  %v5665 = vadd.f32 %v5649, 1.0
  %v5666 = vadd.f32 %v5650, 1.0
  %v5667 = vadd.f32 %v5651, 1.0
  %v5668 = vadd.f32 %v5652, 1.0
  %v5669 = vadd.f32 %v5653, 1.0
  %v5670 = vadd.f32 %v5654, 1.0
  %v5671 = vadd.f32 %v5655, 1.0
  %v5672 = vadd.f32 %v5656, 1.0
  %v5673 = vadd.f32 %v5657, 1.0
  %v5674 = vadd.f32 %v5658, 1.0
  %v5675 = vadd.f32 %v5659, 1.0
  %v5676 = vadd.f32 %v5660, 1.0
  %v5677 = vadd.f32 %v5661, 1.0
  %v5678 = vmul.f32 %v5662, 0.5
  %v5679 = vmul.f32 %v5663, 0.5
  %v5680 = vmul.f32 %v5664, 0.5
  %v5681 = vmul.f32 %v5665, 0.5
  %v5682 = vmul.f32 %v5666, 0.5
  %v5683 = vmul.f32 %v5667, 0.5
  %v5684 = vmul.f32 %v5668, 0.5
  %v5685 = vmul.f32 %v5669, 0.5
  %v5686 = vmul.f32 %v5670, 0.5
  %v5687 = vmul.f32 %v5671, 0.5
  %v5688 = vmul.f32 %v5672, 0.5
  %v5689 = vmul.f32 %v5673, 0.5
  %v5690 = vmul.f32 %v5674, 0.5
  %v5691 = vmul.f32 %v5675, 0.5
  %v5692 = vmul.f32 %v5676, 0.5
  %v5693 = vmul.f32 %v5677, 0.5
  %v5694 = vmul.f32 %v5504, %v5678
  %v5695 = vmul.f32 %v5507, %v5679
  %v5696 = vmul.f32 %v5512, %v5680
  %v5697 = vmul.f32 %v5515, %v5681
  %v5698 = vmul.f32 %v5520, %v5682
  %v5699 = vmul.f32 %v5523, %v5683
  %v5700 = vmul.f32 %v5528, %v5684
  %v5701 = vmul.f32 %v5531, %v5685
  %v5702 = vmul.f32 %v5536, %v5686
  %v5703 = vmul.f32 %v5539, %v5687
  %v5704 = vmul.f32 %v5544, %v5688
  %v5705 = vmul.f32 %v5547, %v5689
  %v5706 = vmul.f32 %v5552, %v5690
  %v5707 = vmul.f32 %v5555, %v5691
  %v5708 = vmul.f32 %v5560, %v5692
  %v5709 = vmul.f32 %v5563, %v5693
  %v5710 = vpack.c.bf16 %v5695, %v5694
  %v5711 = vpack.c.bf16 %v5697, %v5696
  %v5712 = vpack.c.bf16 %v5699, %v5698
  %v5713 = vpack.c.bf16 %v5701, %v5700
  %v5714 = vpack.c.bf16 %v5703, %v5702
  %v5715 = vpack.c.bf16 %v5705, %v5704
  %v5716 = vpack.c.bf16 %v5707, %v5706
  %v5717 = vpack.c.bf16 %v5709, %v5708
  %v5718 = vld [vmem:[%s59] sm:$0xf]
  %v5719 = vld [vmem:[%s59 + $0x4] sm:$0xf]
  %v5720 = vld [vmem:[%s59 + $0x8] sm:$0xf]
  %v5721 = vld [vmem:[%s59 + $0xc] sm:$0xf]
  %v5722 = vld [vmem:[%s59 + $0x10] sm:$0xf]
  %v5723 = vld [vmem:[%s59 + $0x14] sm:$0xf]
  %v5724 = vld [vmem:[%s59 + $0x18] sm:$0xf]
  %v5725 = vld [vmem:[%s59 + $0x1c] sm:$0xf]
  %v5726 = vld [vmem:[%s59 + $0x20] sm:$0xf]
  %v5727 = vld [vmem:[%s59 + $0x24] sm:$0xf]
  %v5728 = vld [vmem:[%s59 + $0x28] sm:$0xf]
  %v5729 = vld [vmem:[%s59 + $0x2c] sm:$0xf]
  %v5730 = vld [vmem:[%s59 + $0x30] sm:$0xf]
  %v5731 = vld [vmem:[%s59 + $0x34] sm:$0xf]
  %v5732 = vld [vmem:[%s59 + $0x38] sm:$0xf]
  %v5733 = vld [vmem:[%s59 + $0x3c] sm:$0xf]
  %v5734 = vld [vmem:[%s61] sm:$0x1]
  %v5736 = vlaneseq
  %v5737 = vshrl.u32 %v5736, 7
  %v5738 = vsub.s32 0, %v5737
  %v5739 = vrot.slane %v5734, %v5738
  %v5757 = vunpack.c.l.b16 %v5718
  %v5758 = vunpack.c.l.b16 %v5719
  %v5759 = vunpack.c.l.b16 %v5720
  %v5760 = vunpack.c.l.b16 %v5721
  %v5761 = vunpack.c.l.b16 %v5722
  %v5762 = vunpack.c.l.b16 %v5723
  %v5763 = vunpack.c.l.b16 %v5724
  %v5764 = vunpack.c.l.b16 %v5725
  %v5765 = vunpack.c.l.b16 %v5726
  %v5766 = vunpack.c.l.b16 %v5727
  %v5767 = vunpack.c.l.b16 %v5728
  %v5768 = vunpack.c.l.b16 %v5729
  %v5769 = vunpack.c.l.b16 %v5730
  %v5770 = vunpack.c.l.b16 %v5731
  %v5771 = vunpack.c.l.b16 %v5732
  %v5772 = vunpack.c.l.b16 %v5733
  %v5773 = vpack.c.b16 %v5758, %v5757
  %v5774 = vpack.c.b16 %v5760, %v5759
  %v5775 = vpack.c.b16 %v5762, %v5761
  %v5776 = vpack.c.b16 %v5764, %v5763
  %v5777 = vpack.c.b16 %v5766, %v5765
  %v5778 = vpack.c.b16 %v5768, %v5767
  %v5779 = vpack.c.b16 %v5770, %v5769
  %v5780 = vpack.c.b16 %v5772, %v5771
  %5789 = vmatprep.subr.bf16.mxu0 0
  %5790 = vmatpush1.bf16.msra.mxu0 %v5773
  %5791 = vmatprep.subr.bf16.mxu0 0
  %5792 = vmatpush1.bf16.msra.mxu0 %v5774
  %5793 = vmatprep.subr.bf16.mxu0 0
  %5794 = vmatpush1.bf16.msra.mxu0 %v5775
  %5795 = vmatprep.subr.bf16.mxu0 0
  %5796 = vmatpush1.bf16.msra.mxu0 %v5776
  %5797 = vmatprep.subr.bf16.mxu0 0
  %5798 = vmatpush1.bf16.msra.mxu0 %v5777
  %5799 = vmatprep.subr.bf16.mxu0 0
  %5800 = vmatpush1.bf16.msra.mxu0 %v5778
  %5801 = vmatprep.subr.bf16.mxu0 0
  %5802 = vmatpush1.bf16.msra.mxu0 %v5779
  %5803 = vmatprep.subr.bf16.mxu0 0
  %5804 = vmatpush1.bf16.msra.mxu0 %v5780
  %5805 = vmatprep.subr.bf16.mxu0 0
  %5806 = vmatpush1.bf16.msra.mxu0 0
  %5807 = vmatprep.subr.bf16.mxu0 0
  %5808 = vmatpush1.bf16.msra.mxu0 0
  %5809 = vmatprep.subr.bf16.mxu0 0
  %5810 = vmatpush1.bf16.msra.mxu0 0
  %5811 = vmatprep.subr.bf16.mxu0 0
  %5812 = vmatpush1.bf16.msra.mxu0 0
  %5813 = vmatprep.subr.bf16.mxu0 0
  %5814 = vmatpush1.bf16.msra.mxu0 0
  %5815 = vmatprep.subr.bf16.mxu0 0
  %5816 = vmatpush1.bf16.msra.mxu0 0
  %5817 = vmatprep.subr.bf16.mxu0 0
  %5818 = vmatpush1.bf16.msra.mxu0 0
  %5819 = vmatprep.subr.bf16.mxu0 0
  %5820 = vmatpush1.bf16.msra.mxu0 0
  %5821 = vmatprep.mubr.bf16.mxu0 0
  %5822 = vmatmul.mubr.bf16.gmra.mrb[0].mxu0 %v5710
  %v5823 = vpop.f32.mrb[0].mxu0
  %v5824 = vadd.f32 %v5739, %v5823
  %v5825 = vpop.f32.mrb[0].mxu0
  %v5826 = vpop.f32.mrb[0].mxu0
  %v5827 = vadd.f32 %v5739, %v5826
  %v5828 = vpop.f32.mrb[0].mxu0
  %5829 = vmatprep.mubr.bf16.mxu0 0
  %5830 = vmatmul.mubr.bf16.gmra.mrb[0].mxu0 %v5711
  %v5831 = vpop.f32.mrb[0].mxu0
  %v5832 = vadd.f32 %v5739, %v5831
  %v5833 = vpop.f32.mrb[0].mxu0
  %v5834 = vpop.f32.mrb[0].mxu0
  %v5835 = vadd.f32 %v5739, %v5834
  %v5836 = vpop.f32.mrb[0].mxu0
  %5837 = vmatprep.mubr.bf16.mxu0 0
  %5838 = vmatmul.mubr.bf16.gmra.mrb[0].mxu0 %v5712
  %v5839 = vpop.f32.mrb[0].mxu0
  %v5840 = vadd.f32 %v5739, %v5839
  %v5841 = vpop.f32.mrb[0].mxu0
  %v5842 = vpop.f32.mrb[0].mxu0
  %v5843 = vadd.f32 %v5739, %v5842
  %v5844 = vpop.f32.mrb[0].mxu0
  %5845 = vmatprep.mubr.bf16.mxu0 0
  %5846 = vmatmul.mubr.bf16.gmra.mrb[0].mxu0 %v5713
  %v5847 = vpop.f32.mrb[0].mxu0
  %v5848 = vadd.f32 %v5739, %v5847
  %v5849 = vpop.f32.mrb[0].mxu0
  %v5850 = vpop.f32.mrb[0].mxu0
  %v5851 = vadd.f32 %v5739, %v5850
  %v5852 = vpop.f32.mrb[0].mxu0
  %5853 = vmatprep.mubr.bf16.mxu0 0
  %5854 = vmatmul.mubr.bf16.gmra.mrb[0].mxu0 %v5714
  %v5855 = vpop.f32.mrb[0].mxu0
  %v5856 = vadd.f32 %v5739, %v5855
  %v5857 = vpop.f32.mrb[0].mxu0
  %v5858 = vpop.f32.mrb[0].mxu0
  %v5859 = vadd.f32 %v5739, %v5858
  %v5860 = vpop.f32.mrb[0].mxu0
  %5861 = vmatprep.mubr.bf16.mxu0 0
  %5862 = vmatmul.mubr.bf16.gmra.mrb[0].mxu0 %v5715
  %v5863 = vpop.f32.mrb[0].mxu0
  %v5864 = vadd.f32 %v5739, %v5863
  %v5865 = vpop.f32.mrb[0].mxu0
  %v5866 = vpop.f32.mrb[0].mxu0
  %v5867 = vadd.f32 %v5739, %v5866
  %v5868 = vpop.f32.mrb[0].mxu0
  %5869 = vmatprep.mubr.bf16.mxu0 0
  %5870 = vmatmul.mubr.bf16.gmra.mrb[0].mxu0 %v5716
  %v5871 = vpop.f32.mrb[0].mxu0
  %v5872 = vadd.f32 %v5739, %v5871
  %v5873 = vpop.f32.mrb[0].mxu0
  %v5874 = vpop.f32.mrb[0].mxu0
  %v5875 = vadd.f32 %v5739, %v5874
  %v5876 = vpop.f32.mrb[0].mxu0
  %5877 = vmatprep.mubr.bf16.mxu0 0
  %5878 = vmatmul.mubr.bf16.gmra.mrb[0].mxu0 %v5717
  %v5879 = vpop.f32.mrb[0].mxu0
  %v5880 = vadd.f32 %v5739, %v5879
  %v5881 = vpop.f32.mrb[0].mxu0
  %v5882 = vpop.f32.mrb[0].mxu0
  %v5883 = vadd.f32 %v5739, %v5882
  %v5884 = vpop.f32.mrb[0].mxu0
  %5885 = vdwg.mxu0
  %v5886 = vadd.f32 %v5144, %v5824
  %v5887 = vadd.f32 %v5145, %v5827
  %v5888 = vadd.f32 %v5146, %v5832
  %v5889 = vadd.f32 %v5147, %v5835
  %v5890 = vadd.f32 %v5148, %v5840
  %v5891 = vadd.f32 %v5149, %v5843
  %v5892 = vadd.f32 %v5150, %v5848
  %v5893 = vadd.f32 %v5151, %v5851
  %v5894 = vadd.f32 %v5152, %v5856
  %v5895 = vadd.f32 %v5153, %v5859
  %v5896 = vadd.f32 %v5154, %v5864
  %v5897 = vadd.f32 %v5155, %v5867
  %v5898 = vadd.f32 %v5156, %v5872
  %v5899 = vadd.f32 %v5157, %v5875
  %v5900 = vadd.f32 %v5158, %v5880
  %v5901 = vadd.f32 %v5159, %v5883
  %5902 = vst.msk [vmem:[%s63] sm:$0xff] %vm310, %v5886
  %5903 = vst.msk [vmem:[%s63 + $0x8] sm:$0xff] %vm310, %v5887
  %5904 = vst.msk [vmem:[%s63 + $0x10] sm:$0xff] %vm310, %v5888
  %5905 = vst.msk [vmem:[%s63 + $0x18] sm:$0xff] %vm310, %v5889
  %5906 = vst.msk [vmem:[%s63 + $0x20] sm:$0xff] %vm310, %v5890
  %5907 = vst.msk [vmem:[%s63 + $0x28] sm:$0xff] %vm310, %v5891
  %5908 = vst.msk [vmem:[%s63 + $0x30] sm:$0xff] %vm310, %v5892
  %5909 = vst.msk [vmem:[%s63 + $0x38] sm:$0xff] %vm310, %v5893
  %5910 = vst.msk [vmem:[%s63 + $0x40] sm:$0xff] %vm310, %v5894
  %5911 = vst.msk [vmem:[%s63 + $0x48] sm:$0xff] %vm310, %v5895
  %5912 = vst.msk [vmem:[%s63 + $0x50] sm:$0xff] %vm310, %v5896
  %5913 = vst.msk [vmem:[%s63 + $0x58] sm:$0xff] %vm310, %v5897
  %5914 = vst.msk [vmem:[%s63 + $0x60] sm:$0xff] %vm310, %v5898
  %5915 = vst.msk [vmem:[%s63 + $0x68] sm:$0xff] %vm310, %v5899
  %5916 = vst.msk [vmem:[%s63 + $0x70] sm:$0xff] %vm310, %v5900
  %5917 = vst.msk [vmem:[%s63 + $0x78] sm:$0xff] %vm310, %v5901
  // Predicated region
  $region126: #{swin_encoder_forward.2} parent=0 // pred_check
    _
  $region127: #{swin_encoder_forward.2} parent=0 // pred_check_branch
    %5919 = sbr.rel (0) target = $region129
  $region128: #{swin_encoder_forward.2} parent=0 // pred_region
    _
  $region129: #{swin_encoder_forward.2} parent=0 // pred_fallthru
    _
  // Predicated region
  $region130: #{swin_encoder_forward.2} parent=0 // pred_check
    _
  $region131: #{swin_encoder_forward.2} parent=0 // pred_check_branch
    %5921 = sbr.rel (0) target = $region133
  $region132: #{swin_encoder_forward.2} parent=0 // pred_region
    _
  $region133: #{swin_encoder_forward.2} parent=0 // pred_fallthru
    _

</llo_original>
